<compile_context>
chip_gen: v6e
topology: v6e:2x2x1
jax: 0.10.0
libtpu: 0.0.40
codegen_flags: <defaults>
</compile_context>

<pallas_src>
import math
import numpy as np
import jax
import jax.numpy as jnp
from jax.experimental import pallas as pl
from jax.experimental.pallas import tpu as pltpu

TRAIN_SIZE = 384
_SQRT1_2 = 0.7071067811865476
_GELU_K = 0.7978845608028654  # sqrt(2/pi)


def _gelu_exact(x):
    # Exact (erf-based) GELU, matching torch.nn.GELU() default — reference only.
    return 0.5 * x * (1.0 + jax.lax.erf(x * _SQRT1_2))


def _gelu_tanh(x):
    # tanh-approximate GELU: tanh lowers to the EUP (otherwise-idle slot).
    return 0.5 * x * (1.0 + jnp.tanh(_GELU_K * (x + 0.044715 * x * x * x)))


def _bilinear_matrix_np(n_in, n_out):
    # align_corners=True interpolation matrix (n_out, n_in):  out = A @ in
    if n_out == 1:
        src = np.zeros((1,), dtype=np.float64)
    else:
        src = np.arange(n_out, dtype=np.float64) * (n_in - 1) / (n_out - 1)
    i0 = np.clip(np.floor(src).astype(np.int64), 0, n_in - 1)
    i1 = np.minimum(i0 + 1, n_in - 1)
    frac = (src - i0).astype(np.float32)
    A = np.zeros((n_out, n_in), dtype=np.float32)
    A[np.arange(n_out), i0] += (1.0 - frac)
    A[np.arange(n_out), i1] += frac
    return A


def _tap_masks_np(H, W):
    # Validity mask per 3x3 tap for the flattened (H*W) spatial axis (zero padding).
    n = np.arange(H * W)
    y, x = n // W, n % W
    m = np.zeros((9, H * W), np.float32)
    t = 0
    for dy in (-1, 0, 1):
        for dx in (-1, 0, 1):
            ok = (y + dy >= 0) & (y + dy < H) & (x + dx >= 0) & (x + dx < W)
            m[t] = ok.astype(np.float32)
            t += 1
    return m


def _bn_fold(c, eps=1e-5):
    # Fresh BatchNorm2d (gamma=1, beta=0, mean=0, var=1), eval-mode scale/shift.
    gamma = jnp.ones((c,), jnp.float32)
    beta = jnp.zeros((c,), jnp.float32)
    mean = jnp.zeros((c,), jnp.float32)
    var = jnp.ones((c,), jnp.float32)
    scale = gamma / jnp.sqrt(var + eps)
    shift = beta - mean * scale
    return scale, shift


def init_mcm_params(key, inc, outc):
    k = jax.random.split(key, 6)

    def dw_weight(kk, c):
        # torch Conv2d(c, c, 3, groups=c): fan_out = 9
        return math.sqrt(2.0 / 9.0) * jax.random.normal(kk, (3, 3, c), jnp.float32)

    def pw_weight(kk, cin, cout):
        # torch Conv2d(cin, cout, 1): fan_out = cout
        return math.sqrt(2.0 / cout) * jax.random.normal(kk, (cin, cout), jnp.float32)

    params = {}
    s1, b1 = _bn_fold(inc)
    s2, b2 = _bn_fold(outc)
    params['rc'] = (dw_weight(k[0], inc), jnp.zeros((inc,), jnp.float32), s1, b1,
                    pw_weight(k[1], inc, outc), jnp.zeros((outc,), jnp.float32), s2, b2)
    s1, b1 = _bn_fold(2 * outc)
    s2, b2 = _bn_fold(outc)
    params['rc2'] = (dw_weight(k[2], 2 * outc), jnp.zeros((2 * outc,), jnp.float32), s1, b1,
                     pw_weight(k[3], 2 * outc, outc), jnp.zeros((outc,), jnp.float32), s2, b2)
    s1, b1 = _bn_fold(outc)
    params['predtrans'] = (dw_weight(k[4], outc), jnp.zeros((outc,), jnp.float32), s1, b1,
                           pw_weight(k[5], outc, 1), jnp.zeros((1,), jnp.float32),
                           jnp.ones((1,), jnp.float32), jnp.zeros((1,), jnp.float32))
    return params


def _fold_dwpw(dw_w, dw_b, s1, b1, pw_w, pw_b, s2, b2):
    """Fold eval-mode BN into the conv weights.

    Returns: w9c (Cin, 9) depthwise weights (BN1 scale folded in),
             dsh (Cin, 1) depthwise shift, pwf (Cout, Cin) 1x1 weights
             (BN2 scale folded in), psh (Cout, 1) 1x1 shift.
    """
    cin = dw_w.shape[-1]
    w9c = dw_w.reshape(9, cin).T * s1[:, None]            # (Cin, 9)
    dsh = (dw_b * s1 + b1).reshape(cin, 1)                # (Cin, 1)
    pwf = (pw_w * s2[None, :]).T                          # (Cout, Cin)
    psh = (pw_b * s2 + b2).reshape(-1, 1)                 # (Cout, 1)
    return w9c, dsh, pwf, psh


def _const_spec(a):
    # Constant operands: block index never changes across grid steps ->
    # single-buffer them (halves VMEM footprint; DMA'd once).
    nd = a.ndim
    idx = lambda b, _nd=nd: (0,) * _nd
    try:
        return pl.BlockSpec(a.shape, idx, pipeline_mode=pl.Buffered(1))
    except (AttributeError, TypeError):
        return pl.BlockSpec(a.shape, idx)


def mcm_forward(params, x1, x2, *, images_per_step=None):
    # Module-facing layout: NCHW. x1: (B, outc, 2H, 2W), x2: (B, inc, H, W).
    B, outc, H1, W1 = x1.shape
    Bb, inc, H2, W2 = x2.shape
    assert B == Bb and H1 == 2 * H2 and W1 == 2 * W2
    HW1, HW2 = H1 * W1, H2 * W2
    assert HW1 % 128 == 0 and HW2 % 128 == 0, "flattened spatial extent must be lane-aligned"
    assert inc % 8 == 0 and outc % 8 == 0

    # Batch-block folding: bb images share one grid step (pixels side-by-side on
    # lanes).  Default keeps >=2 "parallel" steps when the batch allows it so both
    # v7x TensorCores get work; pass images_per_step=B to fold everything (best on
    # the single-TC v5e/v6e).
    if images_per_step is None:
        images_per_step = B // 2 if (B >= 2 and B % 2 == 0) else 1
    bb = int(images_per_step)
    assert bb >= 1 and B % bb == 0
    nb = B // bb
    L1, L2 = bb * HW1, bb * HW2
    f32 = jnp.float32

    # ---- host-side structural constants (exact, f32) -------------------------
    ah_up = _bilinear_matrix_np(H2, H1)                    # (H1, H2)
    aw_up = _bilinear_matrix_np(W2, W1)                    # (W1, W2)
    kron_up_t = jnp.asarray(np.ascontiguousarray(np.kron(ah_up, aw_up).T))   # (HW2, HW1)

    nidx = np.arange(HW1)
    rowmask = jnp.asarray((nidx[None, :] // W1 ==
                           np.arange(H1)[:, None]).astype(np.float32))       # (H1, HW1)
    ah_pred = jnp.asarray(_bilinear_matrix_np(H1, TRAIN_SIZE))               # (384, H1)
    aw_pred_t = _bilinear_matrix_np(W1, TRAIN_SIZE).T                        # (W1, 384)
    # Column-select unflatten folded into the W-interp matrix: resize tail stays
    # lane-dense at 384 lanes and one matmul is deleted.
    colsel_awt = jnp.asarray(np.ascontiguousarray(aw_pred_t[nidx % W1, :]))  # (HW1, 384)

    # ---- fold eval-mode BN into conv weights / shifts -------------------------
    rc_w9, rc_ds, rc_pw, rc_ps = _fold_dwpw(*params['rc'])
    w9_2, ds_2, pw_2, ps_2 = _fold_dwpw(*params['rc2'])
    a_w9, b_w9 = w9_2[:outc], w9_2[outc:]                  # cat order: (x1, x2_rc)
    a_ds, b_ds = ds_2[:outc], ds_2[outc:]
    pt_w9, pt_ds, pt_pw, pt_pb = _fold_dwpw(*params['predtrans'])

    # Pack the four depthwise convs into one slab with the per-tap boundary mask
    # (tiled per image in the block) folded into the weights.
    Ctot = inc + 3 * outc
    off_rc, off_a, off_b, off_pt = 0, inc, inc + outc, inc + 2 * outc
    tap_masks = np.tile(_tap_masks_np(H1, W1), (1, bb))                      # (9, L1)
    w9_all = jnp.concatenate([rc_w9, a_w9, b_w9, pt_w9], axis=0)             # (Ctot, 9)
    dw_wm = w9_all.T[:, :, None] * jnp.asarray(tap_masks)[:, None, :]        # (9, Ctot, L1)

    # Pack every bias/shift vector into one (rows, 1) slab (offsets are 8-aligned).
    dsh_all = jnp.concatenate([rc_ds, a_ds, b_ds, pt_ds], axis=0)            # (Ctot, 1)
    pt_pb_pad = jnp.pad(pt_pb, ((0, 7), (0, 0)))                             # (8, 1)
    shift_slab = jnp.concatenate([dsh_all, rc_ps, ps_2, pt_pb_pad], axis=0)
    soff_rc_ps, soff_rc2_ps, soff_pt_pb = Ctot, Ctot + outc, Ctot + 2 * outc

    # Pack the three 1x1 weight matrices into one slab; rc2's two halves stay
    # merged as a single (outc, 2*outc) so rc2 is one MXU pass.
    PC = max(inc, 2 * outc)
    pad_c = lambda w: jnp.pad(w, ((0, 0), (0, PC - w.shape[1])))
    pw_slab = jnp.concatenate([pad_c(rc_pw), pad_c(pw_2),
                               pad_c(jnp.pad(pt_pw, ((0, 7), (0, 0))))], axis=0)

    # ---- fold batch blocks into the lane axis ---------------------------------
    def fold(x, hw):
        C = x.shape[1]
        return (x.reshape(nb, bb, C, hw).transpose(0, 2, 1, 3).reshape(nb, C, bb * hw))

    x1_f = fold(x1, HW1)          # (nb, outc, L1)
    x2_f = fold(x2, HW2)          # (nb, inc,  L2)

    def kernel(x1_ref, x2_ref, wm_ref, sh_ref, pw_ref, kron_ref, rowm_ref,
               cawt_ref, ahp_ref, pred_ref, xfwd_ref):
        sh = sh_ref[...]                                    # (rows, 1)
        pw = pw_ref[...]                                    # (rows, PC)
        rc_pw_m = pw[0:outc, 0:inc]                         # (outc, inc)
        pw2_m = pw[outc:2 * outc, 0:2 * outc]               # (outc, 2*outc)
        pt_pw_m = pw[2 * outc:2 * outc + 1, 0:outc]         # (1, outc)

        def dw_gelu(x, coff, clen):
            # depthwise 3x3 (zero pad) as 9 lane-rolls against mask-folded weights,
            # then BN shift + tanh-GELU.  Cross-image / wrap-around neighbors are
            # zeroed by the folded masks.
            acc = None
            tap = 0
            for dy in (-1, 0, 1):
                for dx in (-1, 0, 1):
                    off = dy * W1 + dx
                    # np.roll semantics: shifted[n] = x[(n + off) % L1]
                    shifted = x if off == 0 else pltpu.roll(x, (-off) % L1, 1)
                    term = shifted * wm_ref[tap, coff:coff + clen, :]
                    acc = term if acc is None else acc + term
                    tap += 1
            return _gelu_tanh(acc + sh[coff:coff + clen, :])

        # --- 2x bilinear upsample (align_corners): per-image MXU matmul --------
        x2s = x2_ref[0]                                     # (inc, L2)
        ups = [jnp.dot(x2s[:, i * HW2:(i + 1) * HW2], kron_ref[...],
                       preferred_element_type=jnp.float32) for i in range(bb)]
        x2_up = ups[0] if bb == 1 else jnp.concatenate(ups, axis=1)   # (inc, L1)

        # --- rc block -----------------------------------------------------------
        a1 = dw_gelu(x2_up, off_rc, inc)
        x2_rc = _gelu_tanh(jnp.dot(rc_pw_m, a1, preferred_element_type=jnp.float32)
                           + sh[soff_rc_ps:soff_rc_ps + outc, :])     # (outc, L1)

        # --- rc2 block (concat-free channel halves, one merged 1x1) + shortcut --
        ga = dw_gelu(x1_ref[0], off_a, outc)
        gb = dw_gelu(x2_rc, off_b, outc)
        gab = jnp.concatenate([ga, gb], axis=0)                        # (2*outc, L1)
        y2 = (jnp.dot(pw2_m, gab, preferred_element_type=jnp.float32)
              + sh[soff_rc2_ps:soff_rc2_ps + outc, :])
        x_fwd = _gelu_tanh(y2) + x2_rc                                 # (outc, L1)
        for i in range(bb):
            xfwd_ref[i] = x_fwd[:, i * HW1:(i + 1) * HW1].astype(xfwd_ref.dtype)

        # --- predtrans + fused 384x384 bilinear resize (lane-dense tail) --------
        a3 = dw_gelu(x_fwd, off_pt, outc)
        p = (jnp.dot(pt_pw_m, a3, preferred_element_type=jnp.float32)
             + sh[soff_pt_pb:soff_pt_pb + 1, :])                       # (1, L1)
        rowm = rowm_ref[...]                                           # (H1, HW1)
        for i in range(bb):
            pi = p[:, i * HW1:(i + 1) * HW1]                           # (1, HW1)
            t2 = jnp.dot(rowm * pi, cawt_ref[...],
                         preferred_element_type=jnp.float32)           # (H1, 384)
            pred_ref[i] = jnp.dot(ahp_ref[...], t2,
                                  preferred_element_type=jnp.float32).astype(pred_ref.dtype)

    const_args = [dw_wm, shift_slab, pw_slab, kron_up_t, rowmask, colsel_awt, ah_pred]

    in_specs = ([pl.BlockSpec((1, outc, L1), lambda b: (b, 0, 0)),
                 pl.BlockSpec((1, inc, L2), lambda b: (b, 0, 0))]
                + [_const_spec(a) for a in const_args])

    out_shape = (jax.ShapeDtypeStruct((B, TRAIN_SIZE, TRAIN_SIZE), f32),
                 jax.ShapeDtypeStruct((B, outc, HW1), f32))
    out_specs = [pl.BlockSpec((bb, TRAIN_SIZE, TRAIN_SIZE), lambda b: (b, 0, 0)),
                 pl.BlockSpec((bb, outc, HW1), lambda b: (b, 0, 0))]

    pred, xfwd = pl.pallas_call(
        kernel,
        out_shape=out_shape,
        grid_spec=pltpu.PrefetchScalarGridSpec(
            num_scalar_prefetch=0,
            grid=(nb,),
            in_specs=in_specs,
            out_specs=out_specs,
        ),
        compiler_params=pltpu.CompilerParams(
            dimension_semantics=("parallel",),
            vmem_limit_bytes=32 * 1024 * 1024,
        ),
    )(x1_f, x2_f, *const_args)

    return pred.reshape(B, 1, TRAIN_SIZE, TRAIN_SIZE), xfwd.reshape(B, outc, H1, W1)


# ----------------------------- pure-JAX reference -----------------------------
def _ref_resize_bilinear(x, h_out, w_out):
    hin, win = x.shape[2], x.shape[3]
    ah = jnp.asarray(_bilinear_matrix_np(hin, h_out))
    aw = jnp.asarray(_bilinear_matrix_np(win, w_out))
    hi = jax.lax.Precision.HIGHEST
    t = jnp.einsum('oh,bchw->bcow', ah, x, precision=hi)
    return jnp.einsum('pw,bcow->bcop', aw, t, precision=hi)


def _ref_dwpw(x, dw_w, dw_b, s1, b1, pw_w, pw_b, s2, b2, final_act=True):
    _, _, H, W = x.shape
    hi = jax.lax.Precision.HIGHEST
    xp = jnp.pad(x, ((0, 0), (0, 0), (1, 1), (1, 1)))
    acc = jnp.zeros_like(x)
    for ky in range(3):
        for kx in range(3):
            acc = acc + xp[:, :, ky:ky + H, kx:kx + W] * dw_w[ky, kx][None, :, None, None]
    acc = _gelu_exact((acc + dw_b[None, :, None, None]) * s1[None, :, None, None]
                      + b1[None, :, None, None])
    y = jnp.einsum('bchw,co->bohw', acc, pw_w, precision=hi) + pw_b[None, :, None, None]
    if final_act:
        y = _gelu_exact(y * s2[None, :, None, None] + b2[None, :, None, None])
    return y


def mcm_reference(params, x1, x2):
    _, _, H1, W1 = x1.shape
    x2_up = _ref_resize_bilinear(x2, H1, W1)
    x2_rc = _ref_dwpw(x2_up, *params['rc'])
    x_cat = jnp.concatenate([x1, x2_rc], axis=1)
    x_fwd = _ref_dwpw(x_cat, *params['rc2']) + x2_rc
    pred = _ref_resize_bilinear(_ref_dwpw(x_fwd, *params['predtrans'], final_act=False),
                                TRAIN_SIZE, TRAIN_SIZE)
    return pred, x_fwd


if __name__ == "__main__":
    # TODO(synk): BatchNorm uses eval-mode (running-stat) semantics folded into
    # scale/shift; training-mode batch statistics are not modeled.
    B, inc, outc, H2, W2 = 2, 8, 8, 16, 16
    key = jax.random.PRNGKey(0)
    kp, k1, k2 = jax.random.split(key, 3)
    params = init_mcm_params(kp, inc, outc)
    x1 = jax.random.normal(k1, (B, outc, 2 * H2, 2 * W2), jnp.float32)
    x2 = jax.random.normal(k2, (B, inc, H2, W2), jnp.float32)

    pred, x_forward = jax.jit(mcm_forward)(params, x1, x2)
    jax.block_until_ready((pred, x_forward))
    assert pred.shape == (B, 1, TRAIN_SIZE, TRAIN_SIZE)
    assert x_forward.shape == (B, outc, 2 * H2, 2 * W2)

    pred_ref, xf_ref = jax.jit(mcm_reference)(params, x1, x2)
    # 1e-2 tolerance: the kernel uses tanh-approximate GELU (EUP slot) while the
    # reference uses the exact erf GELU (~1e-3 drift across the three blocks).
    np.testing.assert_allclose(np.asarray(pred), np.asarray(pred_ref), rtol=1e-2, atol=1e-2)
    np.testing.assert_allclose(np.asarray(x_forward), np.asarray(xf_ref), rtol=1e-2, atol=1e-2)
    print("KERNEL_OK")
</pallas_src>

<mosaic_0001>
module attributes {stable_mosaic.version = 11 : i64} {
  func.func @kernel(%arg0: i32, %arg1: memref<1x8x1024xf32, #tpu.memory_space<vmem>>, %arg2: memref<1x8x256xf32, #tpu.memory_space<vmem>>, %arg3: memref<9x32x1024xf32, #tpu.memory_space<vmem>>, %arg4: memref<56x1xf32, #tpu.memory_space<vmem>>, %arg5: memref<24x16xf32, #tpu.memory_space<vmem>>, %arg6: memref<256x1024xf32, #tpu.memory_space<vmem>>, %arg7: memref<32x1024xf32, #tpu.memory_space<vmem>>, %arg8: memref<1024x384xf32, #tpu.memory_space<vmem>>, %arg9: memref<384x32xf32, #tpu.memory_space<vmem>>, %arg10: memref<1x384x384xf32, #tpu.memory_space<vmem>>, %arg11: memref<1x8x1024xf32, #tpu.memory_space<vmem>>) attributes {dimension_semantics = [#tpu.dimension_semantics<parallel>], iteration_bounds = array<i64: 2>, scalar_prefetch = 0 : i64, scratch_operands = 0 : i64, tpu.core_type = #tpu.core_type<tc>, window_params = [{transform_indices = @transform_0, window_bounds = array<i64: 1, 8, 1024>}, {transform_indices = @transform_1, window_bounds = array<i64: 1, 8, 256>}, {pipeline_mode = #tpu.pipeline_mode<synchronous>, transform_indices = @transform_2, window_bounds = array<i64: 9, 32, 1024>}, {pipeline_mode = #tpu.pipeline_mode<synchronous>, transform_indices = @transform_3, window_bounds = array<i64: 56, 1>}, {pipeline_mode = #tpu.pipeline_mode<synchronous>, transform_indices = @transform_4, window_bounds = array<i64: 24, 16>}, {pipeline_mode = #tpu.pipeline_mode<synchronous>, transform_indices = @transform_5, window_bounds = array<i64: 256, 1024>}, {pipeline_mode = #tpu.pipeline_mode<synchronous>, transform_indices = @transform_6, window_bounds = array<i64: 32, 1024>}, {pipeline_mode = #tpu.pipeline_mode<synchronous>, transform_indices = @transform_7, window_bounds = array<i64: 1024, 384>}, {pipeline_mode = #tpu.pipeline_mode<synchronous>, transform_indices = @transform_8, window_bounds = array<i64: 384, 32>}, {transform_indices = @transform_9, window_bounds = array<i64: 1, 384, 384>}, {transform_indices = @transform_10, window_bounds = array<i64: 1, 8, 1024>}]} {
    %c0 = arith.constant 0 : index
    %c0_0 = arith.constant 0 : index
    %0 = vector.load %arg4[%c0, %c0_0] : memref<56x1xf32, #tpu.memory_space<vmem>>, vector<56x1xf32>
    %c0_1 = arith.constant 0 : index
    %c0_2 = arith.constant 0 : index
    %1 = vector.load %arg5[%c0_1, %c0_2] : memref<24x16xf32, #tpu.memory_space<vmem>>, vector<24x16xf32>
    %2 = vector.extract_strided_slice %1 {offsets = [0, 0], sizes = [8, 8], strides = [1, 1]} : vector<24x16xf32> to vector<8x8xf32>
    %3 = vector.extract_strided_slice %1 {offsets = [8, 0], sizes = [8, 16], strides = [1, 1]} : vector<24x16xf32> to vector<8x16xf32>
    %4 = vector.extract_strided_slice %1 {offsets = [16, 0], sizes = [1, 8], strides = [1, 1]} : vector<24x16xf32> to vector<1x8xf32>
    %c0_3 = arith.constant 0 : index
    %c0_4 = arith.constant 0 : index
    %c0_5 = arith.constant 0 : index
    %5 = vector.load %arg2[%c0_3, %c0_4, %c0_5] : memref<1x8x256xf32, #tpu.memory_space<vmem>>, vector<1x8x256xf32>
    %6 = vector.shape_cast %5 : vector<1x8x256xf32> to vector<8x256xf32>
    %c0_6 = arith.constant 0 : index
    %c0_7 = arith.constant 0 : index
    %7 = vector.load %arg6[%c0_6, %c0_7] : memref<256x1024xf32, #tpu.memory_space<vmem>>, vector<256x1024xf32>
    %cst = arith.constant dense<0.000000e+00> : vector<8x1024xf32>
    %8 = tpu.matmul %6, %7, %cst {dimension_numbers = #tpu.dot_dimension_numbers<[1], [0], [0], [1], [0, 0, 1, 1], [], []>} : vector<8x256xf32>, vector<256x1024xf32>, vector<8x1024xf32> -> vector<8x1024xf32>
    %c33_i32 = arith.constant 33 : i32
    %9 = tpu.dynamic_rotate %8 by %c33_i32 dim 1 : vector<8x1024xf32>, i32 -> vector<8x1024xf32>
    %c0_8 = arith.constant 0 : index
    %c0_9 = arith.constant 0 : index
    %c0_10 = arith.constant 0 : index
    %10 = vector.load %arg3[%c0_8, %c0_9, %c0_10] : memref<9x32x1024xf32, #tpu.memory_space<vmem>>, vector<1x8x1024xf32>
    %11 = vector.shape_cast %10 : vector<1x8x1024xf32> to vector<8x1024xf32>
    %12 = arith.mulf %9, %11 : vector<8x1024xf32>
    %c32_i32 = arith.constant 32 : i32
    %13 = tpu.dynamic_rotate %8 by %c32_i32 dim 1 : vector<8x1024xf32>, i32 -> vector<8x1024xf32>
    %c1 = arith.constant 1 : index
    %c0_11 = arith.constant 0 : index
    %c0_12 = arith.constant 0 : index
    %14 = vector.load %arg3[%c1, %c0_11, %c0_12] : memref<9x32x1024xf32, #tpu.memory_space<vmem>>, vector<1x8x1024xf32>
    %15 = vector.shape_cast %14 : vector<1x8x1024xf32> to vector<8x1024xf32>
    %16 = arith.mulf %13, %15 : vector<8x1024xf32>
    %17 = arith.addf %12, %16 : vector<8x1024xf32>
    %c31_i32 = arith.constant 31 : i32
    %18 = tpu.dynamic_rotate %8 by %c31_i32 dim 1 : vector<8x1024xf32>, i32 -> vector<8x1024xf32>
    %c2 = arith.constant 2 : index
    %c0_13 = arith.constant 0 : index
    %c0_14 = arith.constant 0 : index
    %19 = vector.load %arg3[%c2, %c0_13, %c0_14] : memref<9x32x1024xf32, #tpu.memory_space<vmem>>, vector<1x8x1024xf32>
    %20 = vector.shape_cast %19 : vector<1x8x1024xf32> to vector<8x1024xf32>
    %21 = arith.mulf %18, %20 : vector<8x1024xf32>
    %22 = arith.addf %17, %21 : vector<8x1024xf32>
    %c1_i32 = arith.constant 1 : i32
    %23 = tpu.dynamic_rotate %8 by %c1_i32 dim 1 : vector<8x1024xf32>, i32 -> vector<8x1024xf32>
    %c3 = arith.constant 3 : index
    %c0_15 = arith.constant 0 : index
    %c0_16 = arith.constant 0 : index
    %24 = vector.load %arg3[%c3, %c0_15, %c0_16] : memref<9x32x1024xf32, #tpu.memory_space<vmem>>, vector<1x8x1024xf32>
    %25 = vector.shape_cast %24 : vector<1x8x1024xf32> to vector<8x1024xf32>
    %26 = arith.mulf %23, %25 : vector<8x1024xf32>
    %27 = arith.addf %22, %26 : vector<8x1024xf32>
    %c4 = arith.constant 4 : index
    %c0_17 = arith.constant 0 : index
    %c0_18 = arith.constant 0 : index
    %28 = vector.load %arg3[%c4, %c0_17, %c0_18] : memref<9x32x1024xf32, #tpu.memory_space<vmem>>, vector<1x8x1024xf32>
    %29 = vector.shape_cast %28 : vector<1x8x1024xf32> to vector<8x1024xf32>
    %30 = arith.mulf %8, %29 : vector<8x1024xf32>
    %31 = arith.addf %27, %30 : vector<8x1024xf32>
    %c1023_i32 = arith.constant 1023 : i32
    %32 = tpu.dynamic_rotate %8 by %c1023_i32 dim 1 : vector<8x1024xf32>, i32 -> vector<8x1024xf32>
    %c5 = arith.constant 5 : index
    %c0_19 = arith.constant 0 : index
    %c0_20 = arith.constant 0 : index
    %33 = vector.load %arg3[%c5, %c0_19, %c0_20] : memref<9x32x1024xf32, #tpu.memory_space<vmem>>, vector<1x8x1024xf32>
    %34 = vector.shape_cast %33 : vector<1x8x1024xf32> to vector<8x1024xf32>
    %35 = arith.mulf %32, %34 : vector<8x1024xf32>
    %36 = arith.addf %31, %35 : vector<8x1024xf32>
    %c993_i32 = arith.constant 993 : i32
    %37 = tpu.dynamic_rotate %8 by %c993_i32 dim 1 : vector<8x1024xf32>, i32 -> vector<8x1024xf32>
    %c6 = arith.constant 6 : index
    %c0_21 = arith.constant 0 : index
    %c0_22 = arith.constant 0 : index
    %38 = vector.load %arg3[%c6, %c0_21, %c0_22] : memref<9x32x1024xf32, #tpu.memory_space<vmem>>, vector<1x8x1024xf32>
    %39 = vector.shape_cast %38 : vector<1x8x1024xf32> to vector<8x1024xf32>
    %40 = arith.mulf %37, %39 : vector<8x1024xf32>
    %41 = arith.addf %36, %40 : vector<8x1024xf32>
    %c992_i32 = arith.constant 992 : i32
    %42 = tpu.dynamic_rotate %8 by %c992_i32 dim 1 : vector<8x1024xf32>, i32 -> vector<8x1024xf32>
    %c7 = arith.constant 7 : index
    %c0_23 = arith.constant 0 : index
    %c0_24 = arith.constant 0 : index
    %43 = vector.load %arg3[%c7, %c0_23, %c0_24] : memref<9x32x1024xf32, #tpu.memory_space<vmem>>, vector<1x8x1024xf32>
    %44 = vector.shape_cast %43 : vector<1x8x1024xf32> to vector<8x1024xf32>
    %45 = arith.mulf %42, %44 : vector<8x1024xf32>
    %46 = arith.addf %41, %45 : vector<8x1024xf32>
    %c991_i32 = arith.constant 991 : i32
    %47 = tpu.dynamic_rotate %8 by %c991_i32 dim 1 : vector<8x1024xf32>, i32 -> vector<8x1024xf32>
    %c8 = arith.constant 8 : index
    %c0_25 = arith.constant 0 : index
    %c0_26 = arith.constant 0 : index
    %48 = vector.load %arg3[%c8, %c0_25, %c0_26] : memref<9x32x1024xf32, #tpu.memory_space<vmem>>, vector<1x8x1024xf32>
    %49 = vector.shape_cast %48 : vector<1x8x1024xf32> to vector<8x1024xf32>
    %50 = arith.mulf %47, %49 : vector<8x1024xf32>
    %51 = arith.addf %46, %50 : vector<8x1024xf32>
    %52 = vector.extract_strided_slice %0 {offsets = [0, 0], sizes = [8, 1], strides = [1, 1]} : vector<56x1xf32> to vector<8x1xf32>
    %53 = vector.broadcast %52 : vector<8x1xf32> to vector<8x1024xf32>
    %54 = arith.addf %51, %53 : vector<8x1024xf32>
    %cst_27 = arith.constant 5.000000e-01 : f32
    %55 = vector.broadcast %cst_27 : f32 to vector<8x1024xf32>
    %56 = arith.mulf %55, %54 : vector<8x1024xf32>
    %cst_28 = arith.constant 4.471500e-02 : f32
    %57 = vector.broadcast %cst_28 : f32 to vector<8x1024xf32>
    %58 = arith.mulf %57, %54 : vector<8x1024xf32>
    %59 = arith.mulf %58, %54 : vector<8x1024xf32>
    %60 = arith.mulf %59, %54 : vector<8x1024xf32>
    %61 = arith.addf %54, %60 : vector<8x1024xf32>
    %cst_29 = arith.constant 0.797884583 : f32
    %62 = vector.broadcast %cst_29 : f32 to vector<8x1024xf32>
    %63 = arith.mulf %62, %61 : vector<8x1024xf32>
    %64 = math.tanh %63 : vector<8x1024xf32>
    %cst_30 = arith.constant 1.000000e+00 : f32
    %65 = vector.broadcast %cst_30 : f32 to vector<8x1024xf32>
    %66 = arith.addf %65, %64 : vector<8x1024xf32>
    %67 = arith.mulf %56, %66 : vector<8x1024xf32>
    %cst_31 = arith.constant dense<0.000000e+00> : vector<8x1024xf32>
    %68 = tpu.matmul %2, %67, %cst_31 {dimension_numbers = #tpu.dot_dimension_numbers<[1], [0], [0], [1], [0, 0, 1, 1], [], []>} : vector<8x8xf32>, vector<8x1024xf32>, vector<8x1024xf32> -> vector<8x1024xf32>
    %69 = vector.extract_strided_slice %0 {offsets = [32, 0], sizes = [8, 1], strides = [1, 1]} : vector<56x1xf32> to vector<8x1xf32>
    %70 = vector.broadcast %69 : vector<8x1xf32> to vector<8x1024xf32>
    %71 = arith.addf %68, %70 : vector<8x1024xf32>
    %cst_32 = arith.constant 5.000000e-01 : f32
    %72 = vector.broadcast %cst_32 : f32 to vector<8x1024xf32>
    %73 = arith.mulf %72, %71 : vector<8x1024xf32>
    %cst_33 = arith.constant 4.471500e-02 : f32
    %74 = vector.broadcast %cst_33 : f32 to vector<8x1024xf32>
    %75 = arith.mulf %74, %71 : vector<8x1024xf32>
    %76 = arith.mulf %75, %71 : vector<8x1024xf32>
    %77 = arith.mulf %76, %71 : vector<8x1024xf32>
    %78 = arith.addf %71, %77 : vector<8x1024xf32>
    %cst_34 = arith.constant 0.797884583 : f32
    %79 = vector.broadcast %cst_34 : f32 to vector<8x1024xf32>
    %80 = arith.mulf %79, %78 : vector<8x1024xf32>
    %81 = math.tanh %80 : vector<8x1024xf32>
    %cst_35 = arith.constant 1.000000e+00 : f32
    %82 = vector.broadcast %cst_35 : f32 to vector<8x1024xf32>
    %83 = arith.addf %82, %81 : vector<8x1024xf32>
    %84 = arith.mulf %73, %83 : vector<8x1024xf32>
    %c0_36 = arith.constant 0 : index
    %c0_37 = arith.constant 0 : index
    %c0_38 = arith.constant 0 : index
    %85 = vector.load %arg1[%c0_36, %c0_37, %c0_38] : memref<1x8x1024xf32, #tpu.memory_space<vmem>>, vector<1x8x1024xf32>
    %86 = vector.shape_cast %85 : vector<1x8x1024xf32> to vector<8x1024xf32>
    %c33_i32_39 = arith.constant 33 : i32
    %87 = tpu.dynamic_rotate %86 by %c33_i32_39 dim 1 : vector<8x1024xf32>, i32 -> vector<8x1024xf32>
    %c0_40 = arith.constant 0 : index
    %c8_41 = arith.constant 8 : index
    %c0_42 = arith.constant 0 : index
    %88 = vector.load %arg3[%c0_40, %c8_41, %c0_42] : memref<9x32x1024xf32, #tpu.memory_space<vmem>>, vector<1x8x1024xf32>
    %89 = vector.shape_cast %88 : vector<1x8x1024xf32> to vector<8x1024xf32>
    %90 = arith.mulf %87, %89 : vector<8x1024xf32>
    %c32_i32_43 = arith.constant 32 : i32
    %91 = tpu.dynamic_rotate %86 by %c32_i32_43 dim 1 : vector<8x1024xf32>, i32 -> vector<8x1024xf32>
    %c1_44 = arith.constant 1 : index
    %c8_45 = arith.constant 8 : index
    %c0_46 = arith.constant 0 : index
    %92 = vector.load %arg3[%c1_44, %c8_45, %c0_46] : memref<9x32x1024xf32, #tpu.memory_space<vmem>>, vector<1x8x1024xf32>
    %93 = vector.shape_cast %92 : vector<1x8x1024xf32> to vector<8x1024xf32>
    %94 = arith.mulf %91, %93 : vector<8x1024xf32>
    %95 = arith.addf %90, %94 : vector<8x1024xf32>
    %c31_i32_47 = arith.constant 31 : i32
    %96 = tpu.dynamic_rotate %86 by %c31_i32_47 dim 1 : vector<8x1024xf32>, i32 -> vector<8x1024xf32>
    %c2_48 = arith.constant 2 : index
    %c8_49 = arith.constant 8 : index
    %c0_50 = arith.constant 0 : index
    %97 = vector.load %arg3[%c2_48, %c8_49, %c0_50] : memref<9x32x1024xf32, #tpu.memory_space<vmem>>, vector<1x8x1024xf32>
    %98 = vector.shape_cast %97 : vector<1x8x1024xf32> to vector<8x1024xf32>
    %99 = arith.mulf %96, %98 : vector<8x1024xf32>
    %100 = arith.addf %95, %99 : vector<8x1024xf32>
    %c1_i32_51 = arith.constant 1 : i32
    %101 = tpu.dynamic_rotate %86 by %c1_i32_51 dim 1 : vector<8x1024xf32>, i32 -> vector<8x1024xf32>
    %c3_52 = arith.constant 3 : index
    %c8_53 = arith.constant 8 : index
    %c0_54 = arith.constant 0 : index
    %102 = vector.load %arg3[%c3_52, %c8_53, %c0_54] : memref<9x32x1024xf32, #tpu.memory_space<vmem>>, vector<1x8x1024xf32>
    %103 = vector.shape_cast %102 : vector<1x8x1024xf32> to vector<8x1024xf32>
    %104 = arith.mulf %101, %103 : vector<8x1024xf32>
    %105 = arith.addf %100, %104 : vector<8x1024xf32>
    %c4_55 = arith.constant 4 : index
    %c8_56 = arith.constant 8 : index
    %c0_57 = arith.constant 0 : index
    %106 = vector.load %arg3[%c4_55, %c8_56, %c0_57] : memref<9x32x1024xf32, #tpu.memory_space<vmem>>, vector<1x8x1024xf32>
    %107 = vector.shape_cast %106 : vector<1x8x1024xf32> to vector<8x1024xf32>
    %108 = arith.mulf %86, %107 : vector<8x1024xf32>
    %109 = arith.addf %105, %108 : vector<8x1024xf32>
    %c1023_i32_58 = arith.constant 1023 : i32
    %110 = tpu.dynamic_rotate %86 by %c1023_i32_58 dim 1 : vector<8x1024xf32>, i32 -> vector<8x1024xf32>
    %c5_59 = arith.constant 5 : index
    %c8_60 = arith.constant 8 : index
    %c0_61 = arith.constant 0 : index
    %111 = vector.load %arg3[%c5_59, %c8_60, %c0_61] : memref<9x32x1024xf32, #tpu.memory_space<vmem>>, vector<1x8x1024xf32>
    %112 = vector.shape_cast %111 : vector<1x8x1024xf32> to vector<8x1024xf32>
    %113 = arith.mulf %110, %112 : vector<8x1024xf32>
    %114 = arith.addf %109, %113 : vector<8x1024xf32>
    %c993_i32_62 = arith.constant 993 : i32
    %115 = tpu.dynamic_rotate %86 by %c993_i32_62 dim 1 : vector<8x1024xf32>, i32 -> vector<8x1024xf32>
    %c6_63 = arith.constant 6 : index
    %c8_64 = arith.constant 8 : index
    %c0_65 = arith.constant 0 : index
    %116 = vector.load %arg3[%c6_63, %c8_64, %c0_65] : memref<9x32x1024xf32, #tpu.memory_space<vmem>>, vector<1x8x1024xf32>
    %117 = vector.shape_cast %116 : vector<1x8x1024xf32> to vector<8x1024xf32>
    %118 = arith.mulf %115, %117 : vector<8x1024xf32>
    %119 = arith.addf %114, %118 : vector<8x1024xf32>
    %c992_i32_66 = arith.constant 992 : i32
    %120 = tpu.dynamic_rotate %86 by %c992_i32_66 dim 1 : vector<8x1024xf32>, i32 -> vector<8x1024xf32>
    %c7_67 = arith.constant 7 : index
    %c8_68 = arith.constant 8 : index
    %c0_69 = arith.constant 0 : index
    %121 = vector.load %arg3[%c7_67, %c8_68, %c0_69] : memref<9x32x1024xf32, #tpu.memory_space<vmem>>, vector<1x8x1024xf32>
    %122 = vector.shape_cast %121 : vector<1x8x1024xf32> to vector<8x1024xf32>
    %123 = arith.mulf %120, %122 : vector<8x1024xf32>
    %124 = arith.addf %119, %123 : vector<8x1024xf32>
    %c991_i32_70 = arith.constant 991 : i32
    %125 = tpu.dynamic_rotate %86 by %c991_i32_70 dim 1 : vector<8x1024xf32>, i32 -> vector<8x1024xf32>
    %c8_71 = arith.constant 8 : index
    %c8_72 = arith.constant 8 : index
    %c0_73 = arith.constant 0 : index
    %126 = vector.load %arg3[%c8_71, %c8_72, %c0_73] : memref<9x32x1024xf32, #tpu.memory_space<vmem>>, vector<1x8x1024xf32>
    %127 = vector.shape_cast %126 : vector<1x8x1024xf32> to vector<8x1024xf32>
    %128 = arith.mulf %125, %127 : vector<8x1024xf32>
    %129 = arith.addf %124, %128 : vector<8x1024xf32>
    %130 = vector.extract_strided_slice %0 {offsets = [8, 0], sizes = [8, 1], strides = [1, 1]} : vector<56x1xf32> to vector<8x1xf32>
    %131 = vector.broadcast %130 : vector<8x1xf32> to vector<8x1024xf32>
    %132 = arith.addf %129, %131 : vector<8x1024xf32>
    %cst_74 = arith.constant 5.000000e-01 : f32
    %133 = vector.broadcast %cst_74 : f32 to vector<8x1024xf32>
    %134 = arith.mulf %133, %132 : vector<8x1024xf32>
    %cst_75 = arith.constant 4.471500e-02 : f32
    %135 = vector.broadcast %cst_75 : f32 to vector<8x1024xf32>
    %136 = arith.mulf %135, %132 : vector<8x1024xf32>
    %137 = arith.mulf %136, %132 : vector<8x1024xf32>
    %138 = arith.mulf %137, %132 : vector<8x1024xf32>
    %139 = arith.addf %132, %138 : vector<8x1024xf32>
    %cst_76 = arith.constant 0.797884583 : f32
    %140 = vector.broadcast %cst_76 : f32 to vector<8x1024xf32>
    %141 = arith.mulf %140, %139 : vector<8x1024xf32>
    %142 = math.tanh %141 : vector<8x1024xf32>
    %cst_77 = arith.constant 1.000000e+00 : f32
    %143 = vector.broadcast %cst_77 : f32 to vector<8x1024xf32>
    %144 = arith.addf %143, %142 : vector<8x1024xf32>
    %145 = arith.mulf %134, %144 : vector<8x1024xf32>
    %c33_i32_78 = arith.constant 33 : i32
    %146 = tpu.dynamic_rotate %84 by %c33_i32_78 dim 1 : vector<8x1024xf32>, i32 -> vector<8x1024xf32>
    %c0_79 = arith.constant 0 : index
    %c16 = arith.constant 16 : index
    %c0_80 = arith.constant 0 : index
    %147 = vector.load %arg3[%c0_79, %c16, %c0_80] : memref<9x32x1024xf32, #tpu.memory_space<vmem>>, vector<1x8x1024xf32>
    %148 = vector.shape_cast %147 : vector<1x8x1024xf32> to vector<8x1024xf32>
    %149 = arith.mulf %146, %148 : vector<8x1024xf32>
    %c32_i32_81 = arith.constant 32 : i32
    %150 = tpu.dynamic_rotate %84 by %c32_i32_81 dim 1 : vector<8x1024xf32>, i32 -> vector<8x1024xf32>
    %c1_82 = arith.constant 1 : index
    %c16_83 = arith.constant 16 : index
    %c0_84 = arith.constant 0 : index
    %151 = vector.load %arg3[%c1_82, %c16_83, %c0_84] : memref<9x32x1024xf32, #tpu.memory_space<vmem>>, vector<1x8x1024xf32>
    %152 = vector.shape_cast %151 : vector<1x8x1024xf32> to vector<8x1024xf32>
    %153 = arith.mulf %150, %152 : vector<8x1024xf32>
    %154 = arith.addf %149, %153 : vector<8x1024xf32>
    %c31_i32_85 = arith.constant 31 : i32
    %155 = tpu.dynamic_rotate %84 by %c31_i32_85 dim 1 : vector<8x1024xf32>, i32 -> vector<8x1024xf32>
    %c2_86 = arith.constant 2 : index
    %c16_87 = arith.constant 16 : index
    %c0_88 = arith.constant 0 : index
    %156 = vector.load %arg3[%c2_86, %c16_87, %c0_88] : memref<9x32x1024xf32, #tpu.memory_space<vmem>>, vector<1x8x1024xf32>
    %157 = vector.shape_cast %156 : vector<1x8x1024xf32> to vector<8x1024xf32>
    %158 = arith.mulf %155, %157 : vector<8x1024xf32>
    %159 = arith.addf %154, %158 : vector<8x1024xf32>
    %c1_i32_89 = arith.constant 1 : i32
    %160 = tpu.dynamic_rotate %84 by %c1_i32_89 dim 1 : vector<8x1024xf32>, i32 -> vector<8x1024xf32>
    %c3_90 = arith.constant 3 : index
    %c16_91 = arith.constant 16 : index
    %c0_92 = arith.constant 0 : index
    %161 = vector.load %arg3[%c3_90, %c16_91, %c0_92] : memref<9x32x1024xf32, #tpu.memory_space<vmem>>, vector<1x8x1024xf32>
    %162 = vector.shape_cast %161 : vector<1x8x1024xf32> to vector<8x1024xf32>
    %163 = arith.mulf %160, %162 : vector<8x1024xf32>
    %164 = arith.addf %159, %163 : vector<8x1024xf32>
    %c4_93 = arith.constant 4 : index
    %c16_94 = arith.constant 16 : index
    %c0_95 = arith.constant 0 : index
    %165 = vector.load %arg3[%c4_93, %c16_94, %c0_95] : memref<9x32x1024xf32, #tpu.memory_space<vmem>>, vector<1x8x1024xf32>
    %166 = vector.shape_cast %165 : vector<1x8x1024xf32> to vector<8x1024xf32>
    %167 = arith.mulf %84, %166 : vector<8x1024xf32>
    %168 = arith.addf %164, %167 : vector<8x1024xf32>
    %c1023_i32_96 = arith.constant 1023 : i32
    %169 = tpu.dynamic_rotate %84 by %c1023_i32_96 dim 1 : vector<8x1024xf32>, i32 -> vector<8x1024xf32>
    %c5_97 = arith.constant 5 : index
    %c16_98 = arith.constant 16 : index
    %c0_99 = arith.constant 0 : index
    %170 = vector.load %arg3[%c5_97, %c16_98, %c0_99] : memref<9x32x1024xf32, #tpu.memory_space<vmem>>, vector<1x8x1024xf32>
    %171 = vector.shape_cast %170 : vector<1x8x1024xf32> to vector<8x1024xf32>
    %172 = arith.mulf %169, %171 : vector<8x1024xf32>
    %173 = arith.addf %168, %172 : vector<8x1024xf32>
    %c993_i32_100 = arith.constant 993 : i32
    %174 = tpu.dynamic_rotate %84 by %c993_i32_100 dim 1 : vector<8x1024xf32>, i32 -> vector<8x1024xf32>
    %c6_101 = arith.constant 6 : index
    %c16_102 = arith.constant 16 : index
    %c0_103 = arith.constant 0 : index
    %175 = vector.load %arg3[%c6_101, %c16_102, %c0_103] : memref<9x32x1024xf32, #tpu.memory_space<vmem>>, vector<1x8x1024xf32>
    %176 = vector.shape_cast %175 : vector<1x8x1024xf32> to vector<8x1024xf32>
    %177 = arith.mulf %174, %176 : vector<8x1024xf32>
    %178 = arith.addf %173, %177 : vector<8x1024xf32>
    %c992_i32_104 = arith.constant 992 : i32
    %179 = tpu.dynamic_rotate %84 by %c992_i32_104 dim 1 : vector<8x1024xf32>, i32 -> vector<8x1024xf32>
    %c7_105 = arith.constant 7 : index
    %c16_106 = arith.constant 16 : index
    %c0_107 = arith.constant 0 : index
    %180 = vector.load %arg3[%c7_105, %c16_106, %c0_107] : memref<9x32x1024xf32, #tpu.memory_space<vmem>>, vector<1x8x1024xf32>
    %181 = vector.shape_cast %180 : vector<1x8x1024xf32> to vector<8x1024xf32>
    %182 = arith.mulf %179, %181 : vector<8x1024xf32>
    %183 = arith.addf %178, %182 : vector<8x1024xf32>
    %c991_i32_108 = arith.constant 991 : i32
    %184 = tpu.dynamic_rotate %84 by %c991_i32_108 dim 1 : vector<8x1024xf32>, i32 -> vector<8x1024xf32>
    %c8_109 = arith.constant 8 : index
    %c16_110 = arith.constant 16 : index
    %c0_111 = arith.constant 0 : index
    %185 = vector.load %arg3[%c8_109, %c16_110, %c0_111] : memref<9x32x1024xf32, #tpu.memory_space<vmem>>, vector<1x8x1024xf32>
    %186 = vector.shape_cast %185 : vector<1x8x1024xf32> to vector<8x1024xf32>
    %187 = arith.mulf %184, %186 : vector<8x1024xf32>
    %188 = arith.addf %183, %187 : vector<8x1024xf32>
    %189 = vector.extract_strided_slice %0 {offsets = [16, 0], sizes = [8, 1], strides = [1, 1]} : vector<56x1xf32> to vector<8x1xf32>
    %190 = vector.broadcast %189 : vector<8x1xf32> to vector<8x1024xf32>
    %191 = arith.addf %188, %190 : vector<8x1024xf32>
    %cst_112 = arith.constant 5.000000e-01 : f32
    %192 = vector.broadcast %cst_112 : f32 to vector<8x1024xf32>
    %193 = arith.mulf %192, %191 : vector<8x1024xf32>
    %cst_113 = arith.constant 4.471500e-02 : f32
    %194 = vector.broadcast %cst_113 : f32 to vector<8x1024xf32>
    %195 = arith.mulf %194, %191 : vector<8x1024xf32>
    %196 = arith.mulf %195, %191 : vector<8x1024xf32>
    %197 = arith.mulf %196, %191 : vector<8x1024xf32>
    %198 = arith.addf %191, %197 : vector<8x1024xf32>
    %cst_114 = arith.constant 0.797884583 : f32
    %199 = vector.broadcast %cst_114 : f32 to vector<8x1024xf32>
    %200 = arith.mulf %199, %198 : vector<8x1024xf32>
    %201 = math.tanh %200 : vector<8x1024xf32>
    %cst_115 = arith.constant 1.000000e+00 : f32
    %202 = vector.broadcast %cst_115 : f32 to vector<8x1024xf32>
    %203 = arith.addf %202, %201 : vector<8x1024xf32>
    %204 = arith.mulf %193, %203 : vector<8x1024xf32>
    %205 = tpu.concatenate %145, %204 in 0 : vector<8x1024xf32>, vector<8x1024xf32> -> vector<16x1024xf32>
    %cst_116 = arith.constant dense<0.000000e+00> : vector<8x1024xf32>
    %206 = tpu.matmul %3, %205, %cst_116 {dimension_numbers = #tpu.dot_dimension_numbers<[1], [0], [0], [1], [0, 0, 1, 1], [], []>} : vector<8x16xf32>, vector<16x1024xf32>, vector<8x1024xf32> -> vector<8x1024xf32>
    %207 = vector.extract_strided_slice %0 {offsets = [40, 0], sizes = [8, 1], strides = [1, 1]} : vector<56x1xf32> to vector<8x1xf32>
    %208 = vector.broadcast %207 : vector<8x1xf32> to vector<8x1024xf32>
    %209 = arith.addf %206, %208 : vector<8x1024xf32>
    %cst_117 = arith.constant 5.000000e-01 : f32
    %210 = vector.broadcast %cst_117 : f32 to vector<8x1024xf32>
    %211 = arith.mulf %210, %209 : vector<8x1024xf32>
    %cst_118 = arith.constant 4.471500e-02 : f32
    %212 = vector.broadcast %cst_118 : f32 to vector<8x1024xf32>
    %213 = arith.mulf %212, %209 : vector<8x1024xf32>
    %214 = arith.mulf %213, %209 : vector<8x1024xf32>
    %215 = arith.mulf %214, %209 : vector<8x1024xf32>
    %216 = arith.addf %209, %215 : vector<8x1024xf32>
    %cst_119 = arith.constant 0.797884583 : f32
    %217 = vector.broadcast %cst_119 : f32 to vector<8x1024xf32>
    %218 = arith.mulf %217, %216 : vector<8x1024xf32>
    %219 = math.tanh %218 : vector<8x1024xf32>
    %cst_120 = arith.constant 1.000000e+00 : f32
    %220 = vector.broadcast %cst_120 : f32 to vector<8x1024xf32>
    %221 = arith.addf %220, %219 : vector<8x1024xf32>
    %222 = arith.mulf %211, %221 : vector<8x1024xf32>
    %223 = arith.addf %222, %84 : vector<8x1024xf32>
    %c0_121 = arith.constant 0 : index
    %c0_122 = arith.constant 0 : index
    %c0_123 = arith.constant 0 : index
    %224 = vector.load %arg11[%c0_121, %c0_122, %c0_123] : memref<1x8x1024xf32, #tpu.memory_space<vmem>>, vector<1x8x1024xf32>
    %225 = vector.shape_cast %224 : vector<1x8x1024xf32> to vector<8x1024xf32>
    %226 = vector.shape_cast %223 : vector<8x1024xf32> to vector<1x8x1024xf32>
    tpu.vector_store %arg11[%c0_121, %c0_122, %c0_123], %226 {strides = array<i32>} : memref<1x8x1024xf32, #tpu.memory_space<vmem>>, vector<1x8x1024xf32>,
    %c33_i32_124 = arith.constant 33 : i32
    %227 = tpu.dynamic_rotate %223 by %c33_i32_124 dim 1 : vector<8x1024xf32>, i32 -> vector<8x1024xf32>
    %c0_125 = arith.constant 0 : index
    %c24 = arith.constant 24 : index
    %c0_126 = arith.constant 0 : index
    %228 = vector.load %arg3[%c0_125, %c24, %c0_126] : memref<9x32x1024xf32, #tpu.memory_space<vmem>>, vector<1x8x1024xf32>
    %229 = vector.shape_cast %228 : vector<1x8x1024xf32> to vector<8x1024xf32>
    %230 = arith.mulf %227, %229 : vector<8x1024xf32>
    %c32_i32_127 = arith.constant 32 : i32
    %231 = tpu.dynamic_rotate %223 by %c32_i32_127 dim 1 : vector<8x1024xf32>, i32 -> vector<8x1024xf32>
    %c1_128 = arith.constant 1 : index
    %c24_129 = arith.constant 24 : index
    %c0_130 = arith.constant 0 : index
    %232 = vector.load %arg3[%c1_128, %c24_129, %c0_130] : memref<9x32x1024xf32, #tpu.memory_space<vmem>>, vector<1x8x1024xf32>
    %233 = vector.shape_cast %232 : vector<1x8x1024xf32> to vector<8x1024xf32>
    %234 = arith.mulf %231, %233 : vector<8x1024xf32>
    %235 = arith.addf %230, %234 : vector<8x1024xf32>
    %c31_i32_131 = arith.constant 31 : i32
    %236 = tpu.dynamic_rotate %223 by %c31_i32_131 dim 1 : vector<8x1024xf32>, i32 -> vector<8x1024xf32>
    %c2_132 = arith.constant 2 : index
    %c24_133 = arith.constant 24 : index
    %c0_134 = arith.constant 0 : index
    %237 = vector.load %arg3[%c2_132, %c24_133, %c0_134] : memref<9x32x1024xf32, #tpu.memory_space<vmem>>, vector<1x8x1024xf32>
    %238 = vector.shape_cast %237 : vector<1x8x1024xf32> to vector<8x1024xf32>
    %239 = arith.mulf %236, %238 : vector<8x1024xf32>
    %240 = arith.addf %235, %239 : vector<8x1024xf32>
    %c1_i32_135 = arith.constant 1 : i32
    %241 = tpu.dynamic_rotate %223 by %c1_i32_135 dim 1 : vector<8x1024xf32>, i32 -> vector<8x1024xf32>
    %c3_136 = arith.constant 3 : index
    %c24_137 = arith.constant 24 : index
    %c0_138 = arith.constant 0 : index
    %242 = vector.load %arg3[%c3_136, %c24_137, %c0_138] : memref<9x32x1024xf32, #tpu.memory_space<vmem>>, vector<1x8x1024xf32>
    %243 = vector.shape_cast %242 : vector<1x8x1024xf32> to vector<8x1024xf32>
    %244 = arith.mulf %241, %243 : vector<8x1024xf32>
    %245 = arith.addf %240, %244 : vector<8x1024xf32>
    %c4_139 = arith.constant 4 : index
    %c24_140 = arith.constant 24 : index
    %c0_141 = arith.constant 0 : index
    %246 = vector.load %arg3[%c4_139, %c24_140, %c0_141] : memref<9x32x1024xf32, #tpu.memory_space<vmem>>, vector<1x8x1024xf32>
    %247 = vector.shape_cast %246 : vector<1x8x1024xf32> to vector<8x1024xf32>
    %248 = arith.mulf %223, %247 : vector<8x1024xf32>
    %249 = arith.addf %245, %248 : vector<8x1024xf32>
    %c1023_i32_142 = arith.constant 1023 : i32
    %250 = tpu.dynamic_rotate %223 by %c1023_i32_142 dim 1 : vector<8x1024xf32>, i32 -> vector<8x1024xf32>
    %c5_143 = arith.constant 5 : index
    %c24_144 = arith.constant 24 : index
    %c0_145 = arith.constant 0 : index
    %251 = vector.load %arg3[%c5_143, %c24_144, %c0_145] : memref<9x32x1024xf32, #tpu.memory_space<vmem>>, vector<1x8x1024xf32>
    %252 = vector.shape_cast %251 : vector<1x8x1024xf32> to vector<8x1024xf32>
    %253 = arith.mulf %250, %252 : vector<8x1024xf32>
    %254 = arith.addf %249, %253 : vector<8x1024xf32>
    %c993_i32_146 = arith.constant 993 : i32
    %255 = tpu.dynamic_rotate %223 by %c993_i32_146 dim 1 : vector<8x1024xf32>, i32 -> vector<8x1024xf32>
    %c6_147 = arith.constant 6 : index
    %c24_148 = arith.constant 24 : index
    %c0_149 = arith.constant 0 : index
    %256 = vector.load %arg3[%c6_147, %c24_148, %c0_149] : memref<9x32x1024xf32, #tpu.memory_space<vmem>>, vector<1x8x1024xf32>
    %257 = vector.shape_cast %256 : vector<1x8x1024xf32> to vector<8x1024xf32>
    %258 = arith.mulf %255, %257 : vector<8x1024xf32>
    %259 = arith.addf %254, %258 : vector<8x1024xf32>
    %c992_i32_150 = arith.constant 992 : i32
    %260 = tpu.dynamic_rotate %223 by %c992_i32_150 dim 1 : vector<8x1024xf32>, i32 -> vector<8x1024xf32>
    %c7_151 = arith.constant 7 : index
    %c24_152 = arith.constant 24 : index
    %c0_153 = arith.constant 0 : index
    %261 = vector.load %arg3[%c7_151, %c24_152, %c0_153] : memref<9x32x1024xf32, #tpu.memory_space<vmem>>, vector<1x8x1024xf32>
    %262 = vector.shape_cast %261 : vector<1x8x1024xf32> to vector<8x1024xf32>
    %263 = arith.mulf %260, %262 : vector<8x1024xf32>
    %264 = arith.addf %259, %263 : vector<8x1024xf32>
    %c991_i32_154 = arith.constant 991 : i32
    %265 = tpu.dynamic_rotate %223 by %c991_i32_154 dim 1 : vector<8x1024xf32>, i32 -> vector<8x1024xf32>
    %c8_155 = arith.constant 8 : index
    %c24_156 = arith.constant 24 : index
    %c0_157 = arith.constant 0 : index
    %266 = vector.load %arg3[%c8_155, %c24_156, %c0_157] : memref<9x32x1024xf32, #tpu.memory_space<vmem>>, vector<1x8x1024xf32>
    %267 = vector.shape_cast %266 : vector<1x8x1024xf32> to vector<8x1024xf32>
    %268 = arith.mulf %265, %267 : vector<8x1024xf32>
    %269 = arith.addf %264, %268 : vector<8x1024xf32>
    %270 = vector.extract_strided_slice %0 {offsets = [24, 0], sizes = [8, 1], strides = [1, 1]} : vector<56x1xf32> to vector<8x1xf32>
    %271 = vector.broadcast %270 : vector<8x1xf32> to vector<8x1024xf32>
    %272 = arith.addf %269, %271 : vector<8x1024xf32>
    %cst_158 = arith.constant 5.000000e-01 : f32
    %273 = vector.broadcast %cst_158 : f32 to vector<8x1024xf32>
    %274 = arith.mulf %273, %272 : vector<8x1024xf32>
    %cst_159 = arith.constant 4.471500e-02 : f32
    %275 = vector.broadcast %cst_159 : f32 to vector<8x1024xf32>
    %276 = arith.mulf %275, %272 : vector<8x1024xf32>
    %277 = arith.mulf %276, %272 : vector<8x1024xf32>
    %278 = arith.mulf %277, %272 : vector<8x1024xf32>
    %279 = arith.addf %272, %278 : vector<8x1024xf32>
    %cst_160 = arith.constant 0.797884583 : f32
    %280 = vector.broadcast %cst_160 : f32 to vector<8x1024xf32>
    %281 = arith.mulf %280, %279 : vector<8x1024xf32>
    %282 = math.tanh %281 : vector<8x1024xf32>
    %cst_161 = arith.constant 1.000000e+00 : f32
    %283 = vector.broadcast %cst_161 : f32 to vector<8x1024xf32>
    %284 = arith.addf %283, %282 : vector<8x1024xf32>
    %285 = arith.mulf %274, %284 : vector<8x1024xf32>
    %cst_162 = arith.constant dense<0.000000e+00> : vector<1x1024xf32>
    %286 = tpu.matmul %4, %285, %cst_162 {dimension_numbers = #tpu.dot_dimension_numbers<[1], [0], [0], [1], [0, 0, 1, 1], [], []>} : vector<1x8xf32>, vector<8x1024xf32>, vector<1x1024xf32> -> vector<1x1024xf32>
    %287 = vector.extract_strided_slice %0 {offsets = [48, 0], sizes = [1, 1], strides = [1, 1]} : vector<56x1xf32> to vector<1x1xf32>
    %288 = vector.broadcast %287 : vector<1x1xf32> to vector<1x1024xf32>
    %289 = arith.addf %286, %288 : vector<1x1024xf32>
    %c0_163 = arith.constant 0 : index
    %c0_164 = arith.constant 0 : index
    %290 = vector.load %arg7[%c0_163, %c0_164] : memref<32x1024xf32, #tpu.memory_space<vmem>>, vector<32x1024xf32>
    %291 = vector.broadcast %289 : vector<1x1024xf32> to vector<32x1024xf32>
    %292 = arith.mulf %290, %291 : vector<32x1024xf32>
    %c0_165 = arith.constant 0 : index
    %c0_166 = arith.constant 0 : index
    %293 = vector.load %arg8[%c0_165, %c0_166] : memref<1024x384xf32, #tpu.memory_space<vmem>>, vector<1024x384xf32>
    %cst_167 = arith.constant dense<0.000000e+00> : vector<32x384xf32>
    %294 = tpu.matmul %292, %293, %cst_167 {dimension_numbers = #tpu.dot_dimension_numbers<[1], [0], [0], [1], [0, 0, 1, 1], [], []>} : vector<32x1024xf32>, vector<1024x384xf32>, vector<32x384xf32> -> vector<32x384xf32>
    %c0_168 = arith.constant 0 : index
    %c0_169 = arith.constant 0 : index
    %295 = vector.load %arg9[%c0_168, %c0_169] : memref<384x32xf32, #tpu.memory_space<vmem>>, vector<384x32xf32>
    %cst_170 = arith.constant dense<0.000000e+00> : vector<384x384xf32>
    %296 = tpu.matmul %295, %294, %cst_170 {dimension_numbers = #tpu.dot_dimension_numbers<[1], [0], [0], [1], [0, 0, 1, 1], [], []>} : vector<384x32xf32>, vector<32x384xf32>, vector<384x384xf32> -> vector<384x384xf32>
    %c0_171 = arith.constant 0 : index
    %c0_172 = arith.constant 0 : index
    %c0_173 = arith.constant 0 : index
    %297 = vector.load %arg10[%c0_171, %c0_172, %c0_173] : memref<1x384x384xf32, #tpu.memory_space<vmem>>, vector<1x384x384xf32>
    %298 = vector.shape_cast %297 : vector<1x384x384xf32> to vector<384x384xf32>
    %299 = vector.shape_cast %296 : vector<384x384xf32> to vector<1x384x384xf32>
    tpu.vector_store %arg10[%c0_171, %c0_172, %c0_173], %299 {strides = array<i32>} : memref<1x384x384xf32, #tpu.memory_space<vmem>>, vector<1x384x384xf32>,
    return
  }
  func.func @transform_0(%arg0: i32) -> (i32, i32, i32) {
    %c0_i32 = arith.constant 0 : i32
    %c0_i32_0 = arith.constant 0 : i32
    %c0_i32_1 = arith.constant 0 : i32
    return %arg0, %c0_i32, %c0_i32_0 : i32, i32, i32
  }
  func.func @transform_1(%arg0: i32) -> (i32, i32, i32) {
    %c0_i32 = arith.constant 0 : i32
    %c0_i32_0 = arith.constant 0 : i32
    %c0_i32_1 = arith.constant 0 : i32
    return %arg0, %c0_i32, %c0_i32_0 : i32, i32, i32
  }
  func.func @transform_2(%arg0: i32) -> (i32, i32, i32) {
    %c0_i32 = arith.constant 0 : i32
    %c0_i32_0 = arith.constant 0 : i32
    %c0_i32_1 = arith.constant 0 : i32
    %c0_i32_2 = arith.constant 0 : i32
    return %c0_i32, %c0_i32_0, %c0_i32_1 : i32, i32, i32
  }
  func.func @transform_3(%arg0: i32) -> (i32, i32) {
    %c0_i32 = arith.constant 0 : i32
    %c0_i32_0 = arith.constant 0 : i32
    %c0_i32_1 = arith.constant 0 : i32
    return %c0_i32, %c0_i32_0 : i32, i32
  }
  func.func @transform_4(%arg0: i32) -> (i32, i32) {
    %c0_i32 = arith.constant 0 : i32
    %c0_i32_0 = arith.constant 0 : i32
    %c0_i32_1 = arith.constant 0 : i32
    return %c0_i32, %c0_i32_0 : i32, i32
  }
  func.func @transform_5(%arg0: i32) -> (i32, i32) {
    %c0_i32 = arith.constant 0 : i32
    %c0_i32_0 = arith.constant 0 : i32
    %c0_i32_1 = arith.constant 0 : i32
    return %c0_i32, %c0_i32_0 : i32, i32
  }
  func.func @transform_6(%arg0: i32) -> (i32, i32) {
    %c0_i32 = arith.constant 0 : i32
    %c0_i32_0 = arith.constant 0 : i32
    %c0_i32_1 = arith.constant 0 : i32
    return %c0_i32, %c0_i32_0 : i32, i32
  }
  func.func @transform_7(%arg0: i32) -> (i32, i32) {
    %c0_i32 = arith.constant 0 : i32
    %c0_i32_0 = arith.constant 0 : i32
    %c0_i32_1 = arith.constant 0 : i32
    return %c0_i32, %c0_i32_0 : i32, i32
  }
  func.func @transform_8(%arg0: i32) -> (i32, i32) {
    %c0_i32 = arith.constant 0 : i32
    %c0_i32_0 = arith.constant 0 : i32
    %c0_i32_1 = arith.constant 0 : i32
    return %c0_i32, %c0_i32_0 : i32, i32
  }
  func.func @transform_9(%arg0: i32) -> (i32, i32, i32) {
    %c0_i32 = arith.constant 0 : i32
    %c0_i32_0 = arith.constant 0 : i32
    %c0_i32_1 = arith.constant 0 : i32
    return %arg0, %c0_i32, %c0_i32_0 : i32, i32, i32
  }
  func.func @transform_10(%arg0: i32) -> (i32, i32, i32) {
    %c0_i32 = arith.constant 0 : i32
    %c0_i32_0 = arith.constant 0 : i32
    %c0_i32_1 = arith.constant 0 : i32
    return %arg0, %c0_i32, %c0_i32_0 : i32, i32, i32
  }
}

</mosaic_0001>

<llo_original>
// kernel: mcm_forward.1
$region0: #{mcm_forward.1}
  #allocation0 [shape = 'u32[]', space=smem, size = 0x4, offset = 0x4, fixed_abs, tag = 'smem constant byte address 0x4 - core index']
  #allocation1 [shape = 'u32[144,128]{1,0:T(1,128)}', space=vmem, size = 0x12000, scoped, tag = 'internal scratch']
  %s0 = inlined_call_operand.vmem [shape: f32[2,8,1024], index: 0, kind: input, shape index: {}]
  %s1 = inlined_call_operand.vmem [shape: f32[2,8,256], index: 1, kind: input, shape index: {}]
  %s2 = inlined_call_operand.vmem [shape: f32[9,32,1024], index: 2, kind: input, shape index: {}]
  %s3 = inlined_call_operand.vmem [shape: f32[56,1], index: 3, kind: input, shape index: {}]
  %s4 = inlined_call_operand.vmem [shape: f32[24,16], index: 4, kind: input, shape index: {}]
  %s5 = inlined_call_operand.hbm [shape: f32[256,1024], index: 5, kind: input, shape index: {}]
  %s6 = inlined_call_operand.vmem [shape: f32[32,1024], index: 6, kind: input, shape index: {}]
  %s7 = inlined_call_operand.vmem [shape: f32[1024,384], index: 7, kind: input, shape index: {}]
  %s8 = inlined_call_operand.vmem [shape: f32[384,32], index: 8, kind: input, shape index: {}]
  %s9 = inlined_call_operand.hbm [shape: f32[2,384,384], index: 9, kind: output, shape index: {0}]
  %s10 = inlined_call_operand.vmem [shape: f32[2,8,1024], index: 10, kind: output, shape index: {1}]
  %11 = xla_tuple %s9, %s10
  %s12 = sld [smem:[#allocation0]]
  $region81: #{mcm_forward.1} parent=0
    _
  %s14 = ssub.s32 1, %s12
  %s15 = scalar_select 0, %s14, %s12
  $region1: #{mcm_forward.1} parent=0
    #allocation2 [shape = 'u8[1048576]{0}', space=vmem, size = 0x100000, scoped, tag = 'input window, operand 5, single buffered']
    #allocation3 [shape = 's32[2]{0}', space=sflag, size = 0x8, scoped, tag = 'scoped memory for mcm_forward.1']
    #allocation4 [shape = 's32[2]{0}', space=sflag, size = 0x8, scoped, tag = 'scoped memory for mcm_forward.1']
    #allocation5 [shape = 'u8[1179648]{0}', space=vmem, size = 0x120000, scoped, tag = 'output window, operand 0']
    %16 = vsyncpa [#allocation3], 0
    %17 = vsyncpa [#allocation4], 0
    %s18 = scalar_lea.sflag [#allocation4], 1
    %19 = vsyncpa %s18, 0
    loop: start=0, step=1, limit=4
    $region2: #{mcm_forward.1} parent=1 // loop_pre_header
      _
    $region3: #{mcm_forward.1} parent=1 // loop_header
      %s21 = sphi 0, %s25
      %p22 = scmp.ge.s32.totalorder %s21, 4
      %s31 = sphi 0, %s33
      %s34 = sphi 0, %s31
      %s35 = sphi 0, %s34
      %s51 = sphi 0, %s35
      %s57 = sphi 0, %s59
      %s60 = sphi 0, %s57
      %s61 = sphi 0, %s60
      %s77 = sphi 0, %s61
      %s81 = sphi 0, %s81
      %s83 = sphi 0, %s81
      %s84 = sphi 0, %s83
      %s98 = sphi 0, %s84
      %s102 = sphi 0, %s102
      %s104 = sphi 0, %s102
      %s105 = sphi 0, %s104
      %s119 = sphi 0, %s105
      %s123 = sphi 0, %s123
      %s125 = sphi 0, %s123
      %s126 = sphi 0, %s125
      %s140 = sphi 0, %s126
      %s144 = sphi 0, %s144
      %s146 = sphi 0, %s144
      %s147 = sphi 0, %s146
      %s161 = sphi 0, %s147
      %s165 = sphi 0, %s165
      %s167 = sphi 0, %s165
      %s168 = sphi 0, %s167
      %s182 = sphi 0, %s168
      %s186 = sphi 0, %s186
      %s188 = sphi 0, %s186
      %s189 = sphi 0, %s188
      %s203 = sphi 0, %s189
      %s207 = sphi 0, %s207
      %s209 = sphi 0, %s207
      %s210 = sphi 0, %s209
      %s224 = sphi 0, %s210
      %s230 = sphi 0, %s232
      %s233 = sphi 0, %s230
      %s234 = sphi 0, %s233
      %s250 = sphi 0, %s234
      %s256 = sphi 0, %s258
      %s259 = sphi 0, %s256
      %s260 = sphi 0, %s259
      %s276 = sphi 0, %s260
    $region4: #{mcm_forward.1} parent=1 // loop_header_branch
      %24 = sbr.rel (%p22) target = $region8
    $region5: #{mcm_forward.1} parent=1 // loop_body
      %s26 = ssub.s32 %s21, 1
      %s27 = ssub.s32 %s21, 2
      %s28 = sadd.s32 %s21, 1
      %s29 = ssub.s32 %s21, %s28
      %p30 = scmp.eq.s32.totalorder %s29, 0
      %s32 = sadd.s32 %s31, 1
      %s33 = scalar_select %p30, %s31, %s32
      %p36 = pneg %p30
      %p37 = scmp.eq.s32.totalorder %s21, 1
      %p38 = por %p36, %p37
      %p39 = scmp.ne.s32.totalorder %s31, %s34
      %p40 = scmp.eq.s32.totalorder %s21, 0
      %p41 = por %p39, %p40
      %p42 = scmp.ne.s32.totalorder %s31, %s34
      %p43 = scmp.eq.s32.totalorder %s26, 1
      %p44 = por %p42, %p43
      %p45 = scmp.ne.s32.totalorder %s34, %s35
      %p46 = scmp.eq.s32.totalorder %s26, 0
      %p47 = por %p45, %p46
      %p48 = scmp.ne.s32.totalorder %s34, %s35
      %p49 = scmp.eq.s32.totalorder %s27, 1
      %p50 = por %p48, %p49
      %p52 = scmp.ne.s32.totalorder %s35, %s51
      %p53 = scmp.eq.s32.totalorder %s27, 0
      %p54 = por %p52, %p53
      %s55 = ssub.s32 %s21, %s28
      %p56 = scmp.eq.s32.totalorder %s55, 0
      %s58 = sadd.s32 %s57, 1
      %s59 = scalar_select %p56, %s57, %s58
      %p62 = pneg %p56
      %p63 = scmp.eq.s32.totalorder %s21, 1
      %p64 = por %p62, %p63
      %p65 = scmp.ne.s32.totalorder %s57, %s60
      %p66 = scmp.eq.s32.totalorder %s21, 0
      %p67 = por %p65, %p66
      %p68 = scmp.ne.s32.totalorder %s57, %s60
      %p69 = scmp.eq.s32.totalorder %s26, 1
      %p70 = por %p68, %p69
      %p71 = scmp.ne.s32.totalorder %s60, %s61
      %p72 = scmp.eq.s32.totalorder %s26, 0
      %p73 = por %p71, %p72
      %p74 = scmp.ne.s32.totalorder %s60, %s61
      %p75 = scmp.eq.s32.totalorder %s27, 1
      %p76 = por %p74, %p75
      %p78 = scmp.ne.s32.totalorder %s61, %s77
      %p79 = scmp.eq.s32.totalorder %s27, 0
      %p80 = por %p78, %p79
      %s82 = sadd.s32 %s81, 1
      %p85 = scmp.eq.s32.totalorder %s21, 1
      %p86 = scmp.ne.s32.totalorder %s81, %s83
      %p87 = scmp.eq.s32.totalorder %s21, 0
      %p88 = por %p86, %p87
      %p89 = scmp.ne.s32.totalorder %s81, %s83
      %p90 = scmp.eq.s32.totalorder %s26, 1
      %p91 = por %p89, %p90
      %p92 = scmp.ne.s32.totalorder %s83, %s84
      %p93 = scmp.eq.s32.totalorder %s26, 0
      %p94 = por %p92, %p93
      %p95 = scmp.ne.s32.totalorder %s83, %s84
      %p96 = scmp.eq.s32.totalorder %s27, 1
      %p97 = por %p95, %p96
      %p99 = scmp.ne.s32.totalorder %s84, %s98
      %p100 = scmp.eq.s32.totalorder %s27, 0
      %p101 = por %p99, %p100
      %s103 = sadd.s32 %s102, 1
      %p106 = scmp.eq.s32.totalorder %s21, 1
      %p107 = scmp.ne.s32.totalorder %s102, %s104
      %p108 = scmp.eq.s32.totalorder %s21, 0
      %p109 = por %p107, %p108
      %p110 = scmp.ne.s32.totalorder %s102, %s104
      %p111 = scmp.eq.s32.totalorder %s26, 1
      %p112 = por %p110, %p111
      %p113 = scmp.ne.s32.totalorder %s104, %s105
      %p114 = scmp.eq.s32.totalorder %s26, 0
      %p115 = por %p113, %p114
      %p116 = scmp.ne.s32.totalorder %s104, %s105
      %p117 = scmp.eq.s32.totalorder %s27, 1
      %p118 = por %p116, %p117
      %p120 = scmp.ne.s32.totalorder %s105, %s119
      %p121 = scmp.eq.s32.totalorder %s27, 0
      %p122 = por %p120, %p121
      %s124 = sadd.s32 %s123, 1
      %p127 = scmp.eq.s32.totalorder %s21, 1
      %p128 = scmp.ne.s32.totalorder %s123, %s125
      %p129 = scmp.eq.s32.totalorder %s21, 0
      %p130 = por %p128, %p129
      %p131 = scmp.ne.s32.totalorder %s123, %s125
      %p132 = scmp.eq.s32.totalorder %s26, 1
      %p133 = por %p131, %p132
      %p134 = scmp.ne.s32.totalorder %s125, %s126
      %p135 = scmp.eq.s32.totalorder %s26, 0
      %p136 = por %p134, %p135
      %p137 = scmp.ne.s32.totalorder %s125, %s126
      %p138 = scmp.eq.s32.totalorder %s27, 1
      %p139 = por %p137, %p138
      %p141 = scmp.ne.s32.totalorder %s126, %s140
      %p142 = scmp.eq.s32.totalorder %s27, 0
      %p143 = por %p141, %p142
      %s145 = sadd.s32 %s144, 1
      %p148 = scmp.eq.s32.totalorder %s21, 1
      %p149 = scmp.ne.s32.totalorder %s144, %s146
      %p150 = scmp.eq.s32.totalorder %s21, 0
      %p151 = por %p149, %p150
      %p152 = scmp.ne.s32.totalorder %s144, %s146
      %p153 = scmp.eq.s32.totalorder %s26, 1
      %p154 = por %p152, %p153
      %p155 = scmp.ne.s32.totalorder %s146, %s147
      %p156 = scmp.eq.s32.totalorder %s26, 0
      %p157 = por %p155, %p156
      %p158 = scmp.ne.s32.totalorder %s146, %s147
      %p159 = scmp.eq.s32.totalorder %s27, 1
      %p160 = por %p158, %p159
      %p162 = scmp.ne.s32.totalorder %s147, %s161
      %p163 = scmp.eq.s32.totalorder %s27, 0
      %p164 = por %p162, %p163
      %s166 = sadd.s32 %s165, 1
      %p169 = scmp.eq.s32.totalorder %s21, 1
      %p170 = scmp.ne.s32.totalorder %s165, %s167
      %p171 = scmp.eq.s32.totalorder %s21, 0
      %p172 = por %p170, %p171
      %p173 = scmp.ne.s32.totalorder %s165, %s167
      %p174 = scmp.eq.s32.totalorder %s26, 1
      %p175 = por %p173, %p174
      %p176 = scmp.ne.s32.totalorder %s167, %s168
      %p177 = scmp.eq.s32.totalorder %s26, 0
      %p178 = por %p176, %p177
      %p179 = scmp.ne.s32.totalorder %s167, %s168
      %p180 = scmp.eq.s32.totalorder %s27, 1
      %p181 = por %p179, %p180
      %p183 = scmp.ne.s32.totalorder %s168, %s182
      %p184 = scmp.eq.s32.totalorder %s27, 0
      %p185 = por %p183, %p184
      %s187 = sadd.s32 %s186, 1
      %p190 = scmp.eq.s32.totalorder %s21, 1
      %p191 = scmp.ne.s32.totalorder %s186, %s188
      %p192 = scmp.eq.s32.totalorder %s21, 0
      %p193 = por %p191, %p192
      %p194 = scmp.ne.s32.totalorder %s186, %s188
      %p195 = scmp.eq.s32.totalorder %s26, 1
      %p196 = por %p194, %p195
      %p197 = scmp.ne.s32.totalorder %s188, %s189
      %p198 = scmp.eq.s32.totalorder %s26, 0
      %p199 = por %p197, %p198
      %p200 = scmp.ne.s32.totalorder %s188, %s189
      %p201 = scmp.eq.s32.totalorder %s27, 1
      %p202 = por %p200, %p201
      %p204 = scmp.ne.s32.totalorder %s189, %s203
      %p205 = scmp.eq.s32.totalorder %s27, 0
      %p206 = por %p204, %p205
      %s208 = sadd.s32 %s207, 1
      %p211 = scmp.eq.s32.totalorder %s21, 1
      %p212 = scmp.ne.s32.totalorder %s207, %s209
      %p213 = scmp.eq.s32.totalorder %s21, 0
      %p214 = por %p212, %p213
      %p215 = scmp.ne.s32.totalorder %s207, %s209
      %p216 = scmp.eq.s32.totalorder %s26, 1
      %p217 = por %p215, %p216
      %p218 = scmp.ne.s32.totalorder %s209, %s210
      %p219 = scmp.eq.s32.totalorder %s26, 0
      %p220 = por %p218, %p219
      %p221 = scmp.ne.s32.totalorder %s209, %s210
      %p222 = scmp.eq.s32.totalorder %s27, 1
      %p223 = por %p221, %p222
      %p225 = scmp.ne.s32.totalorder %s210, %s224
      %p226 = scmp.eq.s32.totalorder %s27, 0
      %p227 = por %p225, %p226
      %s228 = ssub.s32 %s21, %s28
      %p229 = scmp.eq.s32.totalorder %s228, 0
      %s231 = sadd.s32 %s230, 1
      %s232 = scalar_select %p229, %s230, %s231
      %p235 = pneg %p229
      %p236 = scmp.eq.s32.totalorder %s21, 1
      %p237 = por %p235, %p236
      %p238 = scmp.ne.s32.totalorder %s230, %s233
      %p239 = scmp.eq.s32.totalorder %s21, 0
      %p240 = por %p238, %p239
      %p241 = scmp.ne.s32.totalorder %s230, %s233
      %p242 = scmp.eq.s32.totalorder %s26, 1
      %p243 = por %p241, %p242
      %p244 = scmp.ne.s32.totalorder %s233, %s234
      %p245 = scmp.eq.s32.totalorder %s26, 0
      %p246 = por %p244, %p245
      %p247 = scmp.ne.s32.totalorder %s233, %s234
      %p248 = scmp.eq.s32.totalorder %s27, 1
      %p249 = por %p247, %p248
      %p251 = scmp.ne.s32.totalorder %s234, %s250
      %p252 = scmp.eq.s32.totalorder %s27, 0
      %p253 = por %p251, %p252
      %s254 = ssub.s32 %s21, %s28
      %p255 = scmp.eq.s32.totalorder %s254, 0
      %s257 = sadd.s32 %s256, 1
      %s258 = scalar_select %p255, %s256, %s257
      %p261 = pneg %p255
      %p262 = scmp.eq.s32.totalorder %s21, 1
      %p263 = por %p261, %p262
      %p264 = scmp.ne.s32.totalorder %s256, %s259
      %p265 = scmp.eq.s32.totalorder %s21, 0
      %p266 = por %p264, %p265
      %p267 = scmp.ne.s32.totalorder %s256, %s259
      %p268 = scmp.eq.s32.totalorder %s26, 1
      %p269 = por %p267, %p268
      %p270 = scmp.ne.s32.totalorder %s259, %s260
      %p271 = scmp.eq.s32.totalorder %s26, 0
      %p272 = por %p270, %p271
      %p273 = scmp.ne.s32.totalorder %s259, %s260
      %p274 = scmp.eq.s32.totalorder %s27, 1
      %p275 = por %p273, %p274
      %p277 = scmp.ne.s32.totalorder %s260, %s276
      %p278 = scmp.eq.s32.totalorder %s27, 0
      %p279 = por %p277, %p278
      %p280 = scmp.le.s32.totalorder 1, %s21
      %p281 = scmp.lt.s32.totalorder %s21, 3
      %p282 = pnand %p280, %p281
      %p283 = pneg %p282
      // Predicated region
      $region9: #{mcm_forward.1} parent=5 // pred_check
        _
      $region10: #{mcm_forward.1} parent=5 // pred_check_branch
        %285 = sbr.rel (%p282) target = $region12
      $region11: #{mcm_forward.1} parent=5 // pred_region
        %s286 = ssub.s32 %s21, 1
        // Predicated region
        $region13: #{mcm_forward.1} parent=11 // pred_check
          %p287 = pneg %p94
        $region14: #{mcm_forward.1} parent=11 // pred_check_branch
          %289 = sbr.rel (%p287) target = $region16
        $region15: #{mcm_forward.1} parent=11 // pred_region
          _
        $region16: #{mcm_forward.1} parent=11 // pred_fallthru
          _
        // Predicated region
        $region17: #{mcm_forward.1} parent=11 // pred_check
          %p290 = pneg %p115
        $region18: #{mcm_forward.1} parent=11 // pred_check_branch
          %292 = sbr.rel (%p290) target = $region20
        $region19: #{mcm_forward.1} parent=11 // pred_region
          _
        $region20: #{mcm_forward.1} parent=11 // pred_fallthru
          _
        // Predicated region
        $region21: #{mcm_forward.1} parent=11 // pred_check
          %p293 = pneg %p136
        $region22: #{mcm_forward.1} parent=11 // pred_check_branch
          %295 = sbr.rel (%p293) target = $region24
        $region23: #{mcm_forward.1} parent=11 // pred_region
          _
        $region24: #{mcm_forward.1} parent=11 // pred_fallthru
          _
        // Predicated region
        $region25: #{mcm_forward.1} parent=11 // pred_check
          %p296 = pneg %p157
        $region26: #{mcm_forward.1} parent=11 // pred_check_branch
          %298 = sbr.rel (%p296) target = $region28
        $region27: #{mcm_forward.1} parent=11 // pred_region
          %s300 = ssub.s32 32768, 32768
          %301 = vsyncadd [#allocation3], %s300
          %s302 = sshll.u32 [#allocation2], 4
          %s303 = int_to_ptr.vmem [resolvable:$true] %s302
          %308 = dma.hbm_to_vmem [thread:$0]  %s5, 32768, %s303, [#allocation3], 1024, 1024, 64
        $region28: #{mcm_forward.1} parent=11 // pred_fallthru
          _
        // Predicated region
        $region29: #{mcm_forward.1} parent=11 // pred_check
          %p309 = pneg %p178
        $region30: #{mcm_forward.1} parent=11 // pred_check_branch
          %311 = sbr.rel (%p309) target = $region32
        $region31: #{mcm_forward.1} parent=11 // pred_region
          _
        $region32: #{mcm_forward.1} parent=11 // pred_fallthru
          _
        // Predicated region
        $region33: #{mcm_forward.1} parent=11 // pred_check
          %p312 = pneg %p199
        $region34: #{mcm_forward.1} parent=11 // pred_check_branch
          %314 = sbr.rel (%p312) target = $region36
        $region35: #{mcm_forward.1} parent=11 // pred_region
          _
        $region36: #{mcm_forward.1} parent=11 // pred_fallthru
          _
        // Predicated region
        $region37: #{mcm_forward.1} parent=11 // pred_check
          %p315 = pneg %p220
        $region38: #{mcm_forward.1} parent=11 // pred_check_branch
          %317 = sbr.rel (%p315) target = $region40
        $region39: #{mcm_forward.1} parent=11 // pred_region
          _
        $region40: #{mcm_forward.1} parent=11 // pred_fallthru
          _
      $region12: #{mcm_forward.1} parent=5 // pred_fallthru
        _
      %p318 = scmp.lt.s32.totalorder %s21, 2
      // Predicated region
      $region41: #{mcm_forward.1} parent=5 // pred_check
        %p319 = pneg %p318
      $region42: #{mcm_forward.1} parent=5 // pred_check_branch
        %321 = sbr.rel (%p319) target = $region44
      $region43: #{mcm_forward.1} parent=5 // pred_region
        // Predicated region
        $region45: #{mcm_forward.1} parent=43 // pred_check
          %p322 = pneg %p41
        $region46: #{mcm_forward.1} parent=43 // pred_check_branch
          %324 = sbr.rel (%p322) target = $region48
        $region47: #{mcm_forward.1} parent=43 // pred_region
          %p325 = scmp.lt.s32.totalorder %s21, 1
          %s326 = scalar_select %p325, %s21, 1
          %s327 = smul.addr %s326, 8
          %s328 = smul.addr %s327, 8
          %s329 = scalar_lea.vmem %s0, %s328
        $region48: #{mcm_forward.1} parent=43 // pred_fallthru
          _
        // Predicated region
        $region49: #{mcm_forward.1} parent=43 // pred_check
          %p330 = pneg %p67
        $region50: #{mcm_forward.1} parent=43 // pred_check_branch
          %332 = sbr.rel (%p330) target = $region52
        $region51: #{mcm_forward.1} parent=43 // pred_region
          %p333 = scmp.lt.s32.totalorder %s21, 1
          %s334 = scalar_select %p333, %s21, 1
          %s335 = smul.addr %s334, 2
          %s336 = smul.addr %s335, 8
          %s337 = scalar_lea.vmem %s1, %s336
        $region52: #{mcm_forward.1} parent=43 // pred_fallthru
          _
      $region44: #{mcm_forward.1} parent=5 // pred_fallthru
        _
      %p338 = scmp.le.s32.totalorder 1, %s21
      %p339 = scmp.lt.s32.totalorder %s21, 3
      %p340 = pnand %p338, %p339
      %p341 = pneg %p340
      // Predicated region
      $region53: #{mcm_forward.1} parent=5 // pred_check
        _
      $region54: #{mcm_forward.1} parent=5 // pred_check_branch
        %343 = sbr.rel (%p340) target = $region56
      $region55: #{mcm_forward.1} parent=5 // pred_region
        %s344 = ssub.s32 %s21, 1
        // Predicated region
        $region57: #{mcm_forward.1} parent=55 // pred_check
          %p345 = pneg %p157
        $region58: #{mcm_forward.1} parent=55 // pred_check_branch
          %347 = sbr.rel (%p345) target = $region60
        $region59: #{mcm_forward.1} parent=55 // pred_region
          %348 = dma.done [#allocation3], 32768
        $region60: #{mcm_forward.1} parent=55 // pred_fallthru
          _
        %p349 = scmp.lt.s32.totalorder %s26, 1
        %s350 = scalar_select %p349, %s26, 1
        %s351 = smul.addr %s350, 8
        %s352 = smul.addr %s351, 8
        %s353 = scalar_lea.vmem %s0, %s352
        %p354 = pneg %p47
        %p355 = pneg %p44
        %p356 = scmp.lt.s32.totalorder %s26, 1
        %s357 = scalar_select %p356, %s26, 1
        %s358 = smul.addr %s357, 2
        %s359 = smul.addr %s358, 8
        %s360 = scalar_lea.vmem %s1, %s359
        %p361 = pneg %p73
        %p362 = pneg %p70
        %p363 = pneg %p94
        %p364 = pneg %p91
        %p365 = pneg %p115
        %p366 = pneg %p112
        %p367 = pneg %p136
        %p368 = pneg %p133
        %p369 = pneg %p157
        %p370 = pneg %p154
        %p371 = pneg %p178
        %p372 = pneg %p175
        %p373 = pneg %p199
        %p374 = pneg %p196
        %p375 = pneg %p220
        %p376 = pneg %p217
        %p377 = pneg %p246
        %p378 = pneg %p243
        %s379 = sand.u32 %s233, 1
        %s380 = scalar_lea.sflag [#allocation4], %s379
        %s381 = sand.u32 %s233, 1
        %s382 = smul.addr %s381, 1152
        %s383 = scalar_lea.vmem [#allocation5], %s382
        %p384 = pneg %p272
        %p385 = pneg %p269
        %p386 = scmp.lt.s32.totalorder %s26, 1
        %s387 = scalar_select %p386, %s26, 1
        %s388 = smul.addr %s387, 8
        %s389 = smul.addr %s388, 8
        %s390 = scalar_lea.vmem %s10, %s389
        %p391 = scmp.lt.s32.totalorder %s26, 1
        %s392 = scalar_select %p391, %s26, 1
        %s393 = smul.addr %s392, 8
        %s394 = smul.addr %s393, 8
        %s395 = scalar_lea.vmem %s0, %s394
        %p396 = scmp.lt.s32.totalorder %s26, 1
        %s397 = scalar_select %p396, %s26, 1
        %s398 = smul.addr %s397, 2
        %s399 = smul.addr %s398, 8
        %s400 = scalar_lea.vmem %s1, %s399
        %p401 = scmp.lt.s32.totalorder %s26, 1
        %s402 = scalar_select %p401, %s26, 1
        %s403 = smul.addr %s402, 8
        %s404 = smul.addr %s403, 8
        %s405 = scalar_lea.vmem %s10, %s404
        %v406 = vld [vmem:[%s3] sm:$0xff]
        %v407 = vld [vmem:[%s3 + $0x8] sm:$0xff]
        %v408 = vld [vmem:[%s3 + $0x10] sm:$0xff]
        %v409 = vld [vmem:[%s3 + $0x18] sm:$0xff]
        %v410 = vld [vmem:[%s3 + $0x20] sm:$0xff]
        %v411 = vld [vmem:[%s3 + $0x28] sm:$0xff]
        %v412 = vld [vmem:[%s3 + $0x30] sm:$0xff]
        %v413 = vld [vmem:[%s4] sm:$0xff]
        %v414 = vld [vmem:[%s4 + $0x8] sm:$0xff]
        %v415 = vld [vmem:[%s4 + $0x10] sm:$0xff]
        %v416 = vld [vmem:[%s400] sm:$0xff]
        %v417 = vld [vmem:[%s400 + $0x8] sm:$0xff]
        %v418 = vld [vmem:[#allocation2] sm:$0xff]
        %v419 = vld [vmem:[#allocation2 + $0x8] sm:$0xff]
        %v420 = vld [vmem:[#allocation2 + $0x10] sm:$0xff]
        %v421 = vld [vmem:[#allocation2 + $0x18] sm:$0xff]
        %v422 = vld [vmem:[#allocation2 + $0x20] sm:$0xff]
        %v423 = vld [vmem:[#allocation2 + $0x28] sm:$0xff]
        %v424 = vld [vmem:[#allocation2 + $0x30] sm:$0xff]
        %v425 = vld [vmem:[#allocation2 + $0x38] sm:$0xff]
        %v426 = vld [vmem:[#allocation2 + $0x40] sm:$0xff]
        %v427 = vld [vmem:[#allocation2 + $0x48] sm:$0xff]
        %v428 = vld [vmem:[#allocation2 + $0x50] sm:$0xff]
        %v429 = vld [vmem:[#allocation2 + $0x58] sm:$0xff]
        %v430 = vld [vmem:[#allocation2 + $0x60] sm:$0xff]
        %v431 = vld [vmem:[#allocation2 + $0x68] sm:$0xff]
        %v432 = vld [vmem:[#allocation2 + $0x70] sm:$0xff]
        %v433 = vld [vmem:[#allocation2 + $0x78] sm:$0xff]
        %v434 = vld [vmem:[#allocation2 + $0x80] sm:$0xff]
        %v435 = vld [vmem:[#allocation2 + $0x88] sm:$0xff]
        %v436 = vld [vmem:[#allocation2 + $0x90] sm:$0xff]
        %v437 = vld [vmem:[#allocation2 + $0x98] sm:$0xff]
        %v438 = vld [vmem:[#allocation2 + $0xa0] sm:$0xff]
        %v439 = vld [vmem:[#allocation2 + $0xa8] sm:$0xff]
        %v440 = vld [vmem:[#allocation2 + $0xb0] sm:$0xff]
        %v441 = vld [vmem:[#allocation2 + $0xb8] sm:$0xff]
        %v442 = vld [vmem:[#allocation2 + $0xc0] sm:$0xff]
        %v443 = vld [vmem:[#allocation2 + $0xc8] sm:$0xff]
        %v444 = vld [vmem:[#allocation2 + $0xd0] sm:$0xff]
        %v445 = vld [vmem:[#allocation2 + $0xd8] sm:$0xff]
        %v446 = vld [vmem:[#allocation2 + $0xe0] sm:$0xff]
        %v447 = vld [vmem:[#allocation2 + $0xe8] sm:$0xff]
        %v448 = vld [vmem:[#allocation2 + $0xf0] sm:$0xff]
        %v449 = vld [vmem:[#allocation2 + $0xf8] sm:$0xff]
        %v450 = vld [vmem:[#allocation2 + $0x100] sm:$0xff]
        %v451 = vld [vmem:[#allocation2 + $0x108] sm:$0xff]
        %v452 = vld [vmem:[#allocation2 + $0x110] sm:$0xff]
        %v453 = vld [vmem:[#allocation2 + $0x118] sm:$0xff]
        %v454 = vld [vmem:[#allocation2 + $0x120] sm:$0xff]
        %v455 = vld [vmem:[#allocation2 + $0x128] sm:$0xff]
        %v456 = vld [vmem:[#allocation2 + $0x130] sm:$0xff]
        %v457 = vld [vmem:[#allocation2 + $0x138] sm:$0xff]
        %v458 = vld [vmem:[#allocation2 + $0x140] sm:$0xff]
        %v459 = vld [vmem:[#allocation2 + $0x148] sm:$0xff]
        %v460 = vld [vmem:[#allocation2 + $0x150] sm:$0xff]
        %v461 = vld [vmem:[#allocation2 + $0x158] sm:$0xff]
        %v462 = vld [vmem:[#allocation2 + $0x160] sm:$0xff]
        %v463 = vld [vmem:[#allocation2 + $0x168] sm:$0xff]
        %v464 = vld [vmem:[#allocation2 + $0x170] sm:$0xff]
        %v465 = vld [vmem:[#allocation2 + $0x178] sm:$0xff]
        %v466 = vld [vmem:[#allocation2 + $0x180] sm:$0xff]
        %v467 = vld [vmem:[#allocation2 + $0x188] sm:$0xff]
        %v468 = vld [vmem:[#allocation2 + $0x190] sm:$0xff]
        %v469 = vld [vmem:[#allocation2 + $0x198] sm:$0xff]
        %v470 = vld [vmem:[#allocation2 + $0x1a0] sm:$0xff]
        %v471 = vld [vmem:[#allocation2 + $0x1a8] sm:$0xff]
        %v472 = vld [vmem:[#allocation2 + $0x1b0] sm:$0xff]
        %v473 = vld [vmem:[#allocation2 + $0x1b8] sm:$0xff]
        %v474 = vld [vmem:[#allocation2 + $0x1c0] sm:$0xff]
        %v475 = vld [vmem:[#allocation2 + $0x1c8] sm:$0xff]
        %v476 = vld [vmem:[#allocation2 + $0x1d0] sm:$0xff]
        %v477 = vld [vmem:[#allocation2 + $0x1d8] sm:$0xff]
        %v478 = vld [vmem:[#allocation2 + $0x1e0] sm:$0xff]
        %v479 = vld [vmem:[#allocation2 + $0x1e8] sm:$0xff]
        %v480 = vld [vmem:[#allocation2 + $0x1f0] sm:$0xff]
        %v481 = vld [vmem:[#allocation2 + $0x1f8] sm:$0xff]
        %v482 = vld [vmem:[#allocation2 + $0x200] sm:$0xff]
        %v483 = vld [vmem:[#allocation2 + $0x208] sm:$0xff]
        %v484 = vld [vmem:[#allocation2 + $0x210] sm:$0xff]
        %v485 = vld [vmem:[#allocation2 + $0x218] sm:$0xff]
        %v486 = vld [vmem:[#allocation2 + $0x220] sm:$0xff]
        %v487 = vld [vmem:[#allocation2 + $0x228] sm:$0xff]
        %v488 = vld [vmem:[#allocation2 + $0x230] sm:$0xff]
        %v489 = vld [vmem:[#allocation2 + $0x238] sm:$0xff]
        %v490 = vld [vmem:[#allocation2 + $0x240] sm:$0xff]
        %v491 = vld [vmem:[#allocation2 + $0x248] sm:$0xff]
        %v492 = vld [vmem:[#allocation2 + $0x250] sm:$0xff]
        %v493 = vld [vmem:[#allocation2 + $0x258] sm:$0xff]
        %v494 = vld [vmem:[#allocation2 + $0x260] sm:$0xff]
        %v495 = vld [vmem:[#allocation2 + $0x268] sm:$0xff]
        %v496 = vld [vmem:[#allocation2 + $0x270] sm:$0xff]
        %v497 = vld [vmem:[#allocation2 + $0x278] sm:$0xff]
        %v498 = vld [vmem:[#allocation2 + $0x280] sm:$0xff]
        %v499 = vld [vmem:[#allocation2 + $0x288] sm:$0xff]
        %v500 = vld [vmem:[#allocation2 + $0x290] sm:$0xff]
        %v501 = vld [vmem:[#allocation2 + $0x298] sm:$0xff]
        %v502 = vld [vmem:[#allocation2 + $0x2a0] sm:$0xff]
        %v503 = vld [vmem:[#allocation2 + $0x2a8] sm:$0xff]
        %v504 = vld [vmem:[#allocation2 + $0x2b0] sm:$0xff]
        %v505 = vld [vmem:[#allocation2 + $0x2b8] sm:$0xff]
        %v506 = vld [vmem:[#allocation2 + $0x2c0] sm:$0xff]
        %v507 = vld [vmem:[#allocation2 + $0x2c8] sm:$0xff]
        %v508 = vld [vmem:[#allocation2 + $0x2d0] sm:$0xff]
        %v509 = vld [vmem:[#allocation2 + $0x2d8] sm:$0xff]
        %v510 = vld [vmem:[#allocation2 + $0x2e0] sm:$0xff]
        %v511 = vld [vmem:[#allocation2 + $0x2e8] sm:$0xff]
        %v512 = vld [vmem:[#allocation2 + $0x2f0] sm:$0xff]
        %v513 = vld [vmem:[#allocation2 + $0x2f8] sm:$0xff]
        %v514 = vld [vmem:[#allocation2 + $0x300] sm:$0xff]
        %v515 = vld [vmem:[#allocation2 + $0x308] sm:$0xff]
        %v516 = vld [vmem:[#allocation2 + $0x310] sm:$0xff]
        %v517 = vld [vmem:[#allocation2 + $0x318] sm:$0xff]
        %v518 = vld [vmem:[#allocation2 + $0x320] sm:$0xff]
        %v519 = vld [vmem:[#allocation2 + $0x328] sm:$0xff]
        %v520 = vld [vmem:[#allocation2 + $0x330] sm:$0xff]
        %v521 = vld [vmem:[#allocation2 + $0x338] sm:$0xff]
        %v522 = vld [vmem:[#allocation2 + $0x340] sm:$0xff]
        %v523 = vld [vmem:[#allocation2 + $0x348] sm:$0xff]
        %v524 = vld [vmem:[#allocation2 + $0x350] sm:$0xff]
        %v525 = vld [vmem:[#allocation2 + $0x358] sm:$0xff]
        %v526 = vld [vmem:[#allocation2 + $0x360] sm:$0xff]
        %v527 = vld [vmem:[#allocation2 + $0x368] sm:$0xff]
        %v528 = vld [vmem:[#allocation2 + $0x370] sm:$0xff]
        %v529 = vld [vmem:[#allocation2 + $0x378] sm:$0xff]
        %v530 = vld [vmem:[#allocation2 + $0x380] sm:$0xff]
        %v531 = vld [vmem:[#allocation2 + $0x388] sm:$0xff]
        %v532 = vld [vmem:[#allocation2 + $0x390] sm:$0xff]
        %v533 = vld [vmem:[#allocation2 + $0x398] sm:$0xff]
        %v534 = vld [vmem:[#allocation2 + $0x3a0] sm:$0xff]
        %v535 = vld [vmem:[#allocation2 + $0x3a8] sm:$0xff]
        %v536 = vld [vmem:[#allocation2 + $0x3b0] sm:$0xff]
        %v537 = vld [vmem:[#allocation2 + $0x3b8] sm:$0xff]
        %v538 = vld [vmem:[#allocation2 + $0x3c0] sm:$0xff]
        %v539 = vld [vmem:[#allocation2 + $0x3c8] sm:$0xff]
        %v540 = vld [vmem:[#allocation2 + $0x3d0] sm:$0xff]
        %v541 = vld [vmem:[#allocation2 + $0x3d8] sm:$0xff]
        %v542 = vld [vmem:[#allocation2 + $0x3e0] sm:$0xff]
        %v543 = vld [vmem:[#allocation2 + $0x3e8] sm:$0xff]
        %v544 = vld [vmem:[#allocation2 + $0x3f0] sm:$0xff]
        %v545 = vld [vmem:[#allocation2 + $0x3f8] sm:$0xff]
        %v546 = vld [vmem:[#allocation2 + $0x400] sm:$0xff]
        %v547 = vld [vmem:[#allocation2 + $0x408] sm:$0xff]
        %v548 = vld [vmem:[#allocation2 + $0x410] sm:$0xff]
        %v549 = vld [vmem:[#allocation2 + $0x418] sm:$0xff]
        %v550 = vld [vmem:[#allocation2 + $0x420] sm:$0xff]
        %v551 = vld [vmem:[#allocation2 + $0x428] sm:$0xff]
        %v552 = vld [vmem:[#allocation2 + $0x430] sm:$0xff]
        %v553 = vld [vmem:[#allocation2 + $0x438] sm:$0xff]
        %v554 = vld [vmem:[#allocation2 + $0x440] sm:$0xff]
        %v555 = vld [vmem:[#allocation2 + $0x448] sm:$0xff]
        %v556 = vld [vmem:[#allocation2 + $0x450] sm:$0xff]
        %v557 = vld [vmem:[#allocation2 + $0x458] sm:$0xff]
        %v558 = vld [vmem:[#allocation2 + $0x460] sm:$0xff]
        %v559 = vld [vmem:[#allocation2 + $0x468] sm:$0xff]
        %v560 = vld [vmem:[#allocation2 + $0x470] sm:$0xff]
        %v561 = vld [vmem:[#allocation2 + $0x478] sm:$0xff]
        %v562 = vld [vmem:[#allocation2 + $0x480] sm:$0xff]
        %v563 = vld [vmem:[#allocation2 + $0x488] sm:$0xff]
        %v564 = vld [vmem:[#allocation2 + $0x490] sm:$0xff]
        %v565 = vld [vmem:[#allocation2 + $0x498] sm:$0xff]
        %v566 = vld [vmem:[#allocation2 + $0x4a0] sm:$0xff]
        %v567 = vld [vmem:[#allocation2 + $0x4a8] sm:$0xff]
        %v568 = vld [vmem:[#allocation2 + $0x4b0] sm:$0xff]
        %v569 = vld [vmem:[#allocation2 + $0x4b8] sm:$0xff]
        %v570 = vld [vmem:[#allocation2 + $0x4c0] sm:$0xff]
        %v571 = vld [vmem:[#allocation2 + $0x4c8] sm:$0xff]
        %v572 = vld [vmem:[#allocation2 + $0x4d0] sm:$0xff]
        %v573 = vld [vmem:[#allocation2 + $0x4d8] sm:$0xff]
        %v574 = vld [vmem:[#allocation2 + $0x4e0] sm:$0xff]
        %v575 = vld [vmem:[#allocation2 + $0x4e8] sm:$0xff]
        %v576 = vld [vmem:[#allocation2 + $0x4f0] sm:$0xff]
        %v577 = vld [vmem:[#allocation2 + $0x4f8] sm:$0xff]
        %v578 = vld [vmem:[#allocation2 + $0x500] sm:$0xff]
        %v579 = vld [vmem:[#allocation2 + $0x508] sm:$0xff]
        %v580 = vld [vmem:[#allocation2 + $0x510] sm:$0xff]
        %v581 = vld [vmem:[#allocation2 + $0x518] sm:$0xff]
        %v582 = vld [vmem:[#allocation2 + $0x520] sm:$0xff]
        %v583 = vld [vmem:[#allocation2 + $0x528] sm:$0xff]
        %v584 = vld [vmem:[#allocation2 + $0x530] sm:$0xff]
        %v585 = vld [vmem:[#allocation2 + $0x538] sm:$0xff]
        %v586 = vld [vmem:[#allocation2 + $0x540] sm:$0xff]
        %v587 = vld [vmem:[#allocation2 + $0x548] sm:$0xff]
        %v588 = vld [vmem:[#allocation2 + $0x550] sm:$0xff]
        %v589 = vld [vmem:[#allocation2 + $0x558] sm:$0xff]
        %v590 = vld [vmem:[#allocation2 + $0x560] sm:$0xff]
        %v591 = vld [vmem:[#allocation2 + $0x568] sm:$0xff]
        %v592 = vld [vmem:[#allocation2 + $0x570] sm:$0xff]
        %v593 = vld [vmem:[#allocation2 + $0x578] sm:$0xff]
        %v594 = vld [vmem:[#allocation2 + $0x580] sm:$0xff]
        %v595 = vld [vmem:[#allocation2 + $0x588] sm:$0xff]
        %v596 = vld [vmem:[#allocation2 + $0x590] sm:$0xff]
        %v597 = vld [vmem:[#allocation2 + $0x598] sm:$0xff]
        %v598 = vld [vmem:[#allocation2 + $0x5a0] sm:$0xff]
        %v599 = vld [vmem:[#allocation2 + $0x5a8] sm:$0xff]
        %v600 = vld [vmem:[#allocation2 + $0x5b0] sm:$0xff]
        %v601 = vld [vmem:[#allocation2 + $0x5b8] sm:$0xff]
        %v602 = vld [vmem:[#allocation2 + $0x5c0] sm:$0xff]
        %v603 = vld [vmem:[#allocation2 + $0x5c8] sm:$0xff]
        %v604 = vld [vmem:[#allocation2 + $0x5d0] sm:$0xff]
        %v605 = vld [vmem:[#allocation2 + $0x5d8] sm:$0xff]
        %v606 = vld [vmem:[#allocation2 + $0x5e0] sm:$0xff]
        %v607 = vld [vmem:[#allocation2 + $0x5e8] sm:$0xff]
        %v608 = vld [vmem:[#allocation2 + $0x5f0] sm:$0xff]
        %v609 = vld [vmem:[#allocation2 + $0x5f8] sm:$0xff]
        %v610 = vld [vmem:[#allocation2 + $0x600] sm:$0xff]
        %v611 = vld [vmem:[#allocation2 + $0x608] sm:$0xff]
        %v612 = vld [vmem:[#allocation2 + $0x610] sm:$0xff]
        %v613 = vld [vmem:[#allocation2 + $0x618] sm:$0xff]
        %v614 = vld [vmem:[#allocation2 + $0x620] sm:$0xff]
        %v615 = vld [vmem:[#allocation2 + $0x628] sm:$0xff]
        %v616 = vld [vmem:[#allocation2 + $0x630] sm:$0xff]
        %v617 = vld [vmem:[#allocation2 + $0x638] sm:$0xff]
        %v618 = vld [vmem:[#allocation2 + $0x640] sm:$0xff]
        %v619 = vld [vmem:[#allocation2 + $0x648] sm:$0xff]
        %v620 = vld [vmem:[#allocation2 + $0x650] sm:$0xff]
        %v621 = vld [vmem:[#allocation2 + $0x658] sm:$0xff]
        %v622 = vld [vmem:[#allocation2 + $0x660] sm:$0xff]
        %v623 = vld [vmem:[#allocation2 + $0x668] sm:$0xff]
        %v624 = vld [vmem:[#allocation2 + $0x670] sm:$0xff]
        %v625 = vld [vmem:[#allocation2 + $0x678] sm:$0xff]
        %v626 = vld [vmem:[#allocation2 + $0x680] sm:$0xff]
        %v627 = vld [vmem:[#allocation2 + $0x688] sm:$0xff]
        %v628 = vld [vmem:[#allocation2 + $0x690] sm:$0xff]
        %v629 = vld [vmem:[#allocation2 + $0x698] sm:$0xff]
        %v630 = vld [vmem:[#allocation2 + $0x6a0] sm:$0xff]
        %v631 = vld [vmem:[#allocation2 + $0x6a8] sm:$0xff]
        %v632 = vld [vmem:[#allocation2 + $0x6b0] sm:$0xff]
        %v633 = vld [vmem:[#allocation2 + $0x6b8] sm:$0xff]
        %v634 = vld [vmem:[#allocation2 + $0x6c0] sm:$0xff]
        %v635 = vld [vmem:[#allocation2 + $0x6c8] sm:$0xff]
        %v636 = vld [vmem:[#allocation2 + $0x6d0] sm:$0xff]
        %v637 = vld [vmem:[#allocation2 + $0x6d8] sm:$0xff]
        %v638 = vld [vmem:[#allocation2 + $0x6e0] sm:$0xff]
        %v639 = vld [vmem:[#allocation2 + $0x6e8] sm:$0xff]
        %v640 = vld [vmem:[#allocation2 + $0x6f0] sm:$0xff]
        %v641 = vld [vmem:[#allocation2 + $0x6f8] sm:$0xff]
        %v642 = vld [vmem:[#allocation2 + $0x700] sm:$0xff]
        %v643 = vld [vmem:[#allocation2 + $0x708] sm:$0xff]
        %v644 = vld [vmem:[#allocation2 + $0x710] sm:$0xff]
        %v645 = vld [vmem:[#allocation2 + $0x718] sm:$0xff]
        %v646 = vld [vmem:[#allocation2 + $0x720] sm:$0xff]
        %v647 = vld [vmem:[#allocation2 + $0x728] sm:$0xff]
        %v648 = vld [vmem:[#allocation2 + $0x730] sm:$0xff]
        %v649 = vld [vmem:[#allocation2 + $0x738] sm:$0xff]
        %v650 = vld [vmem:[#allocation2 + $0x740] sm:$0xff]
        %v651 = vld [vmem:[#allocation2 + $0x748] sm:$0xff]
        %v652 = vld [vmem:[#allocation2 + $0x750] sm:$0xff]
        %v653 = vld [vmem:[#allocation2 + $0x758] sm:$0xff]
        %v654 = vld [vmem:[#allocation2 + $0x760] sm:$0xff]
        %v655 = vld [vmem:[#allocation2 + $0x768] sm:$0xff]
        %v656 = vld [vmem:[#allocation2 + $0x770] sm:$0xff]
        %v657 = vld [vmem:[#allocation2 + $0x778] sm:$0xff]
        %v658 = vld [vmem:[#allocation2 + $0x780] sm:$0xff]
        %v659 = vld [vmem:[#allocation2 + $0x788] sm:$0xff]
        %v660 = vld [vmem:[#allocation2 + $0x790] sm:$0xff]
        %v661 = vld [vmem:[#allocation2 + $0x798] sm:$0xff]
        %v662 = vld [vmem:[#allocation2 + $0x7a0] sm:$0xff]
        %v663 = vld [vmem:[#allocation2 + $0x7a8] sm:$0xff]
        %v664 = vld [vmem:[#allocation2 + $0x7b0] sm:$0xff]
        %v665 = vld [vmem:[#allocation2 + $0x7b8] sm:$0xff]
        %v666 = vld [vmem:[#allocation2 + $0x7c0] sm:$0xff]
        %v667 = vld [vmem:[#allocation2 + $0x7c8] sm:$0xff]
        %v668 = vld [vmem:[#allocation2 + $0x7d0] sm:$0xff]
        %v669 = vld [vmem:[#allocation2 + $0x7d8] sm:$0xff]
        %v670 = vld [vmem:[#allocation2 + $0x7e0] sm:$0xff]
        %v671 = vld [vmem:[#allocation2 + $0x7e8] sm:$0xff]
        %v672 = vld [vmem:[#allocation2 + $0x7f0] sm:$0xff]
        %v673 = vld [vmem:[#allocation2 + $0x7f8] sm:$0xff]
        %674 = vmatprep.subr.mxu0 %v539
        %675 = vmatpush1.msra.mxu0 %v538
        %676 = vmatprep.subr.mxu0 %v531
        %677 = vmatpush1.msra.mxu0 %v530
        %678 = vmatprep.subr.mxu0 %v523
        %679 = vmatpush1.msra.mxu0 %v522
        %680 = vmatprep.subr.mxu0 %v515
        %681 = vmatpush1.msra.mxu0 %v514
        %682 = vmatprep.subr.mxu0 %v507
        %683 = vmatpush1.msra.mxu0 %v506
        %684 = vmatprep.subr.mxu0 %v499
        %685 = vmatpush1.msra.mxu0 %v498
        %686 = vmatprep.subr.mxu0 %v491
        %687 = vmatpush1.msra.mxu0 %v490
        %688 = vmatprep.subr.mxu0 %v483
        %689 = vmatpush1.msra.mxu0 %v482
        %690 = vmatprep.subr.mxu0 %v475
        %691 = vmatpush1.msra.mxu0 %v474
        %692 = vmatprep.subr.mxu0 %v467
        %693 = vmatpush1.msra.mxu0 %v466
        %694 = vmatprep.subr.mxu0 %v459
        %695 = vmatpush1.msra.mxu0 %v458
        %696 = vmatprep.subr.mxu0 %v451
        %697 = vmatpush1.msra.mxu0 %v450
        %698 = vmatprep.subr.mxu0 %v443
        %699 = vmatpush1.msra.mxu0 %v442
        %700 = vmatprep.subr.mxu0 %v435
        %701 = vmatpush1.msra.mxu0 %v434
        %702 = vmatprep.subr.mxu0 %v427
        %703 = vmatpush1.msra.mxu0 %v426
        %704 = vmatprep.subr.mxu0 %v419
        %705 = vmatpush1.msra.mxu0 %v418
        %706 = vmatprep.subr.mxu0 %v667
        %707 = vmatpush2.msra.mxu0 %v666
        %708 = vmatprep.subr.mxu0 %v659
        %709 = vmatpush2.msra.mxu0 %v658
        %710 = vmatprep.subr.mxu0 %v651
        %711 = vmatpush2.msra.mxu0 %v650
        %712 = vmatprep.subr.mxu0 %v643
        %713 = vmatpush2.msra.mxu0 %v642
        %714 = vmatprep.subr.mxu0 %v635
        %715 = vmatpush2.msra.mxu0 %v634
        %716 = vmatprep.subr.mxu0 %v627
        %717 = vmatpush2.msra.mxu0 %v626
        %718 = vmatprep.subr.mxu0 %v619
        %719 = vmatpush2.msra.mxu0 %v618
        %720 = vmatprep.subr.mxu0 %v611
        %721 = vmatpush2.msra.mxu0 %v610
        %722 = vmatprep.subr.mxu0 %v603
        %723 = vmatpush2.msra.mxu0 %v602
        %724 = vmatprep.subr.mxu0 %v595
        %725 = vmatpush2.msra.mxu0 %v594
        %726 = vmatprep.subr.mxu0 %v587
        %727 = vmatpush2.msra.mxu0 %v586
        %728 = vmatprep.subr.mxu0 %v579
        %729 = vmatpush2.msra.mxu0 %v578
        %730 = vmatprep.subr.mxu0 %v571
        %731 = vmatpush2.msra.mxu0 %v570
        %732 = vmatprep.subr.mxu0 %v563
        %733 = vmatpush2.msra.mxu0 %v562
        %734 = vmatprep.subr.mxu0 %v555
        %735 = vmatpush2.msra.mxu0 %v554
        %736 = vmatprep.subr.mxu0 %v547
        %737 = vmatpush2.msra.mxu0 %v546
        %738 = vmatprep.mubr.f32.mxu0 %v417
        %739 = vmatmul.mubr.f32.gmra.mxu0 %v416
        %v740 = vpop.f32.mrf.mxu0
        %v741 = vadd.f32 0.0, %v740
        %v742 = vpop.f32.mrf.mxu0
        %v743 = vadd.f32 0.0, %v742
        %744 = vdwg.mxu0
        %745 = vmatprep.subr.mxu0 %v541
        %746 = vmatpush1.msra.mxu0 %v540
        %747 = vmatprep.subr.mxu0 %v533
        %748 = vmatpush1.msra.mxu0 %v532
        %749 = vmatprep.subr.mxu0 %v525
        %750 = vmatpush1.msra.mxu0 %v524
        %751 = vmatprep.subr.mxu0 %v517
        %752 = vmatpush1.msra.mxu0 %v516
        %753 = vmatprep.subr.mxu0 %v509
        %754 = vmatpush1.msra.mxu0 %v508
        %755 = vmatprep.subr.mxu0 %v501
        %756 = vmatpush1.msra.mxu0 %v500
        %757 = vmatprep.subr.mxu0 %v493
        %758 = vmatpush1.msra.mxu0 %v492
        %759 = vmatprep.subr.mxu0 %v485
        %760 = vmatpush1.msra.mxu0 %v484
        %761 = vmatprep.subr.mxu0 %v477
        %762 = vmatpush1.msra.mxu0 %v476
        %763 = vmatprep.subr.mxu0 %v469
        %764 = vmatpush1.msra.mxu0 %v468
        %765 = vmatprep.subr.mxu0 %v461
        %766 = vmatpush1.msra.mxu0 %v460
        %767 = vmatprep.subr.mxu0 %v453
        %768 = vmatpush1.msra.mxu0 %v452
        %769 = vmatprep.subr.mxu0 %v445
        %770 = vmatpush1.msra.mxu0 %v444
        %771 = vmatprep.subr.mxu0 %v437
        %772 = vmatpush1.msra.mxu0 %v436
        %773 = vmatprep.subr.mxu0 %v429
        %774 = vmatpush1.msra.mxu0 %v428
        %775 = vmatprep.subr.mxu0 %v421
        %776 = vmatpush1.msra.mxu0 %v420
        %777 = vmatprep.subr.mxu0 %v669
        %778 = vmatpush2.msra.mxu0 %v668
        %779 = vmatprep.subr.mxu0 %v661
        %780 = vmatpush2.msra.mxu0 %v660
        %781 = vmatprep.subr.mxu0 %v653
        %782 = vmatpush2.msra.mxu0 %v652
        %783 = vmatprep.subr.mxu0 %v645
        %784 = vmatpush2.msra.mxu0 %v644
        %785 = vmatprep.subr.mxu0 %v637
        %786 = vmatpush2.msra.mxu0 %v636
        %787 = vmatprep.subr.mxu0 %v629
        %788 = vmatpush2.msra.mxu0 %v628
        %789 = vmatprep.subr.mxu0 %v621
        %790 = vmatpush2.msra.mxu0 %v620
        %791 = vmatprep.subr.mxu0 %v613
        %792 = vmatpush2.msra.mxu0 %v612
        %793 = vmatprep.subr.mxu0 %v605
        %794 = vmatpush2.msra.mxu0 %v604
        %795 = vmatprep.subr.mxu0 %v597
        %796 = vmatpush2.msra.mxu0 %v596
        %797 = vmatprep.subr.mxu0 %v589
        %798 = vmatpush2.msra.mxu0 %v588
        %799 = vmatprep.subr.mxu0 %v581
        %800 = vmatpush2.msra.mxu0 %v580
        %801 = vmatprep.subr.mxu0 %v573
        %802 = vmatpush2.msra.mxu0 %v572
        %803 = vmatprep.subr.mxu0 %v565
        %804 = vmatpush2.msra.mxu0 %v564
        %805 = vmatprep.subr.mxu0 %v557
        %806 = vmatpush2.msra.mxu0 %v556
        %807 = vmatprep.subr.mxu0 %v549
        %808 = vmatpush2.msra.mxu0 %v548
        %809 = vmatprep.mubr.f32.mxu0 %v417
        %810 = vmatmul.mubr.f32.gmra.mxu0 %v416
        %v811 = vpop.f32.mrf.mxu0
        %v812 = vadd.f32 0.0, %v811
        %v813 = vpop.f32.mrf.mxu0
        %v814 = vadd.f32 0.0, %v813
        %815 = vdwg.mxu0
        %816 = vmatprep.subr.mxu0 %v543
        %817 = vmatpush1.msra.mxu0 %v542
        %818 = vmatprep.subr.mxu0 %v535
        %819 = vmatpush1.msra.mxu0 %v534
        %820 = vmatprep.subr.mxu0 %v527
        %821 = vmatpush1.msra.mxu0 %v526
        %822 = vmatprep.subr.mxu0 %v519
        %823 = vmatpush1.msra.mxu0 %v518
        %824 = vmatprep.subr.mxu0 %v511
        %825 = vmatpush1.msra.mxu0 %v510
        %826 = vmatprep.subr.mxu0 %v503
        %827 = vmatpush1.msra.mxu0 %v502
        %828 = vmatprep.subr.mxu0 %v495
        %829 = vmatpush1.msra.mxu0 %v494
        %830 = vmatprep.subr.mxu0 %v487
        %831 = vmatpush1.msra.mxu0 %v486
        %832 = vmatprep.subr.mxu0 %v479
        %833 = vmatpush1.msra.mxu0 %v478
        %834 = vmatprep.subr.mxu0 %v471
        %835 = vmatpush1.msra.mxu0 %v470
        %836 = vmatprep.subr.mxu0 %v463
        %837 = vmatpush1.msra.mxu0 %v462
        %838 = vmatprep.subr.mxu0 %v455
        %839 = vmatpush1.msra.mxu0 %v454
        %840 = vmatprep.subr.mxu0 %v447
        %841 = vmatpush1.msra.mxu0 %v446
        %842 = vmatprep.subr.mxu0 %v439
        %843 = vmatpush1.msra.mxu0 %v438
        %844 = vmatprep.subr.mxu0 %v431
        %845 = vmatpush1.msra.mxu0 %v430
        %846 = vmatprep.subr.mxu0 %v423
        %847 = vmatpush1.msra.mxu0 %v422
        %848 = vmatprep.subr.mxu0 %v671
        %849 = vmatpush2.msra.mxu0 %v670
        %850 = vmatprep.subr.mxu0 %v663
        %851 = vmatpush2.msra.mxu0 %v662
        %852 = vmatprep.subr.mxu0 %v655
        %853 = vmatpush2.msra.mxu0 %v654
        %854 = vmatprep.subr.mxu0 %v647
        %855 = vmatpush2.msra.mxu0 %v646
        %856 = vmatprep.subr.mxu0 %v639
        %857 = vmatpush2.msra.mxu0 %v638
        %858 = vmatprep.subr.mxu0 %v631
        %859 = vmatpush2.msra.mxu0 %v630
        %860 = vmatprep.subr.mxu0 %v623
        %861 = vmatpush2.msra.mxu0 %v622
        %862 = vmatprep.subr.mxu0 %v615
        %863 = vmatpush2.msra.mxu0 %v614
        %864 = vmatprep.subr.mxu0 %v607
        %865 = vmatpush2.msra.mxu0 %v606
        %866 = vmatprep.subr.mxu0 %v599
        %867 = vmatpush2.msra.mxu0 %v598
        %868 = vmatprep.subr.mxu0 %v591
        %869 = vmatpush2.msra.mxu0 %v590
        %870 = vmatprep.subr.mxu0 %v583
        %871 = vmatpush2.msra.mxu0 %v582
        %872 = vmatprep.subr.mxu0 %v575
        %873 = vmatpush2.msra.mxu0 %v574
        %874 = vmatprep.subr.mxu0 %v567
        %875 = vmatpush2.msra.mxu0 %v566
        %876 = vmatprep.subr.mxu0 %v559
        %877 = vmatpush2.msra.mxu0 %v558
        %878 = vmatprep.subr.mxu0 %v551
        %879 = vmatpush2.msra.mxu0 %v550
        %880 = vmatprep.mubr.f32.mxu0 %v417
        %881 = vmatmul.mubr.f32.gmra.mxu0 %v416
        %v882 = vpop.f32.mrf.mxu0
        %v883 = vadd.f32 0.0, %v882
        %v884 = vpop.f32.mrf.mxu0
        %v885 = vadd.f32 0.0, %v884
        %886 = vdwg.mxu0
        %887 = vmatprep.subr.mxu0 %v545
        %888 = vmatpush1.msra.mxu0 %v544
        %889 = vmatprep.subr.mxu0 %v537
        %890 = vmatpush1.msra.mxu0 %v536
        %891 = vmatprep.subr.mxu0 %v529
        %892 = vmatpush1.msra.mxu0 %v528
        %893 = vmatprep.subr.mxu0 %v521
        %894 = vmatpush1.msra.mxu0 %v520
        %895 = vmatprep.subr.mxu0 %v513
        %896 = vmatpush1.msra.mxu0 %v512
        %897 = vmatprep.subr.mxu0 %v505
        %898 = vmatpush1.msra.mxu0 %v504
        %899 = vmatprep.subr.mxu0 %v497
        %900 = vmatpush1.msra.mxu0 %v496
        %901 = vmatprep.subr.mxu0 %v489
        %902 = vmatpush1.msra.mxu0 %v488
        %903 = vmatprep.subr.mxu0 %v481
        %904 = vmatpush1.msra.mxu0 %v480
        %905 = vmatprep.subr.mxu0 %v473
        %906 = vmatpush1.msra.mxu0 %v472
        %907 = vmatprep.subr.mxu0 %v465
        %908 = vmatpush1.msra.mxu0 %v464
        %909 = vmatprep.subr.mxu0 %v457
        %910 = vmatpush1.msra.mxu0 %v456
        %911 = vmatprep.subr.mxu0 %v449
        %912 = vmatpush1.msra.mxu0 %v448
        %913 = vmatprep.subr.mxu0 %v441
        %914 = vmatpush1.msra.mxu0 %v440
        %915 = vmatprep.subr.mxu0 %v433
        %916 = vmatpush1.msra.mxu0 %v432
        %917 = vmatprep.subr.mxu0 %v425
        %918 = vmatpush1.msra.mxu0 %v424
        %919 = vmatprep.subr.mxu0 %v673
        %920 = vmatpush2.msra.mxu0 %v672
        %921 = vmatprep.subr.mxu0 %v665
        %922 = vmatpush2.msra.mxu0 %v664
        %923 = vmatprep.subr.mxu0 %v657
        %924 = vmatpush2.msra.mxu0 %v656
        %925 = vmatprep.subr.mxu0 %v649
        %926 = vmatpush2.msra.mxu0 %v648
        %927 = vmatprep.subr.mxu0 %v641
        %928 = vmatpush2.msra.mxu0 %v640
        %929 = vmatprep.subr.mxu0 %v633
        %930 = vmatpush2.msra.mxu0 %v632
        %931 = vmatprep.subr.mxu0 %v625
        %932 = vmatpush2.msra.mxu0 %v624
        %933 = vmatprep.subr.mxu0 %v617
        %934 = vmatpush2.msra.mxu0 %v616
        %935 = vmatprep.subr.mxu0 %v609
        %936 = vmatpush2.msra.mxu0 %v608
        %937 = vmatprep.subr.mxu0 %v601
        %938 = vmatpush2.msra.mxu0 %v600
        %939 = vmatprep.subr.mxu0 %v593
        %940 = vmatpush2.msra.mxu0 %v592
        %941 = vmatprep.subr.mxu0 %v585
        %942 = vmatpush2.msra.mxu0 %v584
        %943 = vmatprep.subr.mxu0 %v577
        %944 = vmatpush2.msra.mxu0 %v576
        %945 = vmatprep.subr.mxu0 %v569
        %946 = vmatpush2.msra.mxu0 %v568
        %947 = vmatprep.subr.mxu0 %v561
        %948 = vmatpush2.msra.mxu0 %v560
        %949 = vmatprep.subr.mxu0 %v553
        %950 = vmatpush2.msra.mxu0 %v552
        %951 = vmatprep.mubr.f32.mxu0 %v417
        %952 = vmatmul.mubr.f32.gmra.mxu0 %v416
        %v953 = vpop.f32.mrf.mxu0
        %v954 = vadd.f32 0.0, %v953
        %v955 = vpop.f32.mrf.mxu0
        %v956 = vadd.f32 0.0, %v955
        %957 = vdwg.mxu0
        %958 = vrot.lane.b32.xlu0 %v741, 33
        %v959 = vpop.permute.xlu0 %958
        %960 = vrot.lane.b32.xlu0 %v743, 33
        %v961 = vpop.permute.xlu0 %960
        %962 = vrot.lane.b32.xlu0 %v812, 33
        %v963 = vpop.permute.xlu0 %962
        %964 = vrot.lane.b32.xlu0 %v814, 33
        %v965 = vpop.permute.xlu0 %964
        %966 = vrot.lane.b32.xlu0 %v883, 33
        %v967 = vpop.permute.xlu0 %966
        %968 = vrot.lane.b32.xlu0 %v885, 33
        %v969 = vpop.permute.xlu0 %968
        %970 = vrot.lane.b32.xlu0 %v954, 33
        %v971 = vpop.permute.xlu0 %970
        %972 = vrot.lane.b32.xlu0 %v956, 33
        %v973 = vpop.permute.xlu0 %972
        %v974 = vlaneseq
        %v975 = vand.u32 %v974, 127
        %vm976 = vcmp.lt.s32.totalorder %v975, 33
        %v977 = vsel %vm976, %v971, %v973
        %v978 = vsel %vm976, %v969, %v971
        %v979 = vsel %vm976, %v967, %v969
        %v980 = vsel %vm976, %v965, %v967
        %v981 = vsel %vm976, %v963, %v965
        %v982 = vsel %vm976, %v961, %v963
        %v983 = vsel %vm976, %v959, %v961
        %v984 = vsel %vm976, %v973, %v959
        %v985 = vld [vmem:[%s2] sm:$0xff]
        %v986 = vld [vmem:[%s2 + $0x8] sm:$0xff]
        %v987 = vld [vmem:[%s2 + $0x10] sm:$0xff]
        %v988 = vld [vmem:[%s2 + $0x18] sm:$0xff]
        %v989 = vld [vmem:[%s2 + $0x20] sm:$0xff]
        %v990 = vld [vmem:[%s2 + $0x28] sm:$0xff]
        %v991 = vld [vmem:[%s2 + $0x30] sm:$0xff]
        %v992 = vld [vmem:[%s2 + $0x38] sm:$0xff]
        %v993 = vmul.f32 %v984, %v985
        %v994 = vmul.f32 %v983, %v986
        %v995 = vmul.f32 %v982, %v987
        %v996 = vmul.f32 %v981, %v988
        %v997 = vmul.f32 %v980, %v989
        %v998 = vmul.f32 %v979, %v990
        %v999 = vmul.f32 %v978, %v991
        %v1000 = vmul.f32 %v977, %v992
        %1001 = vrot.lane.b32.xlu0 %v741, 32
        %v1002 = vpop.permute.xlu0 %1001
        %1003 = vrot.lane.b32.xlu0 %v743, 32
        %v1004 = vpop.permute.xlu0 %1003
        %1005 = vrot.lane.b32.xlu0 %v812, 32
        %v1006 = vpop.permute.xlu0 %1005
        %1007 = vrot.lane.b32.xlu0 %v814, 32
        %v1008 = vpop.permute.xlu0 %1007
        %1009 = vrot.lane.b32.xlu0 %v883, 32
        %v1010 = vpop.permute.xlu0 %1009
        %1011 = vrot.lane.b32.xlu0 %v885, 32
        %v1012 = vpop.permute.xlu0 %1011
        %1013 = vrot.lane.b32.xlu0 %v954, 32
        %v1014 = vpop.permute.xlu0 %1013
        %1015 = vrot.lane.b32.xlu0 %v956, 32
        %v1016 = vpop.permute.xlu0 %1015
        %vm1017 = vcmp.lt.s32.totalorder %v975, 32
        %v1018 = vsel %vm1017, %v1014, %v1016
        %v1019 = vsel %vm1017, %v1012, %v1014
        %v1020 = vsel %vm1017, %v1010, %v1012
        %v1021 = vsel %vm1017, %v1008, %v1010
        %v1022 = vsel %vm1017, %v1006, %v1008
        %v1023 = vsel %vm1017, %v1004, %v1006
        %v1024 = vsel %vm1017, %v1002, %v1004
        %v1025 = vsel %vm1017, %v1016, %v1002
        %s1026 = scalar_lea.vmem %s2, 256
        %v1027 = vld [vmem:[%s1026] sm:$0xff]
        %v1028 = vld [vmem:[%s1026 + $0x8] sm:$0xff]
        %v1029 = vld [vmem:[%s1026 + $0x10] sm:$0xff]
        %v1030 = vld [vmem:[%s1026 + $0x18] sm:$0xff]
        %v1031 = vld [vmem:[%s1026 + $0x20] sm:$0xff]
        %v1032 = vld [vmem:[%s1026 + $0x28] sm:$0xff]
        %v1033 = vld [vmem:[%s1026 + $0x30] sm:$0xff]
        %v1034 = vld [vmem:[%s1026 + $0x38] sm:$0xff]
        %v1035 = vmul.f32 %v1025, %v1027
        %v1036 = vmul.f32 %v1024, %v1028
        %v1037 = vmul.f32 %v1023, %v1029
        %v1038 = vmul.f32 %v1022, %v1030
        %v1039 = vmul.f32 %v1021, %v1031
        %v1040 = vmul.f32 %v1020, %v1032
        %v1041 = vmul.f32 %v1019, %v1033
        %v1042 = vmul.f32 %v1018, %v1034
        %v1043 = vadd.f32 %v993, %v1035
        %v1044 = vadd.f32 %v994, %v1036
        %v1045 = vadd.f32 %v995, %v1037
        %v1046 = vadd.f32 %v996, %v1038
        %v1047 = vadd.f32 %v997, %v1039
        %v1048 = vadd.f32 %v998, %v1040
        %v1049 = vadd.f32 %v999, %v1041
        %v1050 = vadd.f32 %v1000, %v1042
        %1051 = vrot.lane.b32.xlu0 %v741, 31
        %v1052 = vpop.permute.xlu0 %1051
        %1053 = vrot.lane.b32.xlu0 %v743, 31
        %v1054 = vpop.permute.xlu0 %1053
        %1055 = vrot.lane.b32.xlu0 %v812, 31
        %v1056 = vpop.permute.xlu0 %1055
        %1057 = vrot.lane.b32.xlu0 %v814, 31
        %v1058 = vpop.permute.xlu0 %1057
        %1059 = vrot.lane.b32.xlu0 %v883, 31
        %v1060 = vpop.permute.xlu0 %1059
        %1061 = vrot.lane.b32.xlu0 %v885, 31
        %v1062 = vpop.permute.xlu0 %1061
        %1063 = vrot.lane.b32.xlu0 %v954, 31
        %v1064 = vpop.permute.xlu0 %1063
        %1065 = vrot.lane.b32.xlu0 %v956, 31
        %v1066 = vpop.permute.xlu0 %1065
        %vm1067 = vcmp.lt.s32.totalorder %v975, 31
        %v1068 = vsel %vm1067, %v1064, %v1066
        %v1069 = vsel %vm1067, %v1062, %v1064
        %v1070 = vsel %vm1067, %v1060, %v1062
        %v1071 = vsel %vm1067, %v1058, %v1060
        %v1072 = vsel %vm1067, %v1056, %v1058
        %v1073 = vsel %vm1067, %v1054, %v1056
        %v1074 = vsel %vm1067, %v1052, %v1054
        %v1075 = vsel %vm1067, %v1066, %v1052
        %s1076 = scalar_lea.vmem %s2, 512
        %v1077 = vld [vmem:[%s1076] sm:$0xff]
        %v1078 = vld [vmem:[%s1076 + $0x8] sm:$0xff]
        %v1079 = vld [vmem:[%s1076 + $0x10] sm:$0xff]
        %v1080 = vld [vmem:[%s1076 + $0x18] sm:$0xff]
        %v1081 = vld [vmem:[%s1076 + $0x20] sm:$0xff]
        %v1082 = vld [vmem:[%s1076 + $0x28] sm:$0xff]
        %v1083 = vld [vmem:[%s1076 + $0x30] sm:$0xff]
        %v1084 = vld [vmem:[%s1076 + $0x38] sm:$0xff]
        %v1085 = vmul.f32 %v1075, %v1077
        %v1086 = vmul.f32 %v1074, %v1078
        %v1087 = vmul.f32 %v1073, %v1079
        %v1088 = vmul.f32 %v1072, %v1080
        %v1089 = vmul.f32 %v1071, %v1081
        %v1090 = vmul.f32 %v1070, %v1082
        %v1091 = vmul.f32 %v1069, %v1083
        %v1092 = vmul.f32 %v1068, %v1084
        %v1093 = vadd.f32 %v1043, %v1085
        %v1094 = vadd.f32 %v1044, %v1086
        %v1095 = vadd.f32 %v1045, %v1087
        %v1096 = vadd.f32 %v1046, %v1088
        %v1097 = vadd.f32 %v1047, %v1089
        %v1098 = vadd.f32 %v1048, %v1090
        %v1099 = vadd.f32 %v1049, %v1091
        %v1100 = vadd.f32 %v1050, %v1092
        %1101 = vrot.lane.b32.xlu0 %v741, 1
        %v1102 = vpop.permute.xlu0 %1101
        %1103 = vrot.lane.b32.xlu0 %v743, 1
        %v1104 = vpop.permute.xlu0 %1103
        %1105 = vrot.lane.b32.xlu0 %v812, 1
        %v1106 = vpop.permute.xlu0 %1105
        %1107 = vrot.lane.b32.xlu0 %v814, 1
        %v1108 = vpop.permute.xlu0 %1107
        %1109 = vrot.lane.b32.xlu0 %v883, 1
        %v1110 = vpop.permute.xlu0 %1109
        %1111 = vrot.lane.b32.xlu0 %v885, 1
        %v1112 = vpop.permute.xlu0 %1111
        %1113 = vrot.lane.b32.xlu0 %v954, 1
        %v1114 = vpop.permute.xlu0 %1113
        %1115 = vrot.lane.b32.xlu0 %v956, 1
        %v1116 = vpop.permute.xlu0 %1115
        %vm1117 = vcmp.lt.s32.totalorder %v975, 1
        %v1118 = vsel %vm1117, %v1114, %v1116
        %v1119 = vsel %vm1117, %v1112, %v1114
        %v1120 = vsel %vm1117, %v1110, %v1112
        %v1121 = vsel %vm1117, %v1108, %v1110
        %v1122 = vsel %vm1117, %v1106, %v1108
        %v1123 = vsel %vm1117, %v1104, %v1106
        %v1124 = vsel %vm1117, %v1102, %v1104
        %v1125 = vsel %vm1117, %v1116, %v1102
        %s1126 = scalar_lea.vmem %s2, 768
        %v1127 = vld [vmem:[%s1126] sm:$0xff]
        %v1128 = vld [vmem:[%s1126 + $0x8] sm:$0xff]
        %v1129 = vld [vmem:[%s1126 + $0x10] sm:$0xff]
        %v1130 = vld [vmem:[%s1126 + $0x18] sm:$0xff]
        %v1131 = vld [vmem:[%s1126 + $0x20] sm:$0xff]
        %v1132 = vld [vmem:[%s1126 + $0x28] sm:$0xff]
        %v1133 = vld [vmem:[%s1126 + $0x30] sm:$0xff]
        %v1134 = vld [vmem:[%s1126 + $0x38] sm:$0xff]
        %v1135 = vmul.f32 %v1125, %v1127
        %v1136 = vmul.f32 %v1124, %v1128
        %v1137 = vmul.f32 %v1123, %v1129
        %v1138 = vmul.f32 %v1122, %v1130
        %v1139 = vmul.f32 %v1121, %v1131
        %v1140 = vmul.f32 %v1120, %v1132
        %v1141 = vmul.f32 %v1119, %v1133
        %v1142 = vmul.f32 %v1118, %v1134
        %v1143 = vadd.f32 %v1093, %v1135
        %v1144 = vadd.f32 %v1094, %v1136
        %v1145 = vadd.f32 %v1095, %v1137
        %v1146 = vadd.f32 %v1096, %v1138
        %v1147 = vadd.f32 %v1097, %v1139
        %v1148 = vadd.f32 %v1098, %v1140
        %v1149 = vadd.f32 %v1099, %v1141
        %v1150 = vadd.f32 %v1100, %v1142
        %s1151 = scalar_lea.vmem %s2, 1024
        %v1152 = vld [vmem:[%s1151] sm:$0xff]
        %v1153 = vld [vmem:[%s1151 + $0x8] sm:$0xff]
        %v1154 = vld [vmem:[%s1151 + $0x10] sm:$0xff]
        %v1155 = vld [vmem:[%s1151 + $0x18] sm:$0xff]
        %v1156 = vld [vmem:[%s1151 + $0x20] sm:$0xff]
        %v1157 = vld [vmem:[%s1151 + $0x28] sm:$0xff]
        %v1158 = vld [vmem:[%s1151 + $0x30] sm:$0xff]
        %v1159 = vld [vmem:[%s1151 + $0x38] sm:$0xff]
        %v1160 = vmul.f32 %v741, %v1152
        %v1161 = vmul.f32 %v743, %v1153
        %v1162 = vmul.f32 %v812, %v1154
        %v1163 = vmul.f32 %v814, %v1155
        %v1164 = vmul.f32 %v883, %v1156
        %v1165 = vmul.f32 %v885, %v1157
        %v1166 = vmul.f32 %v954, %v1158
        %v1167 = vmul.f32 %v956, %v1159
        %v1168 = vadd.f32 %v1143, %v1160
        %v1169 = vadd.f32 %v1144, %v1161
        %v1170 = vadd.f32 %v1145, %v1162
        %v1171 = vadd.f32 %v1146, %v1163
        %v1172 = vadd.f32 %v1147, %v1164
        %v1173 = vadd.f32 %v1148, %v1165
        %v1174 = vadd.f32 %v1149, %v1166
        %v1175 = vadd.f32 %v1150, %v1167
        %1176 = vrot.lane.b32.xlu0 %v741, 127
        %v1177 = vpop.permute.xlu0 %1176
        %1178 = vrot.lane.b32.xlu0 %v743, 127
        %v1179 = vpop.permute.xlu0 %1178
        %1180 = vrot.lane.b32.xlu0 %v812, 127
        %v1181 = vpop.permute.xlu0 %1180
        %1182 = vrot.lane.b32.xlu0 %v814, 127
        %v1183 = vpop.permute.xlu0 %1182
        %1184 = vrot.lane.b32.xlu0 %v883, 127
        %v1185 = vpop.permute.xlu0 %1184
        %1186 = vrot.lane.b32.xlu0 %v885, 127
        %v1187 = vpop.permute.xlu0 %1186
        %1188 = vrot.lane.b32.xlu0 %v954, 127
        %v1189 = vpop.permute.xlu0 %1188
        %1190 = vrot.lane.b32.xlu0 %v956, 127
        %v1191 = vpop.permute.xlu0 %1190
        %vm1192 = vcmp.lt.s32.totalorder %v975, 127
        %v1193 = vsel %vm1192, %v1189, %v1191
        %v1194 = vsel %vm1192, %v1187, %v1189
        %v1195 = vsel %vm1192, %v1185, %v1187
        %v1196 = vsel %vm1192, %v1183, %v1185
        %v1197 = vsel %vm1192, %v1181, %v1183
        %v1198 = vsel %vm1192, %v1179, %v1181
        %v1199 = vsel %vm1192, %v1177, %v1179
        %v1200 = vsel %vm1192, %v1191, %v1177
        %s1201 = scalar_lea.vmem %s2, 1280
        %v1202 = vld [vmem:[%s1201] sm:$0xff]
        %v1203 = vld [vmem:[%s1201 + $0x8] sm:$0xff]
        %v1204 = vld [vmem:[%s1201 + $0x10] sm:$0xff]
        %v1205 = vld [vmem:[%s1201 + $0x18] sm:$0xff]
        %v1206 = vld [vmem:[%s1201 + $0x20] sm:$0xff]
        %v1207 = vld [vmem:[%s1201 + $0x28] sm:$0xff]
        %v1208 = vld [vmem:[%s1201 + $0x30] sm:$0xff]
        %v1209 = vld [vmem:[%s1201 + $0x38] sm:$0xff]
        %v1210 = vmul.f32 %v1199, %v1202
        %v1211 = vmul.f32 %v1198, %v1203
        %v1212 = vmul.f32 %v1197, %v1204
        %v1213 = vmul.f32 %v1196, %v1205
        %v1214 = vmul.f32 %v1195, %v1206
        %v1215 = vmul.f32 %v1194, %v1207
        %v1216 = vmul.f32 %v1193, %v1208
        %v1217 = vmul.f32 %v1200, %v1209
        %v1218 = vadd.f32 %v1168, %v1210
        %v1219 = vadd.f32 %v1169, %v1211
        %v1220 = vadd.f32 %v1170, %v1212
        %v1221 = vadd.f32 %v1171, %v1213
        %v1222 = vadd.f32 %v1172, %v1214
        %v1223 = vadd.f32 %v1173, %v1215
        %v1224 = vadd.f32 %v1174, %v1216
        %v1225 = vadd.f32 %v1175, %v1217
        %1226 = vrot.lane.b32.xlu0 %v741, 97
        %v1227 = vpop.permute.xlu0 %1226
        %1228 = vrot.lane.b32.xlu0 %v743, 97
        %v1229 = vpop.permute.xlu0 %1228
        %1230 = vrot.lane.b32.xlu0 %v812, 97
        %v1231 = vpop.permute.xlu0 %1230
        %1232 = vrot.lane.b32.xlu0 %v814, 97
        %v1233 = vpop.permute.xlu0 %1232
        %1234 = vrot.lane.b32.xlu0 %v883, 97
        %v1235 = vpop.permute.xlu0 %1234
        %1236 = vrot.lane.b32.xlu0 %v885, 97
        %v1237 = vpop.permute.xlu0 %1236
        %1238 = vrot.lane.b32.xlu0 %v954, 97
        %v1239 = vpop.permute.xlu0 %1238
        %1240 = vrot.lane.b32.xlu0 %v956, 97
        %v1241 = vpop.permute.xlu0 %1240
        %vm1242 = vcmp.lt.s32.totalorder %v975, 97
        %v1243 = vsel %vm1242, %v1239, %v1241
        %v1244 = vsel %vm1242, %v1237, %v1239
        %v1245 = vsel %vm1242, %v1235, %v1237
        %v1246 = vsel %vm1242, %v1233, %v1235
        %v1247 = vsel %vm1242, %v1231, %v1233
        %v1248 = vsel %vm1242, %v1229, %v1231
        %v1249 = vsel %vm1242, %v1227, %v1229
        %v1250 = vsel %vm1242, %v1241, %v1227
        %s1251 = scalar_lea.vmem %s2, 1536
        %v1252 = vld [vmem:[%s1251] sm:$0xff]
        %v1253 = vld [vmem:[%s1251 + $0x8] sm:$0xff]
        %v1254 = vld [vmem:[%s1251 + $0x10] sm:$0xff]
        %v1255 = vld [vmem:[%s1251 + $0x18] sm:$0xff]
        %v1256 = vld [vmem:[%s1251 + $0x20] sm:$0xff]
        %v1257 = vld [vmem:[%s1251 + $0x28] sm:$0xff]
        %v1258 = vld [vmem:[%s1251 + $0x30] sm:$0xff]
        %v1259 = vld [vmem:[%s1251 + $0x38] sm:$0xff]
        %v1260 = vmul.f32 %v1249, %v1252
        %v1261 = vmul.f32 %v1248, %v1253
        %v1262 = vmul.f32 %v1247, %v1254
        %v1263 = vmul.f32 %v1246, %v1255
        %v1264 = vmul.f32 %v1245, %v1256
        %v1265 = vmul.f32 %v1244, %v1257
        %v1266 = vmul.f32 %v1243, %v1258
        %v1267 = vmul.f32 %v1250, %v1259
        %v1268 = vadd.f32 %v1218, %v1260
        %v1269 = vadd.f32 %v1219, %v1261
        %v1270 = vadd.f32 %v1220, %v1262
        %v1271 = vadd.f32 %v1221, %v1263
        %v1272 = vadd.f32 %v1222, %v1264
        %v1273 = vadd.f32 %v1223, %v1265
        %v1274 = vadd.f32 %v1224, %v1266
        %v1275 = vadd.f32 %v1225, %v1267
        %1276 = vrot.lane.b32.xlu0 %v741, 96
        %v1277 = vpop.permute.xlu0 %1276
        %1278 = vrot.lane.b32.xlu0 %v743, 96
        %v1279 = vpop.permute.xlu0 %1278
        %1280 = vrot.lane.b32.xlu0 %v812, 96
        %v1281 = vpop.permute.xlu0 %1280
        %1282 = vrot.lane.b32.xlu0 %v814, 96
        %v1283 = vpop.permute.xlu0 %1282
        %1284 = vrot.lane.b32.xlu0 %v883, 96
        %v1285 = vpop.permute.xlu0 %1284
        %1286 = vrot.lane.b32.xlu0 %v885, 96
        %v1287 = vpop.permute.xlu0 %1286
        %1288 = vrot.lane.b32.xlu0 %v954, 96
        %v1289 = vpop.permute.xlu0 %1288
        %1290 = vrot.lane.b32.xlu0 %v956, 96
        %v1291 = vpop.permute.xlu0 %1290
        %vm1292 = vcmp.lt.s32.totalorder %v975, 96
        %v1293 = vsel %vm1292, %v1289, %v1291
        %v1294 = vsel %vm1292, %v1287, %v1289
        %v1295 = vsel %vm1292, %v1285, %v1287
        %v1296 = vsel %vm1292, %v1283, %v1285
        %v1297 = vsel %vm1292, %v1281, %v1283
        %v1298 = vsel %vm1292, %v1279, %v1281
        %v1299 = vsel %vm1292, %v1277, %v1279
        %v1300 = vsel %vm1292, %v1291, %v1277
        %s1301 = scalar_lea.vmem %s2, 1792
        %v1302 = vld [vmem:[%s1301] sm:$0xff]
        %v1303 = vld [vmem:[%s1301 + $0x8] sm:$0xff]
        %v1304 = vld [vmem:[%s1301 + $0x10] sm:$0xff]
        %v1305 = vld [vmem:[%s1301 + $0x18] sm:$0xff]
        %v1306 = vld [vmem:[%s1301 + $0x20] sm:$0xff]
        %v1307 = vld [vmem:[%s1301 + $0x28] sm:$0xff]
        %v1308 = vld [vmem:[%s1301 + $0x30] sm:$0xff]
        %v1309 = vld [vmem:[%s1301 + $0x38] sm:$0xff]
        %v1310 = vmul.f32 %v1299, %v1302
        %v1311 = vmul.f32 %v1298, %v1303
        %v1312 = vmul.f32 %v1297, %v1304
        %v1313 = vmul.f32 %v1296, %v1305
        %v1314 = vmul.f32 %v1295, %v1306
        %v1315 = vmul.f32 %v1294, %v1307
        %v1316 = vmul.f32 %v1293, %v1308
        %v1317 = vmul.f32 %v1300, %v1309
        %v1318 = vadd.f32 %v1268, %v1310
        %v1319 = vadd.f32 %v1269, %v1311
        %v1320 = vadd.f32 %v1270, %v1312
        %v1321 = vadd.f32 %v1271, %v1313
        %v1322 = vadd.f32 %v1272, %v1314
        %v1323 = vadd.f32 %v1273, %v1315
        %v1324 = vadd.f32 %v1274, %v1316
        %v1325 = vadd.f32 %v1275, %v1317
        %1326 = vrot.lane.b32.xlu0 %v741, 95
        %v1327 = vpop.permute.xlu0 %1326
        %1328 = vrot.lane.b32.xlu0 %v743, 95
        %v1329 = vpop.permute.xlu0 %1328
        %1330 = vrot.lane.b32.xlu0 %v812, 95
        %v1331 = vpop.permute.xlu0 %1330
        %1332 = vrot.lane.b32.xlu0 %v814, 95
        %v1333 = vpop.permute.xlu0 %1332
        %1334 = vrot.lane.b32.xlu0 %v883, 95
        %v1335 = vpop.permute.xlu0 %1334
        %1336 = vrot.lane.b32.xlu0 %v885, 95
        %v1337 = vpop.permute.xlu0 %1336
        %1338 = vrot.lane.b32.xlu0 %v954, 95
        %v1339 = vpop.permute.xlu0 %1338
        %1340 = vrot.lane.b32.xlu0 %v956, 95
        %v1341 = vpop.permute.xlu0 %1340
        %vm1342 = vcmp.lt.s32.totalorder %v975, 95
        %v1343 = vsel %vm1342, %v1339, %v1341
        %v1344 = vsel %vm1342, %v1337, %v1339
        %v1345 = vsel %vm1342, %v1335, %v1337
        %v1346 = vsel %vm1342, %v1333, %v1335
        %v1347 = vsel %vm1342, %v1331, %v1333
        %v1348 = vsel %vm1342, %v1329, %v1331
        %v1349 = vsel %vm1342, %v1327, %v1329
        %v1350 = vsel %vm1342, %v1341, %v1327
        %s1351 = scalar_lea.vmem %s2, 2048
        %v1352 = vld [vmem:[%s1351] sm:$0xff]
        %v1353 = vld [vmem:[%s1351 + $0x8] sm:$0xff]
        %v1354 = vld [vmem:[%s1351 + $0x10] sm:$0xff]
        %v1355 = vld [vmem:[%s1351 + $0x18] sm:$0xff]
        %v1356 = vld [vmem:[%s1351 + $0x20] sm:$0xff]
        %v1357 = vld [vmem:[%s1351 + $0x28] sm:$0xff]
        %v1358 = vld [vmem:[%s1351 + $0x30] sm:$0xff]
        %v1359 = vld [vmem:[%s1351 + $0x38] sm:$0xff]
        %v1360 = vmul.f32 %v1349, %v1352
        %v1361 = vmul.f32 %v1348, %v1353
        %v1362 = vmul.f32 %v1347, %v1354
        %v1363 = vmul.f32 %v1346, %v1355
        %v1364 = vmul.f32 %v1345, %v1356
        %v1365 = vmul.f32 %v1344, %v1357
        %v1366 = vmul.f32 %v1343, %v1358
        %v1367 = vmul.f32 %v1350, %v1359
        %v1368 = vadd.f32 %v1318, %v1360
        %v1369 = vadd.f32 %v1319, %v1361
        %v1370 = vadd.f32 %v1320, %v1362
        %v1371 = vadd.f32 %v1321, %v1363
        %v1372 = vadd.f32 %v1322, %v1364
        %v1373 = vadd.f32 %v1323, %v1365
        %v1374 = vadd.f32 %v1324, %v1366
        %v1375 = vadd.f32 %v1325, %v1367
        %1377 = vset.pattern.permute.xlu0 0
        %1378 = vperm.xlu0 %1377, %v406
        %v1379 = vpop.permute.xlu0 %1378
        %v1381 = vadd.f32 %v1368, %v1379
        %v1382 = vadd.f32 %v1369, %v1379
        %v1383 = vadd.f32 %v1370, %v1379
        %v1384 = vadd.f32 %v1371, %v1379
        %v1385 = vadd.f32 %v1372, %v1379
        %v1386 = vadd.f32 %v1373, %v1379
        %v1387 = vadd.f32 %v1374, %v1379
        %v1388 = vadd.f32 %v1375, %v1379
        %v1389 = vmul.f32 %v1381, 0.5
        %v1390 = vmul.f32 %v1382, 0.5
        %v1391 = vmul.f32 %v1383, 0.5
        %v1392 = vmul.f32 %v1384, 0.5
        %v1393 = vmul.f32 %v1385, 0.5
        %v1394 = vmul.f32 %v1386, 0.5
        %v1395 = vmul.f32 %v1387, 0.5
        %v1396 = vmul.f32 %v1388, 0.5
        %v1397 = vmul.f32 %v1381, 0.044715
        %v1398 = vmul.f32 %v1382, 0.044715
        %v1399 = vmul.f32 %v1383, 0.044715
        %v1400 = vmul.f32 %v1384, 0.044715
        %v1401 = vmul.f32 %v1385, 0.044715
        %v1402 = vmul.f32 %v1386, 0.044715
        %v1403 = vmul.f32 %v1387, 0.044715
        %v1404 = vmul.f32 %v1388, 0.044715
        %v1405 = vmul.f32 %v1397, %v1381
        %v1406 = vmul.f32 %v1398, %v1382
        %v1407 = vmul.f32 %v1399, %v1383
        %v1408 = vmul.f32 %v1400, %v1384
        %v1409 = vmul.f32 %v1401, %v1385
        %v1410 = vmul.f32 %v1402, %v1386
        %v1411 = vmul.f32 %v1403, %v1387
        %v1412 = vmul.f32 %v1404, %v1388
        %v1413 = vmul.f32 %v1405, %v1381
        %v1414 = vmul.f32 %v1406, %v1382
        %v1415 = vmul.f32 %v1407, %v1383
        %v1416 = vmul.f32 %v1408, %v1384
        %v1417 = vmul.f32 %v1409, %v1385
        %v1418 = vmul.f32 %v1410, %v1386
        %v1419 = vmul.f32 %v1411, %v1387
        %v1420 = vmul.f32 %v1412, %v1388
        %v1421 = vadd.f32 %v1381, %v1413
        %v1422 = vadd.f32 %v1382, %v1414
        %v1423 = vadd.f32 %v1383, %v1415
        %v1424 = vadd.f32 %v1384, %v1416
        %v1425 = vadd.f32 %v1385, %v1417
        %v1426 = vadd.f32 %v1386, %v1418
        %v1427 = vadd.f32 %v1387, %v1419
        %v1428 = vadd.f32 %v1388, %v1420
        %v1429 = vmul.f32 %v1421, 0.7978846
        %v1430 = vmul.f32 %v1422, 0.7978846
        %v1431 = vmul.f32 %v1423, 0.7978846
        %v1432 = vmul.f32 %v1424, 0.7978846
        %v1433 = vmul.f32 %v1425, 0.7978846
        %v1434 = vmul.f32 %v1426, 0.7978846
        %v1435 = vmul.f32 %v1427, 0.7978846
        %v1436 = vmul.f32 %v1428, 0.7978846
        %v1437 = vtanh.pop %v1429
        %v1438 = vtanh.pop %v1430
        %v1439 = vtanh.pop %v1431
        %v1440 = vtanh.pop %v1432
        %v1441 = vtanh.pop %v1433
        %v1442 = vtanh.pop %v1434
        %v1443 = vtanh.pop %v1435
        %v1444 = vtanh.pop %v1436
        %v1445 = vadd.f32 %v1437, 1.0
        %v1446 = vadd.f32 %v1438, 1.0
        %v1447 = vadd.f32 %v1439, 1.0
        %v1448 = vadd.f32 %v1440, 1.0
        %v1449 = vadd.f32 %v1441, 1.0
        %v1450 = vadd.f32 %v1442, 1.0
        %v1451 = vadd.f32 %v1443, 1.0
        %v1452 = vadd.f32 %v1444, 1.0
        %v1453 = vmul.f32 %v1389, %v1445
        %v1454 = vmul.f32 %v1390, %v1446
        %v1455 = vmul.f32 %v1391, %v1447
        %v1456 = vmul.f32 %v1392, %v1448
        %v1457 = vmul.f32 %v1393, %v1449
        %v1458 = vmul.f32 %v1394, %v1450
        %v1459 = vmul.f32 %v1395, %v1451
        %v1460 = vmul.f32 %v1396, %v1452
        %1462 = vset.pattern.permute.xlu0 0
        %1463 = vperm.xlu0 %1462, %v410
        %v1464 = vpop.permute.xlu0 %1463
        %vm1466 = vcmask 64512
        %v1468 = vsel %vm1466, %v413, 0
        %1470 = vmatprep.subr.mxu0 0.0
        %1471 = vmatpush1.msra.mxu0 0.0
        %1472 = vmatprep.subr.mxu0 0.0
        %1473 = vmatpush1.msra.mxu0 0.0
        %1474 = vmatprep.subr.mxu0 0.0
        %1475 = vmatpush1.msra.mxu0 0.0
        %1476 = vmatprep.subr.mxu0 0.0
        %1477 = vmatpush1.msra.mxu0 0.0
        %1478 = vmatprep.subr.mxu0 0.0
        %1479 = vmatpush1.msra.mxu0 0.0
        %1480 = vmatprep.subr.mxu0 0.0
        %1481 = vmatpush1.msra.mxu0 0.0
        %1482 = vmatprep.subr.mxu0 0.0
        %1483 = vmatpush1.msra.mxu0 0.0
        %1484 = vmatprep.subr.mxu0 0.0
        %1485 = vmatpush1.msra.mxu0 0.0
        %1486 = vmatprep.subr.mxu0 0.0
        %1487 = vmatpush1.msra.mxu0 0.0
        %1488 = vmatprep.subr.mxu0 0.0
        %1489 = vmatpush1.msra.mxu0 0.0
        %1490 = vmatprep.subr.mxu0 0.0
        %1491 = vmatpush1.msra.mxu0 0.0
        %1492 = vmatprep.subr.mxu0 0.0
        %1493 = vmatpush1.msra.mxu0 0.0
        %1494 = vmatprep.subr.mxu0 0.0
        %1495 = vmatpush1.msra.mxu0 0.0
        %1496 = vmatprep.subr.mxu0 0.0
        %1497 = vmatpush1.msra.mxu0 0.0
        %1498 = vmatprep.subr.mxu0 0.0
        %1499 = vmatpush1.msra.mxu0 0.0
        %1500 = vmatprep.subr.mxu0 %v1454
        %1501 = vmatpush1.msra.mxu0 %v1453
        %1502 = vmatprep.subr.mxu0 0.0
        %1503 = vmatpush2.msra.mxu0 0.0
        %1504 = vmatprep.subr.mxu0 0.0
        %1505 = vmatpush2.msra.mxu0 0.0
        %1506 = vmatprep.subr.mxu0 0.0
        %1507 = vmatpush2.msra.mxu0 0.0
        %1508 = vmatprep.subr.mxu0 0.0
        %1509 = vmatpush2.msra.mxu0 0.0
        %1510 = vmatprep.subr.mxu0 0.0
        %1511 = vmatpush2.msra.mxu0 0.0
        %1512 = vmatprep.subr.mxu0 0.0
        %1513 = vmatpush2.msra.mxu0 0.0
        %1514 = vmatprep.subr.mxu0 0.0
        %1515 = vmatpush2.msra.mxu0 0.0
        %1516 = vmatprep.subr.mxu0 0.0
        %1517 = vmatpush2.msra.mxu0 0.0
        %1518 = vmatprep.subr.mxu0 0.0
        %1519 = vmatpush2.msra.mxu0 0.0
        %1520 = vmatprep.subr.mxu0 0.0
        %1521 = vmatpush2.msra.mxu0 0.0
        %1522 = vmatprep.subr.mxu0 0.0
        %1523 = vmatpush2.msra.mxu0 0.0
        %1524 = vmatprep.subr.mxu0 0.0
        %1525 = vmatpush2.msra.mxu0 0.0
        %1526 = vmatprep.subr.mxu0 0.0
        %1527 = vmatpush2.msra.mxu0 0.0
        %1528 = vmatprep.subr.mxu0 0.0
        %1529 = vmatpush2.msra.mxu0 0.0
        %1530 = vmatprep.subr.mxu0 0.0
        %1531 = vmatpush2.msra.mxu0 0.0
        %1532 = vmatprep.subr.mxu0 0.0
        %1533 = vmatpush2.msra.mxu0 0.0
        %1534 = vmatprep.mubr.f32.mxu0 0.0
        %1535 = vmatmul.mubr.f32.gmra.mxu0 %v1468
        %v1536 = vpop.f32.mrf.mxu0
        %v1537 = vadd.f32 %v1464, %v1536
        %v1538 = vpop.f32.mrf.mxu0
        %v1539 = vadd.f32 %v1464, %v1538
        %1540 = vdwg.mxu0
        %1541 = vmatprep.subr.mxu0 0.0
        %1542 = vmatpush1.msra.mxu0 0.0
        %1543 = vmatprep.subr.mxu0 0.0
        %1544 = vmatpush1.msra.mxu0 0.0
        %1545 = vmatprep.subr.mxu0 0.0
        %1546 = vmatpush1.msra.mxu0 0.0
        %1547 = vmatprep.subr.mxu0 0.0
        %1548 = vmatpush1.msra.mxu0 0.0
        %1549 = vmatprep.subr.mxu0 0.0
        %1550 = vmatpush1.msra.mxu0 0.0
        %1551 = vmatprep.subr.mxu0 0.0
        %1552 = vmatpush1.msra.mxu0 0.0
        %1553 = vmatprep.subr.mxu0 0.0
        %1554 = vmatpush1.msra.mxu0 0.0
        %1555 = vmatprep.subr.mxu0 0.0
        %1556 = vmatpush1.msra.mxu0 0.0
        %1557 = vmatprep.subr.mxu0 0.0
        %1558 = vmatpush1.msra.mxu0 0.0
        %1559 = vmatprep.subr.mxu0 0.0
        %1560 = vmatpush1.msra.mxu0 0.0
        %1561 = vmatprep.subr.mxu0 0.0
        %1562 = vmatpush1.msra.mxu0 0.0
        %1563 = vmatprep.subr.mxu0 0.0
        %1564 = vmatpush1.msra.mxu0 0.0
        %1565 = vmatprep.subr.mxu0 0.0
        %1566 = vmatpush1.msra.mxu0 0.0
        %1567 = vmatprep.subr.mxu0 0.0
        %1568 = vmatpush1.msra.mxu0 0.0
        %1569 = vmatprep.subr.mxu0 0.0
        %1570 = vmatpush1.msra.mxu0 0.0
        %1571 = vmatprep.subr.mxu0 %v1456
        %1572 = vmatpush1.msra.mxu0 %v1455
        %1573 = vmatprep.subr.mxu0 0.0
        %1574 = vmatpush2.msra.mxu0 0.0
        %1575 = vmatprep.subr.mxu0 0.0
        %1576 = vmatpush2.msra.mxu0 0.0
        %1577 = vmatprep.subr.mxu0 0.0
        %1578 = vmatpush2.msra.mxu0 0.0
        %1579 = vmatprep.subr.mxu0 0.0
        %1580 = vmatpush2.msra.mxu0 0.0
        %1581 = vmatprep.subr.mxu0 0.0
        %1582 = vmatpush2.msra.mxu0 0.0
        %1583 = vmatprep.subr.mxu0 0.0
        %1584 = vmatpush2.msra.mxu0 0.0
        %1585 = vmatprep.subr.mxu0 0.0
        %1586 = vmatpush2.msra.mxu0 0.0
        %1587 = vmatprep.subr.mxu0 0.0
        %1588 = vmatpush2.msra.mxu0 0.0
        %1589 = vmatprep.subr.mxu0 0.0
        %1590 = vmatpush2.msra.mxu0 0.0
        %1591 = vmatprep.subr.mxu0 0.0
        %1592 = vmatpush2.msra.mxu0 0.0
        %1593 = vmatprep.subr.mxu0 0.0
        %1594 = vmatpush2.msra.mxu0 0.0
        %1595 = vmatprep.subr.mxu0 0.0
        %1596 = vmatpush2.msra.mxu0 0.0
        %1597 = vmatprep.subr.mxu0 0.0
        %1598 = vmatpush2.msra.mxu0 0.0
        %1599 = vmatprep.subr.mxu0 0.0
        %1600 = vmatpush2.msra.mxu0 0.0
        %1601 = vmatprep.subr.mxu0 0.0
        %1602 = vmatpush2.msra.mxu0 0.0
        %1603 = vmatprep.subr.mxu0 0.0
        %1604 = vmatpush2.msra.mxu0 0.0
        %1605 = vmatprep.mubr.f32.mxu0 0.0
        %1606 = vmatmul.mubr.f32.gmra.mxu0 %v1468
        %v1607 = vpop.f32.mrf.mxu0
        %v1608 = vadd.f32 %v1464, %v1607
        %v1609 = vpop.f32.mrf.mxu0
        %v1610 = vadd.f32 %v1464, %v1609
        %1611 = vdwg.mxu0
        %1612 = vmatprep.subr.mxu0 0.0
        %1613 = vmatpush1.msra.mxu0 0.0
        %1614 = vmatprep.subr.mxu0 0.0
        %1615 = vmatpush1.msra.mxu0 0.0
        %1616 = vmatprep.subr.mxu0 0.0
        %1617 = vmatpush1.msra.mxu0 0.0
        %1618 = vmatprep.subr.mxu0 0.0
        %1619 = vmatpush1.msra.mxu0 0.0
        %1620 = vmatprep.subr.mxu0 0.0
        %1621 = vmatpush1.msra.mxu0 0.0
        %1622 = vmatprep.subr.mxu0 0.0
        %1623 = vmatpush1.msra.mxu0 0.0
        %1624 = vmatprep.subr.mxu0 0.0
        %1625 = vmatpush1.msra.mxu0 0.0
        %1626 = vmatprep.subr.mxu0 0.0
        %1627 = vmatpush1.msra.mxu0 0.0
        %1628 = vmatprep.subr.mxu0 0.0
        %1629 = vmatpush1.msra.mxu0 0.0
        %1630 = vmatprep.subr.mxu0 0.0
        %1631 = vmatpush1.msra.mxu0 0.0
        %1632 = vmatprep.subr.mxu0 0.0
        %1633 = vmatpush1.msra.mxu0 0.0
        %1634 = vmatprep.subr.mxu0 0.0
        %1635 = vmatpush1.msra.mxu0 0.0
        %1636 = vmatprep.subr.mxu0 0.0
        %1637 = vmatpush1.msra.mxu0 0.0
        %1638 = vmatprep.subr.mxu0 0.0
        %1639 = vmatpush1.msra.mxu0 0.0
        %1640 = vmatprep.subr.mxu0 0.0
        %1641 = vmatpush1.msra.mxu0 0.0
        %1642 = vmatprep.subr.mxu0 %v1458
        %1643 = vmatpush1.msra.mxu0 %v1457
        %1644 = vmatprep.subr.mxu0 0.0
        %1645 = vmatpush2.msra.mxu0 0.0
        %1646 = vmatprep.subr.mxu0 0.0
        %1647 = vmatpush2.msra.mxu0 0.0
        %1648 = vmatprep.subr.mxu0 0.0
        %1649 = vmatpush2.msra.mxu0 0.0
        %1650 = vmatprep.subr.mxu0 0.0
        %1651 = vmatpush2.msra.mxu0 0.0
        %1652 = vmatprep.subr.mxu0 0.0
        %1653 = vmatpush2.msra.mxu0 0.0
        %1654 = vmatprep.subr.mxu0 0.0
        %1655 = vmatpush2.msra.mxu0 0.0
        %1656 = vmatprep.subr.mxu0 0.0
        %1657 = vmatpush2.msra.mxu0 0.0
        %1658 = vmatprep.subr.mxu0 0.0
        %1659 = vmatpush2.msra.mxu0 0.0
        %1660 = vmatprep.subr.mxu0 0.0
        %1661 = vmatpush2.msra.mxu0 0.0
        %1662 = vmatprep.subr.mxu0 0.0
        %1663 = vmatpush2.msra.mxu0 0.0
        %1664 = vmatprep.subr.mxu0 0.0
        %1665 = vmatpush2.msra.mxu0 0.0
        %1666 = vmatprep.subr.mxu0 0.0
        %1667 = vmatpush2.msra.mxu0 0.0
        %1668 = vmatprep.subr.mxu0 0.0
        %1669 = vmatpush2.msra.mxu0 0.0
        %1670 = vmatprep.subr.mxu0 0.0
        %1671 = vmatpush2.msra.mxu0 0.0
        %1672 = vmatprep.subr.mxu0 0.0
        %1673 = vmatpush2.msra.mxu0 0.0
        %1674 = vmatprep.subr.mxu0 0.0
        %1675 = vmatpush2.msra.mxu0 0.0
        %1676 = vmatprep.mubr.f32.mxu0 0.0
        %1677 = vmatmul.mubr.f32.gmra.mxu0 %v1468
        %v1678 = vpop.f32.mrf.mxu0
        %v1679 = vadd.f32 %v1464, %v1678
        %v1680 = vpop.f32.mrf.mxu0
        %v1681 = vadd.f32 %v1464, %v1680
        %1682 = vdwg.mxu0
        %1683 = vmatprep.subr.mxu0 0.0
        %1684 = vmatpush1.msra.mxu0 0.0
        %1685 = vmatprep.subr.mxu0 0.0
        %1686 = vmatpush1.msra.mxu0 0.0
        %1687 = vmatprep.subr.mxu0 0.0
        %1688 = vmatpush1.msra.mxu0 0.0
        %1689 = vmatprep.subr.mxu0 0.0
        %1690 = vmatpush1.msra.mxu0 0.0
        %1691 = vmatprep.subr.mxu0 0.0
        %1692 = vmatpush1.msra.mxu0 0.0
        %1693 = vmatprep.subr.mxu0 0.0
        %1694 = vmatpush1.msra.mxu0 0.0
        %1695 = vmatprep.subr.mxu0 0.0
        %1696 = vmatpush1.msra.mxu0 0.0
        %1697 = vmatprep.subr.mxu0 0.0
        %1698 = vmatpush1.msra.mxu0 0.0
        %1699 = vmatprep.subr.mxu0 0.0
        %1700 = vmatpush1.msra.mxu0 0.0
        %1701 = vmatprep.subr.mxu0 0.0
        %1702 = vmatpush1.msra.mxu0 0.0
        %1703 = vmatprep.subr.mxu0 0.0
        %1704 = vmatpush1.msra.mxu0 0.0
        %1705 = vmatprep.subr.mxu0 0.0
        %1706 = vmatpush1.msra.mxu0 0.0
        %1707 = vmatprep.subr.mxu0 0.0
        %1708 = vmatpush1.msra.mxu0 0.0
        %1709 = vmatprep.subr.mxu0 0.0
        %1710 = vmatpush1.msra.mxu0 0.0
        %1711 = vmatprep.subr.mxu0 0.0
        %1712 = vmatpush1.msra.mxu0 0.0
        %1713 = vmatprep.subr.mxu0 %v1460
        %1714 = vmatpush1.msra.mxu0 %v1459
        %1715 = vmatprep.subr.mxu0 0.0
        %1716 = vmatpush2.msra.mxu0 0.0
        %1717 = vmatprep.subr.mxu0 0.0
        %1718 = vmatpush2.msra.mxu0 0.0
        %1719 = vmatprep.subr.mxu0 0.0
        %1720 = vmatpush2.msra.mxu0 0.0
        %1721 = vmatprep.subr.mxu0 0.0
        %1722 = vmatpush2.msra.mxu0 0.0
        %1723 = vmatprep.subr.mxu0 0.0
        %1724 = vmatpush2.msra.mxu0 0.0
        %1725 = vmatprep.subr.mxu0 0.0
        %1726 = vmatpush2.msra.mxu0 0.0
        %1727 = vmatprep.subr.mxu0 0.0
        %1728 = vmatpush2.msra.mxu0 0.0
        %1729 = vmatprep.subr.mxu0 0.0
        %1730 = vmatpush2.msra.mxu0 0.0
        %1731 = vmatprep.subr.mxu0 0.0
        %1732 = vmatpush2.msra.mxu0 0.0
        %1733 = vmatprep.subr.mxu0 0.0
        %1734 = vmatpush2.msra.mxu0 0.0
        %1735 = vmatprep.subr.mxu0 0.0
        %1736 = vmatpush2.msra.mxu0 0.0
        %1737 = vmatprep.subr.mxu0 0.0
        %1738 = vmatpush2.msra.mxu0 0.0
        %1739 = vmatprep.subr.mxu0 0.0
        %1740 = vmatpush2.msra.mxu0 0.0
        %1741 = vmatprep.subr.mxu0 0.0
        %1742 = vmatpush2.msra.mxu0 0.0
        %1743 = vmatprep.subr.mxu0 0.0
        %1744 = vmatpush2.msra.mxu0 0.0
        %1745 = vmatprep.subr.mxu0 0.0
        %1746 = vmatpush2.msra.mxu0 0.0
        %1747 = vmatprep.mubr.f32.mxu0 0.0
        %1748 = vmatmul.mubr.f32.gmra.mxu0 %v1468
        %v1749 = vpop.f32.mrf.mxu0
        %v1750 = vadd.f32 %v1464, %v1749
        %v1751 = vpop.f32.mrf.mxu0
        %v1752 = vadd.f32 %v1464, %v1751
        %1753 = vdwg.mxu0
        %v1754 = vmul.f32 %v1537, 0.5
        %v1755 = vmul.f32 %v1539, 0.5
        %v1756 = vmul.f32 %v1608, 0.5
        %v1757 = vmul.f32 %v1610, 0.5
        %v1758 = vmul.f32 %v1679, 0.5
        %v1759 = vmul.f32 %v1681, 0.5
        %v1760 = vmul.f32 %v1750, 0.5
        %v1761 = vmul.f32 %v1752, 0.5
        %v1762 = vmul.f32 %v1537, 0.044715
        %v1763 = vmul.f32 %v1539, 0.044715
        %v1764 = vmul.f32 %v1608, 0.044715
        %v1765 = vmul.f32 %v1610, 0.044715
        %v1766 = vmul.f32 %v1679, 0.044715
        %v1767 = vmul.f32 %v1681, 0.044715
        %v1768 = vmul.f32 %v1750, 0.044715
        %v1769 = vmul.f32 %v1752, 0.044715
        %v1770 = vmul.f32 %v1762, %v1537
        %v1771 = vmul.f32 %v1763, %v1539
        %v1772 = vmul.f32 %v1764, %v1608
        %v1773 = vmul.f32 %v1765, %v1610
        %v1774 = vmul.f32 %v1766, %v1679
        %v1775 = vmul.f32 %v1767, %v1681
        %v1776 = vmul.f32 %v1768, %v1750
        %v1777 = vmul.f32 %v1769, %v1752
        %v1778 = vmul.f32 %v1770, %v1537
        %v1779 = vmul.f32 %v1771, %v1539
        %v1780 = vmul.f32 %v1772, %v1608
        %v1781 = vmul.f32 %v1773, %v1610
        %v1782 = vmul.f32 %v1774, %v1679
        %v1783 = vmul.f32 %v1775, %v1681
        %v1784 = vmul.f32 %v1776, %v1750
        %v1785 = vmul.f32 %v1777, %v1752
        %v1786 = vadd.f32 %v1537, %v1778
        %v1787 = vadd.f32 %v1539, %v1779
        %v1788 = vadd.f32 %v1608, %v1780
        %v1789 = vadd.f32 %v1610, %v1781
        %v1790 = vadd.f32 %v1679, %v1782
        %v1791 = vadd.f32 %v1681, %v1783
        %v1792 = vadd.f32 %v1750, %v1784
        %v1793 = vadd.f32 %v1752, %v1785
        %v1794 = vmul.f32 %v1786, 0.7978846
        %v1795 = vmul.f32 %v1787, 0.7978846
        %v1796 = vmul.f32 %v1788, 0.7978846
        %v1797 = vmul.f32 %v1789, 0.7978846
        %v1798 = vmul.f32 %v1790, 0.7978846
        %v1799 = vmul.f32 %v1791, 0.7978846
        %v1800 = vmul.f32 %v1792, 0.7978846
        %v1801 = vmul.f32 %v1793, 0.7978846
        %v1802 = vtanh.pop %v1794
        %v1803 = vtanh.pop %v1795
        %v1804 = vtanh.pop %v1796
        %v1805 = vtanh.pop %v1797
        %v1806 = vtanh.pop %v1798
        %v1807 = vtanh.pop %v1799
        %v1808 = vtanh.pop %v1800
        %v1809 = vtanh.pop %v1801
        %v1810 = vadd.f32 %v1802, 1.0
        %v1811 = vadd.f32 %v1803, 1.0
        %v1812 = vadd.f32 %v1804, 1.0
        %v1813 = vadd.f32 %v1805, 1.0
        %v1814 = vadd.f32 %v1806, 1.0
        %v1815 = vadd.f32 %v1807, 1.0
        %v1816 = vadd.f32 %v1808, 1.0
        %v1817 = vadd.f32 %v1809, 1.0
        %v1818 = vmul.f32 %v1754, %v1810
        %v1819 = vmul.f32 %v1755, %v1811
        %v1820 = vmul.f32 %v1756, %v1812
        %v1821 = vmul.f32 %v1757, %v1813
        %v1822 = vmul.f32 %v1758, %v1814
        %v1823 = vmul.f32 %v1759, %v1815
        %v1824 = vmul.f32 %v1760, %v1816
        %v1825 = vmul.f32 %v1761, %v1817
        %v1826 = vld [vmem:[%s395] sm:$0xff]
        %v1827 = vld [vmem:[%s395 + $0x8] sm:$0xff]
        %v1828 = vld [vmem:[%s395 + $0x10] sm:$0xff]
        %v1829 = vld [vmem:[%s395 + $0x18] sm:$0xff]
        %v1830 = vld [vmem:[%s395 + $0x20] sm:$0xff]
        %v1831 = vld [vmem:[%s395 + $0x28] sm:$0xff]
        %v1832 = vld [vmem:[%s395 + $0x30] sm:$0xff]
        %v1833 = vld [vmem:[%s395 + $0x38] sm:$0xff]
        %1834 = vrot.lane.b32.xlu0 %v1826, 33
        %v1835 = vpop.permute.xlu0 %1834
        %1836 = vrot.lane.b32.xlu0 %v1827, 33
        %v1837 = vpop.permute.xlu0 %1836
        %1838 = vrot.lane.b32.xlu0 %v1828, 33
        %v1839 = vpop.permute.xlu0 %1838
        %1840 = vrot.lane.b32.xlu0 %v1829, 33
        %v1841 = vpop.permute.xlu0 %1840
        %1842 = vrot.lane.b32.xlu0 %v1830, 33
        %v1843 = vpop.permute.xlu0 %1842
        %1844 = vrot.lane.b32.xlu0 %v1831, 33
        %v1845 = vpop.permute.xlu0 %1844
        %1846 = vrot.lane.b32.xlu0 %v1832, 33
        %v1847 = vpop.permute.xlu0 %1846
        %1848 = vrot.lane.b32.xlu0 %v1833, 33
        %v1849 = vpop.permute.xlu0 %1848
        %v1850 = vsel %vm976, %v1847, %v1849
        %v1851 = vsel %vm976, %v1845, %v1847
        %v1852 = vsel %vm976, %v1843, %v1845
        %v1853 = vsel %vm976, %v1841, %v1843
        %v1854 = vsel %vm976, %v1839, %v1841
        %v1855 = vsel %vm976, %v1837, %v1839
        %v1856 = vsel %vm976, %v1835, %v1837
        %v1857 = vsel %vm976, %v1849, %v1835
        %v1858 = vld [vmem:[%s2 + $0x40] sm:$0xff]
        %v1859 = vld [vmem:[%s2 + $0x48] sm:$0xff]
        %v1860 = vld [vmem:[%s2 + $0x50] sm:$0xff]
        %v1861 = vld [vmem:[%s2 + $0x58] sm:$0xff]
        %v1862 = vld [vmem:[%s2 + $0x60] sm:$0xff]
        %v1863 = vld [vmem:[%s2 + $0x68] sm:$0xff]
        %v1864 = vld [vmem:[%s2 + $0x70] sm:$0xff]
        %v1865 = vld [vmem:[%s2 + $0x78] sm:$0xff]
        %v1866 = vmul.f32 %v1857, %v1858
        %v1867 = vmul.f32 %v1856, %v1859
        %v1868 = vmul.f32 %v1855, %v1860
        %v1869 = vmul.f32 %v1854, %v1861
        %v1870 = vmul.f32 %v1853, %v1862
        %v1871 = vmul.f32 %v1852, %v1863
        %v1872 = vmul.f32 %v1851, %v1864
        %v1873 = vmul.f32 %v1850, %v1865
        %1874 = vrot.lane.b32.xlu0 %v1826, 32
        %v1875 = vpop.permute.xlu0 %1874
        %1876 = vrot.lane.b32.xlu0 %v1827, 32
        %v1877 = vpop.permute.xlu0 %1876
        %1878 = vrot.lane.b32.xlu0 %v1828, 32
        %v1879 = vpop.permute.xlu0 %1878
        %1880 = vrot.lane.b32.xlu0 %v1829, 32
        %v1881 = vpop.permute.xlu0 %1880
        %1882 = vrot.lane.b32.xlu0 %v1830, 32
        %v1883 = vpop.permute.xlu0 %1882
        %1884 = vrot.lane.b32.xlu0 %v1831, 32
        %v1885 = vpop.permute.xlu0 %1884
        %1886 = vrot.lane.b32.xlu0 %v1832, 32
        %v1887 = vpop.permute.xlu0 %1886
        %1888 = vrot.lane.b32.xlu0 %v1833, 32
        %v1889 = vpop.permute.xlu0 %1888
        %v1890 = vsel %vm1017, %v1887, %v1889
        %v1891 = vsel %vm1017, %v1885, %v1887
        %v1892 = vsel %vm1017, %v1883, %v1885
        %v1893 = vsel %vm1017, %v1881, %v1883
        %v1894 = vsel %vm1017, %v1879, %v1881
        %v1895 = vsel %vm1017, %v1877, %v1879
        %v1896 = vsel %vm1017, %v1875, %v1877
        %v1897 = vsel %vm1017, %v1889, %v1875
        %v1898 = vld [vmem:[%s1026 + $0x40] sm:$0xff]
        %v1899 = vld [vmem:[%s1026 + $0x48] sm:$0xff]
        %v1900 = vld [vmem:[%s1026 + $0x50] sm:$0xff]
        %v1901 = vld [vmem:[%s1026 + $0x58] sm:$0xff]
        %v1902 = vld [vmem:[%s1026 + $0x60] sm:$0xff]
        %v1903 = vld [vmem:[%s1026 + $0x68] sm:$0xff]
        %v1904 = vld [vmem:[%s1026 + $0x70] sm:$0xff]
        %v1905 = vld [vmem:[%s1026 + $0x78] sm:$0xff]
        %v1906 = vmul.f32 %v1897, %v1898
        %v1907 = vmul.f32 %v1896, %v1899
        %v1908 = vmul.f32 %v1895, %v1900
        %v1909 = vmul.f32 %v1894, %v1901
        %v1910 = vmul.f32 %v1893, %v1902
        %v1911 = vmul.f32 %v1892, %v1903
        %v1912 = vmul.f32 %v1891, %v1904
        %v1913 = vmul.f32 %v1890, %v1905
        %v1914 = vadd.f32 %v1866, %v1906
        %v1915 = vadd.f32 %v1867, %v1907
        %v1916 = vadd.f32 %v1868, %v1908
        %v1917 = vadd.f32 %v1869, %v1909
        %v1918 = vadd.f32 %v1870, %v1910
        %v1919 = vadd.f32 %v1871, %v1911
        %v1920 = vadd.f32 %v1872, %v1912
        %v1921 = vadd.f32 %v1873, %v1913
        %1922 = vrot.lane.b32.xlu0 %v1826, 31
        %v1923 = vpop.permute.xlu0 %1922
        %1924 = vrot.lane.b32.xlu0 %v1827, 31
        %v1925 = vpop.permute.xlu0 %1924
        %1926 = vrot.lane.b32.xlu0 %v1828, 31
        %v1927 = vpop.permute.xlu0 %1926
        %1928 = vrot.lane.b32.xlu0 %v1829, 31
        %v1929 = vpop.permute.xlu0 %1928
        %1930 = vrot.lane.b32.xlu0 %v1830, 31
        %v1931 = vpop.permute.xlu0 %1930
        %1932 = vrot.lane.b32.xlu0 %v1831, 31
        %v1933 = vpop.permute.xlu0 %1932
        %1934 = vrot.lane.b32.xlu0 %v1832, 31
        %v1935 = vpop.permute.xlu0 %1934
        %1936 = vrot.lane.b32.xlu0 %v1833, 31
        %v1937 = vpop.permute.xlu0 %1936
        %v1938 = vsel %vm1067, %v1935, %v1937
        %v1939 = vsel %vm1067, %v1933, %v1935
        %v1940 = vsel %vm1067, %v1931, %v1933
        %v1941 = vsel %vm1067, %v1929, %v1931
        %v1942 = vsel %vm1067, %v1927, %v1929
        %v1943 = vsel %vm1067, %v1925, %v1927
        %v1944 = vsel %vm1067, %v1923, %v1925
        %v1945 = vsel %vm1067, %v1937, %v1923
        %v1946 = vld [vmem:[%s1076 + $0x40] sm:$0xff]
        %v1947 = vld [vmem:[%s1076 + $0x48] sm:$0xff]
        %v1948 = vld [vmem:[%s1076 + $0x50] sm:$0xff]
        %v1949 = vld [vmem:[%s1076 + $0x58] sm:$0xff]
        %v1950 = vld [vmem:[%s1076 + $0x60] sm:$0xff]
        %v1951 = vld [vmem:[%s1076 + $0x68] sm:$0xff]
        %v1952 = vld [vmem:[%s1076 + $0x70] sm:$0xff]
        %v1953 = vld [vmem:[%s1076 + $0x78] sm:$0xff]
        %v1954 = vmul.f32 %v1945, %v1946
        %v1955 = vmul.f32 %v1944, %v1947
        %v1956 = vmul.f32 %v1943, %v1948
        %v1957 = vmul.f32 %v1942, %v1949
        %v1958 = vmul.f32 %v1941, %v1950
        %v1959 = vmul.f32 %v1940, %v1951
        %v1960 = vmul.f32 %v1939, %v1952
        %v1961 = vmul.f32 %v1938, %v1953
        %v1962 = vadd.f32 %v1914, %v1954
        %v1963 = vadd.f32 %v1915, %v1955
        %v1964 = vadd.f32 %v1916, %v1956
        %v1965 = vadd.f32 %v1917, %v1957
        %v1966 = vadd.f32 %v1918, %v1958
        %v1967 = vadd.f32 %v1919, %v1959
        %v1968 = vadd.f32 %v1920, %v1960
        %v1969 = vadd.f32 %v1921, %v1961
        %1970 = vrot.lane.b32.xlu0 %v1826, 1
        %v1971 = vpop.permute.xlu0 %1970
        %1972 = vrot.lane.b32.xlu0 %v1827, 1
        %v1973 = vpop.permute.xlu0 %1972
        %1974 = vrot.lane.b32.xlu0 %v1828, 1
        %v1975 = vpop.permute.xlu0 %1974
        %1976 = vrot.lane.b32.xlu0 %v1829, 1
        %v1977 = vpop.permute.xlu0 %1976
        %1978 = vrot.lane.b32.xlu0 %v1830, 1
        %v1979 = vpop.permute.xlu0 %1978
        %1980 = vrot.lane.b32.xlu0 %v1831, 1
        %v1981 = vpop.permute.xlu0 %1980
        %1982 = vrot.lane.b32.xlu0 %v1832, 1
        %v1983 = vpop.permute.xlu0 %1982
        %1984 = vrot.lane.b32.xlu0 %v1833, 1
        %v1985 = vpop.permute.xlu0 %1984
        %v1986 = vsel %vm1117, %v1983, %v1985
        %v1987 = vsel %vm1117, %v1981, %v1983
        %v1988 = vsel %vm1117, %v1979, %v1981
        %v1989 = vsel %vm1117, %v1977, %v1979
        %v1990 = vsel %vm1117, %v1975, %v1977
        %v1991 = vsel %vm1117, %v1973, %v1975
        %v1992 = vsel %vm1117, %v1971, %v1973
        %v1993 = vsel %vm1117, %v1985, %v1971
        %v1994 = vld [vmem:[%s1126 + $0x40] sm:$0xff]
        %v1995 = vld [vmem:[%s1126 + $0x48] sm:$0xff]
        %v1996 = vld [vmem:[%s1126 + $0x50] sm:$0xff]
        %v1997 = vld [vmem:[%s1126 + $0x58] sm:$0xff]
        %v1998 = vld [vmem:[%s1126 + $0x60] sm:$0xff]
        %v1999 = vld [vmem:[%s1126 + $0x68] sm:$0xff]
        %v2000 = vld [vmem:[%s1126 + $0x70] sm:$0xff]
        %v2001 = vld [vmem:[%s1126 + $0x78] sm:$0xff]
        %v2002 = vmul.f32 %v1993, %v1994
        %v2003 = vmul.f32 %v1992, %v1995
        %v2004 = vmul.f32 %v1991, %v1996
        %v2005 = vmul.f32 %v1990, %v1997
        %v2006 = vmul.f32 %v1989, %v1998
        %v2007 = vmul.f32 %v1988, %v1999
        %v2008 = vmul.f32 %v1987, %v2000
        %v2009 = vmul.f32 %v1986, %v2001
        %v2010 = vadd.f32 %v1962, %v2002
        %v2011 = vadd.f32 %v1963, %v2003
        %v2012 = vadd.f32 %v1964, %v2004
        %v2013 = vadd.f32 %v1965, %v2005
        %v2014 = vadd.f32 %v1966, %v2006
        %v2015 = vadd.f32 %v1967, %v2007
        %v2016 = vadd.f32 %v1968, %v2008
        %v2017 = vadd.f32 %v1969, %v2009
        %v2018 = vld [vmem:[%s1151 + $0x40] sm:$0xff]
        %v2019 = vld [vmem:[%s1151 + $0x48] sm:$0xff]
        %v2020 = vld [vmem:[%s1151 + $0x50] sm:$0xff]
        %v2021 = vld [vmem:[%s1151 + $0x58] sm:$0xff]
        %v2022 = vld [vmem:[%s1151 + $0x60] sm:$0xff]
        %v2023 = vld [vmem:[%s1151 + $0x68] sm:$0xff]
        %v2024 = vld [vmem:[%s1151 + $0x70] sm:$0xff]
        %v2025 = vld [vmem:[%s1151 + $0x78] sm:$0xff]
        %v2026 = vmul.f32 %v1826, %v2018
        %v2027 = vmul.f32 %v1827, %v2019
        %v2028 = vmul.f32 %v1828, %v2020
        %v2029 = vmul.f32 %v1829, %v2021
        %v2030 = vmul.f32 %v1830, %v2022
        %v2031 = vmul.f32 %v1831, %v2023
        %v2032 = vmul.f32 %v1832, %v2024
        %v2033 = vmul.f32 %v1833, %v2025
        %v2034 = vadd.f32 %v2010, %v2026
        %v2035 = vadd.f32 %v2011, %v2027
        %v2036 = vadd.f32 %v2012, %v2028
        %v2037 = vadd.f32 %v2013, %v2029
        %v2038 = vadd.f32 %v2014, %v2030
        %v2039 = vadd.f32 %v2015, %v2031
        %v2040 = vadd.f32 %v2016, %v2032
        %v2041 = vadd.f32 %v2017, %v2033
        %2042 = vrot.lane.b32.xlu0 %v1826, 127
        %v2043 = vpop.permute.xlu0 %2042
        %2044 = vrot.lane.b32.xlu0 %v1827, 127
        %v2045 = vpop.permute.xlu0 %2044
        %2046 = vrot.lane.b32.xlu0 %v1828, 127
        %v2047 = vpop.permute.xlu0 %2046
        %2048 = vrot.lane.b32.xlu0 %v1829, 127
        %v2049 = vpop.permute.xlu0 %2048
        %2050 = vrot.lane.b32.xlu0 %v1830, 127
        %v2051 = vpop.permute.xlu0 %2050
        %2052 = vrot.lane.b32.xlu0 %v1831, 127
        %v2053 = vpop.permute.xlu0 %2052
        %2054 = vrot.lane.b32.xlu0 %v1832, 127
        %v2055 = vpop.permute.xlu0 %2054
        %2056 = vrot.lane.b32.xlu0 %v1833, 127
        %v2057 = vpop.permute.xlu0 %2056
        %v2058 = vsel %vm1192, %v2055, %v2057
        %v2059 = vsel %vm1192, %v2053, %v2055
        %v2060 = vsel %vm1192, %v2051, %v2053
        %v2061 = vsel %vm1192, %v2049, %v2051
        %v2062 = vsel %vm1192, %v2047, %v2049
        %v2063 = vsel %vm1192, %v2045, %v2047
        %v2064 = vsel %vm1192, %v2043, %v2045
        %v2065 = vsel %vm1192, %v2057, %v2043
        %v2066 = vld [vmem:[%s1201 + $0x40] sm:$0xff]
        %v2067 = vld [vmem:[%s1201 + $0x48] sm:$0xff]
        %v2068 = vld [vmem:[%s1201 + $0x50] sm:$0xff]
        %v2069 = vld [vmem:[%s1201 + $0x58] sm:$0xff]
        %v2070 = vld [vmem:[%s1201 + $0x60] sm:$0xff]
        %v2071 = vld [vmem:[%s1201 + $0x68] sm:$0xff]
        %v2072 = vld [vmem:[%s1201 + $0x70] sm:$0xff]
        %v2073 = vld [vmem:[%s1201 + $0x78] sm:$0xff]
        %v2074 = vmul.f32 %v2064, %v2066
        %v2075 = vmul.f32 %v2063, %v2067
        %v2076 = vmul.f32 %v2062, %v2068
        %v2077 = vmul.f32 %v2061, %v2069
        %v2078 = vmul.f32 %v2060, %v2070
        %v2079 = vmul.f32 %v2059, %v2071
        %v2080 = vmul.f32 %v2058, %v2072
        %v2081 = vmul.f32 %v2065, %v2073
        %v2082 = vadd.f32 %v2034, %v2074
        %v2083 = vadd.f32 %v2035, %v2075
        %v2084 = vadd.f32 %v2036, %v2076
        %v2085 = vadd.f32 %v2037, %v2077
        %v2086 = vadd.f32 %v2038, %v2078
        %v2087 = vadd.f32 %v2039, %v2079
        %v2088 = vadd.f32 %v2040, %v2080
        %v2089 = vadd.f32 %v2041, %v2081
        %2090 = vrot.lane.b32.xlu0 %v1826, 97
        %v2091 = vpop.permute.xlu0 %2090
        %2092 = vrot.lane.b32.xlu0 %v1827, 97
        %v2093 = vpop.permute.xlu0 %2092
        %2094 = vrot.lane.b32.xlu0 %v1828, 97
        %v2095 = vpop.permute.xlu0 %2094
        %2096 = vrot.lane.b32.xlu0 %v1829, 97
        %v2097 = vpop.permute.xlu0 %2096
        %2098 = vrot.lane.b32.xlu0 %v1830, 97
        %v2099 = vpop.permute.xlu0 %2098
        %2100 = vrot.lane.b32.xlu0 %v1831, 97
        %v2101 = vpop.permute.xlu0 %2100
        %2102 = vrot.lane.b32.xlu0 %v1832, 97
        %v2103 = vpop.permute.xlu0 %2102
        %2104 = vrot.lane.b32.xlu0 %v1833, 97
        %v2105 = vpop.permute.xlu0 %2104
        %v2106 = vsel %vm1242, %v2103, %v2105
        %v2107 = vsel %vm1242, %v2101, %v2103
        %v2108 = vsel %vm1242, %v2099, %v2101
        %v2109 = vsel %vm1242, %v2097, %v2099
        %v2110 = vsel %vm1242, %v2095, %v2097
        %v2111 = vsel %vm1242, %v2093, %v2095
        %v2112 = vsel %vm1242, %v2091, %v2093
        %v2113 = vsel %vm1242, %v2105, %v2091
        %v2114 = vld [vmem:[%s1251 + $0x40] sm:$0xff]
        %v2115 = vld [vmem:[%s1251 + $0x48] sm:$0xff]
        %v2116 = vld [vmem:[%s1251 + $0x50] sm:$0xff]
        %v2117 = vld [vmem:[%s1251 + $0x58] sm:$0xff]
        %v2118 = vld [vmem:[%s1251 + $0x60] sm:$0xff]
        %v2119 = vld [vmem:[%s1251 + $0x68] sm:$0xff]
        %v2120 = vld [vmem:[%s1251 + $0x70] sm:$0xff]
        %v2121 = vld [vmem:[%s1251 + $0x78] sm:$0xff]
        %v2122 = vmul.f32 %v2112, %v2114
        %v2123 = vmul.f32 %v2111, %v2115
        %v2124 = vmul.f32 %v2110, %v2116
        %v2125 = vmul.f32 %v2109, %v2117
        %v2126 = vmul.f32 %v2108, %v2118
        %v2127 = vmul.f32 %v2107, %v2119
        %v2128 = vmul.f32 %v2106, %v2120
        %v2129 = vmul.f32 %v2113, %v2121
        %v2130 = vadd.f32 %v2082, %v2122
        %v2131 = vadd.f32 %v2083, %v2123
        %v2132 = vadd.f32 %v2084, %v2124
        %v2133 = vadd.f32 %v2085, %v2125
        %v2134 = vadd.f32 %v2086, %v2126
        %v2135 = vadd.f32 %v2087, %v2127
        %v2136 = vadd.f32 %v2088, %v2128
        %v2137 = vadd.f32 %v2089, %v2129
        %2138 = vrot.lane.b32.xlu0 %v1826, 96
        %v2139 = vpop.permute.xlu0 %2138
        %2140 = vrot.lane.b32.xlu0 %v1827, 96
        %v2141 = vpop.permute.xlu0 %2140
        %2142 = vrot.lane.b32.xlu0 %v1828, 96
        %v2143 = vpop.permute.xlu0 %2142
        %2144 = vrot.lane.b32.xlu0 %v1829, 96
        %v2145 = vpop.permute.xlu0 %2144
        %2146 = vrot.lane.b32.xlu0 %v1830, 96
        %v2147 = vpop.permute.xlu0 %2146
        %2148 = vrot.lane.b32.xlu0 %v1831, 96
        %v2149 = vpop.permute.xlu0 %2148
        %2150 = vrot.lane.b32.xlu0 %v1832, 96
        %v2151 = vpop.permute.xlu0 %2150
        %2152 = vrot.lane.b32.xlu0 %v1833, 96
        %v2153 = vpop.permute.xlu0 %2152
        %v2154 = vsel %vm1292, %v2151, %v2153
        %v2155 = vsel %vm1292, %v2149, %v2151
        %v2156 = vsel %vm1292, %v2147, %v2149
        %v2157 = vsel %vm1292, %v2145, %v2147
        %v2158 = vsel %vm1292, %v2143, %v2145
        %v2159 = vsel %vm1292, %v2141, %v2143
        %v2160 = vsel %vm1292, %v2139, %v2141
        %v2161 = vsel %vm1292, %v2153, %v2139
        %v2162 = vld [vmem:[%s1301 + $0x40] sm:$0xff]
        %v2163 = vld [vmem:[%s1301 + $0x48] sm:$0xff]
        %v2164 = vld [vmem:[%s1301 + $0x50] sm:$0xff]
        %v2165 = vld [vmem:[%s1301 + $0x58] sm:$0xff]
        %v2166 = vld [vmem:[%s1301 + $0x60] sm:$0xff]
        %v2167 = vld [vmem:[%s1301 + $0x68] sm:$0xff]
        %v2168 = vld [vmem:[%s1301 + $0x70] sm:$0xff]
        %v2169 = vld [vmem:[%s1301 + $0x78] sm:$0xff]
        %v2170 = vmul.f32 %v2160, %v2162
        %v2171 = vmul.f32 %v2159, %v2163
        %v2172 = vmul.f32 %v2158, %v2164
        %v2173 = vmul.f32 %v2157, %v2165
        %v2174 = vmul.f32 %v2156, %v2166
        %v2175 = vmul.f32 %v2155, %v2167
        %v2176 = vmul.f32 %v2154, %v2168
        %v2177 = vmul.f32 %v2161, %v2169
        %v2178 = vadd.f32 %v2130, %v2170
        %v2179 = vadd.f32 %v2131, %v2171
        %v2180 = vadd.f32 %v2132, %v2172
        %v2181 = vadd.f32 %v2133, %v2173
        %v2182 = vadd.f32 %v2134, %v2174
        %v2183 = vadd.f32 %v2135, %v2175
        %v2184 = vadd.f32 %v2136, %v2176
        %v2185 = vadd.f32 %v2137, %v2177
        %2186 = vrot.lane.b32.xlu0 %v1826, 95
        %v2187 = vpop.permute.xlu0 %2186
        %2188 = vrot.lane.b32.xlu0 %v1827, 95
        %v2189 = vpop.permute.xlu0 %2188
        %2190 = vrot.lane.b32.xlu0 %v1828, 95
        %v2191 = vpop.permute.xlu0 %2190
        %2192 = vrot.lane.b32.xlu0 %v1829, 95
        %v2193 = vpop.permute.xlu0 %2192
        %2194 = vrot.lane.b32.xlu0 %v1830, 95
        %v2195 = vpop.permute.xlu0 %2194
        %2196 = vrot.lane.b32.xlu0 %v1831, 95
        %v2197 = vpop.permute.xlu0 %2196
        %2198 = vrot.lane.b32.xlu0 %v1832, 95
        %v2199 = vpop.permute.xlu0 %2198
        %2200 = vrot.lane.b32.xlu0 %v1833, 95
        %v2201 = vpop.permute.xlu0 %2200
        %v2202 = vsel %vm1342, %v2199, %v2201
        %v2203 = vsel %vm1342, %v2197, %v2199
        %v2204 = vsel %vm1342, %v2195, %v2197
        %v2205 = vsel %vm1342, %v2193, %v2195
        %v2206 = vsel %vm1342, %v2191, %v2193
        %v2207 = vsel %vm1342, %v2189, %v2191
        %v2208 = vsel %vm1342, %v2187, %v2189
        %v2209 = vsel %vm1342, %v2201, %v2187
        %v2210 = vld [vmem:[%s1351 + $0x40] sm:$0xff]
        %v2211 = vld [vmem:[%s1351 + $0x48] sm:$0xff]
        %v2212 = vld [vmem:[%s1351 + $0x50] sm:$0xff]
        %v2213 = vld [vmem:[%s1351 + $0x58] sm:$0xff]
        %v2214 = vld [vmem:[%s1351 + $0x60] sm:$0xff]
        %v2215 = vld [vmem:[%s1351 + $0x68] sm:$0xff]
        %v2216 = vld [vmem:[%s1351 + $0x70] sm:$0xff]
        %v2217 = vld [vmem:[%s1351 + $0x78] sm:$0xff]
        %v2218 = vmul.f32 %v2208, %v2210
        %v2219 = vmul.f32 %v2207, %v2211
        %v2220 = vmul.f32 %v2206, %v2212
        %v2221 = vmul.f32 %v2205, %v2213
        %v2222 = vmul.f32 %v2204, %v2214
        %v2223 = vmul.f32 %v2203, %v2215
        %v2224 = vmul.f32 %v2202, %v2216
        %v2225 = vmul.f32 %v2209, %v2217
        %v2226 = vadd.f32 %v2178, %v2218
        %v2227 = vadd.f32 %v2179, %v2219
        %v2228 = vadd.f32 %v2180, %v2220
        %v2229 = vadd.f32 %v2181, %v2221
        %v2230 = vadd.f32 %v2182, %v2222
        %v2231 = vadd.f32 %v2183, %v2223
        %v2232 = vadd.f32 %v2184, %v2224
        %v2233 = vadd.f32 %v2185, %v2225
        %2235 = vset.pattern.permute.xlu0 0
        %2236 = vperm.xlu0 %2235, %v407
        %v2237 = vpop.permute.xlu0 %2236
        %v2239 = vadd.f32 %v2226, %v2237
        %v2240 = vadd.f32 %v2227, %v2237
        %v2241 = vadd.f32 %v2228, %v2237
        %v2242 = vadd.f32 %v2229, %v2237
        %v2243 = vadd.f32 %v2230, %v2237
        %v2244 = vadd.f32 %v2231, %v2237
        %v2245 = vadd.f32 %v2232, %v2237
        %v2246 = vadd.f32 %v2233, %v2237
        %v2247 = vmul.f32 %v2239, 0.5
        %v2248 = vmul.f32 %v2240, 0.5
        %v2249 = vmul.f32 %v2241, 0.5
        %v2250 = vmul.f32 %v2242, 0.5
        %v2251 = vmul.f32 %v2243, 0.5
        %v2252 = vmul.f32 %v2244, 0.5
        %v2253 = vmul.f32 %v2245, 0.5
        %v2254 = vmul.f32 %v2246, 0.5
        %v2255 = vmul.f32 %v2239, 0.044715
        %v2256 = vmul.f32 %v2240, 0.044715
        %v2257 = vmul.f32 %v2241, 0.044715
        %v2258 = vmul.f32 %v2242, 0.044715
        %v2259 = vmul.f32 %v2243, 0.044715
        %v2260 = vmul.f32 %v2244, 0.044715
        %v2261 = vmul.f32 %v2245, 0.044715
        %v2262 = vmul.f32 %v2246, 0.044715
        %v2263 = vmul.f32 %v2255, %v2239
        %v2264 = vmul.f32 %v2256, %v2240
        %v2265 = vmul.f32 %v2257, %v2241
        %v2266 = vmul.f32 %v2258, %v2242
        %v2267 = vmul.f32 %v2259, %v2243
        %v2268 = vmul.f32 %v2260, %v2244
        %v2269 = vmul.f32 %v2261, %v2245
        %v2270 = vmul.f32 %v2262, %v2246
        %v2271 = vmul.f32 %v2263, %v2239
        %v2272 = vmul.f32 %v2264, %v2240
        %v2273 = vmul.f32 %v2265, %v2241
        %v2274 = vmul.f32 %v2266, %v2242
        %v2275 = vmul.f32 %v2267, %v2243
        %v2276 = vmul.f32 %v2268, %v2244
        %v2277 = vmul.f32 %v2269, %v2245
        %v2278 = vmul.f32 %v2270, %v2246
        %v2279 = vadd.f32 %v2239, %v2271
        %v2280 = vadd.f32 %v2240, %v2272
        %v2281 = vadd.f32 %v2241, %v2273
        %v2282 = vadd.f32 %v2242, %v2274
        %v2283 = vadd.f32 %v2243, %v2275
        %v2284 = vadd.f32 %v2244, %v2276
        %v2285 = vadd.f32 %v2245, %v2277
        %v2286 = vadd.f32 %v2246, %v2278
        %v2287 = vmul.f32 %v2279, 0.7978846
        %v2288 = vmul.f32 %v2280, 0.7978846
        %v2289 = vmul.f32 %v2281, 0.7978846
        %v2290 = vmul.f32 %v2282, 0.7978846
        %v2291 = vmul.f32 %v2283, 0.7978846
        %v2292 = vmul.f32 %v2284, 0.7978846
        %v2293 = vmul.f32 %v2285, 0.7978846
        %v2294 = vmul.f32 %v2286, 0.7978846
        %v2295 = vtanh.pop %v2287
        %v2296 = vtanh.pop %v2288
        %v2297 = vtanh.pop %v2289
        %v2298 = vtanh.pop %v2290
        %v2299 = vtanh.pop %v2291
        %v2300 = vtanh.pop %v2292
        %v2301 = vtanh.pop %v2293
        %v2302 = vtanh.pop %v2294
        %v2303 = vadd.f32 %v2295, 1.0
        %v2304 = vadd.f32 %v2296, 1.0
        %v2305 = vadd.f32 %v2297, 1.0
        %v2306 = vadd.f32 %v2298, 1.0
        %v2307 = vadd.f32 %v2299, 1.0
        %v2308 = vadd.f32 %v2300, 1.0
        %v2309 = vadd.f32 %v2301, 1.0
        %v2310 = vadd.f32 %v2302, 1.0
        %v2311 = vmul.f32 %v2247, %v2303
        %v2312 = vmul.f32 %v2248, %v2304
        %v2313 = vmul.f32 %v2249, %v2305
        %v2314 = vmul.f32 %v2250, %v2306
        %v2315 = vmul.f32 %v2251, %v2307
        %v2316 = vmul.f32 %v2252, %v2308
        %v2317 = vmul.f32 %v2253, %v2309
        %v2318 = vmul.f32 %v2254, %v2310
        %2319 = vrot.lane.b32.xlu0 %v1818, 33
        %v2320 = vpop.permute.xlu0 %2319
        %2321 = vrot.lane.b32.xlu0 %v1819, 33
        %v2322 = vpop.permute.xlu0 %2321
        %2323 = vrot.lane.b32.xlu0 %v1820, 33
        %v2324 = vpop.permute.xlu0 %2323
        %2325 = vrot.lane.b32.xlu0 %v1821, 33
        %v2326 = vpop.permute.xlu0 %2325
        %2327 = vrot.lane.b32.xlu0 %v1822, 33
        %v2328 = vpop.permute.xlu0 %2327
        %2329 = vrot.lane.b32.xlu0 %v1823, 33
        %v2330 = vpop.permute.xlu0 %2329
        %2331 = vrot.lane.b32.xlu0 %v1824, 33
        %v2332 = vpop.permute.xlu0 %2331
        %2333 = vrot.lane.b32.xlu0 %v1825, 33
        %v2334 = vpop.permute.xlu0 %2333
        %v2335 = vsel %vm976, %v2332, %v2334
        %v2336 = vsel %vm976, %v2330, %v2332
        %v2337 = vsel %vm976, %v2328, %v2330
        %v2338 = vsel %vm976, %v2326, %v2328
        %v2339 = vsel %vm976, %v2324, %v2326
        %v2340 = vsel %vm976, %v2322, %v2324
        %v2341 = vsel %vm976, %v2320, %v2322
        %v2342 = vsel %vm976, %v2334, %v2320
        %v2343 = vld [vmem:[%s2 + $0x80] sm:$0xff]
        %v2344 = vld [vmem:[%s2 + $0x88] sm:$0xff]
        %v2345 = vld [vmem:[%s2 + $0x90] sm:$0xff]
        %v2346 = vld [vmem:[%s2 + $0x98] sm:$0xff]
        %v2347 = vld [vmem:[%s2 + $0xa0] sm:$0xff]
        %v2348 = vld [vmem:[%s2 + $0xa8] sm:$0xff]
        %v2349 = vld [vmem:[%s2 + $0xb0] sm:$0xff]
        %v2350 = vld [vmem:[%s2 + $0xb8] sm:$0xff]
        %v2351 = vmul.f32 %v2342, %v2343
        %v2352 = vmul.f32 %v2341, %v2344
        %v2353 = vmul.f32 %v2340, %v2345
        %v2354 = vmul.f32 %v2339, %v2346
        %v2355 = vmul.f32 %v2338, %v2347
        %v2356 = vmul.f32 %v2337, %v2348
        %v2357 = vmul.f32 %v2336, %v2349
        %v2358 = vmul.f32 %v2335, %v2350
        %2359 = vrot.lane.b32.xlu0 %v1818, 32
        %v2360 = vpop.permute.xlu0 %2359
        %2361 = vrot.lane.b32.xlu0 %v1819, 32
        %v2362 = vpop.permute.xlu0 %2361
        %2363 = vrot.lane.b32.xlu0 %v1820, 32
        %v2364 = vpop.permute.xlu0 %2363
        %2365 = vrot.lane.b32.xlu0 %v1821, 32
        %v2366 = vpop.permute.xlu0 %2365
        %2367 = vrot.lane.b32.xlu0 %v1822, 32
        %v2368 = vpop.permute.xlu0 %2367
        %2369 = vrot.lane.b32.xlu0 %v1823, 32
        %v2370 = vpop.permute.xlu0 %2369
        %2371 = vrot.lane.b32.xlu0 %v1824, 32
        %v2372 = vpop.permute.xlu0 %2371
        %2373 = vrot.lane.b32.xlu0 %v1825, 32
        %v2374 = vpop.permute.xlu0 %2373
        %v2375 = vsel %vm1017, %v2372, %v2374
        %v2376 = vsel %vm1017, %v2370, %v2372
        %v2377 = vsel %vm1017, %v2368, %v2370
        %v2378 = vsel %vm1017, %v2366, %v2368
        %v2379 = vsel %vm1017, %v2364, %v2366
        %v2380 = vsel %vm1017, %v2362, %v2364
        %v2381 = vsel %vm1017, %v2360, %v2362
        %v2382 = vsel %vm1017, %v2374, %v2360
        %v2383 = vld [vmem:[%s1026 + $0x80] sm:$0xff]
        %v2384 = vld [vmem:[%s1026 + $0x88] sm:$0xff]
        %v2385 = vld [vmem:[%s1026 + $0x90] sm:$0xff]
        %v2386 = vld [vmem:[%s1026 + $0x98] sm:$0xff]
        %v2387 = vld [vmem:[%s1026 + $0xa0] sm:$0xff]
        %v2388 = vld [vmem:[%s1026 + $0xa8] sm:$0xff]
        %v2389 = vld [vmem:[%s1026 + $0xb0] sm:$0xff]
        %v2390 = vld [vmem:[%s1026 + $0xb8] sm:$0xff]
        %v2391 = vmul.f32 %v2382, %v2383
        %v2392 = vmul.f32 %v2381, %v2384
        %v2393 = vmul.f32 %v2380, %v2385
        %v2394 = vmul.f32 %v2379, %v2386
        %v2395 = vmul.f32 %v2378, %v2387
        %v2396 = vmul.f32 %v2377, %v2388
        %v2397 = vmul.f32 %v2376, %v2389
        %v2398 = vmul.f32 %v2375, %v2390
        %v2399 = vadd.f32 %v2351, %v2391
        %v2400 = vadd.f32 %v2352, %v2392
        %v2401 = vadd.f32 %v2353, %v2393
        %v2402 = vadd.f32 %v2354, %v2394
        %v2403 = vadd.f32 %v2355, %v2395
        %v2404 = vadd.f32 %v2356, %v2396
        %v2405 = vadd.f32 %v2357, %v2397
        %v2406 = vadd.f32 %v2358, %v2398
        %2407 = vrot.lane.b32.xlu0 %v1818, 31
        %v2408 = vpop.permute.xlu0 %2407
        %2409 = vrot.lane.b32.xlu0 %v1819, 31
        %v2410 = vpop.permute.xlu0 %2409
        %2411 = vrot.lane.b32.xlu0 %v1820, 31
        %v2412 = vpop.permute.xlu0 %2411
        %2413 = vrot.lane.b32.xlu0 %v1821, 31
        %v2414 = vpop.permute.xlu0 %2413
        %2415 = vrot.lane.b32.xlu0 %v1822, 31
        %v2416 = vpop.permute.xlu0 %2415
        %2417 = vrot.lane.b32.xlu0 %v1823, 31
        %v2418 = vpop.permute.xlu0 %2417
        %2419 = vrot.lane.b32.xlu0 %v1824, 31
        %v2420 = vpop.permute.xlu0 %2419
        %2421 = vrot.lane.b32.xlu0 %v1825, 31
        %v2422 = vpop.permute.xlu0 %2421
        %v2423 = vsel %vm1067, %v2420, %v2422
        %v2424 = vsel %vm1067, %v2418, %v2420
        %v2425 = vsel %vm1067, %v2416, %v2418
        %v2426 = vsel %vm1067, %v2414, %v2416
        %v2427 = vsel %vm1067, %v2412, %v2414
        %v2428 = vsel %vm1067, %v2410, %v2412
        %v2429 = vsel %vm1067, %v2408, %v2410
        %v2430 = vsel %vm1067, %v2422, %v2408
        %v2431 = vld [vmem:[%s1076 + $0x80] sm:$0xff]
        %v2432 = vld [vmem:[%s1076 + $0x88] sm:$0xff]
        %v2433 = vld [vmem:[%s1076 + $0x90] sm:$0xff]
        %v2434 = vld [vmem:[%s1076 + $0x98] sm:$0xff]
        %v2435 = vld [vmem:[%s1076 + $0xa0] sm:$0xff]
        %v2436 = vld [vmem:[%s1076 + $0xa8] sm:$0xff]
        %v2437 = vld [vmem:[%s1076 + $0xb0] sm:$0xff]
        %v2438 = vld [vmem:[%s1076 + $0xb8] sm:$0xff]
        %v2439 = vmul.f32 %v2430, %v2431
        %v2440 = vmul.f32 %v2429, %v2432
        %v2441 = vmul.f32 %v2428, %v2433
        %v2442 = vmul.f32 %v2427, %v2434
        %v2443 = vmul.f32 %v2426, %v2435
        %v2444 = vmul.f32 %v2425, %v2436
        %v2445 = vmul.f32 %v2424, %v2437
        %v2446 = vmul.f32 %v2423, %v2438
        %v2447 = vadd.f32 %v2399, %v2439
        %v2448 = vadd.f32 %v2400, %v2440
        %v2449 = vadd.f32 %v2401, %v2441
        %v2450 = vadd.f32 %v2402, %v2442
        %v2451 = vadd.f32 %v2403, %v2443
        %v2452 = vadd.f32 %v2404, %v2444
        %v2453 = vadd.f32 %v2405, %v2445
        %v2454 = vadd.f32 %v2406, %v2446
        %2455 = vrot.lane.b32.xlu0 %v1818, 1
        %v2456 = vpop.permute.xlu0 %2455
        %2457 = vrot.lane.b32.xlu0 %v1819, 1
        %v2458 = vpop.permute.xlu0 %2457
        %2459 = vrot.lane.b32.xlu0 %v1820, 1
        %v2460 = vpop.permute.xlu0 %2459
        %2461 = vrot.lane.b32.xlu0 %v1821, 1
        %v2462 = vpop.permute.xlu0 %2461
        %2463 = vrot.lane.b32.xlu0 %v1822, 1
        %v2464 = vpop.permute.xlu0 %2463
        %2465 = vrot.lane.b32.xlu0 %v1823, 1
        %v2466 = vpop.permute.xlu0 %2465
        %2467 = vrot.lane.b32.xlu0 %v1824, 1
        %v2468 = vpop.permute.xlu0 %2467
        %2469 = vrot.lane.b32.xlu0 %v1825, 1
        %v2470 = vpop.permute.xlu0 %2469
        %v2471 = vsel %vm1117, %v2468, %v2470
        %v2472 = vsel %vm1117, %v2466, %v2468
        %v2473 = vsel %vm1117, %v2464, %v2466
        %v2474 = vsel %vm1117, %v2462, %v2464
        %v2475 = vsel %vm1117, %v2460, %v2462
        %v2476 = vsel %vm1117, %v2458, %v2460
        %v2477 = vsel %vm1117, %v2456, %v2458
        %v2478 = vsel %vm1117, %v2470, %v2456
        %v2479 = vld [vmem:[%s1126 + $0x80] sm:$0xff]
        %v2480 = vld [vmem:[%s1126 + $0x88] sm:$0xff]
        %v2481 = vld [vmem:[%s1126 + $0x90] sm:$0xff]
        %v2482 = vld [vmem:[%s1126 + $0x98] sm:$0xff]
        %v2483 = vld [vmem:[%s1126 + $0xa0] sm:$0xff]
        %v2484 = vld [vmem:[%s1126 + $0xa8] sm:$0xff]
        %v2485 = vld [vmem:[%s1126 + $0xb0] sm:$0xff]
        %v2486 = vld [vmem:[%s1126 + $0xb8] sm:$0xff]
        %v2487 = vmul.f32 %v2478, %v2479
        %v2488 = vmul.f32 %v2477, %v2480
        %v2489 = vmul.f32 %v2476, %v2481
        %v2490 = vmul.f32 %v2475, %v2482
        %v2491 = vmul.f32 %v2474, %v2483
        %v2492 = vmul.f32 %v2473, %v2484
        %v2493 = vmul.f32 %v2472, %v2485
        %v2494 = vmul.f32 %v2471, %v2486
        %v2495 = vadd.f32 %v2447, %v2487
        %v2496 = vadd.f32 %v2448, %v2488
        %v2497 = vadd.f32 %v2449, %v2489
        %v2498 = vadd.f32 %v2450, %v2490
        %v2499 = vadd.f32 %v2451, %v2491
        %v2500 = vadd.f32 %v2452, %v2492
        %v2501 = vadd.f32 %v2453, %v2493
        %v2502 = vadd.f32 %v2454, %v2494
        %v2503 = vld [vmem:[%s1151 + $0x80] sm:$0xff]
        %v2504 = vld [vmem:[%s1151 + $0x88] sm:$0xff]
        %v2505 = vld [vmem:[%s1151 + $0x90] sm:$0xff]
        %v2506 = vld [vmem:[%s1151 + $0x98] sm:$0xff]
        %v2507 = vld [vmem:[%s1151 + $0xa0] sm:$0xff]
        %v2508 = vld [vmem:[%s1151 + $0xa8] sm:$0xff]
        %v2509 = vld [vmem:[%s1151 + $0xb0] sm:$0xff]
        %v2510 = vld [vmem:[%s1151 + $0xb8] sm:$0xff]
        %v2511 = vmul.f32 %v1818, %v2503
        %v2512 = vmul.f32 %v1819, %v2504
        %v2513 = vmul.f32 %v1820, %v2505
        %v2514 = vmul.f32 %v1821, %v2506
        %v2515 = vmul.f32 %v1822, %v2507
        %v2516 = vmul.f32 %v1823, %v2508
        %v2517 = vmul.f32 %v1824, %v2509
        %v2518 = vmul.f32 %v1825, %v2510
        %v2519 = vadd.f32 %v2495, %v2511
        %v2520 = vadd.f32 %v2496, %v2512
        %v2521 = vadd.f32 %v2497, %v2513
        %v2522 = vadd.f32 %v2498, %v2514
        %v2523 = vadd.f32 %v2499, %v2515
        %v2524 = vadd.f32 %v2500, %v2516
        %v2525 = vadd.f32 %v2501, %v2517
        %v2526 = vadd.f32 %v2502, %v2518
        %2527 = vrot.lane.b32.xlu0 %v1818, 127
        %v2528 = vpop.permute.xlu0 %2527
        %2529 = vrot.lane.b32.xlu0 %v1819, 127
        %v2530 = vpop.permute.xlu0 %2529
        %2531 = vrot.lane.b32.xlu0 %v1820, 127
        %v2532 = vpop.permute.xlu0 %2531
        %2533 = vrot.lane.b32.xlu0 %v1821, 127
        %v2534 = vpop.permute.xlu0 %2533
        %2535 = vrot.lane.b32.xlu0 %v1822, 127
        %v2536 = vpop.permute.xlu0 %2535
        %2537 = vrot.lane.b32.xlu0 %v1823, 127
        %v2538 = vpop.permute.xlu0 %2537
        %2539 = vrot.lane.b32.xlu0 %v1824, 127
        %v2540 = vpop.permute.xlu0 %2539
        %2541 = vrot.lane.b32.xlu0 %v1825, 127
        %v2542 = vpop.permute.xlu0 %2541
        %v2543 = vsel %vm1192, %v2540, %v2542
        %v2544 = vsel %vm1192, %v2538, %v2540
        %v2545 = vsel %vm1192, %v2536, %v2538
        %v2546 = vsel %vm1192, %v2534, %v2536
        %v2547 = vsel %vm1192, %v2532, %v2534
        %v2548 = vsel %vm1192, %v2530, %v2532
        %v2549 = vsel %vm1192, %v2528, %v2530
        %v2550 = vsel %vm1192, %v2542, %v2528
        %v2551 = vld [vmem:[%s1201 + $0x80] sm:$0xff]
        %v2552 = vld [vmem:[%s1201 + $0x88] sm:$0xff]
        %v2553 = vld [vmem:[%s1201 + $0x90] sm:$0xff]
        %v2554 = vld [vmem:[%s1201 + $0x98] sm:$0xff]
        %v2555 = vld [vmem:[%s1201 + $0xa0] sm:$0xff]
        %v2556 = vld [vmem:[%s1201 + $0xa8] sm:$0xff]
        %v2557 = vld [vmem:[%s1201 + $0xb0] sm:$0xff]
        %v2558 = vld [vmem:[%s1201 + $0xb8] sm:$0xff]
        %v2559 = vmul.f32 %v2549, %v2551
        %v2560 = vmul.f32 %v2548, %v2552
        %v2561 = vmul.f32 %v2547, %v2553
        %v2562 = vmul.f32 %v2546, %v2554
        %v2563 = vmul.f32 %v2545, %v2555
        %v2564 = vmul.f32 %v2544, %v2556
        %v2565 = vmul.f32 %v2543, %v2557
        %v2566 = vmul.f32 %v2550, %v2558
        %v2567 = vadd.f32 %v2519, %v2559
        %v2568 = vadd.f32 %v2520, %v2560
        %v2569 = vadd.f32 %v2521, %v2561
        %v2570 = vadd.f32 %v2522, %v2562
        %v2571 = vadd.f32 %v2523, %v2563
        %v2572 = vadd.f32 %v2524, %v2564
        %v2573 = vadd.f32 %v2525, %v2565
        %v2574 = vadd.f32 %v2526, %v2566
        %2575 = vrot.lane.b32.xlu0 %v1818, 97
        %v2576 = vpop.permute.xlu0 %2575
        %2577 = vrot.lane.b32.xlu0 %v1819, 97
        %v2578 = vpop.permute.xlu0 %2577
        %2579 = vrot.lane.b32.xlu0 %v1820, 97
        %v2580 = vpop.permute.xlu0 %2579
        %2581 = vrot.lane.b32.xlu0 %v1821, 97
        %v2582 = vpop.permute.xlu0 %2581
        %2583 = vrot.lane.b32.xlu0 %v1822, 97
        %v2584 = vpop.permute.xlu0 %2583
        %2585 = vrot.lane.b32.xlu0 %v1823, 97
        %v2586 = vpop.permute.xlu0 %2585
        %2587 = vrot.lane.b32.xlu0 %v1824, 97
        %v2588 = vpop.permute.xlu0 %2587
        %2589 = vrot.lane.b32.xlu0 %v1825, 97
        %v2590 = vpop.permute.xlu0 %2589
        %v2591 = vsel %vm1242, %v2588, %v2590
        %v2592 = vsel %vm1242, %v2586, %v2588
        %v2593 = vsel %vm1242, %v2584, %v2586
        %v2594 = vsel %vm1242, %v2582, %v2584
        %v2595 = vsel %vm1242, %v2580, %v2582
        %v2596 = vsel %vm1242, %v2578, %v2580
        %v2597 = vsel %vm1242, %v2576, %v2578
        %v2598 = vsel %vm1242, %v2590, %v2576
        %v2599 = vld [vmem:[%s1251 + $0x80] sm:$0xff]
        %v2600 = vld [vmem:[%s1251 + $0x88] sm:$0xff]
        %v2601 = vld [vmem:[%s1251 + $0x90] sm:$0xff]
        %v2602 = vld [vmem:[%s1251 + $0x98] sm:$0xff]
        %v2603 = vld [vmem:[%s1251 + $0xa0] sm:$0xff]
        %v2604 = vld [vmem:[%s1251 + $0xa8] sm:$0xff]
        %v2605 = vld [vmem:[%s1251 + $0xb0] sm:$0xff]
        %v2606 = vld [vmem:[%s1251 + $0xb8] sm:$0xff]
        %v2607 = vmul.f32 %v2597, %v2599
        %v2608 = vmul.f32 %v2596, %v2600
        %v2609 = vmul.f32 %v2595, %v2601
        %v2610 = vmul.f32 %v2594, %v2602
        %v2611 = vmul.f32 %v2593, %v2603
        %v2612 = vmul.f32 %v2592, %v2604
        %v2613 = vmul.f32 %v2591, %v2605
        %v2614 = vmul.f32 %v2598, %v2606
        %v2615 = vadd.f32 %v2567, %v2607
        %v2616 = vadd.f32 %v2568, %v2608
        %v2617 = vadd.f32 %v2569, %v2609
        %v2618 = vadd.f32 %v2570, %v2610
        %v2619 = vadd.f32 %v2571, %v2611
        %v2620 = vadd.f32 %v2572, %v2612
        %v2621 = vadd.f32 %v2573, %v2613
        %v2622 = vadd.f32 %v2574, %v2614
        %2623 = vrot.lane.b32.xlu0 %v1818, 96
        %v2624 = vpop.permute.xlu0 %2623
        %2625 = vrot.lane.b32.xlu0 %v1819, 96
        %v2626 = vpop.permute.xlu0 %2625
        %2627 = vrot.lane.b32.xlu0 %v1820, 96
        %v2628 = vpop.permute.xlu0 %2627
        %2629 = vrot.lane.b32.xlu0 %v1821, 96
        %v2630 = vpop.permute.xlu0 %2629
        %2631 = vrot.lane.b32.xlu0 %v1822, 96
        %v2632 = vpop.permute.xlu0 %2631
        %2633 = vrot.lane.b32.xlu0 %v1823, 96
        %v2634 = vpop.permute.xlu0 %2633
        %2635 = vrot.lane.b32.xlu0 %v1824, 96
        %v2636 = vpop.permute.xlu0 %2635
        %2637 = vrot.lane.b32.xlu0 %v1825, 96
        %v2638 = vpop.permute.xlu0 %2637
        %v2639 = vsel %vm1292, %v2636, %v2638
        %v2640 = vsel %vm1292, %v2634, %v2636
        %v2641 = vsel %vm1292, %v2632, %v2634
        %v2642 = vsel %vm1292, %v2630, %v2632
        %v2643 = vsel %vm1292, %v2628, %v2630
        %v2644 = vsel %vm1292, %v2626, %v2628
        %v2645 = vsel %vm1292, %v2624, %v2626
        %v2646 = vsel %vm1292, %v2638, %v2624
        %v2647 = vld [vmem:[%s1301 + $0x80] sm:$0xff]
        %v2648 = vld [vmem:[%s1301 + $0x88] sm:$0xff]
        %v2649 = vld [vmem:[%s1301 + $0x90] sm:$0xff]
        %v2650 = vld [vmem:[%s1301 + $0x98] sm:$0xff]
        %v2651 = vld [vmem:[%s1301 + $0xa0] sm:$0xff]
        %v2652 = vld [vmem:[%s1301 + $0xa8] sm:$0xff]
        %v2653 = vld [vmem:[%s1301 + $0xb0] sm:$0xff]
        %v2654 = vld [vmem:[%s1301 + $0xb8] sm:$0xff]
        %v2655 = vmul.f32 %v2645, %v2647
        %v2656 = vmul.f32 %v2644, %v2648
        %v2657 = vmul.f32 %v2643, %v2649
        %v2658 = vmul.f32 %v2642, %v2650
        %v2659 = vmul.f32 %v2641, %v2651
        %v2660 = vmul.f32 %v2640, %v2652
        %v2661 = vmul.f32 %v2639, %v2653
        %v2662 = vmul.f32 %v2646, %v2654
        %v2663 = vadd.f32 %v2615, %v2655
        %v2664 = vadd.f32 %v2616, %v2656
        %v2665 = vadd.f32 %v2617, %v2657
        %v2666 = vadd.f32 %v2618, %v2658
        %v2667 = vadd.f32 %v2619, %v2659
        %v2668 = vadd.f32 %v2620, %v2660
        %v2669 = vadd.f32 %v2621, %v2661
        %v2670 = vadd.f32 %v2622, %v2662
        %2671 = vrot.lane.b32.xlu0 %v1818, 95
        %v2672 = vpop.permute.xlu0 %2671
        %2673 = vrot.lane.b32.xlu0 %v1819, 95
        %v2674 = vpop.permute.xlu0 %2673
        %2675 = vrot.lane.b32.xlu0 %v1820, 95
        %v2676 = vpop.permute.xlu0 %2675
        %2677 = vrot.lane.b32.xlu0 %v1821, 95
        %v2678 = vpop.permute.xlu0 %2677
        %2679 = vrot.lane.b32.xlu0 %v1822, 95
        %v2680 = vpop.permute.xlu0 %2679
        %2681 = vrot.lane.b32.xlu0 %v1823, 95
        %v2682 = vpop.permute.xlu0 %2681
        %2683 = vrot.lane.b32.xlu0 %v1824, 95
        %v2684 = vpop.permute.xlu0 %2683
        %2685 = vrot.lane.b32.xlu0 %v1825, 95
        %v2686 = vpop.permute.xlu0 %2685
        %v2687 = vsel %vm1342, %v2684, %v2686
        %v2688 = vsel %vm1342, %v2682, %v2684
        %v2689 = vsel %vm1342, %v2680, %v2682
        %v2690 = vsel %vm1342, %v2678, %v2680
        %v2691 = vsel %vm1342, %v2676, %v2678
        %v2692 = vsel %vm1342, %v2674, %v2676
        %v2693 = vsel %vm1342, %v2672, %v2674
        %v2694 = vsel %vm1342, %v2686, %v2672
        %v2695 = vld [vmem:[%s1351 + $0x80] sm:$0xff]
        %v2696 = vld [vmem:[%s1351 + $0x88] sm:$0xff]
        %v2697 = vld [vmem:[%s1351 + $0x90] sm:$0xff]
        %v2698 = vld [vmem:[%s1351 + $0x98] sm:$0xff]
        %v2699 = vld [vmem:[%s1351 + $0xa0] sm:$0xff]
        %v2700 = vld [vmem:[%s1351 + $0xa8] sm:$0xff]
        %v2701 = vld [vmem:[%s1351 + $0xb0] sm:$0xff]
        %v2702 = vld [vmem:[%s1351 + $0xb8] sm:$0xff]
        %v2703 = vmul.f32 %v2693, %v2695
        %v2704 = vmul.f32 %v2692, %v2696
        %v2705 = vmul.f32 %v2691, %v2697
        %v2706 = vmul.f32 %v2690, %v2698
        %v2707 = vmul.f32 %v2689, %v2699
        %v2708 = vmul.f32 %v2688, %v2700
        %v2709 = vmul.f32 %v2687, %v2701
        %v2710 = vmul.f32 %v2694, %v2702
        %v2711 = vadd.f32 %v2663, %v2703
        %v2712 = vadd.f32 %v2664, %v2704
        %v2713 = vadd.f32 %v2665, %v2705
        %v2714 = vadd.f32 %v2666, %v2706
        %v2715 = vadd.f32 %v2667, %v2707
        %v2716 = vadd.f32 %v2668, %v2708
        %v2717 = vadd.f32 %v2669, %v2709
        %v2718 = vadd.f32 %v2670, %v2710
        %2720 = vset.pattern.permute.xlu0 0
        %2721 = vperm.xlu0 %2720, %v408
        %v2722 = vpop.permute.xlu0 %2721
        %v2724 = vadd.f32 %v2711, %v2722
        %v2725 = vadd.f32 %v2712, %v2722
        %v2726 = vadd.f32 %v2713, %v2722
        %v2727 = vadd.f32 %v2714, %v2722
        %v2728 = vadd.f32 %v2715, %v2722
        %v2729 = vadd.f32 %v2716, %v2722
        %v2730 = vadd.f32 %v2717, %v2722
        %v2731 = vadd.f32 %v2718, %v2722
        %v2732 = vmul.f32 %v2724, 0.5
        %v2733 = vmul.f32 %v2725, 0.5
        %v2734 = vmul.f32 %v2726, 0.5
        %v2735 = vmul.f32 %v2727, 0.5
        %v2736 = vmul.f32 %v2728, 0.5
        %v2737 = vmul.f32 %v2729, 0.5
        %v2738 = vmul.f32 %v2730, 0.5
        %v2739 = vmul.f32 %v2731, 0.5
        %v2740 = vmul.f32 %v2724, 0.044715
        %v2741 = vmul.f32 %v2725, 0.044715
        %v2742 = vmul.f32 %v2726, 0.044715
        %v2743 = vmul.f32 %v2727, 0.044715
        %v2744 = vmul.f32 %v2728, 0.044715
        %v2745 = vmul.f32 %v2729, 0.044715
        %v2746 = vmul.f32 %v2730, 0.044715
        %v2747 = vmul.f32 %v2731, 0.044715
        %v2748 = vmul.f32 %v2740, %v2724
        %v2749 = vmul.f32 %v2741, %v2725
        %v2750 = vmul.f32 %v2742, %v2726
        %v2751 = vmul.f32 %v2743, %v2727
        %v2752 = vmul.f32 %v2744, %v2728
        %v2753 = vmul.f32 %v2745, %v2729
        %v2754 = vmul.f32 %v2746, %v2730
        %v2755 = vmul.f32 %v2747, %v2731
        %v2756 = vmul.f32 %v2748, %v2724
        %v2757 = vmul.f32 %v2749, %v2725
        %v2758 = vmul.f32 %v2750, %v2726
        %v2759 = vmul.f32 %v2751, %v2727
        %v2760 = vmul.f32 %v2752, %v2728
        %v2761 = vmul.f32 %v2753, %v2729
        %v2762 = vmul.f32 %v2754, %v2730
        %v2763 = vmul.f32 %v2755, %v2731
        %v2764 = vadd.f32 %v2724, %v2756
        %v2765 = vadd.f32 %v2725, %v2757
        %v2766 = vadd.f32 %v2726, %v2758
        %v2767 = vadd.f32 %v2727, %v2759
        %v2768 = vadd.f32 %v2728, %v2760
        %v2769 = vadd.f32 %v2729, %v2761
        %v2770 = vadd.f32 %v2730, %v2762
        %v2771 = vadd.f32 %v2731, %v2763
        %v2772 = vmul.f32 %v2764, 0.7978846
        %v2773 = vmul.f32 %v2765, 0.7978846
        %v2774 = vmul.f32 %v2766, 0.7978846
        %v2775 = vmul.f32 %v2767, 0.7978846
        %v2776 = vmul.f32 %v2768, 0.7978846
        %v2777 = vmul.f32 %v2769, 0.7978846
        %v2778 = vmul.f32 %v2770, 0.7978846
        %v2779 = vmul.f32 %v2771, 0.7978846
        %v2780 = vtanh.pop %v2772
        %v2781 = vtanh.pop %v2773
        %v2782 = vtanh.pop %v2774
        %v2783 = vtanh.pop %v2775
        %v2784 = vtanh.pop %v2776
        %v2785 = vtanh.pop %v2777
        %v2786 = vtanh.pop %v2778
        %v2787 = vtanh.pop %v2779
        %v2788 = vadd.f32 %v2780, 1.0
        %v2789 = vadd.f32 %v2781, 1.0
        %v2790 = vadd.f32 %v2782, 1.0
        %v2791 = vadd.f32 %v2783, 1.0
        %v2792 = vadd.f32 %v2784, 1.0
        %v2793 = vadd.f32 %v2785, 1.0
        %v2794 = vadd.f32 %v2786, 1.0
        %v2795 = vadd.f32 %v2787, 1.0
        %v2796 = vmul.f32 %v2732, %v2788
        %v2797 = vmul.f32 %v2733, %v2789
        %v2798 = vmul.f32 %v2734, %v2790
        %v2799 = vmul.f32 %v2735, %v2791
        %v2800 = vmul.f32 %v2736, %v2792
        %v2801 = vmul.f32 %v2737, %v2793
        %v2802 = vmul.f32 %v2738, %v2794
        %v2803 = vmul.f32 %v2739, %v2795
        %2805 = vset.pattern.permute.xlu0 0
        %2806 = vperm.xlu0 %2805, %v411
        %v2807 = vpop.permute.xlu0 %2806
        %vm2809 = vcmask 130048
        %v2811 = vsel %vm2809, %v414, 0
        %2813 = vmatprep.subr.mxu0 0.0
        %2814 = vmatpush1.msra.mxu0 0.0
        %2815 = vmatprep.subr.mxu0 0.0
        %2816 = vmatpush1.msra.mxu0 0.0
        %2817 = vmatprep.subr.mxu0 0.0
        %2818 = vmatpush1.msra.mxu0 0.0
        %2819 = vmatprep.subr.mxu0 0.0
        %2820 = vmatpush1.msra.mxu0 0.0
        %2821 = vmatprep.subr.mxu0 0.0
        %2822 = vmatpush1.msra.mxu0 0.0
        %2823 = vmatprep.subr.mxu0 0.0
        %2824 = vmatpush1.msra.mxu0 0.0
        %2825 = vmatprep.subr.mxu0 0.0
        %2826 = vmatpush1.msra.mxu0 0.0
        %2827 = vmatprep.subr.mxu0 0.0
        %2828 = vmatpush1.msra.mxu0 0.0
        %2829 = vmatprep.subr.mxu0 0.0
        %2830 = vmatpush1.msra.mxu0 0.0
        %2831 = vmatprep.subr.mxu0 0.0
        %2832 = vmatpush1.msra.mxu0 0.0
        %2833 = vmatprep.subr.mxu0 0.0
        %2834 = vmatpush1.msra.mxu0 0.0
        %2835 = vmatprep.subr.mxu0 0.0
        %2836 = vmatpush1.msra.mxu0 0.0
        %2837 = vmatprep.subr.mxu0 0.0
        %2838 = vmatpush1.msra.mxu0 0.0
        %2839 = vmatprep.subr.mxu0 0.0
        %2840 = vmatpush1.msra.mxu0 0.0
        %2841 = vmatprep.subr.mxu0 %v2797
        %2842 = vmatpush1.msra.mxu0 %v2796
        %2843 = vmatprep.subr.mxu0 %v2312
        %2844 = vmatpush1.msra.mxu0 %v2311
        %2845 = vmatprep.subr.mxu0 0.0
        %2846 = vmatpush2.msra.mxu0 0.0
        %2847 = vmatprep.subr.mxu0 0.0
        %2848 = vmatpush2.msra.mxu0 0.0
        %2849 = vmatprep.subr.mxu0 0.0
        %2850 = vmatpush2.msra.mxu0 0.0
        %2851 = vmatprep.subr.mxu0 0.0
        %2852 = vmatpush2.msra.mxu0 0.0
        %2853 = vmatprep.subr.mxu0 0.0
        %2854 = vmatpush2.msra.mxu0 0.0
        %2855 = vmatprep.subr.mxu0 0.0
        %2856 = vmatpush2.msra.mxu0 0.0
        %2857 = vmatprep.subr.mxu0 0.0
        %2858 = vmatpush2.msra.mxu0 0.0
        %2859 = vmatprep.subr.mxu0 0.0
        %2860 = vmatpush2.msra.mxu0 0.0
        %2861 = vmatprep.subr.mxu0 0.0
        %2862 = vmatpush2.msra.mxu0 0.0
        %2863 = vmatprep.subr.mxu0 0.0
        %2864 = vmatpush2.msra.mxu0 0.0
        %2865 = vmatprep.subr.mxu0 0.0
        %2866 = vmatpush2.msra.mxu0 0.0
        %2867 = vmatprep.subr.mxu0 0.0
        %2868 = vmatpush2.msra.mxu0 0.0
        %2869 = vmatprep.subr.mxu0 0.0
        %2870 = vmatpush2.msra.mxu0 0.0
        %2871 = vmatprep.subr.mxu0 0.0
        %2872 = vmatpush2.msra.mxu0 0.0
        %2873 = vmatprep.subr.mxu0 0.0
        %2874 = vmatpush2.msra.mxu0 0.0
        %2875 = vmatprep.subr.mxu0 0.0
        %2876 = vmatpush2.msra.mxu0 0.0
        %2877 = vmatprep.mubr.f32.mxu0 0.0
        %2878 = vmatmul.mubr.f32.gmra.mxu0 %v2811
        %v2879 = vpop.f32.mrf.mxu0
        %v2880 = vadd.f32 %v2807, %v2879
        %v2881 = vpop.f32.mrf.mxu0
        %v2882 = vadd.f32 %v2807, %v2881
        %2883 = vdwg.mxu0
        %2884 = vmatprep.subr.mxu0 0.0
        %2885 = vmatpush1.msra.mxu0 0.0
        %2886 = vmatprep.subr.mxu0 0.0
        %2887 = vmatpush1.msra.mxu0 0.0
        %2888 = vmatprep.subr.mxu0 0.0
        %2889 = vmatpush1.msra.mxu0 0.0
        %2890 = vmatprep.subr.mxu0 0.0
        %2891 = vmatpush1.msra.mxu0 0.0
        %2892 = vmatprep.subr.mxu0 0.0
        %2893 = vmatpush1.msra.mxu0 0.0
        %2894 = vmatprep.subr.mxu0 0.0
        %2895 = vmatpush1.msra.mxu0 0.0
        %2896 = vmatprep.subr.mxu0 0.0
        %2897 = vmatpush1.msra.mxu0 0.0
        %2898 = vmatprep.subr.mxu0 0.0
        %2899 = vmatpush1.msra.mxu0 0.0
        %2900 = vmatprep.subr.mxu0 0.0
        %2901 = vmatpush1.msra.mxu0 0.0
        %2902 = vmatprep.subr.mxu0 0.0
        %2903 = vmatpush1.msra.mxu0 0.0
        %2904 = vmatprep.subr.mxu0 0.0
        %2905 = vmatpush1.msra.mxu0 0.0
        %2906 = vmatprep.subr.mxu0 0.0
        %2907 = vmatpush1.msra.mxu0 0.0
        %2908 = vmatprep.subr.mxu0 0.0
        %2909 = vmatpush1.msra.mxu0 0.0
        %2910 = vmatprep.subr.mxu0 0.0
        %2911 = vmatpush1.msra.mxu0 0.0
        %2912 = vmatprep.subr.mxu0 %v2799
        %2913 = vmatpush1.msra.mxu0 %v2798
        %2914 = vmatprep.subr.mxu0 %v2314
        %2915 = vmatpush1.msra.mxu0 %v2313
        %2916 = vmatprep.subr.mxu0 0.0
        %2917 = vmatpush2.msra.mxu0 0.0
        %2918 = vmatprep.subr.mxu0 0.0
        %2919 = vmatpush2.msra.mxu0 0.0
        %2920 = vmatprep.subr.mxu0 0.0
        %2921 = vmatpush2.msra.mxu0 0.0
        %2922 = vmatprep.subr.mxu0 0.0
        %2923 = vmatpush2.msra.mxu0 0.0
        %2924 = vmatprep.subr.mxu0 0.0
        %2925 = vmatpush2.msra.mxu0 0.0
        %2926 = vmatprep.subr.mxu0 0.0
        %2927 = vmatpush2.msra.mxu0 0.0
        %2928 = vmatprep.subr.mxu0 0.0
        %2929 = vmatpush2.msra.mxu0 0.0
        %2930 = vmatprep.subr.mxu0 0.0
        %2931 = vmatpush2.msra.mxu0 0.0
        %2932 = vmatprep.subr.mxu0 0.0
        %2933 = vmatpush2.msra.mxu0 0.0
        %2934 = vmatprep.subr.mxu0 0.0
        %2935 = vmatpush2.msra.mxu0 0.0
        %2936 = vmatprep.subr.mxu0 0.0
        %2937 = vmatpush2.msra.mxu0 0.0
        %2938 = vmatprep.subr.mxu0 0.0
        %2939 = vmatpush2.msra.mxu0 0.0
        %2940 = vmatprep.subr.mxu0 0.0
        %2941 = vmatpush2.msra.mxu0 0.0
        %2942 = vmatprep.subr.mxu0 0.0
        %2943 = vmatpush2.msra.mxu0 0.0
        %2944 = vmatprep.subr.mxu0 0.0
        %2945 = vmatpush2.msra.mxu0 0.0
        %2946 = vmatprep.subr.mxu0 0.0
        %2947 = vmatpush2.msra.mxu0 0.0
        %2948 = vmatprep.mubr.f32.mxu0 0.0
        %2949 = vmatmul.mubr.f32.gmra.mxu0 %v2811
        %v2950 = vpop.f32.mrf.mxu0
        %v2951 = vadd.f32 %v2807, %v2950
        %v2952 = vpop.f32.mrf.mxu0
        %v2953 = vadd.f32 %v2807, %v2952
        %2954 = vdwg.mxu0
        %2955 = vmatprep.subr.mxu0 0.0
        %2956 = vmatpush1.msra.mxu0 0.0
        %2957 = vmatprep.subr.mxu0 0.0
        %2958 = vmatpush1.msra.mxu0 0.0
        %2959 = vmatprep.subr.mxu0 0.0
        %2960 = vmatpush1.msra.mxu0 0.0
        %2961 = vmatprep.subr.mxu0 0.0
        %2962 = vmatpush1.msra.mxu0 0.0
        %2963 = vmatprep.subr.mxu0 0.0
        %2964 = vmatpush1.msra.mxu0 0.0
        %2965 = vmatprep.subr.mxu0 0.0
        %2966 = vmatpush1.msra.mxu0 0.0
        %2967 = vmatprep.subr.mxu0 0.0
        %2968 = vmatpush1.msra.mxu0 0.0
        %2969 = vmatprep.subr.mxu0 0.0
        %2970 = vmatpush1.msra.mxu0 0.0
        %2971 = vmatprep.subr.mxu0 0.0
        %2972 = vmatpush1.msra.mxu0 0.0
        %2973 = vmatprep.subr.mxu0 0.0
        %2974 = vmatpush1.msra.mxu0 0.0
        %2975 = vmatprep.subr.mxu0 0.0
        %2976 = vmatpush1.msra.mxu0 0.0
        %2977 = vmatprep.subr.mxu0 0.0
        %2978 = vmatpush1.msra.mxu0 0.0
        %2979 = vmatprep.subr.mxu0 0.0
        %2980 = vmatpush1.msra.mxu0 0.0
        %2981 = vmatprep.subr.mxu0 0.0
        %2982 = vmatpush1.msra.mxu0 0.0
        %2983 = vmatprep.subr.mxu0 %v2801
        %2984 = vmatpush1.msra.mxu0 %v2800
        %2985 = vmatprep.subr.mxu0 %v2316
        %2986 = vmatpush1.msra.mxu0 %v2315
        %2987 = vmatprep.subr.mxu0 0.0
        %2988 = vmatpush2.msra.mxu0 0.0
        %2989 = vmatprep.subr.mxu0 0.0
        %2990 = vmatpush2.msra.mxu0 0.0
        %2991 = vmatprep.subr.mxu0 0.0
        %2992 = vmatpush2.msra.mxu0 0.0
        %2993 = vmatprep.subr.mxu0 0.0
        %2994 = vmatpush2.msra.mxu0 0.0
        %2995 = vmatprep.subr.mxu0 0.0
        %2996 = vmatpush2.msra.mxu0 0.0
        %2997 = vmatprep.subr.mxu0 0.0
        %2998 = vmatpush2.msra.mxu0 0.0
        %2999 = vmatprep.subr.mxu0 0.0
        %3000 = vmatpush2.msra.mxu0 0.0
        %3001 = vmatprep.subr.mxu0 0.0
        %3002 = vmatpush2.msra.mxu0 0.0
        %3003 = vmatprep.subr.mxu0 0.0
        %3004 = vmatpush2.msra.mxu0 0.0
        %3005 = vmatprep.subr.mxu0 0.0
        %3006 = vmatpush2.msra.mxu0 0.0
        %3007 = vmatprep.subr.mxu0 0.0
        %3008 = vmatpush2.msra.mxu0 0.0
        %3009 = vmatprep.subr.mxu0 0.0
        %3010 = vmatpush2.msra.mxu0 0.0
        %3011 = vmatprep.subr.mxu0 0.0
        %3012 = vmatpush2.msra.mxu0 0.0
        %3013 = vmatprep.subr.mxu0 0.0
        %3014 = vmatpush2.msra.mxu0 0.0
        %3015 = vmatprep.subr.mxu0 0.0
        %3016 = vmatpush2.msra.mxu0 0.0
        %3017 = vmatprep.subr.mxu0 0.0
        %3018 = vmatpush2.msra.mxu0 0.0
        %3019 = vmatprep.mubr.f32.mxu0 0.0
        %3020 = vmatmul.mubr.f32.gmra.mxu0 %v2811
        %v3021 = vpop.f32.mrf.mxu0
        %v3022 = vadd.f32 %v2807, %v3021
        %v3023 = vpop.f32.mrf.mxu0
        %v3024 = vadd.f32 %v2807, %v3023
        %3025 = vdwg.mxu0
        %3026 = vmatprep.subr.mxu0 0.0
        %3027 = vmatpush1.msra.mxu0 0.0
        %3028 = vmatprep.subr.mxu0 0.0
        %3029 = vmatpush1.msra.mxu0 0.0
        %3030 = vmatprep.subr.mxu0 0.0
        %3031 = vmatpush1.msra.mxu0 0.0
        %3032 = vmatprep.subr.mxu0 0.0
        %3033 = vmatpush1.msra.mxu0 0.0
        %3034 = vmatprep.subr.mxu0 0.0
        %3035 = vmatpush1.msra.mxu0 0.0
        %3036 = vmatprep.subr.mxu0 0.0
        %3037 = vmatpush1.msra.mxu0 0.0
        %3038 = vmatprep.subr.mxu0 0.0
        %3039 = vmatpush1.msra.mxu0 0.0
        %3040 = vmatprep.subr.mxu0 0.0
        %3041 = vmatpush1.msra.mxu0 0.0
        %3042 = vmatprep.subr.mxu0 0.0
        %3043 = vmatpush1.msra.mxu0 0.0
        %3044 = vmatprep.subr.mxu0 0.0
        %3045 = vmatpush1.msra.mxu0 0.0
        %3046 = vmatprep.subr.mxu0 0.0
        %3047 = vmatpush1.msra.mxu0 0.0
        %3048 = vmatprep.subr.mxu0 0.0
        %3049 = vmatpush1.msra.mxu0 0.0
        %3050 = vmatprep.subr.mxu0 0.0
        %3051 = vmatpush1.msra.mxu0 0.0
        %3052 = vmatprep.subr.mxu0 0.0
        %3053 = vmatpush1.msra.mxu0 0.0
        %3054 = vmatprep.subr.mxu0 %v2803
        %3055 = vmatpush1.msra.mxu0 %v2802
        %3056 = vmatprep.subr.mxu0 %v2318
        %3057 = vmatpush1.msra.mxu0 %v2317
        %3058 = vmatprep.subr.mxu0 0.0
        %3059 = vmatpush2.msra.mxu0 0.0
        %3060 = vmatprep.subr.mxu0 0.0
        %3061 = vmatpush2.msra.mxu0 0.0
        %3062 = vmatprep.subr.mxu0 0.0
        %3063 = vmatpush2.msra.mxu0 0.0
        %3064 = vmatprep.subr.mxu0 0.0
        %3065 = vmatpush2.msra.mxu0 0.0
        %3066 = vmatprep.subr.mxu0 0.0
        %3067 = vmatpush2.msra.mxu0 0.0
        %3068 = vmatprep.subr.mxu0 0.0
        %3069 = vmatpush2.msra.mxu0 0.0
        %3070 = vmatprep.subr.mxu0 0.0
        %3071 = vmatpush2.msra.mxu0 0.0
        %3072 = vmatprep.subr.mxu0 0.0
        %3073 = vmatpush2.msra.mxu0 0.0
        %3074 = vmatprep.subr.mxu0 0.0
        %3075 = vmatpush2.msra.mxu0 0.0
        %3076 = vmatprep.subr.mxu0 0.0
        %3077 = vmatpush2.msra.mxu0 0.0
        %3078 = vmatprep.subr.mxu0 0.0
        %3079 = vmatpush2.msra.mxu0 0.0
        %3080 = vmatprep.subr.mxu0 0.0
        %3081 = vmatpush2.msra.mxu0 0.0
        %3082 = vmatprep.subr.mxu0 0.0
        %3083 = vmatpush2.msra.mxu0 0.0
        %3084 = vmatprep.subr.mxu0 0.0
        %3085 = vmatpush2.msra.mxu0 0.0
        %3086 = vmatprep.subr.mxu0 0.0
        %3087 = vmatpush2.msra.mxu0 0.0
        %3088 = vmatprep.subr.mxu0 0.0
        %3089 = vmatpush2.msra.mxu0 0.0
        %3090 = vmatprep.mubr.f32.mxu0 0.0
        %3091 = vmatmul.mubr.f32.gmra.mxu0 %v2811
        %v3092 = vpop.f32.mrf.mxu0
        %v3093 = vadd.f32 %v2807, %v3092
        %v3094 = vpop.f32.mrf.mxu0
        %v3095 = vadd.f32 %v2807, %v3094
        %3096 = vdwg.mxu0
        %v3097 = vmul.f32 %v2880, 0.5
        %v3098 = vmul.f32 %v2882, 0.5
        %v3099 = vmul.f32 %v2951, 0.5
        %v3100 = vmul.f32 %v2953, 0.5
        %v3101 = vmul.f32 %v3022, 0.5
        %v3102 = vmul.f32 %v3024, 0.5
        %v3103 = vmul.f32 %v3093, 0.5
        %v3104 = vmul.f32 %v3095, 0.5
        %v3105 = vmul.f32 %v2880, 0.044715
        %v3106 = vmul.f32 %v2882, 0.044715
        %v3107 = vmul.f32 %v2951, 0.044715
        %v3108 = vmul.f32 %v2953, 0.044715
        %v3109 = vmul.f32 %v3022, 0.044715
        %v3110 = vmul.f32 %v3024, 0.044715
        %v3111 = vmul.f32 %v3093, 0.044715
        %v3112 = vmul.f32 %v3095, 0.044715
        %v3113 = vmul.f32 %v3105, %v2880
        %v3114 = vmul.f32 %v3106, %v2882
        %v3115 = vmul.f32 %v3107, %v2951
        %v3116 = vmul.f32 %v3108, %v2953
        %v3117 = vmul.f32 %v3109, %v3022
        %v3118 = vmul.f32 %v3110, %v3024
        %v3119 = vmul.f32 %v3111, %v3093
        %v3120 = vmul.f32 %v3112, %v3095
        %v3121 = vmul.f32 %v3113, %v2880
        %v3122 = vmul.f32 %v3114, %v2882
        %v3123 = vmul.f32 %v3115, %v2951
        %v3124 = vmul.f32 %v3116, %v2953
        %v3125 = vmul.f32 %v3117, %v3022
        %v3126 = vmul.f32 %v3118, %v3024
        %v3127 = vmul.f32 %v3119, %v3093
        %v3128 = vmul.f32 %v3120, %v3095
        %v3129 = vadd.f32 %v2880, %v3121
        %v3130 = vadd.f32 %v2882, %v3122
        %v3131 = vadd.f32 %v2951, %v3123
        %v3132 = vadd.f32 %v2953, %v3124
        %v3133 = vadd.f32 %v3022, %v3125
        %v3134 = vadd.f32 %v3024, %v3126
        %v3135 = vadd.f32 %v3093, %v3127
        %v3136 = vadd.f32 %v3095, %v3128
        %v3137 = vmul.f32 %v3129, 0.7978846
        %v3138 = vmul.f32 %v3130, 0.7978846
        %v3139 = vmul.f32 %v3131, 0.7978846
        %v3140 = vmul.f32 %v3132, 0.7978846
        %v3141 = vmul.f32 %v3133, 0.7978846
        %v3142 = vmul.f32 %v3134, 0.7978846
        %v3143 = vmul.f32 %v3135, 0.7978846
        %v3144 = vmul.f32 %v3136, 0.7978846
        %v3145 = vtanh.pop %v3137
        %v3146 = vtanh.pop %v3138
        %v3147 = vtanh.pop %v3139
        %v3148 = vtanh.pop %v3140
        %v3149 = vtanh.pop %v3141
        %v3150 = vtanh.pop %v3142
        %v3151 = vtanh.pop %v3143
        %v3152 = vtanh.pop %v3144
        %v3153 = vadd.f32 %v3145, 1.0
        %v3154 = vadd.f32 %v3146, 1.0
        %v3155 = vadd.f32 %v3147, 1.0
        %v3156 = vadd.f32 %v3148, 1.0
        %v3157 = vadd.f32 %v3149, 1.0
        %v3158 = vadd.f32 %v3150, 1.0
        %v3159 = vadd.f32 %v3151, 1.0
        %v3160 = vadd.f32 %v3152, 1.0
        %v3161 = vmul.f32 %v3097, %v3153
        %v3162 = vmul.f32 %v3098, %v3154
        %v3163 = vmul.f32 %v3099, %v3155
        %v3164 = vmul.f32 %v3100, %v3156
        %v3165 = vmul.f32 %v3101, %v3157
        %v3166 = vmul.f32 %v3102, %v3158
        %v3167 = vmul.f32 %v3103, %v3159
        %v3168 = vmul.f32 %v3104, %v3160
        %v3169 = vadd.f32 %v3161, %v1818
        %v3170 = vadd.f32 %v3162, %v1819
        %v3171 = vadd.f32 %v3163, %v1820
        %v3172 = vadd.f32 %v3164, %v1821
        %v3173 = vadd.f32 %v3165, %v1822
        %v3174 = vadd.f32 %v3166, %v1823
        %v3175 = vadd.f32 %v3167, %v1824
        %v3176 = vadd.f32 %v3168, %v1825
        %3177 = vst [vmem:[%s405] sm:$0xff] %v3169
        %3178 = vst [vmem:[%s405 + $0x8] sm:$0xff] %v3170
        %3179 = vst [vmem:[%s405 + $0x10] sm:$0xff] %v3171
        %3180 = vst [vmem:[%s405 + $0x18] sm:$0xff] %v3172
        %3181 = vst [vmem:[%s405 + $0x20] sm:$0xff] %v3173
        %3182 = vst [vmem:[%s405 + $0x28] sm:$0xff] %v3174
        %3183 = vst [vmem:[%s405 + $0x30] sm:$0xff] %v3175
        %3184 = vst [vmem:[%s405 + $0x38] sm:$0xff] %v3176
        %3185 = vrot.lane.b32.xlu0 %v3169, 33
        %v3186 = vpop.permute.xlu0 %3185
        %3187 = vrot.lane.b32.xlu0 %v3170, 33
        %v3188 = vpop.permute.xlu0 %3187
        %3189 = vrot.lane.b32.xlu0 %v3171, 33
        %v3190 = vpop.permute.xlu0 %3189
        %3191 = vrot.lane.b32.xlu0 %v3172, 33
        %v3192 = vpop.permute.xlu0 %3191
        %3193 = vrot.lane.b32.xlu0 %v3173, 33
        %v3194 = vpop.permute.xlu0 %3193
        %3195 = vrot.lane.b32.xlu0 %v3174, 33
        %v3196 = vpop.permute.xlu0 %3195
        %3197 = vrot.lane.b32.xlu0 %v3175, 33
        %v3198 = vpop.permute.xlu0 %3197
        %3199 = vrot.lane.b32.xlu0 %v3176, 33
        %v3200 = vpop.permute.xlu0 %3199
        %v3201 = vsel %vm976, %v3198, %v3200
        %v3202 = vsel %vm976, %v3196, %v3198
        %v3203 = vsel %vm976, %v3194, %v3196
        %v3204 = vsel %vm976, %v3192, %v3194
        %v3205 = vsel %vm976, %v3190, %v3192
        %v3206 = vsel %vm976, %v3188, %v3190
        %v3207 = vsel %vm976, %v3186, %v3188
        %v3208 = vsel %vm976, %v3200, %v3186
        %v3209 = vld [vmem:[%s2 + $0xc0] sm:$0xff]
        %v3210 = vld [vmem:[%s2 + $0xc8] sm:$0xff]
        %v3211 = vld [vmem:[%s2 + $0xd0] sm:$0xff]
        %v3212 = vld [vmem:[%s2 + $0xd8] sm:$0xff]
        %v3213 = vld [vmem:[%s2 + $0xe0] sm:$0xff]
        %v3214 = vld [vmem:[%s2 + $0xe8] sm:$0xff]
        %v3215 = vld [vmem:[%s2 + $0xf0] sm:$0xff]
        %v3216 = vld [vmem:[%s2 + $0xf8] sm:$0xff]
        %v3217 = vmul.f32 %v3208, %v3209
        %v3218 = vmul.f32 %v3207, %v3210
        %v3219 = vmul.f32 %v3206, %v3211
        %v3220 = vmul.f32 %v3205, %v3212
        %v3221 = vmul.f32 %v3204, %v3213
        %v3222 = vmul.f32 %v3203, %v3214
        %v3223 = vmul.f32 %v3202, %v3215
        %v3224 = vmul.f32 %v3201, %v3216
        %3225 = vrot.lane.b32.xlu0 %v3169, 32
        %v3226 = vpop.permute.xlu0 %3225
        %3227 = vrot.lane.b32.xlu0 %v3170, 32
        %v3228 = vpop.permute.xlu0 %3227
        %3229 = vrot.lane.b32.xlu0 %v3171, 32
        %v3230 = vpop.permute.xlu0 %3229
        %3231 = vrot.lane.b32.xlu0 %v3172, 32
        %v3232 = vpop.permute.xlu0 %3231
        %3233 = vrot.lane.b32.xlu0 %v3173, 32
        %v3234 = vpop.permute.xlu0 %3233
        %3235 = vrot.lane.b32.xlu0 %v3174, 32
        %v3236 = vpop.permute.xlu0 %3235
        %3237 = vrot.lane.b32.xlu0 %v3175, 32
        %v3238 = vpop.permute.xlu0 %3237
        %3239 = vrot.lane.b32.xlu0 %v3176, 32
        %v3240 = vpop.permute.xlu0 %3239
        %v3241 = vsel %vm1017, %v3238, %v3240
        %v3242 = vsel %vm1017, %v3236, %v3238
        %v3243 = vsel %vm1017, %v3234, %v3236
        %v3244 = vsel %vm1017, %v3232, %v3234
        %v3245 = vsel %vm1017, %v3230, %v3232
        %v3246 = vsel %vm1017, %v3228, %v3230
        %v3247 = vsel %vm1017, %v3226, %v3228
        %v3248 = vsel %vm1017, %v3240, %v3226
        %v3249 = vld [vmem:[%s1026 + $0xc0] sm:$0xff]
        %v3250 = vld [vmem:[%s1026 + $0xc8] sm:$0xff]
        %v3251 = vld [vmem:[%s1026 + $0xd0] sm:$0xff]
        %v3252 = vld [vmem:[%s1026 + $0xd8] sm:$0xff]
        %v3253 = vld [vmem:[%s1026 + $0xe0] sm:$0xff]
        %v3254 = vld [vmem:[%s1026 + $0xe8] sm:$0xff]
        %v3255 = vld [vmem:[%s1026 + $0xf0] sm:$0xff]
        %v3256 = vld [vmem:[%s1026 + $0xf8] sm:$0xff]
        %v3257 = vmul.f32 %v3248, %v3249
        %v3258 = vmul.f32 %v3247, %v3250
        %v3259 = vmul.f32 %v3246, %v3251
        %v3260 = vmul.f32 %v3245, %v3252
        %v3261 = vmul.f32 %v3244, %v3253
        %v3262 = vmul.f32 %v3243, %v3254
        %v3263 = vmul.f32 %v3242, %v3255
        %v3264 = vmul.f32 %v3241, %v3256
        %v3265 = vadd.f32 %v3217, %v3257
        %v3266 = vadd.f32 %v3218, %v3258
        %v3267 = vadd.f32 %v3219, %v3259
        %v3268 = vadd.f32 %v3220, %v3260
        %v3269 = vadd.f32 %v3221, %v3261
        %v3270 = vadd.f32 %v3222, %v3262
        %v3271 = vadd.f32 %v3223, %v3263
        %v3272 = vadd.f32 %v3224, %v3264
        %3273 = vrot.lane.b32.xlu0 %v3169, 31
        %v3274 = vpop.permute.xlu0 %3273
        %3275 = vrot.lane.b32.xlu0 %v3170, 31
        %v3276 = vpop.permute.xlu0 %3275
        %3277 = vrot.lane.b32.xlu0 %v3171, 31
        %v3278 = vpop.permute.xlu0 %3277
        %3279 = vrot.lane.b32.xlu0 %v3172, 31
        %v3280 = vpop.permute.xlu0 %3279
        %3281 = vrot.lane.b32.xlu0 %v3173, 31
        %v3282 = vpop.permute.xlu0 %3281
        %3283 = vrot.lane.b32.xlu0 %v3174, 31
        %v3284 = vpop.permute.xlu0 %3283
        %3285 = vrot.lane.b32.xlu0 %v3175, 31
        %v3286 = vpop.permute.xlu0 %3285
        %3287 = vrot.lane.b32.xlu0 %v3176, 31
        %v3288 = vpop.permute.xlu0 %3287
        %v3289 = vsel %vm1067, %v3286, %v3288
        %v3290 = vsel %vm1067, %v3284, %v3286
        %v3291 = vsel %vm1067, %v3282, %v3284
        %v3292 = vsel %vm1067, %v3280, %v3282
        %v3293 = vsel %vm1067, %v3278, %v3280
        %v3294 = vsel %vm1067, %v3276, %v3278
        %v3295 = vsel %vm1067, %v3274, %v3276
        %v3296 = vsel %vm1067, %v3288, %v3274
        %v3297 = vld [vmem:[%s1076 + $0xc0] sm:$0xff]
        %v3298 = vld [vmem:[%s1076 + $0xc8] sm:$0xff]
        %v3299 = vld [vmem:[%s1076 + $0xd0] sm:$0xff]
        %v3300 = vld [vmem:[%s1076 + $0xd8] sm:$0xff]
        %v3301 = vld [vmem:[%s1076 + $0xe0] sm:$0xff]
        %v3302 = vld [vmem:[%s1076 + $0xe8] sm:$0xff]
        %v3303 = vld [vmem:[%s1076 + $0xf0] sm:$0xff]
        %v3304 = vld [vmem:[%s1076 + $0xf8] sm:$0xff]
        %v3305 = vmul.f32 %v3296, %v3297
        %v3306 = vmul.f32 %v3295, %v3298
        %v3307 = vmul.f32 %v3294, %v3299
        %v3308 = vmul.f32 %v3293, %v3300
        %v3309 = vmul.f32 %v3292, %v3301
        %v3310 = vmul.f32 %v3291, %v3302
        %v3311 = vmul.f32 %v3290, %v3303
        %v3312 = vmul.f32 %v3289, %v3304
        %v3313 = vadd.f32 %v3265, %v3305
        %v3314 = vadd.f32 %v3266, %v3306
        %v3315 = vadd.f32 %v3267, %v3307
        %v3316 = vadd.f32 %v3268, %v3308
        %v3317 = vadd.f32 %v3269, %v3309
        %v3318 = vadd.f32 %v3270, %v3310
        %v3319 = vadd.f32 %v3271, %v3311
        %v3320 = vadd.f32 %v3272, %v3312
        %3321 = vrot.lane.b32.xlu0 %v3169, 1
        %v3322 = vpop.permute.xlu0 %3321
        %3323 = vrot.lane.b32.xlu0 %v3170, 1
        %v3324 = vpop.permute.xlu0 %3323
        %3325 = vrot.lane.b32.xlu0 %v3171, 1
        %v3326 = vpop.permute.xlu0 %3325
        %3327 = vrot.lane.b32.xlu0 %v3172, 1
        %v3328 = vpop.permute.xlu0 %3327
        %3329 = vrot.lane.b32.xlu0 %v3173, 1
        %v3330 = vpop.permute.xlu0 %3329
        %3331 = vrot.lane.b32.xlu0 %v3174, 1
        %v3332 = vpop.permute.xlu0 %3331
        %3333 = vrot.lane.b32.xlu0 %v3175, 1
        %v3334 = vpop.permute.xlu0 %3333
        %3335 = vrot.lane.b32.xlu0 %v3176, 1
        %v3336 = vpop.permute.xlu0 %3335
        %v3337 = vsel %vm1117, %v3334, %v3336
        %v3338 = vsel %vm1117, %v3332, %v3334
        %v3339 = vsel %vm1117, %v3330, %v3332
        %v3340 = vsel %vm1117, %v3328, %v3330
        %v3341 = vsel %vm1117, %v3326, %v3328
        %v3342 = vsel %vm1117, %v3324, %v3326
        %v3343 = vsel %vm1117, %v3322, %v3324
        %v3344 = vsel %vm1117, %v3336, %v3322
        %v3345 = vld [vmem:[%s1126 + $0xc0] sm:$0xff]
        %v3346 = vld [vmem:[%s1126 + $0xc8] sm:$0xff]
        %v3347 = vld [vmem:[%s1126 + $0xd0] sm:$0xff]
        %v3348 = vld [vmem:[%s1126 + $0xd8] sm:$0xff]
        %v3349 = vld [vmem:[%s1126 + $0xe0] sm:$0xff]
        %v3350 = vld [vmem:[%s1126 + $0xe8] sm:$0xff]
        %v3351 = vld [vmem:[%s1126 + $0xf0] sm:$0xff]
        %v3352 = vld [vmem:[%s1126 + $0xf8] sm:$0xff]
        %v3353 = vmul.f32 %v3344, %v3345
        %v3354 = vmul.f32 %v3343, %v3346
        %v3355 = vmul.f32 %v3342, %v3347
        %v3356 = vmul.f32 %v3341, %v3348
        %v3357 = vmul.f32 %v3340, %v3349
        %v3358 = vmul.f32 %v3339, %v3350
        %v3359 = vmul.f32 %v3338, %v3351
        %v3360 = vmul.f32 %v3337, %v3352
        %v3361 = vadd.f32 %v3313, %v3353
        %v3362 = vadd.f32 %v3314, %v3354
        %v3363 = vadd.f32 %v3315, %v3355
        %v3364 = vadd.f32 %v3316, %v3356
        %v3365 = vadd.f32 %v3317, %v3357
        %v3366 = vadd.f32 %v3318, %v3358
        %v3367 = vadd.f32 %v3319, %v3359
        %v3368 = vadd.f32 %v3320, %v3360
        %v3369 = vld [vmem:[%s1151 + $0xc0] sm:$0xff]
        %v3370 = vld [vmem:[%s1151 + $0xc8] sm:$0xff]
        %v3371 = vld [vmem:[%s1151 + $0xd0] sm:$0xff]
        %v3372 = vld [vmem:[%s1151 + $0xd8] sm:$0xff]
        %v3373 = vld [vmem:[%s1151 + $0xe0] sm:$0xff]
        %v3374 = vld [vmem:[%s1151 + $0xe8] sm:$0xff]
        %v3375 = vld [vmem:[%s1151 + $0xf0] sm:$0xff]
        %v3376 = vld [vmem:[%s1151 + $0xf8] sm:$0xff]
        %v3377 = vmul.f32 %v3169, %v3369
        %v3378 = vmul.f32 %v3170, %v3370
        %v3379 = vmul.f32 %v3171, %v3371
        %v3380 = vmul.f32 %v3172, %v3372
        %v3381 = vmul.f32 %v3173, %v3373
        %v3382 = vmul.f32 %v3174, %v3374
        %v3383 = vmul.f32 %v3175, %v3375
        %v3384 = vmul.f32 %v3176, %v3376
        %v3385 = vadd.f32 %v3361, %v3377
        %v3386 = vadd.f32 %v3362, %v3378
        %v3387 = vadd.f32 %v3363, %v3379
        %v3388 = vadd.f32 %v3364, %v3380
        %v3389 = vadd.f32 %v3365, %v3381
        %v3390 = vadd.f32 %v3366, %v3382
        %v3391 = vadd.f32 %v3367, %v3383
        %v3392 = vadd.f32 %v3368, %v3384
        %3393 = vrot.lane.b32.xlu0 %v3169, 127
        %v3394 = vpop.permute.xlu0 %3393
        %3395 = vrot.lane.b32.xlu0 %v3170, 127
        %v3396 = vpop.permute.xlu0 %3395
        %3397 = vrot.lane.b32.xlu0 %v3171, 127
        %v3398 = vpop.permute.xlu0 %3397
        %3399 = vrot.lane.b32.xlu0 %v3172, 127
        %v3400 = vpop.permute.xlu0 %3399
        %3401 = vrot.lane.b32.xlu0 %v3173, 127
        %v3402 = vpop.permute.xlu0 %3401
        %3403 = vrot.lane.b32.xlu0 %v3174, 127
        %v3404 = vpop.permute.xlu0 %3403
        %3405 = vrot.lane.b32.xlu0 %v3175, 127
        %v3406 = vpop.permute.xlu0 %3405
        %3407 = vrot.lane.b32.xlu0 %v3176, 127
        %v3408 = vpop.permute.xlu0 %3407
        %v3409 = vsel %vm1192, %v3406, %v3408
        %v3410 = vsel %vm1192, %v3404, %v3406
        %v3411 = vsel %vm1192, %v3402, %v3404
        %v3412 = vsel %vm1192, %v3400, %v3402
        %v3413 = vsel %vm1192, %v3398, %v3400
        %v3414 = vsel %vm1192, %v3396, %v3398
        %v3415 = vsel %vm1192, %v3394, %v3396
        %v3416 = vsel %vm1192, %v3408, %v3394
        %v3417 = vld [vmem:[%s1201 + $0xc0] sm:$0xff]
        %v3418 = vld [vmem:[%s1201 + $0xc8] sm:$0xff]
        %v3419 = vld [vmem:[%s1201 + $0xd0] sm:$0xff]
        %v3420 = vld [vmem:[%s1201 + $0xd8] sm:$0xff]
        %v3421 = vld [vmem:[%s1201 + $0xe0] sm:$0xff]
        %v3422 = vld [vmem:[%s1201 + $0xe8] sm:$0xff]
        %v3423 = vld [vmem:[%s1201 + $0xf0] sm:$0xff]
        %v3424 = vld [vmem:[%s1201 + $0xf8] sm:$0xff]
        %v3425 = vmul.f32 %v3415, %v3417
        %v3426 = vmul.f32 %v3414, %v3418
        %v3427 = vmul.f32 %v3413, %v3419
        %v3428 = vmul.f32 %v3412, %v3420
        %v3429 = vmul.f32 %v3411, %v3421
        %v3430 = vmul.f32 %v3410, %v3422
        %v3431 = vmul.f32 %v3409, %v3423
        %v3432 = vmul.f32 %v3416, %v3424
        %v3433 = vadd.f32 %v3385, %v3425
        %v3434 = vadd.f32 %v3386, %v3426
        %v3435 = vadd.f32 %v3387, %v3427
        %v3436 = vadd.f32 %v3388, %v3428
        %v3437 = vadd.f32 %v3389, %v3429
        %v3438 = vadd.f32 %v3390, %v3430
        %v3439 = vadd.f32 %v3391, %v3431
        %v3440 = vadd.f32 %v3392, %v3432
        %3441 = vrot.lane.b32.xlu0 %v3169, 97
        %v3442 = vpop.permute.xlu0 %3441
        %3443 = vrot.lane.b32.xlu0 %v3170, 97
        %v3444 = vpop.permute.xlu0 %3443
        %3445 = vrot.lane.b32.xlu0 %v3171, 97
        %v3446 = vpop.permute.xlu0 %3445
        %3447 = vrot.lane.b32.xlu0 %v3172, 97
        %v3448 = vpop.permute.xlu0 %3447
        %3449 = vrot.lane.b32.xlu0 %v3173, 97
        %v3450 = vpop.permute.xlu0 %3449
        %3451 = vrot.lane.b32.xlu0 %v3174, 97
        %v3452 = vpop.permute.xlu0 %3451
        %3453 = vrot.lane.b32.xlu0 %v3175, 97
        %v3454 = vpop.permute.xlu0 %3453
        %3455 = vrot.lane.b32.xlu0 %v3176, 97
        %v3456 = vpop.permute.xlu0 %3455
        %v3457 = vsel %vm1242, %v3454, %v3456
        %v3458 = vsel %vm1242, %v3452, %v3454
        %v3459 = vsel %vm1242, %v3450, %v3452
        %v3460 = vsel %vm1242, %v3448, %v3450
        %v3461 = vsel %vm1242, %v3446, %v3448
        %v3462 = vsel %vm1242, %v3444, %v3446
        %v3463 = vsel %vm1242, %v3442, %v3444
        %v3464 = vsel %vm1242, %v3456, %v3442
        %v3465 = vld [vmem:[%s1251 + $0xc0] sm:$0xff]
        %v3466 = vld [vmem:[%s1251 + $0xc8] sm:$0xff]
        %v3467 = vld [vmem:[%s1251 + $0xd0] sm:$0xff]
        %v3468 = vld [vmem:[%s1251 + $0xd8] sm:$0xff]
        %v3469 = vld [vmem:[%s1251 + $0xe0] sm:$0xff]
        %v3470 = vld [vmem:[%s1251 + $0xe8] sm:$0xff]
        %v3471 = vld [vmem:[%s1251 + $0xf0] sm:$0xff]
        %v3472 = vld [vmem:[%s1251 + $0xf8] sm:$0xff]
        %v3473 = vmul.f32 %v3463, %v3465
        %v3474 = vmul.f32 %v3462, %v3466
        %v3475 = vmul.f32 %v3461, %v3467
        %v3476 = vmul.f32 %v3460, %v3468
        %v3477 = vmul.f32 %v3459, %v3469
        %v3478 = vmul.f32 %v3458, %v3470
        %v3479 = vmul.f32 %v3457, %v3471
        %v3480 = vmul.f32 %v3464, %v3472
        %v3481 = vadd.f32 %v3433, %v3473
        %v3482 = vadd.f32 %v3434, %v3474
        %v3483 = vadd.f32 %v3435, %v3475
        %v3484 = vadd.f32 %v3436, %v3476
        %v3485 = vadd.f32 %v3437, %v3477
        %v3486 = vadd.f32 %v3438, %v3478
        %v3487 = vadd.f32 %v3439, %v3479
        %v3488 = vadd.f32 %v3440, %v3480
        %3489 = vrot.lane.b32.xlu0 %v3169, 96
        %v3490 = vpop.permute.xlu0 %3489
        %3491 = vrot.lane.b32.xlu0 %v3170, 96
        %v3492 = vpop.permute.xlu0 %3491
        %3493 = vrot.lane.b32.xlu0 %v3171, 96
        %v3494 = vpop.permute.xlu0 %3493
        %3495 = vrot.lane.b32.xlu0 %v3172, 96
        %v3496 = vpop.permute.xlu0 %3495
        %3497 = vrot.lane.b32.xlu0 %v3173, 96
        %v3498 = vpop.permute.xlu0 %3497
        %3499 = vrot.lane.b32.xlu0 %v3174, 96
        %v3500 = vpop.permute.xlu0 %3499
        %3501 = vrot.lane.b32.xlu0 %v3175, 96
        %v3502 = vpop.permute.xlu0 %3501
        %3503 = vrot.lane.b32.xlu0 %v3176, 96
        %v3504 = vpop.permute.xlu0 %3503
        %v3505 = vsel %vm1292, %v3502, %v3504
        %v3506 = vsel %vm1292, %v3500, %v3502
        %v3507 = vsel %vm1292, %v3498, %v3500
        %v3508 = vsel %vm1292, %v3496, %v3498
        %v3509 = vsel %vm1292, %v3494, %v3496
        %v3510 = vsel %vm1292, %v3492, %v3494
        %v3511 = vsel %vm1292, %v3490, %v3492
        %v3512 = vsel %vm1292, %v3504, %v3490
        %v3513 = vld [vmem:[%s1301 + $0xc0] sm:$0xff]
        %v3514 = vld [vmem:[%s1301 + $0xc8] sm:$0xff]
        %v3515 = vld [vmem:[%s1301 + $0xd0] sm:$0xff]
        %v3516 = vld [vmem:[%s1301 + $0xd8] sm:$0xff]
        %v3517 = vld [vmem:[%s1301 + $0xe0] sm:$0xff]
        %v3518 = vld [vmem:[%s1301 + $0xe8] sm:$0xff]
        %v3519 = vld [vmem:[%s1301 + $0xf0] sm:$0xff]
        %v3520 = vld [vmem:[%s1301 + $0xf8] sm:$0xff]
        %v3521 = vmul.f32 %v3511, %v3513
        %v3522 = vmul.f32 %v3510, %v3514
        %v3523 = vmul.f32 %v3509, %v3515
        %v3524 = vmul.f32 %v3508, %v3516
        %v3525 = vmul.f32 %v3507, %v3517
        %v3526 = vmul.f32 %v3506, %v3518
        %v3527 = vmul.f32 %v3505, %v3519
        %v3528 = vmul.f32 %v3512, %v3520
        %v3529 = vadd.f32 %v3481, %v3521
        %v3530 = vadd.f32 %v3482, %v3522
        %v3531 = vadd.f32 %v3483, %v3523
        %v3532 = vadd.f32 %v3484, %v3524
        %v3533 = vadd.f32 %v3485, %v3525
        %v3534 = vadd.f32 %v3486, %v3526
        %v3535 = vadd.f32 %v3487, %v3527
        %v3536 = vadd.f32 %v3488, %v3528
        %3537 = vrot.lane.b32.xlu0 %v3169, 95
        %v3538 = vpop.permute.xlu0 %3537
        %3539 = vrot.lane.b32.xlu0 %v3170, 95
        %v3540 = vpop.permute.xlu0 %3539
        %3541 = vrot.lane.b32.xlu0 %v3171, 95
        %v3542 = vpop.permute.xlu0 %3541
        %3543 = vrot.lane.b32.xlu0 %v3172, 95
        %v3544 = vpop.permute.xlu0 %3543
        %3545 = vrot.lane.b32.xlu0 %v3173, 95
        %v3546 = vpop.permute.xlu0 %3545
        %3547 = vrot.lane.b32.xlu0 %v3174, 95
        %v3548 = vpop.permute.xlu0 %3547
        %3549 = vrot.lane.b32.xlu0 %v3175, 95
        %v3550 = vpop.permute.xlu0 %3549
        %3551 = vrot.lane.b32.xlu0 %v3176, 95
        %v3552 = vpop.permute.xlu0 %3551
        %v3553 = vsel %vm1342, %v3550, %v3552
        %v3554 = vsel %vm1342, %v3548, %v3550
        %v3555 = vsel %vm1342, %v3546, %v3548
        %v3556 = vsel %vm1342, %v3544, %v3546
        %v3557 = vsel %vm1342, %v3542, %v3544
        %v3558 = vsel %vm1342, %v3540, %v3542
        %v3559 = vsel %vm1342, %v3538, %v3540
        %v3560 = vsel %vm1342, %v3552, %v3538
        %v3561 = vld [vmem:[%s1351 + $0xc0] sm:$0xff]
        %v3562 = vld [vmem:[%s1351 + $0xc8] sm:$0xff]
        %v3563 = vld [vmem:[%s1351 + $0xd0] sm:$0xff]
        %v3564 = vld [vmem:[%s1351 + $0xd8] sm:$0xff]
        %v3565 = vld [vmem:[%s1351 + $0xe0] sm:$0xff]
        %v3566 = vld [vmem:[%s1351 + $0xe8] sm:$0xff]
        %v3567 = vld [vmem:[%s1351 + $0xf0] sm:$0xff]
        %v3568 = vld [vmem:[%s1351 + $0xf8] sm:$0xff]
        %v3569 = vmul.f32 %v3559, %v3561
        %v3570 = vmul.f32 %v3558, %v3562
        %v3571 = vmul.f32 %v3557, %v3563
        %v3572 = vmul.f32 %v3556, %v3564
        %v3573 = vmul.f32 %v3555, %v3565
        %v3574 = vmul.f32 %v3554, %v3566
        %v3575 = vmul.f32 %v3553, %v3567
        %v3576 = vmul.f32 %v3560, %v3568
        %v3577 = vadd.f32 %v3529, %v3569
        %v3578 = vadd.f32 %v3530, %v3570
        %v3579 = vadd.f32 %v3531, %v3571
        %v3580 = vadd.f32 %v3532, %v3572
        %v3581 = vadd.f32 %v3533, %v3573
        %v3582 = vadd.f32 %v3534, %v3574
        %v3583 = vadd.f32 %v3535, %v3575
        %v3584 = vadd.f32 %v3536, %v3576
        %3586 = vset.pattern.permute.xlu0 0
        %3587 = vperm.xlu0 %3586, %v409
        %v3588 = vpop.permute.xlu0 %3587
        %v3590 = vadd.f32 %v3577, %v3588
        %v3591 = vadd.f32 %v3578, %v3588
        %v3592 = vadd.f32 %v3579, %v3588
        %v3593 = vadd.f32 %v3580, %v3588
        %v3594 = vadd.f32 %v3581, %v3588
        %v3595 = vadd.f32 %v3582, %v3588
        %v3596 = vadd.f32 %v3583, %v3588
        %v3597 = vadd.f32 %v3584, %v3588
        %v3598 = vmul.f32 %v3590, 0.5
        %v3599 = vmul.f32 %v3591, 0.5
        %v3600 = vmul.f32 %v3592, 0.5
        %v3601 = vmul.f32 %v3593, 0.5
        %v3602 = vmul.f32 %v3594, 0.5
        %v3603 = vmul.f32 %v3595, 0.5
        %v3604 = vmul.f32 %v3596, 0.5
        %v3605 = vmul.f32 %v3597, 0.5
        %v3606 = vmul.f32 %v3590, 0.044715
        %v3607 = vmul.f32 %v3591, 0.044715
        %v3608 = vmul.f32 %v3592, 0.044715
        %v3609 = vmul.f32 %v3593, 0.044715
        %v3610 = vmul.f32 %v3594, 0.044715
        %v3611 = vmul.f32 %v3595, 0.044715
        %v3612 = vmul.f32 %v3596, 0.044715
        %v3613 = vmul.f32 %v3597, 0.044715
        %v3614 = vmul.f32 %v3606, %v3590
        %v3615 = vmul.f32 %v3607, %v3591
        %v3616 = vmul.f32 %v3608, %v3592
        %v3617 = vmul.f32 %v3609, %v3593
        %v3618 = vmul.f32 %v3610, %v3594
        %v3619 = vmul.f32 %v3611, %v3595
        %v3620 = vmul.f32 %v3612, %v3596
        %v3621 = vmul.f32 %v3613, %v3597
        %v3622 = vmul.f32 %v3614, %v3590
        %v3623 = vmul.f32 %v3615, %v3591
        %v3624 = vmul.f32 %v3616, %v3592
        %v3625 = vmul.f32 %v3617, %v3593
        %v3626 = vmul.f32 %v3618, %v3594
        %v3627 = vmul.f32 %v3619, %v3595
        %v3628 = vmul.f32 %v3620, %v3596
        %v3629 = vmul.f32 %v3621, %v3597
        %v3630 = vadd.f32 %v3590, %v3622
        %v3631 = vadd.f32 %v3591, %v3623
        %v3632 = vadd.f32 %v3592, %v3624
        %v3633 = vadd.f32 %v3593, %v3625
        %v3634 = vadd.f32 %v3594, %v3626
        %v3635 = vadd.f32 %v3595, %v3627
        %v3636 = vadd.f32 %v3596, %v3628
        %v3637 = vadd.f32 %v3597, %v3629
        %v3638 = vmul.f32 %v3630, 0.7978846
        %v3639 = vmul.f32 %v3631, 0.7978846
        %v3640 = vmul.f32 %v3632, 0.7978846
        %v3641 = vmul.f32 %v3633, 0.7978846
        %v3642 = vmul.f32 %v3634, 0.7978846
        %v3643 = vmul.f32 %v3635, 0.7978846
        %v3644 = vmul.f32 %v3636, 0.7978846
        %v3645 = vmul.f32 %v3637, 0.7978846
        %v3646 = vtanh.pop %v3638
        %v3647 = vtanh.pop %v3639
        %v3648 = vtanh.pop %v3640
        %v3649 = vtanh.pop %v3641
        %v3650 = vtanh.pop %v3642
        %v3651 = vtanh.pop %v3643
        %v3652 = vtanh.pop %v3644
        %v3653 = vtanh.pop %v3645
        %v3654 = vadd.f32 %v3646, 1.0
        %v3655 = vadd.f32 %v3647, 1.0
        %v3656 = vadd.f32 %v3648, 1.0
        %v3657 = vadd.f32 %v3649, 1.0
        %v3658 = vadd.f32 %v3650, 1.0
        %v3659 = vadd.f32 %v3651, 1.0
        %v3660 = vadd.f32 %v3652, 1.0
        %v3661 = vadd.f32 %v3653, 1.0
        %v3662 = vmul.f32 %v3598, %v3654
        %v3663 = vmul.f32 %v3599, %v3655
        %v3664 = vmul.f32 %v3600, %v3656
        %v3665 = vmul.f32 %v3601, %v3657
        %v3666 = vmul.f32 %v3602, %v3658
        %v3667 = vmul.f32 %v3603, %v3659
        %v3668 = vmul.f32 %v3604, %v3660
        %v3669 = vmul.f32 %v3605, %v3661
        %3671 = vset.pattern.permute.xlu0 0
        %3672 = vperm.xlu0 %3671, %v412
        %v3673 = vpop.permute.xlu0 %3672
        %v3676 = vsel %vm1466, %v415, 0
        %3678 = vmatprep.subr.mxu0 0.0
        %3679 = vmatpush1.msra.mxu0 0.0
        %3680 = vmatprep.subr.mxu0 0.0
        %3681 = vmatpush1.msra.mxu0 0.0
        %3682 = vmatprep.subr.mxu0 0.0
        %3683 = vmatpush1.msra.mxu0 0.0
        %3684 = vmatprep.subr.mxu0 0.0
        %3685 = vmatpush1.msra.mxu0 0.0
        %3686 = vmatprep.subr.mxu0 0.0
        %3687 = vmatpush1.msra.mxu0 0.0
        %3688 = vmatprep.subr.mxu0 0.0
        %3689 = vmatpush1.msra.mxu0 0.0
        %3690 = vmatprep.subr.mxu0 0.0
        %3691 = vmatpush1.msra.mxu0 0.0
        %3692 = vmatprep.subr.mxu0 0.0
        %3693 = vmatpush1.msra.mxu0 0.0
        %3694 = vmatprep.subr.mxu0 0.0
        %3695 = vmatpush1.msra.mxu0 0.0
        %3696 = vmatprep.subr.mxu0 0.0
        %3697 = vmatpush1.msra.mxu0 0.0
        %3698 = vmatprep.subr.mxu0 0.0
        %3699 = vmatpush1.msra.mxu0 0.0
        %3700 = vmatprep.subr.mxu0 0.0
        %3701 = vmatpush1.msra.mxu0 0.0
        %3702 = vmatprep.subr.mxu0 0.0
        %3703 = vmatpush1.msra.mxu0 0.0
        %3704 = vmatprep.subr.mxu0 0.0
        %3705 = vmatpush1.msra.mxu0 0.0
        %3706 = vmatprep.subr.mxu0 0.0
        %3707 = vmatpush1.msra.mxu0 0.0
        %3708 = vmatprep.subr.mxu0 %v3663
        %3709 = vmatpush1.msra.mxu0 %v3662
        %3710 = vmatprep.subr.mxu0 0.0
        %3711 = vmatpush2.msra.mxu0 0.0
        %3712 = vmatprep.subr.mxu0 0.0
        %3713 = vmatpush2.msra.mxu0 0.0
        %3714 = vmatprep.subr.mxu0 0.0
        %3715 = vmatpush2.msra.mxu0 0.0
        %3716 = vmatprep.subr.mxu0 0.0
        %3717 = vmatpush2.msra.mxu0 0.0
        %3718 = vmatprep.subr.mxu0 0.0
        %3719 = vmatpush2.msra.mxu0 0.0
        %3720 = vmatprep.subr.mxu0 0.0
        %3721 = vmatpush2.msra.mxu0 0.0
        %3722 = vmatprep.subr.mxu0 0.0
        %3723 = vmatpush2.msra.mxu0 0.0
        %3724 = vmatprep.subr.mxu0 0.0
        %3725 = vmatpush2.msra.mxu0 0.0
        %3726 = vmatprep.subr.mxu0 0.0
        %3727 = vmatpush2.msra.mxu0 0.0
        %3728 = vmatprep.subr.mxu0 0.0
        %3729 = vmatpush2.msra.mxu0 0.0
        %3730 = vmatprep.subr.mxu0 0.0
        %3731 = vmatpush2.msra.mxu0 0.0
        %3732 = vmatprep.subr.mxu0 0.0
        %3733 = vmatpush2.msra.mxu0 0.0
        %3734 = vmatprep.subr.mxu0 0.0
        %3735 = vmatpush2.msra.mxu0 0.0
        %3736 = vmatprep.subr.mxu0 0.0
        %3737 = vmatpush2.msra.mxu0 0.0
        %3738 = vmatprep.subr.mxu0 0.0
        %3739 = vmatpush2.msra.mxu0 0.0
        %3740 = vmatprep.subr.mxu0 0.0
        %3741 = vmatpush2.msra.mxu0 0.0
        %3742 = vmatprep.mubr.f32.mxu0 0.0
        %3743 = vmatmul.mubr.f32.gmra.mxu0 %v3676
        %v3744 = vpop.f32.mrf.mxu0
        %v3745 = vadd.f32 %v3673, %v3744
        %v3746 = vpop.f32.mrf.mxu0
        %v3747 = vadd.f32 %v3673, %v3746
        %3748 = vdwg.mxu0
        %3749 = vmatprep.subr.mxu0 0.0
        %3750 = vmatpush1.msra.mxu0 0.0
        %3751 = vmatprep.subr.mxu0 0.0
        %3752 = vmatpush1.msra.mxu0 0.0
        %3753 = vmatprep.subr.mxu0 0.0
        %3754 = vmatpush1.msra.mxu0 0.0
        %3755 = vmatprep.subr.mxu0 0.0
        %3756 = vmatpush1.msra.mxu0 0.0
        %3757 = vmatprep.subr.mxu0 0.0
        %3758 = vmatpush1.msra.mxu0 0.0
        %3759 = vmatprep.subr.mxu0 0.0
        %3760 = vmatpush1.msra.mxu0 0.0
        %3761 = vmatprep.subr.mxu0 0.0
        %3762 = vmatpush1.msra.mxu0 0.0
        %3763 = vmatprep.subr.mxu0 0.0
        %3764 = vmatpush1.msra.mxu0 0.0
        %3765 = vmatprep.subr.mxu0 0.0
        %3766 = vmatpush1.msra.mxu0 0.0
        %3767 = vmatprep.subr.mxu0 0.0
        %3768 = vmatpush1.msra.mxu0 0.0
        %3769 = vmatprep.subr.mxu0 0.0
        %3770 = vmatpush1.msra.mxu0 0.0
        %3771 = vmatprep.subr.mxu0 0.0
        %3772 = vmatpush1.msra.mxu0 0.0
        %3773 = vmatprep.subr.mxu0 0.0
        %3774 = vmatpush1.msra.mxu0 0.0
        %3775 = vmatprep.subr.mxu0 0.0
        %3776 = vmatpush1.msra.mxu0 0.0
        %3777 = vmatprep.subr.mxu0 0.0
        %3778 = vmatpush1.msra.mxu0 0.0
        %3779 = vmatprep.subr.mxu0 %v3665
        %3780 = vmatpush1.msra.mxu0 %v3664
        %3781 = vmatprep.subr.mxu0 0.0
        %3782 = vmatpush2.msra.mxu0 0.0
        %3783 = vmatprep.subr.mxu0 0.0
        %3784 = vmatpush2.msra.mxu0 0.0
        %3785 = vmatprep.subr.mxu0 0.0
        %3786 = vmatpush2.msra.mxu0 0.0
        %3787 = vmatprep.subr.mxu0 0.0
        %3788 = vmatpush2.msra.mxu0 0.0
        %3789 = vmatprep.subr.mxu0 0.0
        %3790 = vmatpush2.msra.mxu0 0.0
        %3791 = vmatprep.subr.mxu0 0.0
        %3792 = vmatpush2.msra.mxu0 0.0
        %3793 = vmatprep.subr.mxu0 0.0
        %3794 = vmatpush2.msra.mxu0 0.0
        %3795 = vmatprep.subr.mxu0 0.0
        %3796 = vmatpush2.msra.mxu0 0.0
        %3797 = vmatprep.subr.mxu0 0.0
        %3798 = vmatpush2.msra.mxu0 0.0
        %3799 = vmatprep.subr.mxu0 0.0
        %3800 = vmatpush2.msra.mxu0 0.0
        %3801 = vmatprep.subr.mxu0 0.0
        %3802 = vmatpush2.msra.mxu0 0.0
        %3803 = vmatprep.subr.mxu0 0.0
        %3804 = vmatpush2.msra.mxu0 0.0
        %3805 = vmatprep.subr.mxu0 0.0
        %3806 = vmatpush2.msra.mxu0 0.0
        %3807 = vmatprep.subr.mxu0 0.0
        %3808 = vmatpush2.msra.mxu0 0.0
        %3809 = vmatprep.subr.mxu0 0.0
        %3810 = vmatpush2.msra.mxu0 0.0
        %3811 = vmatprep.subr.mxu0 0.0
        %3812 = vmatpush2.msra.mxu0 0.0
        %3813 = vmatprep.mubr.f32.mxu0 0.0
        %3814 = vmatmul.mubr.f32.gmra.mxu0 %v3676
        %v3815 = vpop.f32.mrf.mxu0
        %v3816 = vadd.f32 %v3673, %v3815
        %v3817 = vpop.f32.mrf.mxu0
        %v3818 = vadd.f32 %v3673, %v3817
        %3819 = vdwg.mxu0
        %3820 = vmatprep.subr.mxu0 0.0
        %3821 = vmatpush1.msra.mxu0 0.0
        %3822 = vmatprep.subr.mxu0 0.0
        %3823 = vmatpush1.msra.mxu0 0.0
        %3824 = vmatprep.subr.mxu0 0.0
        %3825 = vmatpush1.msra.mxu0 0.0
        %3826 = vmatprep.subr.mxu0 0.0
        %3827 = vmatpush1.msra.mxu0 0.0
        %3828 = vmatprep.subr.mxu0 0.0
        %3829 = vmatpush1.msra.mxu0 0.0
        %3830 = vmatprep.subr.mxu0 0.0
        %3831 = vmatpush1.msra.mxu0 0.0
        %3832 = vmatprep.subr.mxu0 0.0
        %3833 = vmatpush1.msra.mxu0 0.0
        %3834 = vmatprep.subr.mxu0 0.0
        %3835 = vmatpush1.msra.mxu0 0.0
        %3836 = vmatprep.subr.mxu0 0.0
        %3837 = vmatpush1.msra.mxu0 0.0
        %3838 = vmatprep.subr.mxu0 0.0
        %3839 = vmatpush1.msra.mxu0 0.0
        %3840 = vmatprep.subr.mxu0 0.0
        %3841 = vmatpush1.msra.mxu0 0.0
        %3842 = vmatprep.subr.mxu0 0.0
        %3843 = vmatpush1.msra.mxu0 0.0
        %3844 = vmatprep.subr.mxu0 0.0
        %3845 = vmatpush1.msra.mxu0 0.0
        %3846 = vmatprep.subr.mxu0 0.0
        %3847 = vmatpush1.msra.mxu0 0.0
        %3848 = vmatprep.subr.mxu0 0.0
        %3849 = vmatpush1.msra.mxu0 0.0
        %3850 = vmatprep.subr.mxu0 %v3667
        %3851 = vmatpush1.msra.mxu0 %v3666
        %3852 = vmatprep.subr.mxu0 0.0
        %3853 = vmatpush2.msra.mxu0 0.0
        %3854 = vmatprep.subr.mxu0 0.0
        %3855 = vmatpush2.msra.mxu0 0.0
        %3856 = vmatprep.subr.mxu0 0.0
        %3857 = vmatpush2.msra.mxu0 0.0
        %3858 = vmatprep.subr.mxu0 0.0
        %3859 = vmatpush2.msra.mxu0 0.0
        %3860 = vmatprep.subr.mxu0 0.0
        %3861 = vmatpush2.msra.mxu0 0.0
        %3862 = vmatprep.subr.mxu0 0.0
        %3863 = vmatpush2.msra.mxu0 0.0
        %3864 = vmatprep.subr.mxu0 0.0
        %3865 = vmatpush2.msra.mxu0 0.0
        %3866 = vmatprep.subr.mxu0 0.0
        %3867 = vmatpush2.msra.mxu0 0.0
        %3868 = vmatprep.subr.mxu0 0.0
        %3869 = vmatpush2.msra.mxu0 0.0
        %3870 = vmatprep.subr.mxu0 0.0
        %3871 = vmatpush2.msra.mxu0 0.0
        %3872 = vmatprep.subr.mxu0 0.0
        %3873 = vmatpush2.msra.mxu0 0.0
        %3874 = vmatprep.subr.mxu0 0.0
        %3875 = vmatpush2.msra.mxu0 0.0
        %3876 = vmatprep.subr.mxu0 0.0
        %3877 = vmatpush2.msra.mxu0 0.0
        %3878 = vmatprep.subr.mxu0 0.0
        %3879 = vmatpush2.msra.mxu0 0.0
        %3880 = vmatprep.subr.mxu0 0.0
        %3881 = vmatpush2.msra.mxu0 0.0
        %3882 = vmatprep.subr.mxu0 0.0
        %3883 = vmatpush2.msra.mxu0 0.0
        %3884 = vmatprep.mubr.f32.mxu0 0.0
        %3885 = vmatmul.mubr.f32.gmra.mxu0 %v3676
        %v3886 = vpop.f32.mrf.mxu0
        %v3887 = vadd.f32 %v3673, %v3886
        %v3888 = vpop.f32.mrf.mxu0
        %v3889 = vadd.f32 %v3673, %v3888
        %3890 = vdwg.mxu0
        %3891 = vmatprep.subr.mxu0 0.0
        %3892 = vmatpush1.msra.mxu0 0.0
        %3893 = vmatprep.subr.mxu0 0.0
        %3894 = vmatpush1.msra.mxu0 0.0
        %3895 = vmatprep.subr.mxu0 0.0
        %3896 = vmatpush1.msra.mxu0 0.0
        %3897 = vmatprep.subr.mxu0 0.0
        %3898 = vmatpush1.msra.mxu0 0.0
        %3899 = vmatprep.subr.mxu0 0.0
        %3900 = vmatpush1.msra.mxu0 0.0
        %3901 = vmatprep.subr.mxu0 0.0
        %3902 = vmatpush1.msra.mxu0 0.0
        %3903 = vmatprep.subr.mxu0 0.0
        %3904 = vmatpush1.msra.mxu0 0.0
        %3905 = vmatprep.subr.mxu0 0.0
        %3906 = vmatpush1.msra.mxu0 0.0
        %3907 = vmatprep.subr.mxu0 0.0
        %3908 = vmatpush1.msra.mxu0 0.0
        %3909 = vmatprep.subr.mxu0 0.0
        %3910 = vmatpush1.msra.mxu0 0.0
        %3911 = vmatprep.subr.mxu0 0.0
        %3912 = vmatpush1.msra.mxu0 0.0
        %3913 = vmatprep.subr.mxu0 0.0
        %3914 = vmatpush1.msra.mxu0 0.0
        %3915 = vmatprep.subr.mxu0 0.0
        %3916 = vmatpush1.msra.mxu0 0.0
        %3917 = vmatprep.subr.mxu0 0.0
        %3918 = vmatpush1.msra.mxu0 0.0
        %3919 = vmatprep.subr.mxu0 0.0
        %3920 = vmatpush1.msra.mxu0 0.0
        %3921 = vmatprep.subr.mxu0 %v3669
        %3922 = vmatpush1.msra.mxu0 %v3668
        %3923 = vmatprep.subr.mxu0 0.0
        %3924 = vmatpush2.msra.mxu0 0.0
        %3925 = vmatprep.subr.mxu0 0.0
        %3926 = vmatpush2.msra.mxu0 0.0
        %3927 = vmatprep.subr.mxu0 0.0
        %3928 = vmatpush2.msra.mxu0 0.0
        %3929 = vmatprep.subr.mxu0 0.0
        %3930 = vmatpush2.msra.mxu0 0.0
        %3931 = vmatprep.subr.mxu0 0.0
        %3932 = vmatpush2.msra.mxu0 0.0
        %3933 = vmatprep.subr.mxu0 0.0
        %3934 = vmatpush2.msra.mxu0 0.0
        %3935 = vmatprep.subr.mxu0 0.0
        %3936 = vmatpush2.msra.mxu0 0.0
        %3937 = vmatprep.subr.mxu0 0.0
        %3938 = vmatpush2.msra.mxu0 0.0
        %3939 = vmatprep.subr.mxu0 0.0
        %3940 = vmatpush2.msra.mxu0 0.0
        %3941 = vmatprep.subr.mxu0 0.0
        %3942 = vmatpush2.msra.mxu0 0.0
        %3943 = vmatprep.subr.mxu0 0.0
        %3944 = vmatpush2.msra.mxu0 0.0
        %3945 = vmatprep.subr.mxu0 0.0
        %3946 = vmatpush2.msra.mxu0 0.0
        %3947 = vmatprep.subr.mxu0 0.0
        %3948 = vmatpush2.msra.mxu0 0.0
        %3949 = vmatprep.subr.mxu0 0.0
        %3950 = vmatpush2.msra.mxu0 0.0
        %3951 = vmatprep.subr.mxu0 0.0
        %3952 = vmatpush2.msra.mxu0 0.0
        %3953 = vmatprep.subr.mxu0 0.0
        %3954 = vmatpush2.msra.mxu0 0.0
        %3955 = vmatprep.mubr.f32.mxu0 0.0
        %3956 = vmatmul.mubr.f32.gmra.mxu0 %v3676
        %v3957 = vpop.f32.mrf.mxu0
        %v3958 = vadd.f32 %v3673, %v3957
        %v3959 = vpop.f32.mrf.mxu0
        %v3960 = vadd.f32 %v3673, %v3959
        %3961 = vdwg.mxu0
        %v3962 = vld [vmem:[%s6] sm:$0xff]
        %v3963 = vld [vmem:[%s6 + $0x8] sm:$0xff]
        %v3964 = vld [vmem:[%s6 + $0x10] sm:$0xff]
        %v3965 = vld [vmem:[%s6 + $0x18] sm:$0xff]
        %v3966 = vld [vmem:[%s6 + $0x20] sm:$0xff]
        %v3967 = vld [vmem:[%s6 + $0x28] sm:$0xff]
        %v3968 = vld [vmem:[%s6 + $0x30] sm:$0xff]
        %v3969 = vld [vmem:[%s6 + $0x38] sm:$0xff]
        %v3970 = vld [vmem:[%s6 + $0x40] sm:$0xff]
        %v3971 = vld [vmem:[%s6 + $0x48] sm:$0xff]
        %v3972 = vld [vmem:[%s6 + $0x50] sm:$0xff]
        %v3973 = vld [vmem:[%s6 + $0x58] sm:$0xff]
        %v3974 = vld [vmem:[%s6 + $0x60] sm:$0xff]
        %v3975 = vld [vmem:[%s6 + $0x68] sm:$0xff]
        %v3976 = vld [vmem:[%s6 + $0x70] sm:$0xff]
        %v3977 = vld [vmem:[%s6 + $0x78] sm:$0xff]
        %v3978 = vld [vmem:[%s6 + $0x80] sm:$0xff]
        %v3979 = vld [vmem:[%s6 + $0x88] sm:$0xff]
        %v3980 = vld [vmem:[%s6 + $0x90] sm:$0xff]
        %v3981 = vld [vmem:[%s6 + $0x98] sm:$0xff]
        %v3982 = vld [vmem:[%s6 + $0xa0] sm:$0xff]
        %v3983 = vld [vmem:[%s6 + $0xa8] sm:$0xff]
        %v3984 = vld [vmem:[%s6 + $0xb0] sm:$0xff]
        %v3985 = vld [vmem:[%s6 + $0xb8] sm:$0xff]
        %v3986 = vld [vmem:[%s6 + $0xc0] sm:$0xff]
        %v3987 = vld [vmem:[%s6 + $0xc8] sm:$0xff]
        %v3988 = vld [vmem:[%s6 + $0xd0] sm:$0xff]
        %v3989 = vld [vmem:[%s6 + $0xd8] sm:$0xff]
        %v3990 = vld [vmem:[%s6 + $0xe0] sm:$0xff]
        %v3991 = vld [vmem:[%s6 + $0xe8] sm:$0xff]
        %v3992 = vld [vmem:[%s6 + $0xf0] sm:$0xff]
        %v3993 = vld [vmem:[%s6 + $0xf8] sm:$0xff]
        %v3994 = vlaneseq
        %v3995 = vshrl.u32 %v3994, 7
        %v3996 = vsub.s32 0, %v3995
        %v3997 = vrot.slane %v3745, %v3996
        %v3998 = vlaneseq
        %v3999 = vshrl.u32 %v3998, 7
        %v4000 = vsub.s32 0, %v3999
        %v4001 = vrot.slane %v3747, %v4000
        %v4002 = vlaneseq
        %v4003 = vshrl.u32 %v4002, 7
        %v4004 = vsub.s32 0, %v4003
        %v4005 = vrot.slane %v3816, %v4004
        %v4006 = vlaneseq
        %v4007 = vshrl.u32 %v4006, 7
        %v4008 = vsub.s32 0, %v4007
        %v4009 = vrot.slane %v3818, %v4008
        %v4010 = vlaneseq
        %v4011 = vshrl.u32 %v4010, 7
        %v4012 = vsub.s32 0, %v4011
        %v4013 = vrot.slane %v3887, %v4012
        %v4014 = vlaneseq
        %v4015 = vshrl.u32 %v4014, 7
        %v4016 = vsub.s32 0, %v4015
        %v4017 = vrot.slane %v3889, %v4016
        %v4018 = vlaneseq
        %v4019 = vshrl.u32 %v4018, 7
        %v4020 = vsub.s32 0, %v4019
        %v4021 = vrot.slane %v3958, %v4020
        %v4022 = vlaneseq
        %v4023 = vshrl.u32 %v4022, 7
        %v4024 = vsub.s32 0, %v4023
        %v4025 = vrot.slane %v3960, %v4024
        %v4026 = vmul.f32 %v3962, %v3997
        %v4027 = vmul.f32 %v3963, %v4001
        %v4028 = vmul.f32 %v3964, %v4005
        %v4029 = vmul.f32 %v3965, %v4009
        %v4030 = vmul.f32 %v3966, %v4013
        %v4031 = vmul.f32 %v3967, %v4017
        %v4032 = vmul.f32 %v3968, %v4021
        %v4033 = vmul.f32 %v3969, %v4025
        %v4034 = vmul.f32 %v3970, %v3997
        %v4035 = vmul.f32 %v3971, %v4001
        %v4036 = vmul.f32 %v3972, %v4005
        %v4037 = vmul.f32 %v3973, %v4009
        %v4038 = vmul.f32 %v3974, %v4013
        %v4039 = vmul.f32 %v3975, %v4017
        %v4040 = vmul.f32 %v3976, %v4021
        %v4041 = vmul.f32 %v3977, %v4025
        %v4042 = vmul.f32 %v3978, %v3997
        %v4043 = vmul.f32 %v3979, %v4001
        %v4044 = vmul.f32 %v3980, %v4005
        %v4045 = vmul.f32 %v3981, %v4009
        %v4046 = vmul.f32 %v3982, %v4013
        %v4047 = vmul.f32 %v3983, %v4017
        %v4048 = vmul.f32 %v3984, %v4021
        %v4049 = vmul.f32 %v3985, %v4025
        %v4050 = vmul.f32 %v3986, %v3997
        %v4051 = vmul.f32 %v3987, %v4001
        %v4052 = vmul.f32 %v3988, %v4005
        %v4053 = vmul.f32 %v3989, %v4009
        %v4054 = vmul.f32 %v3990, %v4013
        %v4055 = vmul.f32 %v3991, %v4017
        %v4056 = vmul.f32 %v3992, %v4021
        %v4057 = vmul.f32 %v3993, %v4025
        %v4058 = vld [vmem:[%s7] sm:$0xff]
        %v4059 = vld [vmem:[%s7 + $0x8] sm:$0xff]
        %v4060 = vld [vmem:[%s7 + $0x10] sm:$0xff]
        %v4061 = vld [vmem:[%s7 + $0x18] sm:$0xff]
        %v4062 = vld [vmem:[%s7 + $0x20] sm:$0xff]
        %v4063 = vld [vmem:[%s7 + $0x28] sm:$0xff]
        %v4064 = vld [vmem:[%s7 + $0x30] sm:$0xff]
        %v4065 = vld [vmem:[%s7 + $0x38] sm:$0xff]
        %v4066 = vld [vmem:[%s7 + $0x40] sm:$0xff]
        %v4067 = vld [vmem:[%s7 + $0x48] sm:$0xff]
        %v4068 = vld [vmem:[%s7 + $0x50] sm:$0xff]
        %v4069 = vld [vmem:[%s7 + $0x58] sm:$0xff]
        %v4070 = vld [vmem:[%s7 + $0x60] sm:$0xff]
        %v4071 = vld [vmem:[%s7 + $0x68] sm:$0xff]
        %v4072 = vld [vmem:[%s7 + $0x70] sm:$0xff]
        %v4073 = vld [vmem:[%s7 + $0x78] sm:$0xff]
        %v4074 = vld [vmem:[%s7 + $0x80] sm:$0xff]
        %v4075 = vld [vmem:[%s7 + $0x88] sm:$0xff]
        %v4076 = vld [vmem:[%s7 + $0x90] sm:$0xff]
        %v4077 = vld [vmem:[%s7 + $0x98] sm:$0xff]
        %v4078 = vld [vmem:[%s7 + $0xa0] sm:$0xff]
        %v4079 = vld [vmem:[%s7 + $0xa8] sm:$0xff]
        %v4080 = vld [vmem:[%s7 + $0xb0] sm:$0xff]
        %v4081 = vld [vmem:[%s7 + $0xb8] sm:$0xff]
        %v4082 = vld [vmem:[%s7 + $0xc0] sm:$0xff]
        %v4083 = vld [vmem:[%s7 + $0xc8] sm:$0xff]
        %v4084 = vld [vmem:[%s7 + $0xd0] sm:$0xff]
        %v4085 = vld [vmem:[%s7 + $0xd8] sm:$0xff]
        %v4086 = vld [vmem:[%s7 + $0xe0] sm:$0xff]
        %v4087 = vld [vmem:[%s7 + $0xe8] sm:$0xff]
        %v4088 = vld [vmem:[%s7 + $0xf0] sm:$0xff]
        %v4089 = vld [vmem:[%s7 + $0xf8] sm:$0xff]
        %v4090 = vld [vmem:[%s7 + $0x100] sm:$0xff]
        %v4091 = vld [vmem:[%s7 + $0x108] sm:$0xff]
        %v4092 = vld [vmem:[%s7 + $0x110] sm:$0xff]
        %v4093 = vld [vmem:[%s7 + $0x118] sm:$0xff]
        %v4094 = vld [vmem:[%s7 + $0x120] sm:$0xff]
        %v4095 = vld [vmem:[%s7 + $0x128] sm:$0xff]
        %v4096 = vld [vmem:[%s7 + $0x130] sm:$0xff]
        %v4097 = vld [vmem:[%s7 + $0x138] sm:$0xff]
        %v4098 = vld [vmem:[%s7 + $0x140] sm:$0xff]
        %v4099 = vld [vmem:[%s7 + $0x148] sm:$0xff]
        %v4100 = vld [vmem:[%s7 + $0x150] sm:$0xff]
        %v4101 = vld [vmem:[%s7 + $0x158] sm:$0xff]
        %v4102 = vld [vmem:[%s7 + $0x160] sm:$0xff]
        %v4103 = vld [vmem:[%s7 + $0x168] sm:$0xff]
        %v4104 = vld [vmem:[%s7 + $0x170] sm:$0xff]
        %v4105 = vld [vmem:[%s7 + $0x178] sm:$0xff]
        %v4106 = vld [vmem:[%s7 + $0x180] sm:$0xff]
        %v4107 = vld [vmem:[%s7 + $0x188] sm:$0xff]
        %v4108 = vld [vmem:[%s7 + $0x190] sm:$0xff]
        %v4109 = vld [vmem:[%s7 + $0x198] sm:$0xff]
        %v4110 = vld [vmem:[%s7 + $0x1a0] sm:$0xff]
        %v4111 = vld [vmem:[%s7 + $0x1a8] sm:$0xff]
        %v4112 = vld [vmem:[%s7 + $0x1b0] sm:$0xff]
        %v4113 = vld [vmem:[%s7 + $0x1b8] sm:$0xff]
        %v4114 = vld [vmem:[%s7 + $0x1c0] sm:$0xff]
        %v4115 = vld [vmem:[%s7 + $0x1c8] sm:$0xff]
        %v4116 = vld [vmem:[%s7 + $0x1d0] sm:$0xff]
        %v4117 = vld [vmem:[%s7 + $0x1d8] sm:$0xff]
        %v4118 = vld [vmem:[%s7 + $0x1e0] sm:$0xff]
        %v4119 = vld [vmem:[%s7 + $0x1e8] sm:$0xff]
        %v4120 = vld [vmem:[%s7 + $0x1f0] sm:$0xff]
        %v4121 = vld [vmem:[%s7 + $0x1f8] sm:$0xff]
        %v4122 = vld [vmem:[%s7 + $0x200] sm:$0xff]
        %v4123 = vld [vmem:[%s7 + $0x208] sm:$0xff]
        %v4124 = vld [vmem:[%s7 + $0x210] sm:$0xff]
        %v4125 = vld [vmem:[%s7 + $0x218] sm:$0xff]
        %v4126 = vld [vmem:[%s7 + $0x220] sm:$0xff]
        %v4127 = vld [vmem:[%s7 + $0x228] sm:$0xff]
        %v4128 = vld [vmem:[%s7 + $0x230] sm:$0xff]
        %v4129 = vld [vmem:[%s7 + $0x238] sm:$0xff]
        %v4130 = vld [vmem:[%s7 + $0x240] sm:$0xff]
        %v4131 = vld [vmem:[%s7 + $0x248] sm:$0xff]
        %v4132 = vld [vmem:[%s7 + $0x250] sm:$0xff]
        %v4133 = vld [vmem:[%s7 + $0x258] sm:$0xff]
        %v4134 = vld [vmem:[%s7 + $0x260] sm:$0xff]
        %v4135 = vld [vmem:[%s7 + $0x268] sm:$0xff]
        %v4136 = vld [vmem:[%s7 + $0x270] sm:$0xff]
        %v4137 = vld [vmem:[%s7 + $0x278] sm:$0xff]
        %v4138 = vld [vmem:[%s7 + $0x280] sm:$0xff]
        %v4139 = vld [vmem:[%s7 + $0x288] sm:$0xff]
        %v4140 = vld [vmem:[%s7 + $0x290] sm:$0xff]
        %v4141 = vld [vmem:[%s7 + $0x298] sm:$0xff]
        %v4142 = vld [vmem:[%s7 + $0x2a0] sm:$0xff]
        %v4143 = vld [vmem:[%s7 + $0x2a8] sm:$0xff]
        %v4144 = vld [vmem:[%s7 + $0x2b0] sm:$0xff]
        %v4145 = vld [vmem:[%s7 + $0x2b8] sm:$0xff]
        %v4146 = vld [vmem:[%s7 + $0x2c0] sm:$0xff]
        %v4147 = vld [vmem:[%s7 + $0x2c8] sm:$0xff]
        %v4148 = vld [vmem:[%s7 + $0x2d0] sm:$0xff]
        %v4149 = vld [vmem:[%s7 + $0x2d8] sm:$0xff]
        %v4150 = vld [vmem:[%s7 + $0x2e0] sm:$0xff]
        %v4151 = vld [vmem:[%s7 + $0x2e8] sm:$0xff]
        %v4152 = vld [vmem:[%s7 + $0x2f0] sm:$0xff]
        %v4153 = vld [vmem:[%s7 + $0x2f8] sm:$0xff]
        %v4154 = vld [vmem:[%s7 + $0x300] sm:$0xff]
        %v4155 = vld [vmem:[%s7 + $0x308] sm:$0xff]
        %v4156 = vld [vmem:[%s7 + $0x310] sm:$0xff]
        %v4157 = vld [vmem:[%s7 + $0x318] sm:$0xff]
        %v4158 = vld [vmem:[%s7 + $0x320] sm:$0xff]
        %v4159 = vld [vmem:[%s7 + $0x328] sm:$0xff]
        %v4160 = vld [vmem:[%s7 + $0x330] sm:$0xff]
        %v4161 = vld [vmem:[%s7 + $0x338] sm:$0xff]
        %v4162 = vld [vmem:[%s7 + $0x340] sm:$0xff]
        %v4163 = vld [vmem:[%s7 + $0x348] sm:$0xff]
        %v4164 = vld [vmem:[%s7 + $0x350] sm:$0xff]
        %v4165 = vld [vmem:[%s7 + $0x358] sm:$0xff]
        %v4166 = vld [vmem:[%s7 + $0x360] sm:$0xff]
        %v4167 = vld [vmem:[%s7 + $0x368] sm:$0xff]
        %v4168 = vld [vmem:[%s7 + $0x370] sm:$0xff]
        %v4169 = vld [vmem:[%s7 + $0x378] sm:$0xff]
        %v4170 = vld [vmem:[%s7 + $0x380] sm:$0xff]
        %v4171 = vld [vmem:[%s7 + $0x388] sm:$0xff]
        %v4172 = vld [vmem:[%s7 + $0x390] sm:$0xff]
        %v4173 = vld [vmem:[%s7 + $0x398] sm:$0xff]
        %v4174 = vld [vmem:[%s7 + $0x3a0] sm:$0xff]
        %v4175 = vld [vmem:[%s7 + $0x3a8] sm:$0xff]
        %v4176 = vld [vmem:[%s7 + $0x3b0] sm:$0xff]
        %v4177 = vld [vmem:[%s7 + $0x3b8] sm:$0xff]
        %v4178 = vld [vmem:[%s7 + $0x3c0] sm:$0xff]
        %v4179 = vld [vmem:[%s7 + $0x3c8] sm:$0xff]
        %v4180 = vld [vmem:[%s7 + $0x3d0] sm:$0xff]
        %v4181 = vld [vmem:[%s7 + $0x3d8] sm:$0xff]
        %v4182 = vld [vmem:[%s7 + $0x3e0] sm:$0xff]
        %v4183 = vld [vmem:[%s7 + $0x3e8] sm:$0xff]
        %v4184 = vld [vmem:[%s7 + $0x3f0] sm:$0xff]
        %v4185 = vld [vmem:[%s7 + $0x3f8] sm:$0xff]
        %v4186 = vld [vmem:[%s7 + $0x400] sm:$0xff]
        %v4187 = vld [vmem:[%s7 + $0x408] sm:$0xff]
        %v4188 = vld [vmem:[%s7 + $0x410] sm:$0xff]
        %v4189 = vld [vmem:[%s7 + $0x418] sm:$0xff]
        %v4190 = vld [vmem:[%s7 + $0x420] sm:$0xff]
        %v4191 = vld [vmem:[%s7 + $0x428] sm:$0xff]
        %v4192 = vld [vmem:[%s7 + $0x430] sm:$0xff]
        %v4193 = vld [vmem:[%s7 + $0x438] sm:$0xff]
        %v4194 = vld [vmem:[%s7 + $0x440] sm:$0xff]
        %v4195 = vld [vmem:[%s7 + $0x448] sm:$0xff]
        %v4196 = vld [vmem:[%s7 + $0x450] sm:$0xff]
        %v4197 = vld [vmem:[%s7 + $0x458] sm:$0xff]
        %v4198 = vld [vmem:[%s7 + $0x460] sm:$0xff]
        %v4199 = vld [vmem:[%s7 + $0x468] sm:$0xff]
        %v4200 = vld [vmem:[%s7 + $0x470] sm:$0xff]
        %v4201 = vld [vmem:[%s7 + $0x478] sm:$0xff]
        %v4202 = vld [vmem:[%s7 + $0x480] sm:$0xff]
        %v4203 = vld [vmem:[%s7 + $0x488] sm:$0xff]
        %v4204 = vld [vmem:[%s7 + $0x490] sm:$0xff]
        %v4205 = vld [vmem:[%s7 + $0x498] sm:$0xff]
        %v4206 = vld [vmem:[%s7 + $0x4a0] sm:$0xff]
        %v4207 = vld [vmem:[%s7 + $0x4a8] sm:$0xff]
        %v4208 = vld [vmem:[%s7 + $0x4b0] sm:$0xff]
        %v4209 = vld [vmem:[%s7 + $0x4b8] sm:$0xff]
        %v4210 = vld [vmem:[%s7 + $0x4c0] sm:$0xff]
        %v4211 = vld [vmem:[%s7 + $0x4c8] sm:$0xff]
        %v4212 = vld [vmem:[%s7 + $0x4d0] sm:$0xff]
        %v4213 = vld [vmem:[%s7 + $0x4d8] sm:$0xff]
        %v4214 = vld [vmem:[%s7 + $0x4e0] sm:$0xff]
        %v4215 = vld [vmem:[%s7 + $0x4e8] sm:$0xff]
        %v4216 = vld [vmem:[%s7 + $0x4f0] sm:$0xff]
        %v4217 = vld [vmem:[%s7 + $0x4f8] sm:$0xff]
        %v4218 = vld [vmem:[%s7 + $0x500] sm:$0xff]
        %v4219 = vld [vmem:[%s7 + $0x508] sm:$0xff]
        %v4220 = vld [vmem:[%s7 + $0x510] sm:$0xff]
        %v4221 = vld [vmem:[%s7 + $0x518] sm:$0xff]
        %v4222 = vld [vmem:[%s7 + $0x520] sm:$0xff]
        %v4223 = vld [vmem:[%s7 + $0x528] sm:$0xff]
        %v4224 = vld [vmem:[%s7 + $0x530] sm:$0xff]
        %v4225 = vld [vmem:[%s7 + $0x538] sm:$0xff]
        %v4226 = vld [vmem:[%s7 + $0x540] sm:$0xff]
        %v4227 = vld [vmem:[%s7 + $0x548] sm:$0xff]
        %v4228 = vld [vmem:[%s7 + $0x550] sm:$0xff]
        %v4229 = vld [vmem:[%s7 + $0x558] sm:$0xff]
        %v4230 = vld [vmem:[%s7 + $0x560] sm:$0xff]
        %v4231 = vld [vmem:[%s7 + $0x568] sm:$0xff]
        %v4232 = vld [vmem:[%s7 + $0x570] sm:$0xff]
        %v4233 = vld [vmem:[%s7 + $0x578] sm:$0xff]
        %v4234 = vld [vmem:[%s7 + $0x580] sm:$0xff]
        %v4235 = vld [vmem:[%s7 + $0x588] sm:$0xff]
        %v4236 = vld [vmem:[%s7 + $0x590] sm:$0xff]
        %v4237 = vld [vmem:[%s7 + $0x598] sm:$0xff]
        %v4238 = vld [vmem:[%s7 + $0x5a0] sm:$0xff]
        %v4239 = vld [vmem:[%s7 + $0x5a8] sm:$0xff]
        %v4240 = vld [vmem:[%s7 + $0x5b0] sm:$0xff]
        %v4241 = vld [vmem:[%s7 + $0x5b8] sm:$0xff]
        %v4242 = vld [vmem:[%s7 + $0x5c0] sm:$0xff]
        %v4243 = vld [vmem:[%s7 + $0x5c8] sm:$0xff]
        %v4244 = vld [vmem:[%s7 + $0x5d0] sm:$0xff]
        %v4245 = vld [vmem:[%s7 + $0x5d8] sm:$0xff]
        %v4246 = vld [vmem:[%s7 + $0x5e0] sm:$0xff]
        %v4247 = vld [vmem:[%s7 + $0x5e8] sm:$0xff]
        %v4248 = vld [vmem:[%s7 + $0x5f0] sm:$0xff]
        %v4249 = vld [vmem:[%s7 + $0x5f8] sm:$0xff]
        %v4250 = vld [vmem:[%s7 + $0x600] sm:$0xff]
        %v4251 = vld [vmem:[%s7 + $0x608] sm:$0xff]
        %v4252 = vld [vmem:[%s7 + $0x610] sm:$0xff]
        %v4253 = vld [vmem:[%s7 + $0x618] sm:$0xff]
        %v4254 = vld [vmem:[%s7 + $0x620] sm:$0xff]
        %v4255 = vld [vmem:[%s7 + $0x628] sm:$0xff]
        %v4256 = vld [vmem:[%s7 + $0x630] sm:$0xff]
        %v4257 = vld [vmem:[%s7 + $0x638] sm:$0xff]
        %v4258 = vld [vmem:[%s7 + $0x640] sm:$0xff]
        %v4259 = vld [vmem:[%s7 + $0x648] sm:$0xff]
        %v4260 = vld [vmem:[%s7 + $0x650] sm:$0xff]
        %v4261 = vld [vmem:[%s7 + $0x658] sm:$0xff]
        %v4262 = vld [vmem:[%s7 + $0x660] sm:$0xff]
        %v4263 = vld [vmem:[%s7 + $0x668] sm:$0xff]
        %v4264 = vld [vmem:[%s7 + $0x670] sm:$0xff]
        %v4265 = vld [vmem:[%s7 + $0x678] sm:$0xff]
        %v4266 = vld [vmem:[%s7 + $0x680] sm:$0xff]
        %v4267 = vld [vmem:[%s7 + $0x688] sm:$0xff]
        %v4268 = vld [vmem:[%s7 + $0x690] sm:$0xff]
        %v4269 = vld [vmem:[%s7 + $0x698] sm:$0xff]
        %v4270 = vld [vmem:[%s7 + $0x6a0] sm:$0xff]
        %v4271 = vld [vmem:[%s7 + $0x6a8] sm:$0xff]
        %v4272 = vld [vmem:[%s7 + $0x6b0] sm:$0xff]
        %v4273 = vld [vmem:[%s7 + $0x6b8] sm:$0xff]
        %v4274 = vld [vmem:[%s7 + $0x6c0] sm:$0xff]
        %v4275 = vld [vmem:[%s7 + $0x6c8] sm:$0xff]
        %v4276 = vld [vmem:[%s7 + $0x6d0] sm:$0xff]
        %v4277 = vld [vmem:[%s7 + $0x6d8] sm:$0xff]
        %v4278 = vld [vmem:[%s7 + $0x6e0] sm:$0xff]
        %v4279 = vld [vmem:[%s7 + $0x6e8] sm:$0xff]
        %v4280 = vld [vmem:[%s7 + $0x6f0] sm:$0xff]
        %v4281 = vld [vmem:[%s7 + $0x6f8] sm:$0xff]
        %v4282 = vld [vmem:[%s7 + $0x700] sm:$0xff]
        %v4283 = vld [vmem:[%s7 + $0x708] sm:$0xff]
        %v4284 = vld [vmem:[%s7 + $0x710] sm:$0xff]
        %v4285 = vld [vmem:[%s7 + $0x718] sm:$0xff]
        %v4286 = vld [vmem:[%s7 + $0x720] sm:$0xff]
        %v4287 = vld [vmem:[%s7 + $0x728] sm:$0xff]
        %v4288 = vld [vmem:[%s7 + $0x730] sm:$0xff]
        %v4289 = vld [vmem:[%s7 + $0x738] sm:$0xff]
        %v4290 = vld [vmem:[%s7 + $0x740] sm:$0xff]
        %v4291 = vld [vmem:[%s7 + $0x748] sm:$0xff]
        %v4292 = vld [vmem:[%s7 + $0x750] sm:$0xff]
        %v4293 = vld [vmem:[%s7 + $0x758] sm:$0xff]
        %v4294 = vld [vmem:[%s7 + $0x760] sm:$0xff]
        %v4295 = vld [vmem:[%s7 + $0x768] sm:$0xff]
        %v4296 = vld [vmem:[%s7 + $0x770] sm:$0xff]
        %v4297 = vld [vmem:[%s7 + $0x778] sm:$0xff]
        %v4298 = vld [vmem:[%s7 + $0x780] sm:$0xff]
        %v4299 = vld [vmem:[%s7 + $0x788] sm:$0xff]
        %v4300 = vld [vmem:[%s7 + $0x790] sm:$0xff]
        %v4301 = vld [vmem:[%s7 + $0x798] sm:$0xff]
        %v4302 = vld [vmem:[%s7 + $0x7a0] sm:$0xff]
        %v4303 = vld [vmem:[%s7 + $0x7a8] sm:$0xff]
        %v4304 = vld [vmem:[%s7 + $0x7b0] sm:$0xff]
        %v4305 = vld [vmem:[%s7 + $0x7b8] sm:$0xff]
        %v4306 = vld [vmem:[%s7 + $0x7c0] sm:$0xff]
        %v4307 = vld [vmem:[%s7 + $0x7c8] sm:$0xff]
        %v4308 = vld [vmem:[%s7 + $0x7d0] sm:$0xff]
        %v4309 = vld [vmem:[%s7 + $0x7d8] sm:$0xff]
        %v4310 = vld [vmem:[%s7 + $0x7e0] sm:$0xff]
        %v4311 = vld [vmem:[%s7 + $0x7e8] sm:$0xff]
        %v4312 = vld [vmem:[%s7 + $0x7f0] sm:$0xff]
        %v4313 = vld [vmem:[%s7 + $0x7f8] sm:$0xff]
        %v4314 = vld [vmem:[%s7 + $0x800] sm:$0xff]
        %v4315 = vld [vmem:[%s7 + $0x808] sm:$0xff]
        %v4316 = vld [vmem:[%s7 + $0x810] sm:$0xff]
        %v4317 = vld [vmem:[%s7 + $0x818] sm:$0xff]
        %v4318 = vld [vmem:[%s7 + $0x820] sm:$0xff]
        %v4319 = vld [vmem:[%s7 + $0x828] sm:$0xff]
        %v4320 = vld [vmem:[%s7 + $0x830] sm:$0xff]
        %v4321 = vld [vmem:[%s7 + $0x838] sm:$0xff]
        %v4322 = vld [vmem:[%s7 + $0x840] sm:$0xff]
        %v4323 = vld [vmem:[%s7 + $0x848] sm:$0xff]
        %v4324 = vld [vmem:[%s7 + $0x850] sm:$0xff]
        %v4325 = vld [vmem:[%s7 + $0x858] sm:$0xff]
        %v4326 = vld [vmem:[%s7 + $0x860] sm:$0xff]
        %v4327 = vld [vmem:[%s7 + $0x868] sm:$0xff]
        %v4328 = vld [vmem:[%s7 + $0x870] sm:$0xff]
        %v4329 = vld [vmem:[%s7 + $0x878] sm:$0xff]
        %v4330 = vld [vmem:[%s7 + $0x880] sm:$0xff]
        %v4331 = vld [vmem:[%s7 + $0x888] sm:$0xff]
        %v4332 = vld [vmem:[%s7 + $0x890] sm:$0xff]
        %v4333 = vld [vmem:[%s7 + $0x898] sm:$0xff]
        %v4334 = vld [vmem:[%s7 + $0x8a0] sm:$0xff]
        %v4335 = vld [vmem:[%s7 + $0x8a8] sm:$0xff]
        %v4336 = vld [vmem:[%s7 + $0x8b0] sm:$0xff]
        %v4337 = vld [vmem:[%s7 + $0x8b8] sm:$0xff]
        %v4338 = vld [vmem:[%s7 + $0x8c0] sm:$0xff]
        %v4339 = vld [vmem:[%s7 + $0x8c8] sm:$0xff]
        %v4340 = vld [vmem:[%s7 + $0x8d0] sm:$0xff]
        %v4341 = vld [vmem:[%s7 + $0x8d8] sm:$0xff]
        %v4342 = vld [vmem:[%s7 + $0x8e0] sm:$0xff]
        %v4343 = vld [vmem:[%s7 + $0x8e8] sm:$0xff]
        %v4344 = vld [vmem:[%s7 + $0x8f0] sm:$0xff]
        %v4345 = vld [vmem:[%s7 + $0x8f8] sm:$0xff]
        %v4346 = vld [vmem:[%s7 + $0x900] sm:$0xff]
        %v4347 = vld [vmem:[%s7 + $0x908] sm:$0xff]
        %v4348 = vld [vmem:[%s7 + $0x910] sm:$0xff]
        %v4349 = vld [vmem:[%s7 + $0x918] sm:$0xff]
        %v4350 = vld [vmem:[%s7 + $0x920] sm:$0xff]
        %v4351 = vld [vmem:[%s7 + $0x928] sm:$0xff]
        %v4352 = vld [vmem:[%s7 + $0x930] sm:$0xff]
        %v4353 = vld [vmem:[%s7 + $0x938] sm:$0xff]
        %v4354 = vld [vmem:[%s7 + $0x940] sm:$0xff]
        %v4355 = vld [vmem:[%s7 + $0x948] sm:$0xff]
        %v4356 = vld [vmem:[%s7 + $0x950] sm:$0xff]
        %v4357 = vld [vmem:[%s7 + $0x958] sm:$0xff]
        %v4358 = vld [vmem:[%s7 + $0x960] sm:$0xff]
        %v4359 = vld [vmem:[%s7 + $0x968] sm:$0xff]
        %v4360 = vld [vmem:[%s7 + $0x970] sm:$0xff]
        %v4361 = vld [vmem:[%s7 + $0x978] sm:$0xff]
        %v4362 = vld [vmem:[%s7 + $0x980] sm:$0xff]
        %v4363 = vld [vmem:[%s7 + $0x988] sm:$0xff]
        %v4364 = vld [vmem:[%s7 + $0x990] sm:$0xff]
        %v4365 = vld [vmem:[%s7 + $0x998] sm:$0xff]
        %v4366 = vld [vmem:[%s7 + $0x9a0] sm:$0xff]
        %v4367 = vld [vmem:[%s7 + $0x9a8] sm:$0xff]
        %v4368 = vld [vmem:[%s7 + $0x9b0] sm:$0xff]
        %v4369 = vld [vmem:[%s7 + $0x9b8] sm:$0xff]
        %v4370 = vld [vmem:[%s7 + $0x9c0] sm:$0xff]
        %v4371 = vld [vmem:[%s7 + $0x9c8] sm:$0xff]
        %v4372 = vld [vmem:[%s7 + $0x9d0] sm:$0xff]
        %v4373 = vld [vmem:[%s7 + $0x9d8] sm:$0xff]
        %v4374 = vld [vmem:[%s7 + $0x9e0] sm:$0xff]
        %v4375 = vld [vmem:[%s7 + $0x9e8] sm:$0xff]
        %v4376 = vld [vmem:[%s7 + $0x9f0] sm:$0xff]
        %v4377 = vld [vmem:[%s7 + $0x9f8] sm:$0xff]
        %v4378 = vld [vmem:[%s7 + $0xa00] sm:$0xff]
        %v4379 = vld [vmem:[%s7 + $0xa08] sm:$0xff]
        %v4380 = vld [vmem:[%s7 + $0xa10] sm:$0xff]
        %v4381 = vld [vmem:[%s7 + $0xa18] sm:$0xff]
        %v4382 = vld [vmem:[%s7 + $0xa20] sm:$0xff]
        %v4383 = vld [vmem:[%s7 + $0xa28] sm:$0xff]
        %v4384 = vld [vmem:[%s7 + $0xa30] sm:$0xff]
        %v4385 = vld [vmem:[%s7 + $0xa38] sm:$0xff]
        %v4386 = vld [vmem:[%s7 + $0xa40] sm:$0xff]
        %v4387 = vld [vmem:[%s7 + $0xa48] sm:$0xff]
        %v4388 = vld [vmem:[%s7 + $0xa50] sm:$0xff]
        %v4389 = vld [vmem:[%s7 + $0xa58] sm:$0xff]
        %v4390 = vld [vmem:[%s7 + $0xa60] sm:$0xff]
        %v4391 = vld [vmem:[%s7 + $0xa68] sm:$0xff]
        %v4392 = vld [vmem:[%s7 + $0xa70] sm:$0xff]
        %v4393 = vld [vmem:[%s7 + $0xa78] sm:$0xff]
        %v4394 = vld [vmem:[%s7 + $0xa80] sm:$0xff]
        %v4395 = vld [vmem:[%s7 + $0xa88] sm:$0xff]
        %v4396 = vld [vmem:[%s7 + $0xa90] sm:$0xff]
        %v4397 = vld [vmem:[%s7 + $0xa98] sm:$0xff]
        %v4398 = vld [vmem:[%s7 + $0xaa0] sm:$0xff]
        %v4399 = vld [vmem:[%s7 + $0xaa8] sm:$0xff]
        %v4400 = vld [vmem:[%s7 + $0xab0] sm:$0xff]
        %v4401 = vld [vmem:[%s7 + $0xab8] sm:$0xff]
        %v4402 = vld [vmem:[%s7 + $0xac0] sm:$0xff]
        %v4403 = vld [vmem:[%s7 + $0xac8] sm:$0xff]
        %v4404 = vld [vmem:[%s7 + $0xad0] sm:$0xff]
        %v4405 = vld [vmem:[%s7 + $0xad8] sm:$0xff]
        %v4406 = vld [vmem:[%s7 + $0xae0] sm:$0xff]
        %v4407 = vld [vmem:[%s7 + $0xae8] sm:$0xff]
        %v4408 = vld [vmem:[%s7 + $0xaf0] sm:$0xff]
        %v4409 = vld [vmem:[%s7 + $0xaf8] sm:$0xff]
        %v4410 = vld [vmem:[%s7 + $0xb00] sm:$0xff]
        %v4411 = vld [vmem:[%s7 + $0xb08] sm:$0xff]
        %v4412 = vld [vmem:[%s7 + $0xb10] sm:$0xff]
        %v4413 = vld [vmem:[%s7 + $0xb18] sm:$0xff]
        %v4414 = vld [vmem:[%s7 + $0xb20] sm:$0xff]
        %v4415 = vld [vmem:[%s7 + $0xb28] sm:$0xff]
        %v4416 = vld [vmem:[%s7 + $0xb30] sm:$0xff]
        %v4417 = vld [vmem:[%s7 + $0xb38] sm:$0xff]
        %v4418 = vld [vmem:[%s7 + $0xb40] sm:$0xff]
        %v4419 = vld [vmem:[%s7 + $0xb48] sm:$0xff]
        %v4420 = vld [vmem:[%s7 + $0xb50] sm:$0xff]
        %v4421 = vld [vmem:[%s7 + $0xb58] sm:$0xff]
        %v4422 = vld [vmem:[%s7 + $0xb60] sm:$0xff]
        %v4423 = vld [vmem:[%s7 + $0xb68] sm:$0xff]
        %v4424 = vld [vmem:[%s7 + $0xb70] sm:$0xff]
        %v4425 = vld [vmem:[%s7 + $0xb78] sm:$0xff]
        %v4426 = vld [vmem:[%s7 + $0xb80] sm:$0xff]
        %v4427 = vld [vmem:[%s7 + $0xb88] sm:$0xff]
        %v4428 = vld [vmem:[%s7 + $0xb90] sm:$0xff]
        %v4429 = vld [vmem:[%s7 + $0xb98] sm:$0xff]
        %v4430 = vld [vmem:[%s7 + $0xba0] sm:$0xff]
        %v4431 = vld [vmem:[%s7 + $0xba8] sm:$0xff]
        %v4432 = vld [vmem:[%s7 + $0xbb0] sm:$0xff]
        %v4433 = vld [vmem:[%s7 + $0xbb8] sm:$0xff]
        %v4434 = vld [vmem:[%s7 + $0xbc0] sm:$0xff]
        %v4435 = vld [vmem:[%s7 + $0xbc8] sm:$0xff]
        %v4436 = vld [vmem:[%s7 + $0xbd0] sm:$0xff]
        %v4437 = vld [vmem:[%s7 + $0xbd8] sm:$0xff]
        %v4438 = vld [vmem:[%s7 + $0xbe0] sm:$0xff]
        %v4439 = vld [vmem:[%s7 + $0xbe8] sm:$0xff]
        %v4440 = vld [vmem:[%s7 + $0xbf0] sm:$0xff]
        %v4441 = vld [vmem:[%s7 + $0xbf8] sm:$0xff]
        %4442 = vmatprep.subr.mxu0 %v4104
        %4443 = vmatpush1.msra.mxu0 %v4103
        %4444 = vmatprep.subr.mxu0 %v4101
        %4445 = vmatpush1.msra.mxu0 %v4100
        %4446 = vmatprep.subr.mxu0 %v4098
        %4447 = vmatpush1.msra.mxu0 %v4097
        %4448 = vmatprep.subr.mxu0 %v4095
        %4449 = vmatpush1.msra.mxu0 %v4094
        %4450 = vmatprep.subr.mxu0 %v4092
        %4451 = vmatpush1.msra.mxu0 %v4091
        %4452 = vmatprep.subr.mxu0 %v4089
        %4453 = vmatpush1.msra.mxu0 %v4088
        %4454 = vmatprep.subr.mxu0 %v4086
        %4455 = vmatpush1.msra.mxu0 %v4085
        %4456 = vmatprep.subr.mxu0 %v4083
        %4457 = vmatpush1.msra.mxu0 %v4082
        %4458 = vmatprep.subr.mxu0 %v4080
        %4459 = vmatpush1.msra.mxu0 %v4079
        %4460 = vmatprep.subr.mxu0 %v4077
        %4461 = vmatpush1.msra.mxu0 %v4076
        %4462 = vmatprep.subr.mxu0 %v4074
        %4463 = vmatpush1.msra.mxu0 %v4073
        %4464 = vmatprep.subr.mxu0 %v4071
        %4465 = vmatpush1.msra.mxu0 %v4070
        %4466 = vmatprep.subr.mxu0 %v4068
        %4467 = vmatpush1.msra.mxu0 %v4067
        %4468 = vmatprep.subr.mxu0 %v4065
        %4469 = vmatpush1.msra.mxu0 %v4064
        %4470 = vmatprep.subr.mxu0 %v4062
        %4471 = vmatpush1.msra.mxu0 %v4061
        %4472 = vmatprep.subr.mxu0 %v4059
        %4473 = vmatpush1.msra.mxu0 %v4058
        %4474 = vmatprep.subr.mxu0 %v4152
        %4475 = vmatpush2.msra.mxu0 %v4151
        %4476 = vmatprep.subr.mxu0 %v4149
        %4477 = vmatpush2.msra.mxu0 %v4148
        %4478 = vmatprep.subr.mxu0 %v4146
        %4479 = vmatpush2.msra.mxu0 %v4145
        %4480 = vmatprep.subr.mxu0 %v4143
        %4481 = vmatpush2.msra.mxu0 %v4142
        %4482 = vmatprep.subr.mxu0 %v4140
        %4483 = vmatpush2.msra.mxu0 %v4139
        %4484 = vmatprep.subr.mxu0 %v4137
        %4485 = vmatpush2.msra.mxu0 %v4136
        %4486 = vmatprep.subr.mxu0 %v4134
        %4487 = vmatpush2.msra.mxu0 %v4133
        %4488 = vmatprep.subr.mxu0 %v4131
        %4489 = vmatpush2.msra.mxu0 %v4130
        %4490 = vmatprep.subr.mxu0 %v4128
        %4491 = vmatpush2.msra.mxu0 %v4127
        %4492 = vmatprep.subr.mxu0 %v4125
        %4493 = vmatpush2.msra.mxu0 %v4124
        %4494 = vmatprep.subr.mxu0 %v4122
        %4495 = vmatpush2.msra.mxu0 %v4121
        %4496 = vmatprep.subr.mxu0 %v4119
        %4497 = vmatpush2.msra.mxu0 %v4118
        %4498 = vmatprep.subr.mxu0 %v4116
        %4499 = vmatpush2.msra.mxu0 %v4115
        %4500 = vmatprep.subr.mxu0 %v4113
        %4501 = vmatpush2.msra.mxu0 %v4112
        %4502 = vmatprep.subr.mxu0 %v4110
        %4503 = vmatpush2.msra.mxu0 %v4109
        %4504 = vmatprep.subr.mxu0 %v4107
        %4505 = vmatpush2.msra.mxu0 %v4106
        %4506 = vmatprep.mubr.f32.mxu0 %v4027
        %4507 = vmatmul.mubr.f32.gmra.mxu0 %v4026
        %v4508 = vpop.f32.mrf.mxu0
        %v4509 = vadd.f32 0.0, %v4508
        %v4510 = vpop.f32.mrf.mxu0
        %v4511 = vadd.f32 0.0, %v4510
        %4512 = vmatprep.mubr.f32.mxu0 %v4035
        %4513 = vmatmul.mubr.f32.gmra.mxu0 %v4034
        %v4514 = vpop.f32.mrf.mxu0
        %v4515 = vadd.f32 0.0, %v4514
        %v4516 = vpop.f32.mrf.mxu0
        %v4517 = vadd.f32 0.0, %v4516
        %4518 = vmatprep.mubr.f32.mxu0 %v4043
        %4519 = vmatmul.mubr.f32.gmra.mxu0 %v4042
        %v4520 = vpop.f32.mrf.mxu0
        %v4521 = vadd.f32 0.0, %v4520
        %v4522 = vpop.f32.mrf.mxu0
        %v4523 = vadd.f32 0.0, %v4522
        %4524 = vmatprep.mubr.f32.mxu0 %v4051
        %4525 = vmatmul.mubr.f32.gmra.mxu0 %v4050
        %v4526 = vpop.f32.mrf.mxu0
        %v4527 = vadd.f32 0.0, %v4526
        %v4528 = vpop.f32.mrf.mxu0
        %v4529 = vadd.f32 0.0, %v4528
        %4530 = vdwg.mxu0
        %4531 = vmatprep.subr.mxu0 %v4200
        %4532 = vmatpush1.msra.mxu0 %v4199
        %4533 = vmatprep.subr.mxu0 %v4197
        %4534 = vmatpush1.msra.mxu0 %v4196
        %4535 = vmatprep.subr.mxu0 %v4194
        %4536 = vmatpush1.msra.mxu0 %v4193
        %4537 = vmatprep.subr.mxu0 %v4191
        %4538 = vmatpush1.msra.mxu0 %v4190
        %4539 = vmatprep.subr.mxu0 %v4188
        %4540 = vmatpush1.msra.mxu0 %v4187
        %4541 = vmatprep.subr.mxu0 %v4185
        %4542 = vmatpush1.msra.mxu0 %v4184
        %4543 = vmatprep.subr.mxu0 %v4182
        %4544 = vmatpush1.msra.mxu0 %v4181
        %4545 = vmatprep.subr.mxu0 %v4179
        %4546 = vmatpush1.msra.mxu0 %v4178
        %4547 = vmatprep.subr.mxu0 %v4176
        %4548 = vmatpush1.msra.mxu0 %v4175
        %4549 = vmatprep.subr.mxu0 %v4173
        %4550 = vmatpush1.msra.mxu0 %v4172
        %4551 = vmatprep.subr.mxu0 %v4170
        %4552 = vmatpush1.msra.mxu0 %v4169
        %4553 = vmatprep.subr.mxu0 %v4167
        %4554 = vmatpush1.msra.mxu0 %v4166
        %4555 = vmatprep.subr.mxu0 %v4164
        %4556 = vmatpush1.msra.mxu0 %v4163
        %4557 = vmatprep.subr.mxu0 %v4161
        %4558 = vmatpush1.msra.mxu0 %v4160
        %4559 = vmatprep.subr.mxu0 %v4158
        %4560 = vmatpush1.msra.mxu0 %v4157
        %4561 = vmatprep.subr.mxu0 %v4155
        %4562 = vmatpush1.msra.mxu0 %v4154
        %4563 = vmatprep.subr.mxu0 %v4248
        %4564 = vmatpush2.msra.mxu0 %v4247
        %4565 = vmatprep.subr.mxu0 %v4245
        %4566 = vmatpush2.msra.mxu0 %v4244
        %4567 = vmatprep.subr.mxu0 %v4242
        %4568 = vmatpush2.msra.mxu0 %v4241
        %4569 = vmatprep.subr.mxu0 %v4239
        %4570 = vmatpush2.msra.mxu0 %v4238
        %4571 = vmatprep.subr.mxu0 %v4236
        %4572 = vmatpush2.msra.mxu0 %v4235
        %4573 = vmatprep.subr.mxu0 %v4233
        %4574 = vmatpush2.msra.mxu0 %v4232
        %4575 = vmatprep.subr.mxu0 %v4230
        %4576 = vmatpush2.msra.mxu0 %v4229
        %4577 = vmatprep.subr.mxu0 %v4227
        %4578 = vmatpush2.msra.mxu0 %v4226
        %4579 = vmatprep.subr.mxu0 %v4224
        %4580 = vmatpush2.msra.mxu0 %v4223
        %4581 = vmatprep.subr.mxu0 %v4221
        %4582 = vmatpush2.msra.mxu0 %v4220
        %4583 = vmatprep.subr.mxu0 %v4218
        %4584 = vmatpush2.msra.mxu0 %v4217
        %4585 = vmatprep.subr.mxu0 %v4215
        %4586 = vmatpush2.msra.mxu0 %v4214
        %4587 = vmatprep.subr.mxu0 %v4212
        %4588 = vmatpush2.msra.mxu0 %v4211
        %4589 = vmatprep.subr.mxu0 %v4209
        %4590 = vmatpush2.msra.mxu0 %v4208
        %4591 = vmatprep.subr.mxu0 %v4206
        %4592 = vmatpush2.msra.mxu0 %v4205
        %4593 = vmatprep.subr.mxu0 %v4203
        %4594 = vmatpush2.msra.mxu0 %v4202
        %4595 = vmatprep.mubr.f32.mxu0 %v4029
        %4596 = vmatmul.mubr.f32.gmra.mxu0 %v4028
        %v4597 = vpop.f32.mrf.mxu0
        %v4598 = vadd.f32 %v4509, %v4597
        %v4599 = vpop.f32.mrf.mxu0
        %v4600 = vadd.f32 %v4511, %v4599
        %4601 = vmatprep.mubr.f32.mxu0 %v4037
        %4602 = vmatmul.mubr.f32.gmra.mxu0 %v4036
        %v4603 = vpop.f32.mrf.mxu0
        %v4604 = vadd.f32 %v4515, %v4603
        %v4605 = vpop.f32.mrf.mxu0
        %v4606 = vadd.f32 %v4517, %v4605
        %4607 = vmatprep.mubr.f32.mxu0 %v4045
        %4608 = vmatmul.mubr.f32.gmra.mxu0 %v4044
        %v4609 = vpop.f32.mrf.mxu0
        %v4610 = vadd.f32 %v4521, %v4609
        %v4611 = vpop.f32.mrf.mxu0
        %v4612 = vadd.f32 %v4523, %v4611
        %4613 = vmatprep.mubr.f32.mxu0 %v4053
        %4614 = vmatmul.mubr.f32.gmra.mxu0 %v4052
        %v4615 = vpop.f32.mrf.mxu0
        %v4616 = vadd.f32 %v4527, %v4615
        %v4617 = vpop.f32.mrf.mxu0
        %v4618 = vadd.f32 %v4529, %v4617
        %4619 = vdwg.mxu0
        %4620 = vmatprep.subr.mxu0 %v4296
        %4621 = vmatpush1.msra.mxu0 %v4295
        %4622 = vmatprep.subr.mxu0 %v4293
        %4623 = vmatpush1.msra.mxu0 %v4292
        %4624 = vmatprep.subr.mxu0 %v4290
        %4625 = vmatpush1.msra.mxu0 %v4289
        %4626 = vmatprep.subr.mxu0 %v4287
        %4627 = vmatpush1.msra.mxu0 %v4286
        %4628 = vmatprep.subr.mxu0 %v4284
        %4629 = vmatpush1.msra.mxu0 %v4283
        %4630 = vmatprep.subr.mxu0 %v4281
        %4631 = vmatpush1.msra.mxu0 %v4280
        %4632 = vmatprep.subr.mxu0 %v4278
        %4633 = vmatpush1.msra.mxu0 %v4277
        %4634 = vmatprep.subr.mxu0 %v4275
        %4635 = vmatpush1.msra.mxu0 %v4274
        %4636 = vmatprep.subr.mxu0 %v4272
        %4637 = vmatpush1.msra.mxu0 %v4271
        %4638 = vmatprep.subr.mxu0 %v4269
        %4639 = vmatpush1.msra.mxu0 %v4268
        %4640 = vmatprep.subr.mxu0 %v4266
        %4641 = vmatpush1.msra.mxu0 %v4265
        %4642 = vmatprep.subr.mxu0 %v4263
        %4643 = vmatpush1.msra.mxu0 %v4262
        %4644 = vmatprep.subr.mxu0 %v4260
        %4645 = vmatpush1.msra.mxu0 %v4259
        %4646 = vmatprep.subr.mxu0 %v4257
        %4647 = vmatpush1.msra.mxu0 %v4256
        %4648 = vmatprep.subr.mxu0 %v4254
        %4649 = vmatpush1.msra.mxu0 %v4253
        %4650 = vmatprep.subr.mxu0 %v4251
        %4651 = vmatpush1.msra.mxu0 %v4250
        %4652 = vmatprep.subr.mxu0 %v4344
        %4653 = vmatpush2.msra.mxu0 %v4343
        %4654 = vmatprep.subr.mxu0 %v4341
        %4655 = vmatpush2.msra.mxu0 %v4340
        %4656 = vmatprep.subr.mxu0 %v4338
        %4657 = vmatpush2.msra.mxu0 %v4337
        %4658 = vmatprep.subr.mxu0 %v4335
        %4659 = vmatpush2.msra.mxu0 %v4334
        %4660 = vmatprep.subr.mxu0 %v4332
        %4661 = vmatpush2.msra.mxu0 %v4331
        %4662 = vmatprep.subr.mxu0 %v4329
        %4663 = vmatpush2.msra.mxu0 %v4328
        %4664 = vmatprep.subr.mxu0 %v4326
        %4665 = vmatpush2.msra.mxu0 %v4325
        %4666 = vmatprep.subr.mxu0 %v4323
        %4667 = vmatpush2.msra.mxu0 %v4322
        %4668 = vmatprep.subr.mxu0 %v4320
        %4669 = vmatpush2.msra.mxu0 %v4319
        %4670 = vmatprep.subr.mxu0 %v4317
        %4671 = vmatpush2.msra.mxu0 %v4316
        %4672 = vmatprep.subr.mxu0 %v4314
        %4673 = vmatpush2.msra.mxu0 %v4313
        %4674 = vmatprep.subr.mxu0 %v4311
        %4675 = vmatpush2.msra.mxu0 %v4310
        %4676 = vmatprep.subr.mxu0 %v4308
        %4677 = vmatpush2.msra.mxu0 %v4307
        %4678 = vmatprep.subr.mxu0 %v4305
        %4679 = vmatpush2.msra.mxu0 %v4304
        %4680 = vmatprep.subr.mxu0 %v4302
        %4681 = vmatpush2.msra.mxu0 %v4301
        %4682 = vmatprep.subr.mxu0 %v4299
        %4683 = vmatpush2.msra.mxu0 %v4298
        %4684 = vmatprep.mubr.f32.mxu0 %v4031
        %4685 = vmatmul.mubr.f32.gmra.mxu0 %v4030
        %v4686 = vpop.f32.mrf.mxu0
        %v4687 = vadd.f32 %v4598, %v4686
        %v4688 = vpop.f32.mrf.mxu0
        %v4689 = vadd.f32 %v4600, %v4688
        %4690 = vmatprep.mubr.f32.mxu0 %v4039
        %4691 = vmatmul.mubr.f32.gmra.mxu0 %v4038
        %v4692 = vpop.f32.mrf.mxu0
        %v4693 = vadd.f32 %v4604, %v4692
        %v4694 = vpop.f32.mrf.mxu0
        %v4695 = vadd.f32 %v4606, %v4694
        %4696 = vmatprep.mubr.f32.mxu0 %v4047
        %4697 = vmatmul.mubr.f32.gmra.mxu0 %v4046
        %v4698 = vpop.f32.mrf.mxu0
        %v4699 = vadd.f32 %v4610, %v4698
        %v4700 = vpop.f32.mrf.mxu0
        %v4701 = vadd.f32 %v4612, %v4700
        %4702 = vmatprep.mubr.f32.mxu0 %v4055
        %4703 = vmatmul.mubr.f32.gmra.mxu0 %v4054
        %v4704 = vpop.f32.mrf.mxu0
        %v4705 = vadd.f32 %v4616, %v4704
        %v4706 = vpop.f32.mrf.mxu0
        %v4707 = vadd.f32 %v4618, %v4706
        %4708 = vdwg.mxu0
        %4709 = vmatprep.subr.mxu0 %v4392
        %4710 = vmatpush1.msra.mxu0 %v4391
        %4711 = vmatprep.subr.mxu0 %v4389
        %4712 = vmatpush1.msra.mxu0 %v4388
        %4713 = vmatprep.subr.mxu0 %v4386
        %4714 = vmatpush1.msra.mxu0 %v4385
        %4715 = vmatprep.subr.mxu0 %v4383
        %4716 = vmatpush1.msra.mxu0 %v4382
        %4717 = vmatprep.subr.mxu0 %v4380
        %4718 = vmatpush1.msra.mxu0 %v4379
        %4719 = vmatprep.subr.mxu0 %v4377
        %4720 = vmatpush1.msra.mxu0 %v4376
        %4721 = vmatprep.subr.mxu0 %v4374
        %4722 = vmatpush1.msra.mxu0 %v4373
        %4723 = vmatprep.subr.mxu0 %v4371
        %4724 = vmatpush1.msra.mxu0 %v4370
        %4725 = vmatprep.subr.mxu0 %v4368
        %4726 = vmatpush1.msra.mxu0 %v4367
        %4727 = vmatprep.subr.mxu0 %v4365
        %4728 = vmatpush1.msra.mxu0 %v4364
        %4729 = vmatprep.subr.mxu0 %v4362
        %4730 = vmatpush1.msra.mxu0 %v4361
        %4731 = vmatprep.subr.mxu0 %v4359
        %4732 = vmatpush1.msra.mxu0 %v4358
        %4733 = vmatprep.subr.mxu0 %v4356
        %4734 = vmatpush1.msra.mxu0 %v4355
        %4735 = vmatprep.subr.mxu0 %v4353
        %4736 = vmatpush1.msra.mxu0 %v4352
        %4737 = vmatprep.subr.mxu0 %v4350
        %4738 = vmatpush1.msra.mxu0 %v4349
        %4739 = vmatprep.subr.mxu0 %v4347
        %4740 = vmatpush1.msra.mxu0 %v4346
        %4741 = vmatprep.subr.mxu0 %v4440
        %4742 = vmatpush2.msra.mxu0 %v4439
        %4743 = vmatprep.subr.mxu0 %v4437
        %4744 = vmatpush2.msra.mxu0 %v4436
        %4745 = vmatprep.subr.mxu0 %v4434
        %4746 = vmatpush2.msra.mxu0 %v4433
        %4747 = vmatprep.subr.mxu0 %v4431
        %4748 = vmatpush2.msra.mxu0 %v4430
        %4749 = vmatprep.subr.mxu0 %v4428
        %4750 = vmatpush2.msra.mxu0 %v4427
        %4751 = vmatprep.subr.mxu0 %v4425
        %4752 = vmatpush2.msra.mxu0 %v4424
        %4753 = vmatprep.subr.mxu0 %v4422
        %4754 = vmatpush2.msra.mxu0 %v4421
        %4755 = vmatprep.subr.mxu0 %v4419
        %4756 = vmatpush2.msra.mxu0 %v4418
        %4757 = vmatprep.subr.mxu0 %v4416
        %4758 = vmatpush2.msra.mxu0 %v4415
        %4759 = vmatprep.subr.mxu0 %v4413
        %4760 = vmatpush2.msra.mxu0 %v4412
        %4761 = vmatprep.subr.mxu0 %v4410
        %4762 = vmatpush2.msra.mxu0 %v4409
        %4763 = vmatprep.subr.mxu0 %v4407
        %4764 = vmatpush2.msra.mxu0 %v4406
        %4765 = vmatprep.subr.mxu0 %v4404
        %4766 = vmatpush2.msra.mxu0 %v4403
        %4767 = vmatprep.subr.mxu0 %v4401
        %4768 = vmatpush2.msra.mxu0 %v4400
        %4769 = vmatprep.subr.mxu0 %v4398
        %4770 = vmatpush2.msra.mxu0 %v4397
        %4771 = vmatprep.subr.mxu0 %v4395
        %4772 = vmatpush2.msra.mxu0 %v4394
        %4773 = vmatprep.mubr.f32.mxu0 %v4033
        %4774 = vmatmul.mubr.f32.gmra.mxu0 %v4032
        %v4775 = vpop.f32.mrf.mxu0
        %v4776 = vadd.f32 %v4687, %v4775
        %v4777 = vpop.f32.mrf.mxu0
        %v4778 = vadd.f32 %v4689, %v4777
        %4779 = vmatprep.mubr.f32.mxu0 %v4041
        %4780 = vmatmul.mubr.f32.gmra.mxu0 %v4040
        %v4781 = vpop.f32.mrf.mxu0
        %v4782 = vadd.f32 %v4693, %v4781
        %v4783 = vpop.f32.mrf.mxu0
        %v4784 = vadd.f32 %v4695, %v4783
        %4785 = vmatprep.mubr.f32.mxu0 %v4049
        %4786 = vmatmul.mubr.f32.gmra.mxu0 %v4048
        %v4787 = vpop.f32.mrf.mxu0
        %v4788 = vadd.f32 %v4699, %v4787
        %v4789 = vpop.f32.mrf.mxu0
        %v4790 = vadd.f32 %v4701, %v4789
        %4791 = vmatprep.mubr.f32.mxu0 %v4057
        %4792 = vmatmul.mubr.f32.gmra.mxu0 %v4056
        %v4793 = vpop.f32.mrf.mxu0
        %v4794 = vadd.f32 %v4705, %v4793
        %v4795 = vpop.f32.mrf.mxu0
        %v4796 = vadd.f32 %v4707, %v4795
        %4797 = vdwg.mxu0
        %4798 = vmatprep.subr.mxu0 0.0
        %4799 = vmatpush1.msra.mxu0 %v4105
        %4800 = vmatprep.subr.mxu0 0.0
        %4801 = vmatpush1.msra.mxu0 %v4102
        %4802 = vmatprep.subr.mxu0 0.0
        %4803 = vmatpush1.msra.mxu0 %v4099
        %4804 = vmatprep.subr.mxu0 0.0
        %4805 = vmatpush1.msra.mxu0 %v4096
        %4806 = vmatprep.subr.mxu0 0.0
        %4807 = vmatpush1.msra.mxu0 %v4093
        %4808 = vmatprep.subr.mxu0 0.0
        %4809 = vmatpush1.msra.mxu0 %v4090
        %4810 = vmatprep.subr.mxu0 0.0
        %4811 = vmatpush1.msra.mxu0 %v4087
        %4812 = vmatprep.subr.mxu0 0.0
        %4813 = vmatpush1.msra.mxu0 %v4084
        %4814 = vmatprep.subr.mxu0 0.0
        %4815 = vmatpush1.msra.mxu0 %v4081
        %4816 = vmatprep.subr.mxu0 0.0
        %4817 = vmatpush1.msra.mxu0 %v4078
        %4818 = vmatprep.subr.mxu0 0.0
        %4819 = vmatpush1.msra.mxu0 %v4075
        %4820 = vmatprep.subr.mxu0 0.0
        %4821 = vmatpush1.msra.mxu0 %v4072
        %4822 = vmatprep.subr.mxu0 0.0
        %4823 = vmatpush1.msra.mxu0 %v4069
        %4824 = vmatprep.subr.mxu0 0.0
        %4825 = vmatpush1.msra.mxu0 %v4066
        %4826 = vmatprep.subr.mxu0 0.0
        %4827 = vmatpush1.msra.mxu0 %v4063
        %4828 = vmatprep.subr.mxu0 0.0
        %4829 = vmatpush1.msra.mxu0 %v4060
        %4830 = vmatprep.subr.mxu0 0.0
        %4831 = vmatpush2.msra.mxu0 %v4153
        %4832 = vmatprep.subr.mxu0 0.0
        %4833 = vmatpush2.msra.mxu0 %v4150
        %4834 = vmatprep.subr.mxu0 0.0
        %4835 = vmatpush2.msra.mxu0 %v4147
        %4836 = vmatprep.subr.mxu0 0.0
        %4837 = vmatpush2.msra.mxu0 %v4144
        %4838 = vmatprep.subr.mxu0 0.0
        %4839 = vmatpush2.msra.mxu0 %v4141
        %4840 = vmatprep.subr.mxu0 0.0
        %4841 = vmatpush2.msra.mxu0 %v4138
        %4842 = vmatprep.subr.mxu0 0.0
        %4843 = vmatpush2.msra.mxu0 %v4135
        %4844 = vmatprep.subr.mxu0 0.0
        %4845 = vmatpush2.msra.mxu0 %v4132
        %4846 = vmatprep.subr.mxu0 0.0
        %4847 = vmatpush2.msra.mxu0 %v4129
        %4848 = vmatprep.subr.mxu0 0.0
        %4849 = vmatpush2.msra.mxu0 %v4126
        %4850 = vmatprep.subr.mxu0 0.0
        %4851 = vmatpush2.msra.mxu0 %v4123
        %4852 = vmatprep.subr.mxu0 0.0
        %4853 = vmatpush2.msra.mxu0 %v4120
        %4854 = vmatprep.subr.mxu0 0.0
        %4855 = vmatpush2.msra.mxu0 %v4117
        %4856 = vmatprep.subr.mxu0 0.0
        %4857 = vmatpush2.msra.mxu0 %v4114
        %4858 = vmatprep.subr.mxu0 0.0
        %4859 = vmatpush2.msra.mxu0 %v4111
        %4860 = vmatprep.subr.mxu0 0.0
        %4861 = vmatpush2.msra.mxu0 %v4108
        %4862 = vmatprep.mubr.f32.mxu0 %v4027
        %4863 = vmatmul.mubr.f32.gmra.mxu0 %v4026
        %v4864 = vpop.f32.mrf.mxu0
        %v4865 = vadd.f32 0.0, %v4864
        %v4866 = vpop.f32.mrf.mxu0
        %4867 = vmatprep.mubr.f32.mxu0 %v4035
        %4868 = vmatmul.mubr.f32.gmra.mxu0 %v4034
        %v4869 = vpop.f32.mrf.mxu0
        %v4870 = vadd.f32 0.0, %v4869
        %v4871 = vpop.f32.mrf.mxu0
        %4872 = vmatprep.mubr.f32.mxu0 %v4043
        %4873 = vmatmul.mubr.f32.gmra.mxu0 %v4042
        %v4874 = vpop.f32.mrf.mxu0
        %v4875 = vadd.f32 0.0, %v4874
        %v4876 = vpop.f32.mrf.mxu0
        %4877 = vmatprep.mubr.f32.mxu0 %v4051
        %4878 = vmatmul.mubr.f32.gmra.mxu0 %v4050
        %v4879 = vpop.f32.mrf.mxu0
        %v4880 = vadd.f32 0.0, %v4879
        %v4881 = vpop.f32.mrf.mxu0
        %4882 = vdwg.mxu0
        %4883 = vmatprep.subr.mxu0 0.0
        %4884 = vmatpush1.msra.mxu0 %v4201
        %4885 = vmatprep.subr.mxu0 0.0
        %4886 = vmatpush1.msra.mxu0 %v4198
        %4887 = vmatprep.subr.mxu0 0.0
        %4888 = vmatpush1.msra.mxu0 %v4195
        %4889 = vmatprep.subr.mxu0 0.0
        %4890 = vmatpush1.msra.mxu0 %v4192
        %4891 = vmatprep.subr.mxu0 0.0
        %4892 = vmatpush1.msra.mxu0 %v4189
        %4893 = vmatprep.subr.mxu0 0.0
        %4894 = vmatpush1.msra.mxu0 %v4186
        %4895 = vmatprep.subr.mxu0 0.0
        %4896 = vmatpush1.msra.mxu0 %v4183
        %4897 = vmatprep.subr.mxu0 0.0
        %4898 = vmatpush1.msra.mxu0 %v4180
        %4899 = vmatprep.subr.mxu0 0.0
        %4900 = vmatpush1.msra.mxu0 %v4177
        %4901 = vmatprep.subr.mxu0 0.0
        %4902 = vmatpush1.msra.mxu0 %v4174
        %4903 = vmatprep.subr.mxu0 0.0
        %4904 = vmatpush1.msra.mxu0 %v4171
        %4905 = vmatprep.subr.mxu0 0.0
        %4906 = vmatpush1.msra.mxu0 %v4168
        %4907 = vmatprep.subr.mxu0 0.0
        %4908 = vmatpush1.msra.mxu0 %v4165
        %4909 = vmatprep.subr.mxu0 0.0
        %4910 = vmatpush1.msra.mxu0 %v4162
        %4911 = vmatprep.subr.mxu0 0.0
        %4912 = vmatpush1.msra.mxu0 %v4159
        %4913 = vmatprep.subr.mxu0 0.0
        %4914 = vmatpush1.msra.mxu0 %v4156
        %4915 = vmatprep.subr.mxu0 0.0
        %4916 = vmatpush2.msra.mxu0 %v4249
        %4917 = vmatprep.subr.mxu0 0.0
        %4918 = vmatpush2.msra.mxu0 %v4246
        %4919 = vmatprep.subr.mxu0 0.0
        %4920 = vmatpush2.msra.mxu0 %v4243
        %4921 = vmatprep.subr.mxu0 0.0
        %4922 = vmatpush2.msra.mxu0 %v4240
        %4923 = vmatprep.subr.mxu0 0.0
        %4924 = vmatpush2.msra.mxu0 %v4237
        %4925 = vmatprep.subr.mxu0 0.0
        %4926 = vmatpush2.msra.mxu0 %v4234
        %4927 = vmatprep.subr.mxu0 0.0
        %4928 = vmatpush2.msra.mxu0 %v4231
        %4929 = vmatprep.subr.mxu0 0.0
        %4930 = vmatpush2.msra.mxu0 %v4228
        %4931 = vmatprep.subr.mxu0 0.0
        %4932 = vmatpush2.msra.mxu0 %v4225
        %4933 = vmatprep.subr.mxu0 0.0
        %4934 = vmatpush2.msra.mxu0 %v4222
        %4935 = vmatprep.subr.mxu0 0.0
        %4936 = vmatpush2.msra.mxu0 %v4219
        %4937 = vmatprep.subr.mxu0 0.0
        %4938 = vmatpush2.msra.mxu0 %v4216
        %4939 = vmatprep.subr.mxu0 0.0
        %4940 = vmatpush2.msra.mxu0 %v4213
        %4941 = vmatprep.subr.mxu0 0.0
        %4942 = vmatpush2.msra.mxu0 %v4210
        %4943 = vmatprep.subr.mxu0 0.0
        %4944 = vmatpush2.msra.mxu0 %v4207
        %4945 = vmatprep.subr.mxu0 0.0
        %4946 = vmatpush2.msra.mxu0 %v4204
        %4947 = vmatprep.mubr.f32.mxu0 %v4029
        %4948 = vmatmul.mubr.f32.gmra.mxu0 %v4028
        %v4949 = vpop.f32.mrf.mxu0
        %v4950 = vadd.f32 %v4865, %v4949
        %v4951 = vpop.f32.mrf.mxu0
        %4952 = vmatprep.mubr.f32.mxu0 %v4037
        %4953 = vmatmul.mubr.f32.gmra.mxu0 %v4036
        %v4954 = vpop.f32.mrf.mxu0
        %v4955 = vadd.f32 %v4870, %v4954
        %v4956 = vpop.f32.mrf.mxu0
        %4957 = vmatprep.mubr.f32.mxu0 %v4045
        %4958 = vmatmul.mubr.f32.gmra.mxu0 %v4044
        %v4959 = vpop.f32.mrf.mxu0
        %v4960 = vadd.f32 %v4875, %v4959
        %v4961 = vpop.f32.mrf.mxu0
        %4962 = vmatprep.mubr.f32.mxu0 %v4053
        %4963 = vmatmul.mubr.f32.gmra.mxu0 %v4052
        %v4964 = vpop.f32.mrf.mxu0
        %v4965 = vadd.f32 %v4880, %v4964
        %v4966 = vpop.f32.mrf.mxu0
        %4967 = vdwg.mxu0
        %4968 = vmatprep.subr.mxu0 0.0
        %4969 = vmatpush1.msra.mxu0 %v4297
        %4970 = vmatprep.subr.mxu0 0.0
        %4971 = vmatpush1.msra.mxu0 %v4294
        %4972 = vmatprep.subr.mxu0 0.0
        %4973 = vmatpush1.msra.mxu0 %v4291
        %4974 = vmatprep.subr.mxu0 0.0
        %4975 = vmatpush1.msra.mxu0 %v4288
        %4976 = vmatprep.subr.mxu0 0.0
        %4977 = vmatpush1.msra.mxu0 %v4285
        %4978 = vmatprep.subr.mxu0 0.0
        %4979 = vmatpush1.msra.mxu0 %v4282
        %4980 = vmatprep.subr.mxu0 0.0
        %4981 = vmatpush1.msra.mxu0 %v4279
        %4982 = vmatprep.subr.mxu0 0.0
        %4983 = vmatpush1.msra.mxu0 %v4276
        %4984 = vmatprep.subr.mxu0 0.0
        %4985 = vmatpush1.msra.mxu0 %v4273
        %4986 = vmatprep.subr.mxu0 0.0
        %4987 = vmatpush1.msra.mxu0 %v4270
        %4988 = vmatprep.subr.mxu0 0.0
        %4989 = vmatpush1.msra.mxu0 %v4267
        %4990 = vmatprep.subr.mxu0 0.0
        %4991 = vmatpush1.msra.mxu0 %v4264
        %4992 = vmatprep.subr.mxu0 0.0
        %4993 = vmatpush1.msra.mxu0 %v4261
        %4994 = vmatprep.subr.mxu0 0.0
        %4995 = vmatpush1.msra.mxu0 %v4258
        %4996 = vmatprep.subr.mxu0 0.0
        %4997 = vmatpush1.msra.mxu0 %v4255
        %4998 = vmatprep.subr.mxu0 0.0
        %4999 = vmatpush1.msra.mxu0 %v4252
        %5000 = vmatprep.subr.mxu0 0.0
        %5001 = vmatpush2.msra.mxu0 %v4345
        %5002 = vmatprep.subr.mxu0 0.0
        %5003 = vmatpush2.msra.mxu0 %v4342
        %5004 = vmatprep.subr.mxu0 0.0
        %5005 = vmatpush2.msra.mxu0 %v4339
        %5006 = vmatprep.subr.mxu0 0.0
        %5007 = vmatpush2.msra.mxu0 %v4336
        %5008 = vmatprep.subr.mxu0 0.0
        %5009 = vmatpush2.msra.mxu0 %v4333
        %5010 = vmatprep.subr.mxu0 0.0
        %5011 = vmatpush2.msra.mxu0 %v4330
        %5012 = vmatprep.subr.mxu0 0.0
        %5013 = vmatpush2.msra.mxu0 %v4327
        %5014 = vmatprep.subr.mxu0 0.0
        %5015 = vmatpush2.msra.mxu0 %v4324
        %5016 = vmatprep.subr.mxu0 0.0
        %5017 = vmatpush2.msra.mxu0 %v4321
        %5018 = vmatprep.subr.mxu0 0.0
        %5019 = vmatpush2.msra.mxu0 %v4318
        %5020 = vmatprep.subr.mxu0 0.0
        %5021 = vmatpush2.msra.mxu0 %v4315
        %5022 = vmatprep.subr.mxu0 0.0
        %5023 = vmatpush2.msra.mxu0 %v4312
        %5024 = vmatprep.subr.mxu0 0.0
        %5025 = vmatpush2.msra.mxu0 %v4309
        %5026 = vmatprep.subr.mxu0 0.0
        %5027 = vmatpush2.msra.mxu0 %v4306
        %5028 = vmatprep.subr.mxu0 0.0
        %5029 = vmatpush2.msra.mxu0 %v4303
        %5030 = vmatprep.subr.mxu0 0.0
        %5031 = vmatpush2.msra.mxu0 %v4300
        %5032 = vmatprep.mubr.f32.mxu0 %v4031
        %5033 = vmatmul.mubr.f32.gmra.mxu0 %v4030
        %v5034 = vpop.f32.mrf.mxu0
        %v5035 = vadd.f32 %v4950, %v5034
        %v5036 = vpop.f32.mrf.mxu0
        %5037 = vmatprep.mubr.f32.mxu0 %v4039
        %5038 = vmatmul.mubr.f32.gmra.mxu0 %v4038
        %v5039 = vpop.f32.mrf.mxu0
        %v5040 = vadd.f32 %v4955, %v5039
        %v5041 = vpop.f32.mrf.mxu0
        %5042 = vmatprep.mubr.f32.mxu0 %v4047
        %5043 = vmatmul.mubr.f32.gmra.mxu0 %v4046
        %v5044 = vpop.f32.mrf.mxu0
        %v5045 = vadd.f32 %v4960, %v5044
        %v5046 = vpop.f32.mrf.mxu0
        %5047 = vmatprep.mubr.f32.mxu0 %v4055
        %5048 = vmatmul.mubr.f32.gmra.mxu0 %v4054
        %v5049 = vpop.f32.mrf.mxu0
        %v5050 = vadd.f32 %v4965, %v5049
        %v5051 = vpop.f32.mrf.mxu0
        %5052 = vdwg.mxu0
        %5053 = vmatprep.subr.mxu0 0.0
        %5054 = vmatpush1.msra.mxu0 %v4393
        %5055 = vmatprep.subr.mxu0 0.0
        %5056 = vmatpush1.msra.mxu0 %v4390
        %5057 = vmatprep.subr.mxu0 0.0
        %5058 = vmatpush1.msra.mxu0 %v4387
        %5059 = vmatprep.subr.mxu0 0.0
        %5060 = vmatpush1.msra.mxu0 %v4384
        %5061 = vmatprep.subr.mxu0 0.0
        %5062 = vmatpush1.msra.mxu0 %v4381
        %5063 = vmatprep.subr.mxu0 0.0
        %5064 = vmatpush1.msra.mxu0 %v4378
        %5065 = vmatprep.subr.mxu0 0.0
        %5066 = vmatpush1.msra.mxu0 %v4375
        %5067 = vmatprep.subr.mxu0 0.0
        %5068 = vmatpush1.msra.mxu0 %v4372
        %5069 = vmatprep.subr.mxu0 0.0
        %5070 = vmatpush1.msra.mxu0 %v4369
        %5071 = vmatprep.subr.mxu0 0.0
        %5072 = vmatpush1.msra.mxu0 %v4366
        %5073 = vmatprep.subr.mxu0 0.0
        %5074 = vmatpush1.msra.mxu0 %v4363
        %5075 = vmatprep.subr.mxu0 0.0
        %5076 = vmatpush1.msra.mxu0 %v4360
        %5077 = vmatprep.subr.mxu0 0.0
        %5078 = vmatpush1.msra.mxu0 %v4357
        %5079 = vmatprep.subr.mxu0 0.0
        %5080 = vmatpush1.msra.mxu0 %v4354
        %5081 = vmatprep.subr.mxu0 0.0
        %5082 = vmatpush1.msra.mxu0 %v4351
        %5083 = vmatprep.subr.mxu0 0.0
        %5084 = vmatpush1.msra.mxu0 %v4348
        %5085 = vmatprep.subr.mxu0 0.0
        %5086 = vmatpush2.msra.mxu0 %v4441
        %5087 = vmatprep.subr.mxu0 0.0
        %5088 = vmatpush2.msra.mxu0 %v4438
        %5089 = vmatprep.subr.mxu0 0.0
        %5090 = vmatpush2.msra.mxu0 %v4435
        %5091 = vmatprep.subr.mxu0 0.0
        %5092 = vmatpush2.msra.mxu0 %v4432
        %5093 = vmatprep.subr.mxu0 0.0
        %5094 = vmatpush2.msra.mxu0 %v4429
        %5095 = vmatprep.subr.mxu0 0.0
        %5096 = vmatpush2.msra.mxu0 %v4426
        %5097 = vmatprep.subr.mxu0 0.0
        %5098 = vmatpush2.msra.mxu0 %v4423
        %5099 = vmatprep.subr.mxu0 0.0
        %5100 = vmatpush2.msra.mxu0 %v4420
        %5101 = vmatprep.subr.mxu0 0.0
        %5102 = vmatpush2.msra.mxu0 %v4417
        %5103 = vmatprep.subr.mxu0 0.0
        %5104 = vmatpush2.msra.mxu0 %v4414
        %5105 = vmatprep.subr.mxu0 0.0
        %5106 = vmatpush2.msra.mxu0 %v4411
        %5107 = vmatprep.subr.mxu0 0.0
        %5108 = vmatpush2.msra.mxu0 %v4408
        %5109 = vmatprep.subr.mxu0 0.0
        %5110 = vmatpush2.msra.mxu0 %v4405
        %5111 = vmatprep.subr.mxu0 0.0
        %5112 = vmatpush2.msra.mxu0 %v4402
        %5113 = vmatprep.subr.mxu0 0.0
        %5114 = vmatpush2.msra.mxu0 %v4399
        %5115 = vmatprep.subr.mxu0 0.0
        %5116 = vmatpush2.msra.mxu0 %v4396
        %5117 = vmatprep.mubr.f32.mxu0 %v4033
        %5118 = vmatmul.mubr.f32.gmra.mxu0 %v4032
        %v5119 = vpop.f32.mrf.mxu0
        %v5120 = vadd.f32 %v5035, %v5119
        %v5121 = vpop.f32.mrf.mxu0
        %5122 = vmatprep.mubr.f32.mxu0 %v4041
        %5123 = vmatmul.mubr.f32.gmra.mxu0 %v4040
        %v5124 = vpop.f32.mrf.mxu0
        %v5125 = vadd.f32 %v5040, %v5124
        %v5126 = vpop.f32.mrf.mxu0
        %5127 = vmatprep.mubr.f32.mxu0 %v4049
        %5128 = vmatmul.mubr.f32.gmra.mxu0 %v4048
        %v5129 = vpop.f32.mrf.mxu0
        %v5130 = vadd.f32 %v5045, %v5129
        %v5131 = vpop.f32.mrf.mxu0
        %5132 = vmatprep.mubr.f32.mxu0 %v4057
        %5133 = vmatmul.mubr.f32.gmra.mxu0 %v4056
        %v5134 = vpop.f32.mrf.mxu0
        %v5135 = vadd.f32 %v5050, %v5134
        %v5136 = vpop.f32.mrf.mxu0
        %5137 = vdwg.mxu0
        %v5138 = vld [vmem:[%s8] sm:$0xff]
        %v5139 = vld [vmem:[%s8 + $0x8] sm:$0xff]
        %v5140 = vld [vmem:[%s8 + $0x10] sm:$0xff]
        %v5141 = vld [vmem:[%s8 + $0x18] sm:$0xff]
        %v5142 = vld [vmem:[%s8 + $0x20] sm:$0xff]
        %v5143 = vld [vmem:[%s8 + $0x28] sm:$0xff]
        %v5144 = vld [vmem:[%s8 + $0x30] sm:$0xff]
        %v5145 = vld [vmem:[%s8 + $0x38] sm:$0xff]
        %v5146 = vld [vmem:[%s8 + $0x40] sm:$0xff]
        %v5147 = vld [vmem:[%s8 + $0x48] sm:$0xff]
        %v5148 = vld [vmem:[%s8 + $0x50] sm:$0xff]
        %v5149 = vld [vmem:[%s8 + $0x58] sm:$0xff]
        %v5150 = vld [vmem:[%s8 + $0x60] sm:$0xff]
        %v5151 = vld [vmem:[%s8 + $0x68] sm:$0xff]
        %v5152 = vld [vmem:[%s8 + $0x70] sm:$0xff]
        %v5153 = vld [vmem:[%s8 + $0x78] sm:$0xff]
        %v5154 = vld [vmem:[%s8 + $0x80] sm:$0xff]
        %v5155 = vld [vmem:[%s8 + $0x88] sm:$0xff]
        %v5156 = vld [vmem:[%s8 + $0x90] sm:$0xff]
        %v5157 = vld [vmem:[%s8 + $0x98] sm:$0xff]
        %v5158 = vld [vmem:[%s8 + $0xa0] sm:$0xff]
        %v5159 = vld [vmem:[%s8 + $0xa8] sm:$0xff]
        %v5160 = vld [vmem:[%s8 + $0xb0] sm:$0xff]
        %v5161 = vld [vmem:[%s8 + $0xb8] sm:$0xff]
        %v5162 = vld [vmem:[%s8 + $0xc0] sm:$0xff]
        %v5163 = vld [vmem:[%s8 + $0xc8] sm:$0xff]
        %v5164 = vld [vmem:[%s8 + $0xd0] sm:$0xff]
        %v5165 = vld [vmem:[%s8 + $0xd8] sm:$0xff]
        %v5166 = vld [vmem:[%s8 + $0xe0] sm:$0xff]
        %v5167 = vld [vmem:[%s8 + $0xe8] sm:$0xff]
        %v5168 = vld [vmem:[%s8 + $0xf0] sm:$0xff]
        %v5169 = vld [vmem:[%s8 + $0xf8] sm:$0xff]
        %v5170 = vld [vmem:[%s8 + $0x100] sm:$0xff]
        %v5171 = vld [vmem:[%s8 + $0x108] sm:$0xff]
        %v5172 = vld [vmem:[%s8 + $0x110] sm:$0xff]
        %v5173 = vld [vmem:[%s8 + $0x118] sm:$0xff]
        %v5174 = vld [vmem:[%s8 + $0x120] sm:$0xff]
        %v5175 = vld [vmem:[%s8 + $0x128] sm:$0xff]
        %v5176 = vld [vmem:[%s8 + $0x130] sm:$0xff]
        %v5177 = vld [vmem:[%s8 + $0x138] sm:$0xff]
        %v5178 = vld [vmem:[%s8 + $0x140] sm:$0xff]
        %v5179 = vld [vmem:[%s8 + $0x148] sm:$0xff]
        %v5180 = vld [vmem:[%s8 + $0x150] sm:$0xff]
        %v5181 = vld [vmem:[%s8 + $0x158] sm:$0xff]
        %v5182 = vld [vmem:[%s8 + $0x160] sm:$0xff]
        %v5183 = vld [vmem:[%s8 + $0x168] sm:$0xff]
        %v5184 = vld [vmem:[%s8 + $0x170] sm:$0xff]
        %v5185 = vld [vmem:[%s8 + $0x178] sm:$0xff]
        %vm5186 = vcmask 261120
        %v5188 = vsel %vm5186, %v5138, 0
        %v5191 = vsel %vm5186, %v5139, 0
        %v5194 = vsel %vm5186, %v5140, 0
        %v5197 = vsel %vm5186, %v5141, 0
        %v5200 = vsel %vm5186, %v5142, 0
        %v5203 = vsel %vm5186, %v5143, 0
        %v5206 = vsel %vm5186, %v5144, 0
        %v5209 = vsel %vm5186, %v5145, 0
        %v5212 = vsel %vm5186, %v5146, 0
        %v5215 = vsel %vm5186, %v5147, 0
        %v5218 = vsel %vm5186, %v5148, 0
        %v5221 = vsel %vm5186, %v5149, 0
        %v5224 = vsel %vm5186, %v5150, 0
        %v5227 = vsel %vm5186, %v5151, 0
        %v5230 = vsel %vm5186, %v5152, 0
        %v5233 = vsel %vm5186, %v5153, 0
        %v5236 = vsel %vm5186, %v5154, 0
        %v5239 = vsel %vm5186, %v5155, 0
        %v5242 = vsel %vm5186, %v5156, 0
        %v5245 = vsel %vm5186, %v5157, 0
        %v5248 = vsel %vm5186, %v5158, 0
        %v5251 = vsel %vm5186, %v5159, 0
        %v5254 = vsel %vm5186, %v5160, 0
        %v5257 = vsel %vm5186, %v5161, 0
        %v5260 = vsel %vm5186, %v5162, 0
        %v5263 = vsel %vm5186, %v5163, 0
        %v5266 = vsel %vm5186, %v5164, 0
        %v5269 = vsel %vm5186, %v5165, 0
        %v5272 = vsel %vm5186, %v5166, 0
        %v5275 = vsel %vm5186, %v5167, 0
        %v5278 = vsel %vm5186, %v5168, 0
        %v5281 = vsel %vm5186, %v5169, 0
        %v5284 = vsel %vm5186, %v5170, 0
        %v5287 = vsel %vm5186, %v5171, 0
        %v5290 = vsel %vm5186, %v5172, 0
        %v5293 = vsel %vm5186, %v5173, 0
        %v5296 = vsel %vm5186, %v5174, 0
        %v5299 = vsel %vm5186, %v5175, 0
        %v5302 = vsel %vm5186, %v5176, 0
        %v5305 = vsel %vm5186, %v5177, 0
        %v5308 = vsel %vm5186, %v5178, 0
        %v5311 = vsel %vm5186, %v5179, 0
        %v5314 = vsel %vm5186, %v5180, 0
        %v5317 = vsel %vm5186, %v5181, 0
        %v5320 = vsel %vm5186, %v5182, 0
        %v5323 = vsel %vm5186, %v5183, 0
        %v5326 = vsel %vm5186, %v5184, 0
        %v5329 = vsel %vm5186, %v5185, 0
        %5331 = vmatprep.subr.mxu0 0.0
        %5332 = vmatpush1.msra.mxu0 0.0
        %5333 = vmatprep.subr.mxu0 0.0
        %5334 = vmatpush1.msra.mxu0 0.0
        %5335 = vmatprep.subr.mxu0 0.0
        %5336 = vmatpush1.msra.mxu0 0.0
        %5337 = vmatprep.subr.mxu0 0.0
        %5338 = vmatpush1.msra.mxu0 0.0
        %5339 = vmatprep.subr.mxu0 0.0
        %5340 = vmatpush1.msra.mxu0 0.0
        %5341 = vmatprep.subr.mxu0 0.0
        %5342 = vmatpush1.msra.mxu0 0.0
        %5343 = vmatprep.subr.mxu0 0.0
        %5344 = vmatpush1.msra.mxu0 0.0
        %5345 = vmatprep.subr.mxu0 0.0
        %5346 = vmatpush1.msra.mxu0 0.0
        %5347 = vmatprep.subr.mxu0 0.0
        %5348 = vmatpush1.msra.mxu0 0.0
        %5349 = vmatprep.subr.mxu0 0.0
        %5350 = vmatpush1.msra.mxu0 0.0
        %5351 = vmatprep.subr.mxu0 0.0
        %5352 = vmatpush1.msra.mxu0 0.0
        %5353 = vmatprep.subr.mxu0 0.0
        %5354 = vmatpush1.msra.mxu0 0.0
        %5355 = vmatprep.subr.mxu0 %v4796
        %5356 = vmatpush1.msra.mxu0 %v4794
        %5357 = vmatprep.subr.mxu0 %v4790
        %5358 = vmatpush1.msra.mxu0 %v4788
        %5359 = vmatprep.subr.mxu0 %v4784
        %5360 = vmatpush1.msra.mxu0 %v4782
        %5361 = vmatprep.subr.mxu0 %v4778
        %5362 = vmatpush1.msra.mxu0 %v4776
        %5363 = vmatprep.subr.mxu0 0.0
        %5364 = vmatpush2.msra.mxu0 0.0
        %5365 = vmatprep.subr.mxu0 0.0
        %5366 = vmatpush2.msra.mxu0 0.0
        %5367 = vmatprep.subr.mxu0 0.0
        %5368 = vmatpush2.msra.mxu0 0.0
        %5369 = vmatprep.subr.mxu0 0.0
        %5370 = vmatpush2.msra.mxu0 0.0
        %5371 = vmatprep.subr.mxu0 0.0
        %5372 = vmatpush2.msra.mxu0 0.0
        %5373 = vmatprep.subr.mxu0 0.0
        %5374 = vmatpush2.msra.mxu0 0.0
        %5375 = vmatprep.subr.mxu0 0.0
        %5376 = vmatpush2.msra.mxu0 0.0
        %5377 = vmatprep.subr.mxu0 0.0
        %5378 = vmatpush2.msra.mxu0 0.0
        %5379 = vmatprep.subr.mxu0 0.0
        %5380 = vmatpush2.msra.mxu0 0.0
        %5381 = vmatprep.subr.mxu0 0.0
        %5382 = vmatpush2.msra.mxu0 0.0
        %5383 = vmatprep.subr.mxu0 0.0
        %5384 = vmatpush2.msra.mxu0 0.0
        %5385 = vmatprep.subr.mxu0 0.0
        %5386 = vmatpush2.msra.mxu0 0.0
        %5387 = vmatprep.subr.mxu0 0.0
        %5388 = vmatpush2.msra.mxu0 0.0
        %5389 = vmatprep.subr.mxu0 0.0
        %5390 = vmatpush2.msra.mxu0 0.0
        %5391 = vmatprep.subr.mxu0 0.0
        %5392 = vmatpush2.msra.mxu0 0.0
        %5393 = vmatprep.subr.mxu0 0.0
        %5394 = vmatpush2.msra.mxu0 0.0
        %5395 = vmatprep.mubr.f32.mxu0 0.0
        %5396 = vmatmul.mubr.f32.gmra.mxu0 %v5188
        %v5397 = vpop.f32.mrf.mxu0
        %v5398 = vadd.f32 0.0, %v5397
        %v5399 = vpop.f32.mrf.mxu0
        %v5400 = vadd.f32 0.0, %v5399
        %5401 = vmatprep.mubr.f32.mxu0 0.0
        %5402 = vmatmul.mubr.f32.gmra.mxu0 %v5191
        %v5403 = vpop.f32.mrf.mxu0
        %v5404 = vadd.f32 0.0, %v5403
        %v5405 = vpop.f32.mrf.mxu0
        %v5406 = vadd.f32 0.0, %v5405
        %5407 = vmatprep.mubr.f32.mxu0 0.0
        %5408 = vmatmul.mubr.f32.gmra.mxu0 %v5194
        %v5409 = vpop.f32.mrf.mxu0
        %v5410 = vadd.f32 0.0, %v5409
        %v5411 = vpop.f32.mrf.mxu0
        %v5412 = vadd.f32 0.0, %v5411
        %5413 = vmatprep.mubr.f32.mxu0 0.0
        %5414 = vmatmul.mubr.f32.gmra.mxu0 %v5197
        %v5415 = vpop.f32.mrf.mxu0
        %v5416 = vadd.f32 0.0, %v5415
        %v5417 = vpop.f32.mrf.mxu0
        %v5418 = vadd.f32 0.0, %v5417
        %5419 = vmatprep.mubr.f32.mxu0 0.0
        %5420 = vmatmul.mubr.f32.gmra.mxu0 %v5200
        %v5421 = vpop.f32.mrf.mxu0
        %v5422 = vadd.f32 0.0, %v5421
        %v5423 = vpop.f32.mrf.mxu0
        %v5424 = vadd.f32 0.0, %v5423
        %5425 = vmatprep.mubr.f32.mxu0 0.0
        %5426 = vmatmul.mubr.f32.gmra.mxu0 %v5203
        %v5427 = vpop.f32.mrf.mxu0
        %v5428 = vadd.f32 0.0, %v5427
        %v5429 = vpop.f32.mrf.mxu0
        %v5430 = vadd.f32 0.0, %v5429
        %5431 = vmatprep.mubr.f32.mxu0 0.0
        %5432 = vmatmul.mubr.f32.gmra.mxu0 %v5206
        %v5433 = vpop.f32.mrf.mxu0
        %v5434 = vadd.f32 0.0, %v5433
        %v5435 = vpop.f32.mrf.mxu0
        %v5436 = vadd.f32 0.0, %v5435
        %5437 = vmatprep.mubr.f32.mxu0 0.0
        %5438 = vmatmul.mubr.f32.gmra.mxu0 %v5209
        %v5439 = vpop.f32.mrf.mxu0
        %v5440 = vadd.f32 0.0, %v5439
        %v5441 = vpop.f32.mrf.mxu0
        %v5442 = vadd.f32 0.0, %v5441
        %5443 = vmatprep.mubr.f32.mxu0 0.0
        %5444 = vmatmul.mubr.f32.gmra.mxu0 %v5212
        %v5445 = vpop.f32.mrf.mxu0
        %v5446 = vadd.f32 0.0, %v5445
        %v5447 = vpop.f32.mrf.mxu0
        %v5448 = vadd.f32 0.0, %v5447
        %5449 = vmatprep.mubr.f32.mxu0 0.0
        %5450 = vmatmul.mubr.f32.gmra.mxu0 %v5215
        %v5451 = vpop.f32.mrf.mxu0
        %v5452 = vadd.f32 0.0, %v5451
        %v5453 = vpop.f32.mrf.mxu0
        %v5454 = vadd.f32 0.0, %v5453
        %5455 = vmatprep.mubr.f32.mxu0 0.0
        %5456 = vmatmul.mubr.f32.gmra.mxu0 %v5218
        %v5457 = vpop.f32.mrf.mxu0
        %v5458 = vadd.f32 0.0, %v5457
        %v5459 = vpop.f32.mrf.mxu0
        %v5460 = vadd.f32 0.0, %v5459
        %5461 = vmatprep.mubr.f32.mxu0 0.0
        %5462 = vmatmul.mubr.f32.gmra.mxu0 %v5221
        %v5463 = vpop.f32.mrf.mxu0
        %v5464 = vadd.f32 0.0, %v5463
        %v5465 = vpop.f32.mrf.mxu0
        %v5466 = vadd.f32 0.0, %v5465
        %5467 = vmatprep.mubr.f32.mxu0 0.0
        %5468 = vmatmul.mubr.f32.gmra.mxu0 %v5224
        %v5469 = vpop.f32.mrf.mxu0
        %v5470 = vadd.f32 0.0, %v5469
        %v5471 = vpop.f32.mrf.mxu0
        %v5472 = vadd.f32 0.0, %v5471
        %5473 = vmatprep.mubr.f32.mxu0 0.0
        %5474 = vmatmul.mubr.f32.gmra.mxu0 %v5227
        %v5475 = vpop.f32.mrf.mxu0
        %v5476 = vadd.f32 0.0, %v5475
        %v5477 = vpop.f32.mrf.mxu0
        %v5478 = vadd.f32 0.0, %v5477
        %5479 = vmatprep.mubr.f32.mxu0 0.0
        %5480 = vmatmul.mubr.f32.gmra.mxu0 %v5230
        %v5481 = vpop.f32.mrf.mxu0
        %v5482 = vadd.f32 0.0, %v5481
        %v5483 = vpop.f32.mrf.mxu0
        %v5484 = vadd.f32 0.0, %v5483
        %5485 = vmatprep.mubr.f32.mxu0 0.0
        %5486 = vmatmul.mubr.f32.gmra.mxu0 %v5233
        %v5487 = vpop.f32.mrf.mxu0
        %v5488 = vadd.f32 0.0, %v5487
        %v5489 = vpop.f32.mrf.mxu0
        %v5490 = vadd.f32 0.0, %v5489
        %5491 = vmatprep.mubr.f32.mxu0 0.0
        %5492 = vmatmul.mubr.f32.gmra.mxu0 %v5236
        %v5493 = vpop.f32.mrf.mxu0
        %v5494 = vadd.f32 0.0, %v5493
        %v5495 = vpop.f32.mrf.mxu0
        %v5496 = vadd.f32 0.0, %v5495
        %5497 = vmatprep.mubr.f32.mxu0 0.0
        %5498 = vmatmul.mubr.f32.gmra.mxu0 %v5239
        %v5499 = vpop.f32.mrf.mxu0
        %v5500 = vadd.f32 0.0, %v5499
        %v5501 = vpop.f32.mrf.mxu0
        %v5502 = vadd.f32 0.0, %v5501
        %5503 = vmatprep.mubr.f32.mxu0 0.0
        %5504 = vmatmul.mubr.f32.gmra.mxu0 %v5242
        %v5505 = vpop.f32.mrf.mxu0
        %v5506 = vadd.f32 0.0, %v5505
        %v5507 = vpop.f32.mrf.mxu0
        %v5508 = vadd.f32 0.0, %v5507
        %5509 = vmatprep.mubr.f32.mxu0 0.0
        %5510 = vmatmul.mubr.f32.gmra.mxu0 %v5245
        %v5511 = vpop.f32.mrf.mxu0
        %v5512 = vadd.f32 0.0, %v5511
        %v5513 = vpop.f32.mrf.mxu0
        %v5514 = vadd.f32 0.0, %v5513
        %5515 = vmatprep.mubr.f32.mxu0 0.0
        %5516 = vmatmul.mubr.f32.gmra.mxu0 %v5248
        %v5517 = vpop.f32.mrf.mxu0
        %v5518 = vadd.f32 0.0, %v5517
        %v5519 = vpop.f32.mrf.mxu0
        %v5520 = vadd.f32 0.0, %v5519
        %5521 = vmatprep.mubr.f32.mxu0 0.0
        %5522 = vmatmul.mubr.f32.gmra.mxu0 %v5251
        %v5523 = vpop.f32.mrf.mxu0
        %v5524 = vadd.f32 0.0, %v5523
        %v5525 = vpop.f32.mrf.mxu0
        %v5526 = vadd.f32 0.0, %v5525
        %5527 = vmatprep.mubr.f32.mxu0 0.0
        %5528 = vmatmul.mubr.f32.gmra.mxu0 %v5254
        %v5529 = vpop.f32.mrf.mxu0
        %v5530 = vadd.f32 0.0, %v5529
        %v5531 = vpop.f32.mrf.mxu0
        %v5532 = vadd.f32 0.0, %v5531
        %5533 = vmatprep.mubr.f32.mxu0 0.0
        %5534 = vmatmul.mubr.f32.gmra.mxu0 %v5257
        %v5535 = vpop.f32.mrf.mxu0
        %v5536 = vadd.f32 0.0, %v5535
        %v5537 = vpop.f32.mrf.mxu0
        %v5538 = vadd.f32 0.0, %v5537
        %5539 = vmatprep.mubr.f32.mxu0 0.0
        %5540 = vmatmul.mubr.f32.gmra.mxu0 %v5260
        %v5541 = vpop.f32.mrf.mxu0
        %v5542 = vadd.f32 0.0, %v5541
        %v5543 = vpop.f32.mrf.mxu0
        %v5544 = vadd.f32 0.0, %v5543
        %5545 = vmatprep.mubr.f32.mxu0 0.0
        %5546 = vmatmul.mubr.f32.gmra.mxu0 %v5263
        %v5547 = vpop.f32.mrf.mxu0
        %v5548 = vadd.f32 0.0, %v5547
        %v5549 = vpop.f32.mrf.mxu0
        %v5550 = vadd.f32 0.0, %v5549
        %5551 = vmatprep.mubr.f32.mxu0 0.0
        %5552 = vmatmul.mubr.f32.gmra.mxu0 %v5266
        %v5553 = vpop.f32.mrf.mxu0
        %v5554 = vadd.f32 0.0, %v5553
        %v5555 = vpop.f32.mrf.mxu0
        %v5556 = vadd.f32 0.0, %v5555
        %5557 = vmatprep.mubr.f32.mxu0 0.0
        %5558 = vmatmul.mubr.f32.gmra.mxu0 %v5269
        %v5559 = vpop.f32.mrf.mxu0
        %v5560 = vadd.f32 0.0, %v5559
        %v5561 = vpop.f32.mrf.mxu0
        %v5562 = vadd.f32 0.0, %v5561
        %5563 = vmatprep.mubr.f32.mxu0 0.0
        %5564 = vmatmul.mubr.f32.gmra.mxu0 %v5272
        %v5565 = vpop.f32.mrf.mxu0
        %v5566 = vadd.f32 0.0, %v5565
        %v5567 = vpop.f32.mrf.mxu0
        %v5568 = vadd.f32 0.0, %v5567
        %5569 = vmatprep.mubr.f32.mxu0 0.0
        %5570 = vmatmul.mubr.f32.gmra.mxu0 %v5275
        %v5571 = vpop.f32.mrf.mxu0
        %v5572 = vadd.f32 0.0, %v5571
        %v5573 = vpop.f32.mrf.mxu0
        %v5574 = vadd.f32 0.0, %v5573
        %5575 = vmatprep.mubr.f32.mxu0 0.0
        %5576 = vmatmul.mubr.f32.gmra.mxu0 %v5278
        %v5577 = vpop.f32.mrf.mxu0
        %v5578 = vadd.f32 0.0, %v5577
        %v5579 = vpop.f32.mrf.mxu0
        %v5580 = vadd.f32 0.0, %v5579
        %5581 = vmatprep.mubr.f32.mxu0 0.0
        %5582 = vmatmul.mubr.f32.gmra.mxu0 %v5281
        %v5583 = vpop.f32.mrf.mxu0
        %v5584 = vadd.f32 0.0, %v5583
        %v5585 = vpop.f32.mrf.mxu0
        %v5586 = vadd.f32 0.0, %v5585
        %5587 = vmatprep.mubr.f32.mxu0 0.0
        %5588 = vmatmul.mubr.f32.gmra.mxu0 %v5284
        %v5589 = vpop.f32.mrf.mxu0
        %v5590 = vadd.f32 0.0, %v5589
        %v5591 = vpop.f32.mrf.mxu0
        %v5592 = vadd.f32 0.0, %v5591
        %5593 = vmatprep.mubr.f32.mxu0 0.0
        %5594 = vmatmul.mubr.f32.gmra.mxu0 %v5287
        %v5595 = vpop.f32.mrf.mxu0
        %v5596 = vadd.f32 0.0, %v5595
        %v5597 = vpop.f32.mrf.mxu0
        %v5598 = vadd.f32 0.0, %v5597
        %5599 = vmatprep.mubr.f32.mxu0 0.0
        %5600 = vmatmul.mubr.f32.gmra.mxu0 %v5290
        %v5601 = vpop.f32.mrf.mxu0
        %v5602 = vadd.f32 0.0, %v5601
        %v5603 = vpop.f32.mrf.mxu0
        %v5604 = vadd.f32 0.0, %v5603
        %5605 = vmatprep.mubr.f32.mxu0 0.0
        %5606 = vmatmul.mubr.f32.gmra.mxu0 %v5293
        %v5607 = vpop.f32.mrf.mxu0
        %v5608 = vadd.f32 0.0, %v5607
        %v5609 = vpop.f32.mrf.mxu0
        %v5610 = vadd.f32 0.0, %v5609
        %5611 = vmatprep.mubr.f32.mxu0 0.0
        %5612 = vmatmul.mubr.f32.gmra.mxu0 %v5296
        %v5613 = vpop.f32.mrf.mxu0
        %v5614 = vadd.f32 0.0, %v5613
        %v5615 = vpop.f32.mrf.mxu0
        %v5616 = vadd.f32 0.0, %v5615
        %5617 = vmatprep.mubr.f32.mxu0 0.0
        %5618 = vmatmul.mubr.f32.gmra.mxu0 %v5299
        %v5619 = vpop.f32.mrf.mxu0
        %v5620 = vadd.f32 0.0, %v5619
        %v5621 = vpop.f32.mrf.mxu0
        %v5622 = vadd.f32 0.0, %v5621
        %5623 = vmatprep.mubr.f32.mxu0 0.0
        %5624 = vmatmul.mubr.f32.gmra.mxu0 %v5302
        %v5625 = vpop.f32.mrf.mxu0
        %v5626 = vadd.f32 0.0, %v5625
        %v5627 = vpop.f32.mrf.mxu0
        %v5628 = vadd.f32 0.0, %v5627
        %5629 = vmatprep.mubr.f32.mxu0 0.0
        %5630 = vmatmul.mubr.f32.gmra.mxu0 %v5305
        %v5631 = vpop.f32.mrf.mxu0
        %v5632 = vadd.f32 0.0, %v5631
        %v5633 = vpop.f32.mrf.mxu0
        %v5634 = vadd.f32 0.0, %v5633
        %5635 = vmatprep.mubr.f32.mxu0 0.0
        %5636 = vmatmul.mubr.f32.gmra.mxu0 %v5308
        %v5637 = vpop.f32.mrf.mxu0
        %v5638 = vadd.f32 0.0, %v5637
        %v5639 = vpop.f32.mrf.mxu0
        %v5640 = vadd.f32 0.0, %v5639
        %5641 = vmatprep.mubr.f32.mxu0 0.0
        %5642 = vmatmul.mubr.f32.gmra.mxu0 %v5311
        %v5643 = vpop.f32.mrf.mxu0
        %v5644 = vadd.f32 0.0, %v5643
        %v5645 = vpop.f32.mrf.mxu0
        %v5646 = vadd.f32 0.0, %v5645
        %5647 = vmatprep.mubr.f32.mxu0 0.0
        %5648 = vmatmul.mubr.f32.gmra.mxu0 %v5314
        %v5649 = vpop.f32.mrf.mxu0
        %v5650 = vadd.f32 0.0, %v5649
        %v5651 = vpop.f32.mrf.mxu0
        %v5652 = vadd.f32 0.0, %v5651
        %5653 = vmatprep.mubr.f32.mxu0 0.0
        %5654 = vmatmul.mubr.f32.gmra.mxu0 %v5317
        %v5655 = vpop.f32.mrf.mxu0
        %v5656 = vadd.f32 0.0, %v5655
        %v5657 = vpop.f32.mrf.mxu0
        %v5658 = vadd.f32 0.0, %v5657
        %5659 = vmatprep.mubr.f32.mxu0 0.0
        %5660 = vmatmul.mubr.f32.gmra.mxu0 %v5320
        %v5661 = vpop.f32.mrf.mxu0
        %v5662 = vadd.f32 0.0, %v5661
        %v5663 = vpop.f32.mrf.mxu0
        %v5664 = vadd.f32 0.0, %v5663
        %5665 = vmatprep.mubr.f32.mxu0 0.0
        %5666 = vmatmul.mubr.f32.gmra.mxu0 %v5323
        %v5667 = vpop.f32.mrf.mxu0
        %v5668 = vadd.f32 0.0, %v5667
        %v5669 = vpop.f32.mrf.mxu0
        %v5670 = vadd.f32 0.0, %v5669
        %5671 = vmatprep.mubr.f32.mxu0 0.0
        %5672 = vmatmul.mubr.f32.gmra.mxu0 %v5326
        %v5673 = vpop.f32.mrf.mxu0
        %v5674 = vadd.f32 0.0, %v5673
        %v5675 = vpop.f32.mrf.mxu0
        %v5676 = vadd.f32 0.0, %v5675
        %5677 = vmatprep.mubr.f32.mxu0 0.0
        %5678 = vmatmul.mubr.f32.gmra.mxu0 %v5329
        %v5679 = vpop.f32.mrf.mxu0
        %v5680 = vadd.f32 0.0, %v5679
        %v5681 = vpop.f32.mrf.mxu0
        %v5682 = vadd.f32 0.0, %v5681
        %5683 = vdwg.mxu0
        %5684 = vmatprep.subr.mxu0 0.0
        %5685 = vmatpush1.msra.mxu0 0.0
        %5686 = vmatprep.subr.mxu0 0.0
        %5687 = vmatpush1.msra.mxu0 0.0
        %5688 = vmatprep.subr.mxu0 0.0
        %5689 = vmatpush1.msra.mxu0 0.0
        %5690 = vmatprep.subr.mxu0 0.0
        %5691 = vmatpush1.msra.mxu0 0.0
        %5692 = vmatprep.subr.mxu0 0.0
        %5693 = vmatpush1.msra.mxu0 0.0
        %5694 = vmatprep.subr.mxu0 0.0
        %5695 = vmatpush1.msra.mxu0 0.0
        %5696 = vmatprep.subr.mxu0 0.0
        %5697 = vmatpush1.msra.mxu0 0.0
        %5698 = vmatprep.subr.mxu0 0.0
        %5699 = vmatpush1.msra.mxu0 0.0
        %5700 = vmatprep.subr.mxu0 0.0
        %5701 = vmatpush1.msra.mxu0 0.0
        %5702 = vmatprep.subr.mxu0 0.0
        %5703 = vmatpush1.msra.mxu0 0.0
        %5704 = vmatprep.subr.mxu0 0.0
        %5705 = vmatpush1.msra.mxu0 0.0
        %5706 = vmatprep.subr.mxu0 0.0
        %5707 = vmatpush1.msra.mxu0 0.0
        %5708 = vmatprep.subr.mxu0 0.0
        %5709 = vmatpush1.msra.mxu0 %v5135
        %5710 = vmatprep.subr.mxu0 0.0
        %5711 = vmatpush1.msra.mxu0 %v5130
        %5712 = vmatprep.subr.mxu0 0.0
        %5713 = vmatpush1.msra.mxu0 %v5125
        %5714 = vmatprep.subr.mxu0 0.0
        %5715 = vmatpush1.msra.mxu0 %v5120
        %5716 = vmatprep.subr.mxu0 0.0
        %5717 = vmatpush2.msra.mxu0 0.0
        %5718 = vmatprep.subr.mxu0 0.0
        %5719 = vmatpush2.msra.mxu0 0.0
        %5720 = vmatprep.subr.mxu0 0.0
        %5721 = vmatpush2.msra.mxu0 0.0
        %5722 = vmatprep.subr.mxu0 0.0
        %5723 = vmatpush2.msra.mxu0 0.0
        %5724 = vmatprep.subr.mxu0 0.0
        %5725 = vmatpush2.msra.mxu0 0.0
        %5726 = vmatprep.subr.mxu0 0.0
        %5727 = vmatpush2.msra.mxu0 0.0
        %5728 = vmatprep.subr.mxu0 0.0
        %5729 = vmatpush2.msra.mxu0 0.0
        %5730 = vmatprep.subr.mxu0 0.0
        %5731 = vmatpush2.msra.mxu0 0.0
        %5732 = vmatprep.subr.mxu0 0.0
        %5733 = vmatpush2.msra.mxu0 0.0
        %5734 = vmatprep.subr.mxu0 0.0
        %5735 = vmatpush2.msra.mxu0 0.0
        %5736 = vmatprep.subr.mxu0 0.0
        %5737 = vmatpush2.msra.mxu0 0.0
        %5738 = vmatprep.subr.mxu0 0.0
        %5739 = vmatpush2.msra.mxu0 0.0
        %5740 = vmatprep.subr.mxu0 0.0
        %5741 = vmatpush2.msra.mxu0 0.0
        %5742 = vmatprep.subr.mxu0 0.0
        %5743 = vmatpush2.msra.mxu0 0.0
        %5744 = vmatprep.subr.mxu0 0.0
        %5745 = vmatpush2.msra.mxu0 0.0
        %5746 = vmatprep.subr.mxu0 0.0
        %5747 = vmatpush2.msra.mxu0 0.0
        %5748 = vmatprep.mubr.f32.mxu0 0.0
        %5749 = vmatmul.mubr.f32.gmra.mxu0 %v5188
        %v5750 = vpop.f32.mrf.mxu0
        %v5751 = vadd.f32 0.0, %v5750
        %v5752 = vpop.f32.mrf.mxu0
        %5753 = vmatprep.mubr.f32.mxu0 0.0
        %5754 = vmatmul.mubr.f32.gmra.mxu0 %v5191
        %v5755 = vpop.f32.mrf.mxu0
        %v5756 = vadd.f32 0.0, %v5755
        %v5757 = vpop.f32.mrf.mxu0
        %5758 = vmatprep.mubr.f32.mxu0 0.0
        %5759 = vmatmul.mubr.f32.gmra.mxu0 %v5194
        %v5760 = vpop.f32.mrf.mxu0
        %v5761 = vadd.f32 0.0, %v5760
        %v5762 = vpop.f32.mrf.mxu0
        %5763 = vmatprep.mubr.f32.mxu0 0.0
        %5764 = vmatmul.mubr.f32.gmra.mxu0 %v5197
        %v5765 = vpop.f32.mrf.mxu0
        %v5766 = vadd.f32 0.0, %v5765
        %v5767 = vpop.f32.mrf.mxu0
        %5768 = vmatprep.mubr.f32.mxu0 0.0
        %5769 = vmatmul.mubr.f32.gmra.mxu0 %v5200
        %v5770 = vpop.f32.mrf.mxu0
        %v5771 = vadd.f32 0.0, %v5770
        %v5772 = vpop.f32.mrf.mxu0
        %5773 = vmatprep.mubr.f32.mxu0 0.0
        %5774 = vmatmul.mubr.f32.gmra.mxu0 %v5203
        %v5775 = vpop.f32.mrf.mxu0
        %v5776 = vadd.f32 0.0, %v5775
        %v5777 = vpop.f32.mrf.mxu0
        %5778 = vmatprep.mubr.f32.mxu0 0.0
        %5779 = vmatmul.mubr.f32.gmra.mxu0 %v5206
        %v5780 = vpop.f32.mrf.mxu0
        %v5781 = vadd.f32 0.0, %v5780
        %v5782 = vpop.f32.mrf.mxu0
        %5783 = vmatprep.mubr.f32.mxu0 0.0
        %5784 = vmatmul.mubr.f32.gmra.mxu0 %v5209
        %v5785 = vpop.f32.mrf.mxu0
        %v5786 = vadd.f32 0.0, %v5785
        %v5787 = vpop.f32.mrf.mxu0
        %5788 = vmatprep.mubr.f32.mxu0 0.0
        %5789 = vmatmul.mubr.f32.gmra.mxu0 %v5212
        %v5790 = vpop.f32.mrf.mxu0
        %v5791 = vadd.f32 0.0, %v5790
        %v5792 = vpop.f32.mrf.mxu0
        %5793 = vmatprep.mubr.f32.mxu0 0.0
        %5794 = vmatmul.mubr.f32.gmra.mxu0 %v5215
        %v5795 = vpop.f32.mrf.mxu0
        %v5796 = vadd.f32 0.0, %v5795
        %v5797 = vpop.f32.mrf.mxu0
        %5798 = vmatprep.mubr.f32.mxu0 0.0
        %5799 = vmatmul.mubr.f32.gmra.mxu0 %v5218
        %v5800 = vpop.f32.mrf.mxu0
        %v5801 = vadd.f32 0.0, %v5800
        %v5802 = vpop.f32.mrf.mxu0
        %5803 = vmatprep.mubr.f32.mxu0 0.0
        %5804 = vmatmul.mubr.f32.gmra.mxu0 %v5221
        %v5805 = vpop.f32.mrf.mxu0
        %v5806 = vadd.f32 0.0, %v5805
        %v5807 = vpop.f32.mrf.mxu0
        %5808 = vmatprep.mubr.f32.mxu0 0.0
        %5809 = vmatmul.mubr.f32.gmra.mxu0 %v5224
        %v5810 = vpop.f32.mrf.mxu0
        %v5811 = vadd.f32 0.0, %v5810
        %v5812 = vpop.f32.mrf.mxu0
        %5813 = vmatprep.mubr.f32.mxu0 0.0
        %5814 = vmatmul.mubr.f32.gmra.mxu0 %v5227
        %v5815 = vpop.f32.mrf.mxu0
        %v5816 = vadd.f32 0.0, %v5815
        %v5817 = vpop.f32.mrf.mxu0
        %5818 = vmatprep.mubr.f32.mxu0 0.0
        %5819 = vmatmul.mubr.f32.gmra.mxu0 %v5230
        %v5820 = vpop.f32.mrf.mxu0
        %v5821 = vadd.f32 0.0, %v5820
        %v5822 = vpop.f32.mrf.mxu0
        %5823 = vmatprep.mubr.f32.mxu0 0.0
        %5824 = vmatmul.mubr.f32.gmra.mxu0 %v5233
        %v5825 = vpop.f32.mrf.mxu0
        %v5826 = vadd.f32 0.0, %v5825
        %v5827 = vpop.f32.mrf.mxu0
        %5828 = vmatprep.mubr.f32.mxu0 0.0
        %5829 = vmatmul.mubr.f32.gmra.mxu0 %v5236
        %v5830 = vpop.f32.mrf.mxu0
        %v5831 = vadd.f32 0.0, %v5830
        %v5832 = vpop.f32.mrf.mxu0
        %5833 = vmatprep.mubr.f32.mxu0 0.0
        %5834 = vmatmul.mubr.f32.gmra.mxu0 %v5239
        %v5835 = vpop.f32.mrf.mxu0
        %v5836 = vadd.f32 0.0, %v5835
        %v5837 = vpop.f32.mrf.mxu0
        %5838 = vmatprep.mubr.f32.mxu0 0.0
        %5839 = vmatmul.mubr.f32.gmra.mxu0 %v5242
        %v5840 = vpop.f32.mrf.mxu0
        %v5841 = vadd.f32 0.0, %v5840
        %v5842 = vpop.f32.mrf.mxu0
        %5843 = vmatprep.mubr.f32.mxu0 0.0
        %5844 = vmatmul.mubr.f32.gmra.mxu0 %v5245
        %v5845 = vpop.f32.mrf.mxu0
        %v5846 = vadd.f32 0.0, %v5845
        %v5847 = vpop.f32.mrf.mxu0
        %5848 = vmatprep.mubr.f32.mxu0 0.0
        %5849 = vmatmul.mubr.f32.gmra.mxu0 %v5248
        %v5850 = vpop.f32.mrf.mxu0
        %v5851 = vadd.f32 0.0, %v5850
        %v5852 = vpop.f32.mrf.mxu0
        %5853 = vmatprep.mubr.f32.mxu0 0.0
        %5854 = vmatmul.mubr.f32.gmra.mxu0 %v5251
        %v5855 = vpop.f32.mrf.mxu0
        %v5856 = vadd.f32 0.0, %v5855
        %v5857 = vpop.f32.mrf.mxu0
        %5858 = vmatprep.mubr.f32.mxu0 0.0
        %5859 = vmatmul.mubr.f32.gmra.mxu0 %v5254
        %v5860 = vpop.f32.mrf.mxu0
        %v5861 = vadd.f32 0.0, %v5860
        %v5862 = vpop.f32.mrf.mxu0
        %5863 = vmatprep.mubr.f32.mxu0 0.0
        %5864 = vmatmul.mubr.f32.gmra.mxu0 %v5257
        %v5865 = vpop.f32.mrf.mxu0
        %v5866 = vadd.f32 0.0, %v5865
        %v5867 = vpop.f32.mrf.mxu0
        %5868 = vmatprep.mubr.f32.mxu0 0.0
        %5869 = vmatmul.mubr.f32.gmra.mxu0 %v5260
        %v5870 = vpop.f32.mrf.mxu0
        %v5871 = vadd.f32 0.0, %v5870
        %v5872 = vpop.f32.mrf.mxu0
        %5873 = vmatprep.mubr.f32.mxu0 0.0
        %5874 = vmatmul.mubr.f32.gmra.mxu0 %v5263
        %v5875 = vpop.f32.mrf.mxu0
        %v5876 = vadd.f32 0.0, %v5875
        %v5877 = vpop.f32.mrf.mxu0
        %5878 = vmatprep.mubr.f32.mxu0 0.0
        %5879 = vmatmul.mubr.f32.gmra.mxu0 %v5266
        %v5880 = vpop.f32.mrf.mxu0
        %v5881 = vadd.f32 0.0, %v5880
        %v5882 = vpop.f32.mrf.mxu0
        %5883 = vmatprep.mubr.f32.mxu0 0.0
        %5884 = vmatmul.mubr.f32.gmra.mxu0 %v5269
        %v5885 = vpop.f32.mrf.mxu0
        %v5886 = vadd.f32 0.0, %v5885
        %v5887 = vpop.f32.mrf.mxu0
        %5888 = vmatprep.mubr.f32.mxu0 0.0
        %5889 = vmatmul.mubr.f32.gmra.mxu0 %v5272
        %v5890 = vpop.f32.mrf.mxu0
        %v5891 = vadd.f32 0.0, %v5890
        %v5892 = vpop.f32.mrf.mxu0
        %5893 = vmatprep.mubr.f32.mxu0 0.0
        %5894 = vmatmul.mubr.f32.gmra.mxu0 %v5275
        %v5895 = vpop.f32.mrf.mxu0
        %v5896 = vadd.f32 0.0, %v5895
        %v5897 = vpop.f32.mrf.mxu0
        %5898 = vmatprep.mubr.f32.mxu0 0.0
        %5899 = vmatmul.mubr.f32.gmra.mxu0 %v5278
        %v5900 = vpop.f32.mrf.mxu0
        %v5901 = vadd.f32 0.0, %v5900
        %v5902 = vpop.f32.mrf.mxu0
        %5903 = vmatprep.mubr.f32.mxu0 0.0
        %5904 = vmatmul.mubr.f32.gmra.mxu0 %v5281
        %v5905 = vpop.f32.mrf.mxu0
        %v5906 = vadd.f32 0.0, %v5905
        %v5907 = vpop.f32.mrf.mxu0
        %5908 = vmatprep.mubr.f32.mxu0 0.0
        %5909 = vmatmul.mubr.f32.gmra.mxu0 %v5284
        %v5910 = vpop.f32.mrf.mxu0
        %v5911 = vadd.f32 0.0, %v5910
        %v5912 = vpop.f32.mrf.mxu0
        %5913 = vmatprep.mubr.f32.mxu0 0.0
        %5914 = vmatmul.mubr.f32.gmra.mxu0 %v5287
        %v5915 = vpop.f32.mrf.mxu0
        %v5916 = vadd.f32 0.0, %v5915
        %v5917 = vpop.f32.mrf.mxu0
        %5918 = vmatprep.mubr.f32.mxu0 0.0
        %5919 = vmatmul.mubr.f32.gmra.mxu0 %v5290
        %v5920 = vpop.f32.mrf.mxu0
        %v5921 = vadd.f32 0.0, %v5920
        %v5922 = vpop.f32.mrf.mxu0
        %5923 = vmatprep.mubr.f32.mxu0 0.0
        %5924 = vmatmul.mubr.f32.gmra.mxu0 %v5293
        %v5925 = vpop.f32.mrf.mxu0
        %v5926 = vadd.f32 0.0, %v5925
        %v5927 = vpop.f32.mrf.mxu0
        %5928 = vmatprep.mubr.f32.mxu0 0.0
        %5929 = vmatmul.mubr.f32.gmra.mxu0 %v5296
        %v5930 = vpop.f32.mrf.mxu0
        %v5931 = vadd.f32 0.0, %v5930
        %v5932 = vpop.f32.mrf.mxu0
        %5933 = vmatprep.mubr.f32.mxu0 0.0
        %5934 = vmatmul.mubr.f32.gmra.mxu0 %v5299
        %v5935 = vpop.f32.mrf.mxu0
        %v5936 = vadd.f32 0.0, %v5935
        %v5937 = vpop.f32.mrf.mxu0
        %5938 = vmatprep.mubr.f32.mxu0 0.0
        %5939 = vmatmul.mubr.f32.gmra.mxu0 %v5302
        %v5940 = vpop.f32.mrf.mxu0
        %v5941 = vadd.f32 0.0, %v5940
        %v5942 = vpop.f32.mrf.mxu0
        %5943 = vmatprep.mubr.f32.mxu0 0.0
        %5944 = vmatmul.mubr.f32.gmra.mxu0 %v5305
        %v5945 = vpop.f32.mrf.mxu0
        %v5946 = vadd.f32 0.0, %v5945
        %v5947 = vpop.f32.mrf.mxu0
        %5948 = vmatprep.mubr.f32.mxu0 0.0
        %5949 = vmatmul.mubr.f32.gmra.mxu0 %v5308
        %v5950 = vpop.f32.mrf.mxu0
        %v5951 = vadd.f32 0.0, %v5950
        %v5952 = vpop.f32.mrf.mxu0
        %5953 = vmatprep.mubr.f32.mxu0 0.0
        %5954 = vmatmul.mubr.f32.gmra.mxu0 %v5311
        %v5955 = vpop.f32.mrf.mxu0
        %v5956 = vadd.f32 0.0, %v5955
        %v5957 = vpop.f32.mrf.mxu0
        %5958 = vmatprep.mubr.f32.mxu0 0.0
        %5959 = vmatmul.mubr.f32.gmra.mxu0 %v5314
        %v5960 = vpop.f32.mrf.mxu0
        %v5961 = vadd.f32 0.0, %v5960
        %v5962 = vpop.f32.mrf.mxu0
        %5963 = vmatprep.mubr.f32.mxu0 0.0
        %5964 = vmatmul.mubr.f32.gmra.mxu0 %v5317
        %v5965 = vpop.f32.mrf.mxu0
        %v5966 = vadd.f32 0.0, %v5965
        %v5967 = vpop.f32.mrf.mxu0
        %5968 = vmatprep.mubr.f32.mxu0 0.0
        %5969 = vmatmul.mubr.f32.gmra.mxu0 %v5320
        %v5970 = vpop.f32.mrf.mxu0
        %v5971 = vadd.f32 0.0, %v5970
        %v5972 = vpop.f32.mrf.mxu0
        %5973 = vmatprep.mubr.f32.mxu0 0.0
        %5974 = vmatmul.mubr.f32.gmra.mxu0 %v5323
        %v5975 = vpop.f32.mrf.mxu0
        %v5976 = vadd.f32 0.0, %v5975
        %v5977 = vpop.f32.mrf.mxu0
        %5978 = vmatprep.mubr.f32.mxu0 0.0
        %5979 = vmatmul.mubr.f32.gmra.mxu0 %v5326
        %v5980 = vpop.f32.mrf.mxu0
        %v5981 = vadd.f32 0.0, %v5980
        %v5982 = vpop.f32.mrf.mxu0
        %5983 = vmatprep.mubr.f32.mxu0 0.0
        %5984 = vmatmul.mubr.f32.gmra.mxu0 %v5329
        %v5985 = vpop.f32.mrf.mxu0
        %v5986 = vadd.f32 0.0, %v5985
        %v5987 = vpop.f32.mrf.mxu0
        %5988 = vdwg.mxu0
        %5989 = vst [vmem:[%s383] sm:$0xff] %v5398
        %5990 = vst [vmem:[%s383 + $0x8] sm:$0xff] %v5400
        %5991 = vst [vmem:[%s383 + $0x10] sm:$0xff] %v5751
        %5992 = vst [vmem:[%s383 + $0x18] sm:$0xff] %v5404
        %5993 = vst [vmem:[%s383 + $0x20] sm:$0xff] %v5406
        %5994 = vst [vmem:[%s383 + $0x28] sm:$0xff] %v5756
        %5995 = vst [vmem:[%s383 + $0x30] sm:$0xff] %v5410
        %5996 = vst [vmem:[%s383 + $0x38] sm:$0xff] %v5412
        %5997 = vst [vmem:[%s383 + $0x40] sm:$0xff] %v5761
        %5998 = vst [vmem:[%s383 + $0x48] sm:$0xff] %v5416
        %5999 = vst [vmem:[%s383 + $0x50] sm:$0xff] %v5418
        %6000 = vst [vmem:[%s383 + $0x58] sm:$0xff] %v5766
        %6001 = vst [vmem:[%s383 + $0x60] sm:$0xff] %v5422
        %6002 = vst [vmem:[%s383 + $0x68] sm:$0xff] %v5424
        %6003 = vst [vmem:[%s383 + $0x70] sm:$0xff] %v5771
        %6004 = vst [vmem:[%s383 + $0x78] sm:$0xff] %v5428
        %6005 = vst [vmem:[%s383 + $0x80] sm:$0xff] %v5430
        %6006 = vst [vmem:[%s383 + $0x88] sm:$0xff] %v5776
        %6007 = vst [vmem:[%s383 + $0x90] sm:$0xff] %v5434
        %6008 = vst [vmem:[%s383 + $0x98] sm:$0xff] %v5436
        %6009 = vst [vmem:[%s383 + $0xa0] sm:$0xff] %v5781
        %6010 = vst [vmem:[%s383 + $0xa8] sm:$0xff] %v5440
        %6011 = vst [vmem:[%s383 + $0xb0] sm:$0xff] %v5442
        %6012 = vst [vmem:[%s383 + $0xb8] sm:$0xff] %v5786
        %6013 = vst [vmem:[%s383 + $0xc0] sm:$0xff] %v5446
        %6014 = vst [vmem:[%s383 + $0xc8] sm:$0xff] %v5448
        %6015 = vst [vmem:[%s383 + $0xd0] sm:$0xff] %v5791
        %6016 = vst [vmem:[%s383 + $0xd8] sm:$0xff] %v5452
        %6017 = vst [vmem:[%s383 + $0xe0] sm:$0xff] %v5454
        %6018 = vst [vmem:[%s383 + $0xe8] sm:$0xff] %v5796
        %6019 = vst [vmem:[%s383 + $0xf0] sm:$0xff] %v5458
        %6020 = vst [vmem:[%s383 + $0xf8] sm:$0xff] %v5460
        %6021 = vst [vmem:[%s383 + $0x100] sm:$0xff] %v5801
        %6022 = vst [vmem:[%s383 + $0x108] sm:$0xff] %v5464
        %6023 = vst [vmem:[%s383 + $0x110] sm:$0xff] %v5466
        %6024 = vst [vmem:[%s383 + $0x118] sm:$0xff] %v5806
        %6025 = vst [vmem:[%s383 + $0x120] sm:$0xff] %v5470
        %6026 = vst [vmem:[%s383 + $0x128] sm:$0xff] %v5472
        %6027 = vst [vmem:[%s383 + $0x130] sm:$0xff] %v5811
        %6028 = vst [vmem:[%s383 + $0x138] sm:$0xff] %v5476
        %6029 = vst [vmem:[%s383 + $0x140] sm:$0xff] %v5478
        %6030 = vst [vmem:[%s383 + $0x148] sm:$0xff] %v5816
        %6031 = vst [vmem:[%s383 + $0x150] sm:$0xff] %v5482
        %6032 = vst [vmem:[%s383 + $0x158] sm:$0xff] %v5484
        %6033 = vst [vmem:[%s383 + $0x160] sm:$0xff] %v5821
        %6034 = vst [vmem:[%s383 + $0x168] sm:$0xff] %v5488
        %6035 = vst [vmem:[%s383 + $0x170] sm:$0xff] %v5490
        %6036 = vst [vmem:[%s383 + $0x178] sm:$0xff] %v5826
        %6037 = vst [vmem:[%s383 + $0x180] sm:$0xff] %v5494
        %6038 = vst [vmem:[%s383 + $0x188] sm:$0xff] %v5496
        %6039 = vst [vmem:[%s383 + $0x190] sm:$0xff] %v5831
        %6040 = vst [vmem:[%s383 + $0x198] sm:$0xff] %v5500
        %6041 = vst [vmem:[%s383 + $0x1a0] sm:$0xff] %v5502
        %6042 = vst [vmem:[%s383 + $0x1a8] sm:$0xff] %v5836
        %6043 = vst [vmem:[%s383 + $0x1b0] sm:$0xff] %v5506
        %6044 = vst [vmem:[%s383 + $0x1b8] sm:$0xff] %v5508
        %6045 = vst [vmem:[%s383 + $0x1c0] sm:$0xff] %v5841
        %6046 = vst [vmem:[%s383 + $0x1c8] sm:$0xff] %v5512
        %6047 = vst [vmem:[%s383 + $0x1d0] sm:$0xff] %v5514
        %6048 = vst [vmem:[%s383 + $0x1d8] sm:$0xff] %v5846
        %6049 = vst [vmem:[%s383 + $0x1e0] sm:$0xff] %v5518
        %6050 = vst [vmem:[%s383 + $0x1e8] sm:$0xff] %v5520
        %6051 = vst [vmem:[%s383 + $0x1f0] sm:$0xff] %v5851
        %6052 = vst [vmem:[%s383 + $0x1f8] sm:$0xff] %v5524
        %6053 = vst [vmem:[%s383 + $0x200] sm:$0xff] %v5526
        %6054 = vst [vmem:[%s383 + $0x208] sm:$0xff] %v5856
        %6055 = vst [vmem:[%s383 + $0x210] sm:$0xff] %v5530
        %6056 = vst [vmem:[%s383 + $0x218] sm:$0xff] %v5532
        %6057 = vst [vmem:[%s383 + $0x220] sm:$0xff] %v5861
        %6058 = vst [vmem:[%s383 + $0x228] sm:$0xff] %v5536
        %6059 = vst [vmem:[%s383 + $0x230] sm:$0xff] %v5538
        %6060 = vst [vmem:[%s383 + $0x238] sm:$0xff] %v5866
        %6061 = vst [vmem:[%s383 + $0x240] sm:$0xff] %v5542
        %6062 = vst [vmem:[%s383 + $0x248] sm:$0xff] %v5544
        %6063 = vst [vmem:[%s383 + $0x250] sm:$0xff] %v5871
        %6064 = vst [vmem:[%s383 + $0x258] sm:$0xff] %v5548
        %6065 = vst [vmem:[%s383 + $0x260] sm:$0xff] %v5550
        %6066 = vst [vmem:[%s383 + $0x268] sm:$0xff] %v5876
        %6067 = vst [vmem:[%s383 + $0x270] sm:$0xff] %v5554
        %6068 = vst [vmem:[%s383 + $0x278] sm:$0xff] %v5556
        %6069 = vst [vmem:[%s383 + $0x280] sm:$0xff] %v5881
        %6070 = vst [vmem:[%s383 + $0x288] sm:$0xff] %v5560
        %6071 = vst [vmem:[%s383 + $0x290] sm:$0xff] %v5562
        %6072 = vst [vmem:[%s383 + $0x298] sm:$0xff] %v5886
        %6073 = vst [vmem:[%s383 + $0x2a0] sm:$0xff] %v5566
        %6074 = vst [vmem:[%s383 + $0x2a8] sm:$0xff] %v5568
        %6075 = vst [vmem:[%s383 + $0x2b0] sm:$0xff] %v5891
        %6076 = vst [vmem:[%s383 + $0x2b8] sm:$0xff] %v5572
        %6077 = vst [vmem:[%s383 + $0x2c0] sm:$0xff] %v5574
        %6078 = vst [vmem:[%s383 + $0x2c8] sm:$0xff] %v5896
        %6079 = vst [vmem:[%s383 + $0x2d0] sm:$0xff] %v5578
        %6080 = vst [vmem:[%s383 + $0x2d8] sm:$0xff] %v5580
        %6081 = vst [vmem:[%s383 + $0x2e0] sm:$0xff] %v5901
        %6082 = vst [vmem:[%s383 + $0x2e8] sm:$0xff] %v5584
        %6083 = vst [vmem:[%s383 + $0x2f0] sm:$0xff] %v5586
        %6084 = vst [vmem:[%s383 + $0x2f8] sm:$0xff] %v5906
        %6085 = vst [vmem:[%s383 + $0x300] sm:$0xff] %v5590
        %6086 = vst [vmem:[%s383 + $0x308] sm:$0xff] %v5592
        %6087 = vst [vmem:[%s383 + $0x310] sm:$0xff] %v5911
        %6088 = vst [vmem:[%s383 + $0x318] sm:$0xff] %v5596
        %6089 = vst [vmem:[%s383 + $0x320] sm:$0xff] %v5598
        %6090 = vst [vmem:[%s383 + $0x328] sm:$0xff] %v5916
        %6091 = vst [vmem:[%s383 + $0x330] sm:$0xff] %v5602
        %6092 = vst [vmem:[%s383 + $0x338] sm:$0xff] %v5604
        %6093 = vst [vmem:[%s383 + $0x340] sm:$0xff] %v5921
        %6094 = vst [vmem:[%s383 + $0x348] sm:$0xff] %v5608
        %6095 = vst [vmem:[%s383 + $0x350] sm:$0xff] %v5610
        %6096 = vst [vmem:[%s383 + $0x358] sm:$0xff] %v5926
        %6097 = vst [vmem:[%s383 + $0x360] sm:$0xff] %v5614
        %6098 = vst [vmem:[%s383 + $0x368] sm:$0xff] %v5616
        %6099 = vst [vmem:[%s383 + $0x370] sm:$0xff] %v5931
        %6100 = vst [vmem:[%s383 + $0x378] sm:$0xff] %v5620
        %6101 = vst [vmem:[%s383 + $0x380] sm:$0xff] %v5622
        %6102 = vst [vmem:[%s383 + $0x388] sm:$0xff] %v5936
        %6103 = vst [vmem:[%s383 + $0x390] sm:$0xff] %v5626
        %6104 = vst [vmem:[%s383 + $0x398] sm:$0xff] %v5628
        %6105 = vst [vmem:[%s383 + $0x3a0] sm:$0xff] %v5941
        %6106 = vst [vmem:[%s383 + $0x3a8] sm:$0xff] %v5632
        %6107 = vst [vmem:[%s383 + $0x3b0] sm:$0xff] %v5634
        %6108 = vst [vmem:[%s383 + $0x3b8] sm:$0xff] %v5946
        %6109 = vst [vmem:[%s383 + $0x3c0] sm:$0xff] %v5638
        %6110 = vst [vmem:[%s383 + $0x3c8] sm:$0xff] %v5640
        %6111 = vst [vmem:[%s383 + $0x3d0] sm:$0xff] %v5951
        %6112 = vst [vmem:[%s383 + $0x3d8] sm:$0xff] %v5644
        %6113 = vst [vmem:[%s383 + $0x3e0] sm:$0xff] %v5646
        %6114 = vst [vmem:[%s383 + $0x3e8] sm:$0xff] %v5956
        %6115 = vst [vmem:[%s383 + $0x3f0] sm:$0xff] %v5650
        %6116 = vst [vmem:[%s383 + $0x3f8] sm:$0xff] %v5652
        %6117 = vst [vmem:[%s383 + $0x400] sm:$0xff] %v5961
        %6118 = vst [vmem:[%s383 + $0x408] sm:$0xff] %v5656
        %6119 = vst [vmem:[%s383 + $0x410] sm:$0xff] %v5658
        %6120 = vst [vmem:[%s383 + $0x418] sm:$0xff] %v5966
        %6121 = vst [vmem:[%s383 + $0x420] sm:$0xff] %v5662
        %6122 = vst [vmem:[%s383 + $0x428] sm:$0xff] %v5664
        %6123 = vst [vmem:[%s383 + $0x430] sm:$0xff] %v5971
        %6124 = vst [vmem:[%s383 + $0x438] sm:$0xff] %v5668
        %6125 = vst [vmem:[%s383 + $0x440] sm:$0xff] %v5670
        %6126 = vst [vmem:[%s383 + $0x448] sm:$0xff] %v5976
        %6127 = vst [vmem:[%s383 + $0x450] sm:$0xff] %v5674
        %6128 = vst [vmem:[%s383 + $0x458] sm:$0xff] %v5676
        %6129 = vst [vmem:[%s383 + $0x460] sm:$0xff] %v5981
        %6130 = vst [vmem:[%s383 + $0x468] sm:$0xff] %v5680
        %6131 = vst [vmem:[%s383 + $0x470] sm:$0xff] %v5682
        %6132 = vst [vmem:[%s383 + $0x478] sm:$0xff] %v5986
        %s6133 = sand.u32 %s233, 1
        %s6134 = scalar_lea.sflag [#allocation4], %s6133
        %s6135 = sand.u32 %s233, 1
        %s6136 = smul.addr %s6135, 1152
        %s6137 = scalar_lea.vmem [#allocation5], %s6136
        %p6138 = scmp.lt.s32.totalorder %s26, 1
        %s6139 = scalar_select %p6138, %s26, 1
        %s6140 = smul.addr %s6139, 8
        %s6141 = smul.addr %s6140, 8
        %s6142 = scalar_lea.vmem %s10, %s6141
        // Predicated region
        $region61: #{mcm_forward.1} parent=55 // pred_check
          %p6143 = pneg %p243
        $region62: #{mcm_forward.1} parent=55 // pred_check_branch
          %6145 = sbr.rel (%p6143) target = $region64
        $region63: #{mcm_forward.1} parent=55 // pred_region
          %s6147 = ssub.s32 18432, 18432
          %6148 = vsyncadd %s6134, %s6147
          %s6149 = smul.addr %s26, 144
          %s6150 = smul.addr %s6149, 128
          %s6151 = scalar_lea.hbm %s9, %s6150
          %s6152 = sshll.u32 %s6137, 4
          %s6153 = int_to_ptr.vmem [resolvable:$true] %s6152
          %6158 = dma.vmem_to_hbm [thread:$0]  %s6153, 18432, %s6151, %s6134, 384, 384, 24
        $region64: #{mcm_forward.1} parent=55 // pred_fallthru
          _
        // Predicated region
        $region65: #{mcm_forward.1} parent=55 // pred_check
          %p6159 = pneg %p269
        $region66: #{mcm_forward.1} parent=55 // pred_check_branch
          %6161 = sbr.rel (%p6159) target = $region68
        $region67: #{mcm_forward.1} parent=55 // pred_region
          _
        $region68: #{mcm_forward.1} parent=55 // pred_fallthru
          _
      $region56: #{mcm_forward.1} parent=5 // pred_fallthru
        _
      %p6162 = scmp.le.s32.totalorder 2, %s21
      // Predicated region
      $region69: #{mcm_forward.1} parent=5 // pred_check
        %p6163 = pneg %p6162
      $region70: #{mcm_forward.1} parent=5 // pred_check_branch
        %6165 = sbr.rel (%p6163) target = $region72
      $region71: #{mcm_forward.1} parent=5 // pred_region
        %s6166 = ssub.s32 %s21, 2
        // Predicated region
        $region73: #{mcm_forward.1} parent=71 // pred_check
          %p6167 = pneg %p249
        $region74: #{mcm_forward.1} parent=71 // pred_check_branch
          %6169 = sbr.rel (%p6167) target = $region76
        $region75: #{mcm_forward.1} parent=71 // pred_region
          %s6170 = sand.u32 %s234, 1
          %s6171 = scalar_lea.sflag [#allocation4], %s6170
          %s6172 = sand.u32 %s234, 1
          %s6173 = smul.addr %s6172, 1152
          %s6174 = scalar_lea.vmem [#allocation5], %s6173
          %6175 = dma.done %s6171, 18432
        $region76: #{mcm_forward.1} parent=71 // pred_fallthru
          _
        // Predicated region
        $region77: #{mcm_forward.1} parent=71 // pred_check
          %p6176 = pneg %p275
        $region78: #{mcm_forward.1} parent=71 // pred_check_branch
          %6178 = sbr.rel (%p6176) target = $region80
        $region79: #{mcm_forward.1} parent=71 // pred_region
          %p6179 = scmp.lt.s32.totalorder %s27, 1
          %s6180 = scalar_select %p6179, %s27, 1
          %s6181 = smul.addr %s6180, 8
          %s6182 = smul.addr %s6181, 8
          %s6183 = scalar_lea.vmem %s10, %s6182
        $region80: #{mcm_forward.1} parent=71 // pred_fallthru
          _
      $region72: #{mcm_forward.1} parent=5 // pred_fallthru
        _
    $region6: #{mcm_forward.1} parent=1 // loop_footer
      %s25 = sadd.s32 1, %s21
    $region7: #{mcm_forward.1} parent=1 // loop_footer_branch
      %20 = sbr.rel target = $region3
    $region8: #{mcm_forward.1} parent=1 // loop_exit
      _
    %6184 = vsyncpa [#allocation3], 1
    %s6185 = scalar_lea.sflag [#allocation3], 1
    %6186 = vsyncpa %s6185, 1
    %6187 = vsyncpa [#allocation4], 1
    %s6188 = scalar_lea.sflag [#allocation4], 1
    %6189 = vsyncpa %s6188, 1

</llo_original>
